<compile_context>
chip_gen: v7x
topology: tpu7x:2x2x1
jax: 0.10.0
libtpu: 0.0.40
codegen_flags: <defaults>
</compile_context>

<pallas_src>
import functools
import math

import jax
import jax.numpy as jnp
from jax.experimental import pallas as pl
from jax.experimental.pallas import tpu as pltpu


def _round_up(x, m):
    return ((x + m - 1) // m) * m


def _pick_strip_rows(H, W, budget=1024):
    """Largest even divisor of H with strip_rows * W <= budget (min 2)."""
    best = 2
    for d in range(2, H + 1, 2):
        if H % d == 0 and d * W <= budget:
            best = d
    return best


_C0 = 8   # column offset of the image interior inside the halo buffer;
          # column _C0-1 is the left zero halo, column _C0+W the right one.
          # Keeps interior write-backs 8-sublane aligned (dense stores).


# ----------------------------------------------------------------------------
# Fused kernel: [starter conv+ReLU]*S  ->  grow conv+ReLU  ->  2x2 avg pool
# ----------------------------------------------------------------------------
def _encoder_kernel(x_ref, ws_ref, bs_ref, wg_ref, bg_ref, o_ref, *bufs,
                    H, W, Wq, Cin, Cin_p, Cout_p, num_starter, strip_rows,
                    compute_dtype):
    cd = compute_dtype
    TH = strip_rows
    THo = TH // 2
    n_strips = H // TH
    Wo = W // 2
    C0 = _C0

    # -- zero only the halo ring (scratch persists across grid steps and may
    #    hold garbage / NaNs; the interior is fully overwritten below). --
    for b in bufs:
        b[0:1, :, :] = jnp.zeros((1, Wq, Cin_p), cd)
        b[H + 1:H + 2, :, :] = jnp.zeros((1, Wq, Cin_p), cd)
        b[1:H + 1, 0:C0, :] = jnp.zeros((H, C0, Cin_p), cd)
        b[1:H + 1, C0 + W:Wq, :] = jnp.zeros((H, Wq - C0 - W, Cin_p), cd)

    # -- load this batch element into buffer 0's interior --
    bufs[0][1:H + 1, C0:C0 + W, 0:Cin] = x_ref[0].astype(cd)
    if Cin_p > Cin:
        # Padded input channels must be exactly zero: NaN garbage would leak
        # through the zero weight rows as NaN * 0.
        bufs[0][1:H + 1, C0:C0 + W, Cin:Cin_p] = jnp.zeros(
            (H, W, Cin_p - Cin), cd)

    def conv_strip(src, r0, wtap, cout_p):
        # 9 per-tap MXU dots accumulated in f32 (no im2col scratch).
        acc = jnp.zeros((TH * W, cout_p), jnp.float32)
        for dy in range(3):
            for dx in range(3):
                tap = src[dy + r0:dy + r0 + TH,
                          C0 - 1 + dx:C0 - 1 + dx + W, :]
                tap = tap.reshape(TH * W, Cin_p)
                acc = acc + jnp.dot(tap, wtap(dy * 3 + dx),
                                    preferred_element_type=jnp.float32)
        return acc

    # -- starter convs: ping-pong between the two halo buffers --
    cur = 0
    for i in range(num_starter):
        nxt = 1 - cur                      # num_starter > 0  =>  len(bufs)==2
        b_row = bs_ref[i]                                  # (1, Cin_p) f32
        for s in range(n_strips):
            r0 = s * TH
            acc = conv_strip(bufs[cur], r0,
                             lambda t: ws_ref[i * 9 + t], Cin_p)
            y = jnp.maximum(acc + b_row, 0.0).astype(cd)
            bufs[nxt][1 + r0:1 + r0 + TH, C0:C0 + W, :] = \
                y.reshape(TH, W, Cin_p)
        cur = nxt

    # -- grow conv + ReLU + 2x2/2 average pool, strip-wise to the output --
    bg = bg_ref[...]                                       # (1, Cout_p) f32
    for s in range(n_strips):
        r0 = s * TH
        acc = conv_strip(bufs[cur], r0, lambda t: wg_ref[t], Cout_p)
        y = jnp.maximum(acc + bg, 0.0)                     # (TH*W, Cout_p) f32
        y4 = y.reshape(THo, 2, W, Cout_p)
        rows = y4[:, 0] + y4[:, 1]                         # pool row pairs
        r4 = rows.reshape(THo, Wo, 2, Cout_p)
        pooled = r4.sum(axis=2) * 0.25                     # pool column pairs
        o_ref[0, s * THo:(s + 1) * THo, :, :] = pooled.astype(o_ref.dtype)


# ----------------------------------------------------------------------------
# Wrapper: weight packing, specs, pallas_call
# ----------------------------------------------------------------------------
def progan_encoder_forward(x_nhwc, starter_params, grow_params, *,
                           compute_dtype=jnp.bfloat16, strip_rows=None):
    """Returns NHWC output with channels zero-padded to Cout_p (>= Cout)."""
    N, H, W, Cin = x_nhwc.shape
    Cout = grow_params[0].shape[-1]
    if H % 2 or W % 2:
        raise ValueError("H and W must be even for the 2x2 average pool")

    # Lane-dense channel padding.  Real ProGAN widths (128/256/512) are
    # already multiples of 128 (and 256/512 also fill the 256-wide MXU of
    # v6e/v7x); only tiny demo configs pay padding here.
    Cin_p = _round_up(Cin, 128)
    Cout_p = _round_up(Cout, 128)
    S = len(starter_params)
    S_ = max(S, 1)
    Ho, Wo = H // 2, W // 2
    Wq = _round_up(_C0 + W + 1, 8)        # interior + 1-col halo + right pad

    if strip_rows is None:
        strip_rows = _pick_strip_rows(H, W)
    if strip_rows % 2 or H % strip_rows:
        raise ValueError("strip_rows must be even and divide H")

    cd = compute_dtype
    n_bufs = 2 if S > 0 else 1

    def prep(w_hwio, b, cin_p, cout_p):
        cin, cout = w_hwio.shape[2], w_hwio.shape[3]
        wp = jnp.zeros((3, 3, cin_p, cout_p), jnp.float32)
        wp = wp.at[:, :, :cin, :cout].set(w_hwio.astype(jnp.float32))
        bp = jnp.zeros((1, cout_p), jnp.float32)
        bp = bp.at[0, :cout].set(b.astype(jnp.float32))
        # Tap-major layout: slice t = dy*3 + dx is that tap's (cin_p, cout_p)
        # weight, matching the kernel's per-tap dot ordering.
        return wp.reshape(9, cin_p, cout_p).astype(cd), bp

    if S > 0:
        prepped = [prep(w, b, Cin_p, Cin_p) for (w, b) in starter_params]
        ws = jnp.concatenate([w for w, _ in prepped], axis=0)  # (S*9,Cin_p,Cin_p)
        bs = jnp.stack([b for _, b in prepped])                # (S,1,Cin_p)
    else:   # dummies; never read inside the kernel (static loop of 0)
        ws = jnp.zeros((9, Cin_p, Cin_p), cd)
        bs = jnp.zeros((1, 1, Cin_p), jnp.float32)
    wg, bg = prep(grow_params[0], grow_params[1], Cin_p, Cout_p)

    kernel = functools.partial(
        _encoder_kernel, H=H, W=W, Wq=Wq, Cin=Cin, Cin_p=Cin_p,
        Cout_p=Cout_p, num_starter=S, strip_rows=strip_rows,
        compute_dtype=cd)

    # Explicit VMEM budget: halo buffers + resident weights + pipelined I/O
    # blocks, with headroom for the strip accumulator (x2 safety factor).
    itm = jnp.dtype(cd).itemsize
    xitm = jnp.dtype(x_nhwc.dtype).itemsize
    vmem_est = (n_bufs * (H + 2) * Wq * Cin_p * itm
                + (S_ * 9 * Cin_p * Cin_p + 9 * Cin_p * Cout_p) * itm
                + (S_ * Cin_p + Cout_p) * 4
                + 2 * (H * W * Cin * xitm + Ho * Wo * Cout_p * xitm)
                + 4 * strip_rows * W * max(Cin_p, Cout_p) * 4)
    vmem_limit = int(min(128 * 1024 * 1024,
                         max(32 * 1024 * 1024, 2 * vmem_est)))

    out = pl.pallas_call(
        kernel,
        out_shape=jax.ShapeDtypeStruct((N, Ho, Wo, Cout_p), x_nhwc.dtype),
        grid_spec=pltpu.PrefetchScalarGridSpec(
            num_scalar_prefetch=0,
            grid=(N,),
            in_specs=[
                pl.BlockSpec((1, H, W, Cin), lambda n: (n, 0, 0, 0)),
                pl.BlockSpec((S_ * 9, Cin_p, Cin_p), lambda n: (0, 0, 0)),
                pl.BlockSpec((S_, 1, Cin_p), lambda n: (0, 0, 0)),
                pl.BlockSpec((9, Cin_p, Cout_p), lambda n: (0, 0, 0)),
                pl.BlockSpec((1, Cout_p), lambda n: (0, 0)),
            ],
            out_specs=pl.BlockSpec((1, Ho, Wo, Cout_p),
                                   lambda n: (n, 0, 0, 0)),
            scratch_shapes=[pltpu.VMEM((H + 2, Wq, Cin_p), cd)
                            for _ in range(n_bufs)],
        ),
        compiler_params=pltpu.CompilerParams(
            dimension_semantics=("parallel",),
            vmem_limit_bytes=vmem_limit),
    )(x_nhwc, ws, bs, wg, bg)
    return out


# ----------------------------------------------------------------------------
# Module
# ----------------------------------------------------------------------------
def _init_conv(key, cin, cout):
    # Mimics PyTorch Conv2d default init (uniform +/- 1/sqrt(fan_in)).
    kw, kb = jax.random.split(key)
    fan_in = cin * 3 * 3
    bound = 1.0 / math.sqrt(fan_in)
    w = jax.random.uniform(kw, (3, 3, cin, cout), jnp.float32, -bound, bound)
    b = jax.random.uniform(kb, (cout,), jnp.float32, -bound, bound)
    return w, b


class ProGANEncoderLayerPallas:
    """Pallas port of ProGANEncoderLayer (activation == nn.ReLU)."""

    def __init__(self, num_layers, in_channels, out_channels, key,
                 compute_dtype=jnp.bfloat16, strip_rows=None):
        num_starter = num_layers - 1
        if num_starter < 0:
            raise ValueError("Must have at least one layer")
        keys = jax.random.split(key, num_starter + 1)
        self.starters = [_init_conv(keys[i], in_channels, in_channels)
                         for i in range(num_starter)]
        self.grow = _init_conv(keys[-1], in_channels, out_channels)
        self.out_channels = out_channels
        self.compute_dtype = compute_dtype     # bf16 = native MXU rate
        self.strip_rows = strip_rows

    def __call__(self, x_nchw):
        x = jnp.transpose(x_nchw, (0, 2, 3, 1))          # NCHW -> NHWC
        y = progan_encoder_forward(x, self.starters, self.grow,
                                   compute_dtype=self.compute_dtype,
                                   strip_rows=self.strip_rows)
        # Fold the padded-channel slice into the NHWC->NCHW transpose
        # (single HBM pass over the output under jit).
        return jnp.transpose(y, (0, 3, 1, 2))[:, :self.out_channels]


# ----------------------------------------------------------------------------
# Pure-JAX reference (for correctness check)
# ----------------------------------------------------------------------------
def _ref_forward(model, x_nchw):
    def conv(x, w, b):
        y = jax.lax.conv_general_dilated(
            x, w, (1, 1), "SAME",
            dimension_numbers=("NHWC", "HWIO", "NHWC"))
        return jnp.maximum(y + b, 0.0)

    x = jnp.transpose(x_nchw, (0, 2, 3, 1))
    for w, b in model.starters:
        x = conv(x, w, b)
    w, b = model.grow
    x = conv(x, w, b)
    N, H, W, C = x.shape
    x = x.reshape(N, H // 2, 2, W // 2, 2, C).mean(axis=(2, 4))
    return jnp.transpose(x, (0, 3, 1, 2))


if __name__ == "__main__":
    key = jax.random.PRNGKey(0)
    k_param, k_x = jax.random.split(key)

    num_layers, in_ch, out_ch = 2, 4, 8
    x = jax.random.normal(k_x, (2, in_ch, 16, 16), jnp.float32)   # NCHW

    # Default bf16 MXU path (checked at bf16-appropriate tolerance).
    model = ProGANEncoderLayerPallas(num_layers, in_ch, out_ch, k_param)
    out_bf16 = jax.block_until_ready(jax.jit(lambda a: model(a))(x))

    # f32 compute path (exact vs. reference), forcing several row strips to
    # exercise the strip-wise epilogue / pooling path.
    model_f32 = ProGANEncoderLayerPallas(num_layers, in_ch, out_ch, k_param,
                                         compute_dtype=jnp.float32,
                                         strip_rows=4)
    out_f32 = jax.block_until_ready(model_f32(x))

    ref = jax.block_until_ready(_ref_forward(model_f32, x))

    assert out_f32.shape == (2, out_ch, 8, 8), out_f32.shape
    assert out_bf16.shape == (2, out_ch, 8, 8), out_bf16.shape
    assert jnp.allclose(out_f32, ref, atol=1e-4, rtol=1e-4), \
        float(jnp.max(jnp.abs(out_f32 - ref)))
    assert jnp.allclose(out_bf16, ref, atol=5e-2, rtol=5e-2), \
        float(jnp.max(jnp.abs(out_bf16 - ref)))

    print("KERNEL_OK")
</pallas_src>

<mosaic_0001>
module attributes {stable_mosaic.version = 11 : i64} {
  func.func @_encoder_kernel(%arg0: i32, %arg1: memref<1x16x16x4xf32, #tpu.memory_space<vmem>>, %arg2: memref<9x128x128xbf16, #tpu.memory_space<vmem>>, %arg3: memref<1x1x128xf32, #tpu.memory_space<vmem>>, %arg4: memref<9x128x128xbf16, #tpu.memory_space<vmem>>, %arg5: memref<1x128xf32, #tpu.memory_space<vmem>>, %arg6: memref<1x8x8x128xf32, #tpu.memory_space<vmem>>, %arg7: memref<18x32x128xbf16, #tpu.memory_space<vmem>>, %arg8: memref<18x32x128xbf16, #tpu.memory_space<vmem>>) attributes {dimension_semantics = [#tpu.dimension_semantics<parallel>], iteration_bounds = array<i64: 2>, scalar_prefetch = 0 : i64, scratch_operands = 2 : i64, tpu.core_type = #tpu.core_type<tc>, window_params = [{transform_indices = @transform_0, window_bounds = array<i64: 1, 16, 16, 4>}, {pipeline_mode = #tpu.pipeline_mode<synchronous>, transform_indices = @transform_1, window_bounds = array<i64: 9, 128, 128>}, {pipeline_mode = #tpu.pipeline_mode<synchronous>, transform_indices = @transform_2, window_bounds = array<i64: 1, 1, 128>}, {pipeline_mode = #tpu.pipeline_mode<synchronous>, transform_indices = @transform_3, window_bounds = array<i64: 9, 128, 128>}, {pipeline_mode = #tpu.pipeline_mode<synchronous>, transform_indices = @transform_4, window_bounds = array<i64: 1, 128>}, {transform_indices = @transform_5, window_bounds = array<i64: 1, 8, 8, 128>}]} {
    %cst = arith.constant 0.000000e+00 : bf16
    %0 = vector.broadcast %cst : bf16 to vector<1x32x128xbf16>
    %c0 = arith.constant 0 : index
    %c0_0 = arith.constant 0 : index
    %c0_1 = arith.constant 0 : index
    %1 = vector.load %arg7[%c0, %c0_0, %c0_1] : memref<18x32x128xbf16, #tpu.memory_space<vmem>>, vector<1x32x128xbf16>
    tpu.vector_store %arg7[%c0, %c0_0, %c0_1], %0 {strides = array<i32>} : memref<18x32x128xbf16, #tpu.memory_space<vmem>>, vector<1x32x128xbf16>,
    %cst_2 = arith.constant 0.000000e+00 : bf16
    %2 = vector.broadcast %cst_2 : bf16 to vector<1x32x128xbf16>
    %c17 = arith.constant 17 : index
    %c0_3 = arith.constant 0 : index
    %c0_4 = arith.constant 0 : index
    %3 = vector.load %arg7[%c17, %c0_3, %c0_4] : memref<18x32x128xbf16, #tpu.memory_space<vmem>>, vector<1x32x128xbf16>
    tpu.vector_store %arg7[%c17, %c0_3, %c0_4], %2 {strides = array<i32>} : memref<18x32x128xbf16, #tpu.memory_space<vmem>>, vector<1x32x128xbf16>,
    %cst_5 = arith.constant 0.000000e+00 : bf16
    %4 = vector.broadcast %cst_5 : bf16 to vector<16x8x128xbf16>
    %c1 = arith.constant 1 : index
    %c0_6 = arith.constant 0 : index
    %c0_7 = arith.constant 0 : index
    %5 = vector.load %arg7[%c1, %c0_6, %c0_7] : memref<18x32x128xbf16, #tpu.memory_space<vmem>>, vector<16x8x128xbf16>
    tpu.vector_store %arg7[%c1, %c0_6, %c0_7], %4 {strides = array<i32>} : memref<18x32x128xbf16, #tpu.memory_space<vmem>>, vector<16x8x128xbf16>,
    %cst_8 = arith.constant 0.000000e+00 : bf16
    %6 = vector.broadcast %cst_8 : bf16 to vector<16x8x128xbf16>
    %c1_9 = arith.constant 1 : index
    %c24 = arith.constant 24 : index
    %c0_10 = arith.constant 0 : index
    %7 = vector.load %arg7[%c1_9, %c24, %c0_10] : memref<18x32x128xbf16, #tpu.memory_space<vmem>>, vector<16x8x128xbf16>
    tpu.vector_store %arg7[%c1_9, %c24, %c0_10], %6 {strides = array<i32>} : memref<18x32x128xbf16, #tpu.memory_space<vmem>>, vector<16x8x128xbf16>,
    %cst_11 = arith.constant 0.000000e+00 : bf16
    %8 = vector.broadcast %cst_11 : bf16 to vector<1x32x128xbf16>
    %c0_12 = arith.constant 0 : index
    %c0_13 = arith.constant 0 : index
    %c0_14 = arith.constant 0 : index
    %9 = vector.load %arg8[%c0_12, %c0_13, %c0_14] : memref<18x32x128xbf16, #tpu.memory_space<vmem>>, vector<1x32x128xbf16>
    tpu.vector_store %arg8[%c0_12, %c0_13, %c0_14], %8 {strides = array<i32>} : memref<18x32x128xbf16, #tpu.memory_space<vmem>>, vector<1x32x128xbf16>,
    %cst_15 = arith.constant 0.000000e+00 : bf16
    %10 = vector.broadcast %cst_15 : bf16 to vector<1x32x128xbf16>
    %c17_16 = arith.constant 17 : index
    %c0_17 = arith.constant 0 : index
    %c0_18 = arith.constant 0 : index
    %11 = vector.load %arg8[%c17_16, %c0_17, %c0_18] : memref<18x32x128xbf16, #tpu.memory_space<vmem>>, vector<1x32x128xbf16>
    tpu.vector_store %arg8[%c17_16, %c0_17, %c0_18], %10 {strides = array<i32>} : memref<18x32x128xbf16, #tpu.memory_space<vmem>>, vector<1x32x128xbf16>,
    %cst_19 = arith.constant 0.000000e+00 : bf16
    %12 = vector.broadcast %cst_19 : bf16 to vector<16x8x128xbf16>
    %c1_20 = arith.constant 1 : index
    %c0_21 = arith.constant 0 : index
    %c0_22 = arith.constant 0 : index
    %13 = vector.load %arg8[%c1_20, %c0_21, %c0_22] : memref<18x32x128xbf16, #tpu.memory_space<vmem>>, vector<16x8x128xbf16>
    tpu.vector_store %arg8[%c1_20, %c0_21, %c0_22], %12 {strides = array<i32>} : memref<18x32x128xbf16, #tpu.memory_space<vmem>>, vector<16x8x128xbf16>,
    %cst_23 = arith.constant 0.000000e+00 : bf16
    %14 = vector.broadcast %cst_23 : bf16 to vector<16x8x128xbf16>
    %c1_24 = arith.constant 1 : index
    %c24_25 = arith.constant 24 : index
    %c0_26 = arith.constant 0 : index
    %15 = vector.load %arg8[%c1_24, %c24_25, %c0_26] : memref<18x32x128xbf16, #tpu.memory_space<vmem>>, vector<16x8x128xbf16>
    tpu.vector_store %arg8[%c1_24, %c24_25, %c0_26], %14 {strides = array<i32>} : memref<18x32x128xbf16, #tpu.memory_space<vmem>>, vector<16x8x128xbf16>,
    %c0_27 = arith.constant 0 : index
    %c0_28 = arith.constant 0 : index
    %c0_29 = arith.constant 0 : index
    %c0_30 = arith.constant 0 : index
    %16 = vector.load %arg1[%c0_27, %c0_28, %c0_29, %c0_30] : memref<1x16x16x4xf32, #tpu.memory_space<vmem>>, vector<1x16x16x4xf32>
    %17 = vector.shape_cast %16 : vector<1x16x16x4xf32> to vector<16x16x4xf32>
    %18 = arith.truncf %17 : vector<16x16x4xf32> to vector<16x16x4xbf16>
    %c1_31 = arith.constant 1 : index
    %c8 = arith.constant 8 : index
    %c0_32 = arith.constant 0 : index
    %19 = vector.load %arg7[%c1_31, %c8, %c0_32] : memref<18x32x128xbf16, #tpu.memory_space<vmem>>, vector<16x16x4xbf16>
    tpu.vector_store %arg7[%c1_31, %c8, %c0_32], %18 {strides = array<i32>} : memref<18x32x128xbf16, #tpu.memory_space<vmem>>, vector<16x16x4xbf16>,
    %cst_33 = arith.constant 0.000000e+00 : bf16
    %20 = vector.broadcast %cst_33 : bf16 to vector<16x16x124xbf16>
    %c1_34 = arith.constant 1 : index
    %c8_35 = arith.constant 8 : index
    %c4 = arith.constant 4 : index
    %21 = vector.load %arg7[%c1_34, %c8_35, %c4] : memref<18x32x128xbf16, #tpu.memory_space<vmem>>, vector<16x16x124xbf16>
    tpu.vector_store %arg7[%c1_34, %c8_35, %c4], %20 {strides = array<i32>} : memref<18x32x128xbf16, #tpu.memory_space<vmem>>, vector<16x16x124xbf16>,
    %c0_36 = arith.constant 0 : index
    %c0_37 = arith.constant 0 : index
    %c0_38 = arith.constant 0 : index
    %22 = vector.load %arg3[%c0_36, %c0_37, %c0_38] : memref<1x1x128xf32, #tpu.memory_space<vmem>>, vector<1x1x128xf32>
    %23 = vector.shape_cast %22 : vector<1x1x128xf32> to vector<1x128xf32>
    %cst_39 = arith.constant 0.000000e+00 : f32
    %24 = vector.broadcast %cst_39 : f32 to vector<256x128xf32>
    %c0_40 = arith.constant 0 : index
    %c7 = arith.constant 7 : index
    %c0_41 = arith.constant 0 : index
    %25 = vector.load %arg7[%c0_40, %c7, %c0_41] : memref<18x32x128xbf16, #tpu.memory_space<vmem>>, vector<16x16x128xbf16>
    %26 = vector.shape_cast %25 : vector<16x16x128xbf16> to vector<256x128xbf16>
    %c0_42 = arith.constant 0 : index
    %c0_43 = arith.constant 0 : index
    %c0_44 = arith.constant 0 : index
    %27 = vector.load %arg2[%c0_42, %c0_43, %c0_44] : memref<9x128x128xbf16, #tpu.memory_space<vmem>>, vector<1x128x128xbf16>
    %28 = vector.shape_cast %27 : vector<1x128x128xbf16> to vector<128x128xbf16>
    %cst_45 = arith.constant dense<0.000000e+00> : vector<256x128xf32>
    %29 = tpu.matmul %26, %28, %cst_45 {dimension_numbers = #tpu.dot_dimension_numbers<[1], [0], [0], [1], [0, 0, 1, 1], [], []>} : vector<256x128xbf16>, vector<128x128xbf16>, vector<256x128xf32> -> vector<256x128xf32>
    %30 = arith.addf %24, %29 : vector<256x128xf32>
    %c0_46 = arith.constant 0 : index
    %c8_47 = arith.constant 8 : index
    %c0_48 = arith.constant 0 : index
    %31 = vector.load %arg7[%c0_46, %c8_47, %c0_48] : memref<18x32x128xbf16, #tpu.memory_space<vmem>>, vector<16x16x128xbf16>
    %32 = vector.shape_cast %31 : vector<16x16x128xbf16> to vector<256x128xbf16>
    %c1_49 = arith.constant 1 : index
    %c0_50 = arith.constant 0 : index
    %c0_51 = arith.constant 0 : index
    %33 = vector.load %arg2[%c1_49, %c0_50, %c0_51] : memref<9x128x128xbf16, #tpu.memory_space<vmem>>, vector<1x128x128xbf16>
    %34 = vector.shape_cast %33 : vector<1x128x128xbf16> to vector<128x128xbf16>
    %cst_52 = arith.constant dense<0.000000e+00> : vector<256x128xf32>
    %35 = tpu.matmul %32, %34, %cst_52 {dimension_numbers = #tpu.dot_dimension_numbers<[1], [0], [0], [1], [0, 0, 1, 1], [], []>} : vector<256x128xbf16>, vector<128x128xbf16>, vector<256x128xf32> -> vector<256x128xf32>
    %36 = arith.addf %30, %35 : vector<256x128xf32>
    %c0_53 = arith.constant 0 : index
    %c9 = arith.constant 9 : index
    %c0_54 = arith.constant 0 : index
    %37 = vector.load %arg7[%c0_53, %c9, %c0_54] : memref<18x32x128xbf16, #tpu.memory_space<vmem>>, vector<16x16x128xbf16>
    %38 = vector.shape_cast %37 : vector<16x16x128xbf16> to vector<256x128xbf16>
    %c2 = arith.constant 2 : index
    %c0_55 = arith.constant 0 : index
    %c0_56 = arith.constant 0 : index
    %39 = vector.load %arg2[%c2, %c0_55, %c0_56] : memref<9x128x128xbf16, #tpu.memory_space<vmem>>, vector<1x128x128xbf16>
    %40 = vector.shape_cast %39 : vector<1x128x128xbf16> to vector<128x128xbf16>
    %cst_57 = arith.constant dense<0.000000e+00> : vector<256x128xf32>
    %41 = tpu.matmul %38, %40, %cst_57 {dimension_numbers = #tpu.dot_dimension_numbers<[1], [0], [0], [1], [0, 0, 1, 1], [], []>} : vector<256x128xbf16>, vector<128x128xbf16>, vector<256x128xf32> -> vector<256x128xf32>
    %42 = arith.addf %36, %41 : vector<256x128xf32>
    %c1_58 = arith.constant 1 : index
    %c7_59 = arith.constant 7 : index
    %c0_60 = arith.constant 0 : index
    %43 = vector.load %arg7[%c1_58, %c7_59, %c0_60] : memref<18x32x128xbf16, #tpu.memory_space<vmem>>, vector<16x16x128xbf16>
    %44 = vector.shape_cast %43 : vector<16x16x128xbf16> to vector<256x128xbf16>
    %c3 = arith.constant 3 : index
    %c0_61 = arith.constant 0 : index
    %c0_62 = arith.constant 0 : index
    %45 = vector.load %arg2[%c3, %c0_61, %c0_62] : memref<9x128x128xbf16, #tpu.memory_space<vmem>>, vector<1x128x128xbf16>
    %46 = vector.shape_cast %45 : vector<1x128x128xbf16> to vector<128x128xbf16>
    %cst_63 = arith.constant dense<0.000000e+00> : vector<256x128xf32>
    %47 = tpu.matmul %44, %46, %cst_63 {dimension_numbers = #tpu.dot_dimension_numbers<[1], [0], [0], [1], [0, 0, 1, 1], [], []>} : vector<256x128xbf16>, vector<128x128xbf16>, vector<256x128xf32> -> vector<256x128xf32>
    %48 = arith.addf %42, %47 : vector<256x128xf32>
    %c1_64 = arith.constant 1 : index
    %c8_65 = arith.constant 8 : index
    %c0_66 = arith.constant 0 : index
    %49 = vector.load %arg7[%c1_64, %c8_65, %c0_66] : memref<18x32x128xbf16, #tpu.memory_space<vmem>>, vector<16x16x128xbf16>
    %50 = vector.shape_cast %49 : vector<16x16x128xbf16> to vector<256x128xbf16>
    %c4_67 = arith.constant 4 : index
    %c0_68 = arith.constant 0 : index
    %c0_69 = arith.constant 0 : index
    %51 = vector.load %arg2[%c4_67, %c0_68, %c0_69] : memref<9x128x128xbf16, #tpu.memory_space<vmem>>, vector<1x128x128xbf16>
    %52 = vector.shape_cast %51 : vector<1x128x128xbf16> to vector<128x128xbf16>
    %cst_70 = arith.constant dense<0.000000e+00> : vector<256x128xf32>
    %53 = tpu.matmul %50, %52, %cst_70 {dimension_numbers = #tpu.dot_dimension_numbers<[1], [0], [0], [1], [0, 0, 1, 1], [], []>} : vector<256x128xbf16>, vector<128x128xbf16>, vector<256x128xf32> -> vector<256x128xf32>
    %54 = arith.addf %48, %53 : vector<256x128xf32>
    %c1_71 = arith.constant 1 : index
    %c9_72 = arith.constant 9 : index
    %c0_73 = arith.constant 0 : index
    %55 = vector.load %arg7[%c1_71, %c9_72, %c0_73] : memref<18x32x128xbf16, #tpu.memory_space<vmem>>, vector<16x16x128xbf16>
    %56 = vector.shape_cast %55 : vector<16x16x128xbf16> to vector<256x128xbf16>
    %c5 = arith.constant 5 : index
    %c0_74 = arith.constant 0 : index
    %c0_75 = arith.constant 0 : index
    %57 = vector.load %arg2[%c5, %c0_74, %c0_75] : memref<9x128x128xbf16, #tpu.memory_space<vmem>>, vector<1x128x128xbf16>
    %58 = vector.shape_cast %57 : vector<1x128x128xbf16> to vector<128x128xbf16>
    %cst_76 = arith.constant dense<0.000000e+00> : vector<256x128xf32>
    %59 = tpu.matmul %56, %58, %cst_76 {dimension_numbers = #tpu.dot_dimension_numbers<[1], [0], [0], [1], [0, 0, 1, 1], [], []>} : vector<256x128xbf16>, vector<128x128xbf16>, vector<256x128xf32> -> vector<256x128xf32>
    %60 = arith.addf %54, %59 : vector<256x128xf32>
    %c2_77 = arith.constant 2 : index
    %c7_78 = arith.constant 7 : index
    %c0_79 = arith.constant 0 : index
    %61 = vector.load %arg7[%c2_77, %c7_78, %c0_79] : memref<18x32x128xbf16, #tpu.memory_space<vmem>>, vector<16x16x128xbf16>
    %62 = vector.shape_cast %61 : vector<16x16x128xbf16> to vector<256x128xbf16>
    %c6 = arith.constant 6 : index
    %c0_80 = arith.constant 0 : index
    %c0_81 = arith.constant 0 : index
    %63 = vector.load %arg2[%c6, %c0_80, %c0_81] : memref<9x128x128xbf16, #tpu.memory_space<vmem>>, vector<1x128x128xbf16>
    %64 = vector.shape_cast %63 : vector<1x128x128xbf16> to vector<128x128xbf16>
    %cst_82 = arith.constant dense<0.000000e+00> : vector<256x128xf32>
    %65 = tpu.matmul %62, %64, %cst_82 {dimension_numbers = #tpu.dot_dimension_numbers<[1], [0], [0], [1], [0, 0, 1, 1], [], []>} : vector<256x128xbf16>, vector<128x128xbf16>, vector<256x128xf32> -> vector<256x128xf32>
    %66 = arith.addf %60, %65 : vector<256x128xf32>
    %c2_83 = arith.constant 2 : index
    %c8_84 = arith.constant 8 : index
    %c0_85 = arith.constant 0 : index
    %67 = vector.load %arg7[%c2_83, %c8_84, %c0_85] : memref<18x32x128xbf16, #tpu.memory_space<vmem>>, vector<16x16x128xbf16>
    %68 = vector.shape_cast %67 : vector<16x16x128xbf16> to vector<256x128xbf16>
    %c7_86 = arith.constant 7 : index
    %c0_87 = arith.constant 0 : index
    %c0_88 = arith.constant 0 : index
    %69 = vector.load %arg2[%c7_86, %c0_87, %c0_88] : memref<9x128x128xbf16, #tpu.memory_space<vmem>>, vector<1x128x128xbf16>
    %70 = vector.shape_cast %69 : vector<1x128x128xbf16> to vector<128x128xbf16>
    %cst_89 = arith.constant dense<0.000000e+00> : vector<256x128xf32>
    %71 = tpu.matmul %68, %70, %cst_89 {dimension_numbers = #tpu.dot_dimension_numbers<[1], [0], [0], [1], [0, 0, 1, 1], [], []>} : vector<256x128xbf16>, vector<128x128xbf16>, vector<256x128xf32> -> vector<256x128xf32>
    %72 = arith.addf %66, %71 : vector<256x128xf32>
    %c2_90 = arith.constant 2 : index
    %c9_91 = arith.constant 9 : index
    %c0_92 = arith.constant 0 : index
    %73 = vector.load %arg7[%c2_90, %c9_91, %c0_92] : memref<18x32x128xbf16, #tpu.memory_space<vmem>>, vector<16x16x128xbf16>
    %74 = vector.shape_cast %73 : vector<16x16x128xbf16> to vector<256x128xbf16>
    %c8_93 = arith.constant 8 : index
    %c0_94 = arith.constant 0 : index
    %c0_95 = arith.constant 0 : index
    %75 = vector.load %arg2[%c8_93, %c0_94, %c0_95] : memref<9x128x128xbf16, #tpu.memory_space<vmem>>, vector<1x128x128xbf16>
    %76 = vector.shape_cast %75 : vector<1x128x128xbf16> to vector<128x128xbf16>
    %cst_96 = arith.constant dense<0.000000e+00> : vector<256x128xf32>
    %77 = tpu.matmul %74, %76, %cst_96 {dimension_numbers = #tpu.dot_dimension_numbers<[1], [0], [0], [1], [0, 0, 1, 1], [], []>} : vector<256x128xbf16>, vector<128x128xbf16>, vector<256x128xf32> -> vector<256x128xf32>
    %78 = arith.addf %72, %77 : vector<256x128xf32>
    %79 = vector.broadcast %23 : vector<1x128xf32> to vector<256x128xf32>
    %80 = arith.addf %78, %79 : vector<256x128xf32>
    %cst_97 = arith.constant 0.000000e+00 : f32
    %81 = vector.broadcast %cst_97 : f32 to vector<256x128xf32>
    %82 = arith.maximumf %80, %81 : vector<256x128xf32>
    %83 = arith.truncf %82 : vector<256x128xf32> to vector<256x128xbf16>
    %84 = vector.shape_cast %83 : vector<256x128xbf16> to vector<16x16x128xbf16>
    %c1_98 = arith.constant 1 : index
    %c8_99 = arith.constant 8 : index
    %c0_100 = arith.constant 0 : index
    %85 = vector.load %arg8[%c1_98, %c8_99, %c0_100] : memref<18x32x128xbf16, #tpu.memory_space<vmem>>, vector<16x16x128xbf16>
    tpu.vector_store %arg8[%c1_98, %c8_99, %c0_100], %84 {strides = array<i32>} : memref<18x32x128xbf16, #tpu.memory_space<vmem>>, vector<16x16x128xbf16>,
    %c0_101 = arith.constant 0 : index
    %c0_102 = arith.constant 0 : index
    %86 = vector.load %arg5[%c0_101, %c0_102] : memref<1x128xf32, #tpu.memory_space<vmem>>, vector<1x128xf32>
    %cst_103 = arith.constant 0.000000e+00 : f32
    %87 = vector.broadcast %cst_103 : f32 to vector<256x128xf32>
    %c0_104 = arith.constant 0 : index
    %c7_105 = arith.constant 7 : index
    %c0_106 = arith.constant 0 : index
    %88 = vector.load %arg8[%c0_104, %c7_105, %c0_106] : memref<18x32x128xbf16, #tpu.memory_space<vmem>>, vector<16x16x128xbf16>
    %89 = vector.shape_cast %88 : vector<16x16x128xbf16> to vector<256x128xbf16>
    %c0_107 = arith.constant 0 : index
    %c0_108 = arith.constant 0 : index
    %c0_109 = arith.constant 0 : index
    %90 = vector.load %arg4[%c0_107, %c0_108, %c0_109] : memref<9x128x128xbf16, #tpu.memory_space<vmem>>, vector<1x128x128xbf16>
    %91 = vector.shape_cast %90 : vector<1x128x128xbf16> to vector<128x128xbf16>
    %cst_110 = arith.constant dense<0.000000e+00> : vector<256x128xf32>
    %92 = tpu.matmul %89, %91, %cst_110 {dimension_numbers = #tpu.dot_dimension_numbers<[1], [0], [0], [1], [0, 0, 1, 1], [], []>} : vector<256x128xbf16>, vector<128x128xbf16>, vector<256x128xf32> -> vector<256x128xf32>
    %93 = arith.addf %87, %92 : vector<256x128xf32>
    %c0_111 = arith.constant 0 : index
    %c8_112 = arith.constant 8 : index
    %c0_113 = arith.constant 0 : index
    %94 = vector.load %arg8[%c0_111, %c8_112, %c0_113] : memref<18x32x128xbf16, #tpu.memory_space<vmem>>, vector<16x16x128xbf16>
    %95 = vector.shape_cast %94 : vector<16x16x128xbf16> to vector<256x128xbf16>
    %c1_114 = arith.constant 1 : index
    %c0_115 = arith.constant 0 : index
    %c0_116 = arith.constant 0 : index
    %96 = vector.load %arg4[%c1_114, %c0_115, %c0_116] : memref<9x128x128xbf16, #tpu.memory_space<vmem>>, vector<1x128x128xbf16>
    %97 = vector.shape_cast %96 : vector<1x128x128xbf16> to vector<128x128xbf16>
    %cst_117 = arith.constant dense<0.000000e+00> : vector<256x128xf32>
    %98 = tpu.matmul %95, %97, %cst_117 {dimension_numbers = #tpu.dot_dimension_numbers<[1], [0], [0], [1], [0, 0, 1, 1], [], []>} : vector<256x128xbf16>, vector<128x128xbf16>, vector<256x128xf32> -> vector<256x128xf32>
    %99 = arith.addf %93, %98 : vector<256x128xf32>
    %c0_118 = arith.constant 0 : index
    %c9_119 = arith.constant 9 : index
    %c0_120 = arith.constant 0 : index
    %100 = vector.load %arg8[%c0_118, %c9_119, %c0_120] : memref<18x32x128xbf16, #tpu.memory_space<vmem>>, vector<16x16x128xbf16>
    %101 = vector.shape_cast %100 : vector<16x16x128xbf16> to vector<256x128xbf16>
    %c2_121 = arith.constant 2 : index
    %c0_122 = arith.constant 0 : index
    %c0_123 = arith.constant 0 : index
    %102 = vector.load %arg4[%c2_121, %c0_122, %c0_123] : memref<9x128x128xbf16, #tpu.memory_space<vmem>>, vector<1x128x128xbf16>
    %103 = vector.shape_cast %102 : vector<1x128x128xbf16> to vector<128x128xbf16>
    %cst_124 = arith.constant dense<0.000000e+00> : vector<256x128xf32>
    %104 = tpu.matmul %101, %103, %cst_124 {dimension_numbers = #tpu.dot_dimension_numbers<[1], [0], [0], [1], [0, 0, 1, 1], [], []>} : vector<256x128xbf16>, vector<128x128xbf16>, vector<256x128xf32> -> vector<256x128xf32>
    %105 = arith.addf %99, %104 : vector<256x128xf32>
    %c1_125 = arith.constant 1 : index
    %c7_126 = arith.constant 7 : index
    %c0_127 = arith.constant 0 : index
    %106 = vector.load %arg8[%c1_125, %c7_126, %c0_127] : memref<18x32x128xbf16, #tpu.memory_space<vmem>>, vector<16x16x128xbf16>
    %107 = vector.shape_cast %106 : vector<16x16x128xbf16> to vector<256x128xbf16>
    %c3_128 = arith.constant 3 : index
    %c0_129 = arith.constant 0 : index
    %c0_130 = arith.constant 0 : index
    %108 = vector.load %arg4[%c3_128, %c0_129, %c0_130] : memref<9x128x128xbf16, #tpu.memory_space<vmem>>, vector<1x128x128xbf16>
    %109 = vector.shape_cast %108 : vector<1x128x128xbf16> to vector<128x128xbf16>
    %cst_131 = arith.constant dense<0.000000e+00> : vector<256x128xf32>
    %110 = tpu.matmul %107, %109, %cst_131 {dimension_numbers = #tpu.dot_dimension_numbers<[1], [0], [0], [1], [0, 0, 1, 1], [], []>} : vector<256x128xbf16>, vector<128x128xbf16>, vector<256x128xf32> -> vector<256x128xf32>
    %111 = arith.addf %105, %110 : vector<256x128xf32>
    %c1_132 = arith.constant 1 : index
    %c8_133 = arith.constant 8 : index
    %c0_134 = arith.constant 0 : index
    %112 = vector.load %arg8[%c1_132, %c8_133, %c0_134] : memref<18x32x128xbf16, #tpu.memory_space<vmem>>, vector<16x16x128xbf16>
    %113 = vector.shape_cast %112 : vector<16x16x128xbf16> to vector<256x128xbf16>
    %c4_135 = arith.constant 4 : index
    %c0_136 = arith.constant 0 : index
    %c0_137 = arith.constant 0 : index
    %114 = vector.load %arg4[%c4_135, %c0_136, %c0_137] : memref<9x128x128xbf16, #tpu.memory_space<vmem>>, vector<1x128x128xbf16>
    %115 = vector.shape_cast %114 : vector<1x128x128xbf16> to vector<128x128xbf16>
    %cst_138 = arith.constant dense<0.000000e+00> : vector<256x128xf32>
    %116 = tpu.matmul %113, %115, %cst_138 {dimension_numbers = #tpu.dot_dimension_numbers<[1], [0], [0], [1], [0, 0, 1, 1], [], []>} : vector<256x128xbf16>, vector<128x128xbf16>, vector<256x128xf32> -> vector<256x128xf32>
    %117 = arith.addf %111, %116 : vector<256x128xf32>
    %c1_139 = arith.constant 1 : index
    %c9_140 = arith.constant 9 : index
    %c0_141 = arith.constant 0 : index
    %118 = vector.load %arg8[%c1_139, %c9_140, %c0_141] : memref<18x32x128xbf16, #tpu.memory_space<vmem>>, vector<16x16x128xbf16>
    %119 = vector.shape_cast %118 : vector<16x16x128xbf16> to vector<256x128xbf16>
    %c5_142 = arith.constant 5 : index
    %c0_143 = arith.constant 0 : index
    %c0_144 = arith.constant 0 : index
    %120 = vector.load %arg4[%c5_142, %c0_143, %c0_144] : memref<9x128x128xbf16, #tpu.memory_space<vmem>>, vector<1x128x128xbf16>
    %121 = vector.shape_cast %120 : vector<1x128x128xbf16> to vector<128x128xbf16>
    %cst_145 = arith.constant dense<0.000000e+00> : vector<256x128xf32>
    %122 = tpu.matmul %119, %121, %cst_145 {dimension_numbers = #tpu.dot_dimension_numbers<[1], [0], [0], [1], [0, 0, 1, 1], [], []>} : vector<256x128xbf16>, vector<128x128xbf16>, vector<256x128xf32> -> vector<256x128xf32>
    %123 = arith.addf %117, %122 : vector<256x128xf32>
    %c2_146 = arith.constant 2 : index
    %c7_147 = arith.constant 7 : index
    %c0_148 = arith.constant 0 : index
    %124 = vector.load %arg8[%c2_146, %c7_147, %c0_148] : memref<18x32x128xbf16, #tpu.memory_space<vmem>>, vector<16x16x128xbf16>
    %125 = vector.shape_cast %124 : vector<16x16x128xbf16> to vector<256x128xbf16>
    %c6_149 = arith.constant 6 : index
    %c0_150 = arith.constant 0 : index
    %c0_151 = arith.constant 0 : index
    %126 = vector.load %arg4[%c6_149, %c0_150, %c0_151] : memref<9x128x128xbf16, #tpu.memory_space<vmem>>, vector<1x128x128xbf16>
    %127 = vector.shape_cast %126 : vector<1x128x128xbf16> to vector<128x128xbf16>
    %cst_152 = arith.constant dense<0.000000e+00> : vector<256x128xf32>
    %128 = tpu.matmul %125, %127, %cst_152 {dimension_numbers = #tpu.dot_dimension_numbers<[1], [0], [0], [1], [0, 0, 1, 1], [], []>} : vector<256x128xbf16>, vector<128x128xbf16>, vector<256x128xf32> -> vector<256x128xf32>
    %129 = arith.addf %123, %128 : vector<256x128xf32>
    %c2_153 = arith.constant 2 : index
    %c8_154 = arith.constant 8 : index
    %c0_155 = arith.constant 0 : index
    %130 = vector.load %arg8[%c2_153, %c8_154, %c0_155] : memref<18x32x128xbf16, #tpu.memory_space<vmem>>, vector<16x16x128xbf16>
    %131 = vector.shape_cast %130 : vector<16x16x128xbf16> to vector<256x128xbf16>
    %c7_156 = arith.constant 7 : index
    %c0_157 = arith.constant 0 : index
    %c0_158 = arith.constant 0 : index
    %132 = vector.load %arg4[%c7_156, %c0_157, %c0_158] : memref<9x128x128xbf16, #tpu.memory_space<vmem>>, vector<1x128x128xbf16>
    %133 = vector.shape_cast %132 : vector<1x128x128xbf16> to vector<128x128xbf16>
    %cst_159 = arith.constant dense<0.000000e+00> : vector<256x128xf32>
    %134 = tpu.matmul %131, %133, %cst_159 {dimension_numbers = #tpu.dot_dimension_numbers<[1], [0], [0], [1], [0, 0, 1, 1], [], []>} : vector<256x128xbf16>, vector<128x128xbf16>, vector<256x128xf32> -> vector<256x128xf32>
    %135 = arith.addf %129, %134 : vector<256x128xf32>
    %c2_160 = arith.constant 2 : index
    %c9_161 = arith.constant 9 : index
    %c0_162 = arith.constant 0 : index
    %136 = vector.load %arg8[%c2_160, %c9_161, %c0_162] : memref<18x32x128xbf16, #tpu.memory_space<vmem>>, vector<16x16x128xbf16>
    %137 = vector.shape_cast %136 : vector<16x16x128xbf16> to vector<256x128xbf16>
    %c8_163 = arith.constant 8 : index
    %c0_164 = arith.constant 0 : index
    %c0_165 = arith.constant 0 : index
    %138 = vector.load %arg4[%c8_163, %c0_164, %c0_165] : memref<9x128x128xbf16, #tpu.memory_space<vmem>>, vector<1x128x128xbf16>
    %139 = vector.shape_cast %138 : vector<1x128x128xbf16> to vector<128x128xbf16>
    %cst_166 = arith.constant dense<0.000000e+00> : vector<256x128xf32>
    %140 = tpu.matmul %137, %139, %cst_166 {dimension_numbers = #tpu.dot_dimension_numbers<[1], [0], [0], [1], [0, 0, 1, 1], [], []>} : vector<256x128xbf16>, vector<128x128xbf16>, vector<256x128xf32> -> vector<256x128xf32>
    %141 = arith.addf %135, %140 : vector<256x128xf32>
    %142 = vector.broadcast %86 : vector<1x128xf32> to vector<256x128xf32>
    %143 = arith.addf %141, %142 : vector<256x128xf32>
    %cst_167 = arith.constant 0.000000e+00 : f32
    %144 = vector.broadcast %cst_167 : f32 to vector<256x128xf32>
    %145 = arith.maximumf %143, %144 : vector<256x128xf32>
    %146 = vector.shape_cast %145 : vector<256x128xf32> to vector<8x2x16x128xf32>
    %147 = vector.extract_strided_slice %146 {offsets = [0, 0, 0, 0], sizes = [8, 1, 16, 128], strides = [1, 1, 1, 1]} : vector<8x2x16x128xf32> to vector<8x1x16x128xf32>
    %148 = vector.shape_cast %147 : vector<8x1x16x128xf32> to vector<8x16x128xf32>
    %149 = vector.extract_strided_slice %146 {offsets = [0, 1, 0, 0], sizes = [8, 1, 16, 128], strides = [1, 1, 1, 1]} : vector<8x2x16x128xf32> to vector<8x1x16x128xf32>
    %150 = vector.shape_cast %149 : vector<8x1x16x128xf32> to vector<8x16x128xf32>
    %151 = arith.addf %148, %150 : vector<8x16x128xf32>
    %152 = vector.shape_cast %151 : vector<8x16x128xf32> to vector<8x8x2x128xf32>
    %cst_168 = arith.constant dense<0.000000e+00> : vector<8x8x128xf32>
    %153 = vector.multi_reduction <add>, %152, %cst_168 [2] : vector<8x8x2x128xf32> to vector<8x8x128xf32>
    %cst_169 = arith.constant 2.500000e-01 : f32
    %154 = vector.broadcast %cst_169 : f32 to vector<8x8x128xf32>
    %155 = arith.mulf %153, %154 : vector<8x8x128xf32>
    %c0_170 = arith.constant 0 : index
    %c0_171 = arith.constant 0 : index
    %c0_172 = arith.constant 0 : index
    %c0_173 = arith.constant 0 : index
    %156 = vector.load %arg6[%c0_170, %c0_171, %c0_172, %c0_173] : memref<1x8x8x128xf32, #tpu.memory_space<vmem>>, vector<1x8x8x128xf32>
    %157 = vector.shape_cast %156 : vector<1x8x8x128xf32> to vector<8x8x128xf32>
    %158 = vector.shape_cast %155 : vector<8x8x128xf32> to vector<1x8x8x128xf32>
    tpu.vector_store %arg6[%c0_170, %c0_171, %c0_172, %c0_173], %158 {strides = array<i32>} : memref<1x8x8x128xf32, #tpu.memory_space<vmem>>, vector<1x8x8x128xf32>,
    return
  }
  func.func @transform_0(%arg0: i32) -> (i32, i32, i32, i32) {
    %c0_i32 = arith.constant 0 : i32
    %c0_i32_0 = arith.constant 0 : i32
    %c0_i32_1 = arith.constant 0 : i32
    %c0_i32_2 = arith.constant 0 : i32
    return %arg0, %c0_i32, %c0_i32_0, %c0_i32_1 : i32, i32, i32, i32
  }
  func.func @transform_1(%arg0: i32) -> (i32, i32, i32) {
    %c0_i32 = arith.constant 0 : i32
    %c0_i32_0 = arith.constant 0 : i32
    %c0_i32_1 = arith.constant 0 : i32
    %c0_i32_2 = arith.constant 0 : i32
    return %c0_i32, %c0_i32_0, %c0_i32_1 : i32, i32, i32
  }
  func.func @transform_2(%arg0: i32) -> (i32, i32, i32) {
    %c0_i32 = arith.constant 0 : i32
    %c0_i32_0 = arith.constant 0 : i32
    %c0_i32_1 = arith.constant 0 : i32
    %c0_i32_2 = arith.constant 0 : i32
    return %c0_i32, %c0_i32_0, %c0_i32_1 : i32, i32, i32
  }
  func.func @transform_3(%arg0: i32) -> (i32, i32, i32) {
    %c0_i32 = arith.constant 0 : i32
    %c0_i32_0 = arith.constant 0 : i32
    %c0_i32_1 = arith.constant 0 : i32
    %c0_i32_2 = arith.constant 0 : i32
    return %c0_i32, %c0_i32_0, %c0_i32_1 : i32, i32, i32
  }
  func.func @transform_4(%arg0: i32) -> (i32, i32) {
    %c0_i32 = arith.constant 0 : i32
    %c0_i32_0 = arith.constant 0 : i32
    %c0_i32_1 = arith.constant 0 : i32
    return %c0_i32, %c0_i32_0 : i32, i32
  }
  func.func @transform_5(%arg0: i32) -> (i32, i32, i32, i32) {
    %c0_i32 = arith.constant 0 : i32
    %c0_i32_0 = arith.constant 0 : i32
    %c0_i32_1 = arith.constant 0 : i32
    %c0_i32_2 = arith.constant 0 : i32
    return %arg0, %c0_i32, %c0_i32_0, %c0_i32_1 : i32, i32, i32, i32
  }
}

</mosaic_0001>

<llo_original>
// kernel: _lambda_.1
$region0: #{_lambda_.1}
  #allocation0 [shape = 'u32[]', space=smem, size = 0x4, offset = 0x4, fixed_abs, tag = 'smem constant byte address 0x4 - core index']
  #allocation1 [shape = 'u32[144,128]{1,0:T(1,128)}', space=vmem, size = 0x12000, scoped, tag = 'internal scratch']
  #allocation2 [shape = 'bf16[18,32,128]{2,1,0:T(16,128)(2,1)}', space=vmem, size = 0x24000, scoped, tag = 'scratch operand']
  #allocation3 [shape = 'bf16[18,32,128]{2,1,0:T(16,128)(2,1)}', space=vmem, size = 0x24000, scoped, tag = 'scratch operand']
  %s0 = inlined_call_operand.vmem [shape: f32[2,16,16,4], index: 0, kind: input, shape index: {}]
  %s1 = inlined_call_operand.hbm [shape: bf16[9,128,128], index: 1, kind: input, shape index: {}]
  %s2 = inlined_call_operand.vmem [shape: f32[1,1,128], index: 2, kind: input, shape index: {}]
  %s3 = inlined_call_operand.vmem [shape: bf16[9,128,128], index: 3, kind: input, shape index: {}]
  %s4 = inlined_call_operand.vmem [shape: f32[1,128], index: 4, kind: input, shape index: {}]
  %s5 = inlined_call_operand.vmem [shape: f32[2,8,8,128], index: 5, kind: output, shape index: {}]
  %s6 = sld [smem:[#allocation0]]
  $region57: #{_lambda_.1} parent=0
    _
  %s8 = ssub.s32 1, %s6
  %s9 = scalar_select 0, %s8, %s6
  $region1: #{_lambda_.1} parent=0
    #allocation4 [shape = 'u8[294912]{0}', space=vmem, size = 0x48000, scoped, tag = 'input window, operand 1, single buffered']
    #allocation5 [shape = 's32[2]{0}', space=sflag, size = 0x8, scoped, tag = 'scoped memory for _lambda_.1']
    %10 = vsyncpa [#allocation5], 0
    loop: start=0, step=1, limit=4
    $region2: #{_lambda_.1} parent=1 // loop_pre_header
      _
    $region3: #{_lambda_.1} parent=1 // loop_header
      %s12 = sphi 0, %s16
      %p13 = scmp.ge.s32.totalorder %s12, 4
      %s22 = sphi 0, %s24
      %s25 = sphi 0, %s22
      %s26 = sphi 0, %s25
      %s42 = sphi 0, %s26
      %s46 = sphi 0, %s46
      %s48 = sphi 0, %s46
      %s49 = sphi 0, %s48
      %s63 = sphi 0, %s49
      %s67 = sphi 0, %s67
      %s69 = sphi 0, %s67
      %s70 = sphi 0, %s69
      %s84 = sphi 0, %s70
      %s88 = sphi 0, %s88
      %s90 = sphi 0, %s88
      %s91 = sphi 0, %s90
      %s105 = sphi 0, %s91
      %s109 = sphi 0, %s109
      %s111 = sphi 0, %s109
      %s112 = sphi 0, %s111
      %s126 = sphi 0, %s112
      %s132 = sphi 0, %s134
      %s135 = sphi 0, %s132
      %s136 = sphi 0, %s135
      %s152 = sphi 0, %s136
    $region4: #{_lambda_.1} parent=1 // loop_header_branch
      %15 = sbr.rel (%p13) target = $region8
    $region5: #{_lambda_.1} parent=1 // loop_body
      %s17 = ssub.s32 %s12, 1
      %s18 = ssub.s32 %s12, 2
      %s19 = sadd.s32 %s12, 1
      %s20 = ssub.s32 %s12, %s19
      %p21 = scmp.eq.s32.totalorder %s20, 0
      %s23 = sadd.s32 %s22, 1
      %s24 = scalar_select %p21, %s22, %s23
      %p27 = pneg %p21
      %p28 = scmp.eq.s32.totalorder %s12, 1
      %p29 = por %p27, %p28
      %p30 = scmp.ne.s32.totalorder %s22, %s25
      %p31 = scmp.eq.s32.totalorder %s12, 0
      %p32 = por %p30, %p31
      %p33 = scmp.ne.s32.totalorder %s22, %s25
      %p34 = scmp.eq.s32.totalorder %s17, 1
      %p35 = por %p33, %p34
      %p36 = scmp.ne.s32.totalorder %s25, %s26
      %p37 = scmp.eq.s32.totalorder %s17, 0
      %p38 = por %p36, %p37
      %p39 = scmp.ne.s32.totalorder %s25, %s26
      %p40 = scmp.eq.s32.totalorder %s18, 1
      %p41 = por %p39, %p40
      %p43 = scmp.ne.s32.totalorder %s26, %s42
      %p44 = scmp.eq.s32.totalorder %s18, 0
      %p45 = por %p43, %p44
      %s47 = sadd.s32 %s46, 1
      %p50 = scmp.eq.s32.totalorder %s12, 1
      %p51 = scmp.ne.s32.totalorder %s46, %s48
      %p52 = scmp.eq.s32.totalorder %s12, 0
      %p53 = por %p51, %p52
      %p54 = scmp.ne.s32.totalorder %s46, %s48
      %p55 = scmp.eq.s32.totalorder %s17, 1
      %p56 = por %p54, %p55
      %p57 = scmp.ne.s32.totalorder %s48, %s49
      %p58 = scmp.eq.s32.totalorder %s17, 0
      %p59 = por %p57, %p58
      %p60 = scmp.ne.s32.totalorder %s48, %s49
      %p61 = scmp.eq.s32.totalorder %s18, 1
      %p62 = por %p60, %p61
      %p64 = scmp.ne.s32.totalorder %s49, %s63
      %p65 = scmp.eq.s32.totalorder %s18, 0
      %p66 = por %p64, %p65
      %s68 = sadd.s32 %s67, 1
      %p71 = scmp.eq.s32.totalorder %s12, 1
      %p72 = scmp.ne.s32.totalorder %s67, %s69
      %p73 = scmp.eq.s32.totalorder %s12, 0
      %p74 = por %p72, %p73
      %p75 = scmp.ne.s32.totalorder %s67, %s69
      %p76 = scmp.eq.s32.totalorder %s17, 1
      %p77 = por %p75, %p76
      %p78 = scmp.ne.s32.totalorder %s69, %s70
      %p79 = scmp.eq.s32.totalorder %s17, 0
      %p80 = por %p78, %p79
      %p81 = scmp.ne.s32.totalorder %s69, %s70
      %p82 = scmp.eq.s32.totalorder %s18, 1
      %p83 = por %p81, %p82
      %p85 = scmp.ne.s32.totalorder %s70, %s84
      %p86 = scmp.eq.s32.totalorder %s18, 0
      %p87 = por %p85, %p86
      %s89 = sadd.s32 %s88, 1
      %p92 = scmp.eq.s32.totalorder %s12, 1
      %p93 = scmp.ne.s32.totalorder %s88, %s90
      %p94 = scmp.eq.s32.totalorder %s12, 0
      %p95 = por %p93, %p94
      %p96 = scmp.ne.s32.totalorder %s88, %s90
      %p97 = scmp.eq.s32.totalorder %s17, 1
      %p98 = por %p96, %p97
      %p99 = scmp.ne.s32.totalorder %s90, %s91
      %p100 = scmp.eq.s32.totalorder %s17, 0
      %p101 = por %p99, %p100
      %p102 = scmp.ne.s32.totalorder %s90, %s91
      %p103 = scmp.eq.s32.totalorder %s18, 1
      %p104 = por %p102, %p103
      %p106 = scmp.ne.s32.totalorder %s91, %s105
      %p107 = scmp.eq.s32.totalorder %s18, 0
      %p108 = por %p106, %p107
      %s110 = sadd.s32 %s109, 1
      %p113 = scmp.eq.s32.totalorder %s12, 1
      %p114 = scmp.ne.s32.totalorder %s109, %s111
      %p115 = scmp.eq.s32.totalorder %s12, 0
      %p116 = por %p114, %p115
      %p117 = scmp.ne.s32.totalorder %s109, %s111
      %p118 = scmp.eq.s32.totalorder %s17, 1
      %p119 = por %p117, %p118
      %p120 = scmp.ne.s32.totalorder %s111, %s112
      %p121 = scmp.eq.s32.totalorder %s17, 0
      %p122 = por %p120, %p121
      %p123 = scmp.ne.s32.totalorder %s111, %s112
      %p124 = scmp.eq.s32.totalorder %s18, 1
      %p125 = por %p123, %p124
      %p127 = scmp.ne.s32.totalorder %s112, %s126
      %p128 = scmp.eq.s32.totalorder %s18, 0
      %p129 = por %p127, %p128
      %s130 = ssub.s32 %s12, %s19
      %p131 = scmp.eq.s32.totalorder %s130, 0
      %s133 = sadd.s32 %s132, 1
      %s134 = scalar_select %p131, %s132, %s133
      %p137 = pneg %p131
      %p138 = scmp.eq.s32.totalorder %s12, 1
      %p139 = por %p137, %p138
      %p140 = scmp.ne.s32.totalorder %s132, %s135
      %p141 = scmp.eq.s32.totalorder %s12, 0
      %p142 = por %p140, %p141
      %p143 = scmp.ne.s32.totalorder %s132, %s135
      %p144 = scmp.eq.s32.totalorder %s17, 1
      %p145 = por %p143, %p144
      %p146 = scmp.ne.s32.totalorder %s135, %s136
      %p147 = scmp.eq.s32.totalorder %s17, 0
      %p148 = por %p146, %p147
      %p149 = scmp.ne.s32.totalorder %s135, %s136
      %p150 = scmp.eq.s32.totalorder %s18, 1
      %p151 = por %p149, %p150
      %p153 = scmp.ne.s32.totalorder %s136, %s152
      %p154 = scmp.eq.s32.totalorder %s18, 0
      %p155 = por %p153, %p154
      %p156 = scmp.le.s32.totalorder 1, %s12
      %p157 = scmp.lt.s32.totalorder %s12, 3
      %p158 = pnand %p156, %p157
      %p159 = pneg %p158
      // Predicated region
      $region9: #{_lambda_.1} parent=5 // pred_check
        _
      $region10: #{_lambda_.1} parent=5 // pred_check_branch
        %161 = sbr.rel (%p158) target = $region12
      $region11: #{_lambda_.1} parent=5 // pred_region
        %s162 = ssub.s32 %s12, 1
        // Predicated region
        $region13: #{_lambda_.1} parent=11 // pred_check
          %p163 = pneg %p59
        $region14: #{_lambda_.1} parent=11 // pred_check_branch
          %165 = sbr.rel (%p163) target = $region16
        $region15: #{_lambda_.1} parent=11 // pred_region
          %s167 = ssub.s32 9216, 9216
          %168 = vsyncadd [#allocation5], %s167
          %s169 = sshll.u32 [#allocation4], 4
          %s170 = int_to_ptr.vmem [resolvable:$true] %s169
          %175 = dma.hbm_to_vmem [thread:$0]  %s1, 9216, %s170, [#allocation5], 64, 64, 4
        $region16: #{_lambda_.1} parent=11 // pred_fallthru
          _
        // Predicated region
        $region17: #{_lambda_.1} parent=11 // pred_check
          %p176 = pneg %p80
        $region18: #{_lambda_.1} parent=11 // pred_check_branch
          %178 = sbr.rel (%p176) target = $region20
        $region19: #{_lambda_.1} parent=11 // pred_region
          _
        $region20: #{_lambda_.1} parent=11 // pred_fallthru
          _
        // Predicated region
        $region21: #{_lambda_.1} parent=11 // pred_check
          %p179 = pneg %p101
        $region22: #{_lambda_.1} parent=11 // pred_check_branch
          %181 = sbr.rel (%p179) target = $region24
        $region23: #{_lambda_.1} parent=11 // pred_region
          _
        $region24: #{_lambda_.1} parent=11 // pred_fallthru
          _
        // Predicated region
        $region25: #{_lambda_.1} parent=11 // pred_check
          %p182 = pneg %p122
        $region26: #{_lambda_.1} parent=11 // pred_check_branch
          %184 = sbr.rel (%p182) target = $region28
        $region27: #{_lambda_.1} parent=11 // pred_region
          _
        $region28: #{_lambda_.1} parent=11 // pred_fallthru
          _
      $region12: #{_lambda_.1} parent=5 // pred_fallthru
        _
      %p185 = scmp.lt.s32.totalorder %s12, 2
      // Predicated region
      $region29: #{_lambda_.1} parent=5 // pred_check
        %p186 = pneg %p185
      $region30: #{_lambda_.1} parent=5 // pred_check_branch
        %188 = sbr.rel (%p186) target = $region32
      $region31: #{_lambda_.1} parent=5 // pred_region
        // Predicated region
        $region33: #{_lambda_.1} parent=31 // pred_check
          %p189 = pneg %p32
        $region34: #{_lambda_.1} parent=31 // pred_check_branch
          %191 = sbr.rel (%p189) target = $region36
        $region35: #{_lambda_.1} parent=31 // pred_region
          %p192 = scmp.lt.s32.totalorder %s12, 1
          %s193 = scalar_select %p192, %s12, 1
          %s194 = smul.addr %s193, 32
          %s195 = smul.addr %s194, 8
          %s196 = scalar_lea.vmem %s0, %s195
        $region36: #{_lambda_.1} parent=31 // pred_fallthru
          _
      $region32: #{_lambda_.1} parent=5 // pred_fallthru
        _
      %p197 = scmp.le.s32.totalorder 1, %s12
      %p198 = scmp.lt.s32.totalorder %s12, 3
      %p199 = pnand %p197, %p198
      %p200 = pneg %p199
      // Predicated region
      $region37: #{_lambda_.1} parent=5 // pred_check
        _
      $region38: #{_lambda_.1} parent=5 // pred_check_branch
        %202 = sbr.rel (%p199) target = $region40
      $region39: #{_lambda_.1} parent=5 // pred_region
        %s203 = ssub.s32 %s12, 1
        // Predicated region
        $region41: #{_lambda_.1} parent=39 // pred_check
          %p204 = pneg %p59
        $region42: #{_lambda_.1} parent=39 // pred_check_branch
          %206 = sbr.rel (%p204) target = $region44
        $region43: #{_lambda_.1} parent=39 // pred_region
          %207 = dma.done [#allocation5], 9216
        $region44: #{_lambda_.1} parent=39 // pred_fallthru
          _
        %p208 = scmp.lt.s32.totalorder %s17, 1
        %s209 = scalar_select %p208, %s17, 1
        %s210 = smul.addr %s209, 32
        %s211 = smul.addr %s210, 8
        %s212 = scalar_lea.vmem %s0, %s211
        %p213 = pneg %p38
        %p214 = pneg %p35
        %p215 = pneg %p59
        %p216 = pneg %p56
        %p217 = pneg %p80
        %p218 = pneg %p77
        %p219 = pneg %p101
        %p220 = pneg %p98
        %p221 = pneg %p122
        %p222 = pneg %p119
        %p223 = pneg %p148
        %p224 = pneg %p145
        %p225 = scmp.lt.s32.totalorder %s17, 1
        %s226 = scalar_select %p225, %s17, 1
        %s227 = smul.addr %s226, 8
        %s228 = smul.addr %s227, 8
        %s229 = scalar_lea.vmem %s5, %s228
        %p230 = scmp.lt.s32.totalorder %s17, 1
        %s231 = scalar_select %p230, %s17, 1
        %s232 = smul.addr %s231, 32
        %s233 = smul.addr %s232, 8
        %s234 = scalar_lea.vmem %s0, %s233
        %p235 = scmp.lt.s32.totalorder %s17, 1
        %s236 = scalar_select %p235, %s17, 1
        %s237 = smul.addr %s236, 8
        %s238 = smul.addr %s237, 8
        %s239 = scalar_lea.vmem %s5, %s238
        %241 = vst [vmem:[#allocation2] sm:$0xff] 0
        %242 = vst [vmem:[#allocation2 + $0x8] sm:$0xff] 0
        %s243 = scalar_lea.vmem [#allocation2], 272
        %244 = vst [vmem:[%s243] sm:$0xff] 0
        %245 = vst [vmem:[%s243 + $0x8] sm:$0xff] 0
        %s246 = scalar_lea.vmem [#allocation2], 16
        %247 = vst [vmem:[%s246] sm:$0xf] 0
        %248 = vst [vmem:[%s246 + $0x10] sm:$0xf] 0
        %249 = vst [vmem:[%s246 + $0x20] sm:$0xf] 0
        %250 = vst [vmem:[%s246 + $0x30] sm:$0xf] 0
        %251 = vst [vmem:[%s246 + $0x40] sm:$0xf] 0
        %252 = vst [vmem:[%s246 + $0x50] sm:$0xf] 0
        %253 = vst [vmem:[%s246 + $0x60] sm:$0xf] 0
        %254 = vst [vmem:[%s246 + $0x70] sm:$0xf] 0
        %255 = vst [vmem:[%s246 + $0x80] sm:$0xf] 0
        %256 = vst [vmem:[%s246 + $0x90] sm:$0xf] 0
        %257 = vst [vmem:[%s246 + $0xa0] sm:$0xf] 0
        %258 = vst [vmem:[%s246 + $0xb0] sm:$0xf] 0
        %259 = vst [vmem:[%s246 + $0xc0] sm:$0xf] 0
        %260 = vst [vmem:[%s246 + $0xd0] sm:$0xf] 0
        %261 = vst [vmem:[%s246 + $0xe0] sm:$0xf] 0
        %262 = vst [vmem:[%s246 + $0xf0] sm:$0xf] 0
        %263 = vst [vmem:[%s246 + $0x8] sm:$0xf0] 0
        %264 = vst [vmem:[%s246 + $0x18] sm:$0xf0] 0
        %265 = vst [vmem:[%s246 + $0x28] sm:$0xf0] 0
        %266 = vst [vmem:[%s246 + $0x38] sm:$0xf0] 0
        %267 = vst [vmem:[%s246 + $0x48] sm:$0xf0] 0
        %268 = vst [vmem:[%s246 + $0x58] sm:$0xf0] 0
        %269 = vst [vmem:[%s246 + $0x68] sm:$0xf0] 0
        %270 = vst [vmem:[%s246 + $0x78] sm:$0xf0] 0
        %271 = vst [vmem:[%s246 + $0x88] sm:$0xf0] 0
        %272 = vst [vmem:[%s246 + $0x98] sm:$0xf0] 0
        %273 = vst [vmem:[%s246 + $0xa8] sm:$0xf0] 0
        %274 = vst [vmem:[%s246 + $0xb8] sm:$0xf0] 0
        %275 = vst [vmem:[%s246 + $0xc8] sm:$0xf0] 0
        %276 = vst [vmem:[%s246 + $0xd8] sm:$0xf0] 0
        %277 = vst [vmem:[%s246 + $0xe8] sm:$0xf0] 0
        %278 = vst [vmem:[%s246 + $0xf8] sm:$0xf0] 0
        %279 = vst [vmem:[#allocation3] sm:$0xff] 0
        %280 = vst [vmem:[#allocation3 + $0x8] sm:$0xff] 0
        %s281 = scalar_lea.vmem [#allocation3], 272
        %282 = vst [vmem:[%s281] sm:$0xff] 0
        %283 = vst [vmem:[%s281 + $0x8] sm:$0xff] 0
        %s284 = scalar_lea.vmem [#allocation3], 16
        %285 = vst [vmem:[%s284] sm:$0xf] 0
        %286 = vst [vmem:[%s284 + $0x10] sm:$0xf] 0
        %287 = vst [vmem:[%s284 + $0x20] sm:$0xf] 0
        %288 = vst [vmem:[%s284 + $0x30] sm:$0xf] 0
        %289 = vst [vmem:[%s284 + $0x40] sm:$0xf] 0
        %290 = vst [vmem:[%s284 + $0x50] sm:$0xf] 0
        %291 = vst [vmem:[%s284 + $0x60] sm:$0xf] 0
        %292 = vst [vmem:[%s284 + $0x70] sm:$0xf] 0
        %293 = vst [vmem:[%s284 + $0x80] sm:$0xf] 0
        %294 = vst [vmem:[%s284 + $0x90] sm:$0xf] 0
        %295 = vst [vmem:[%s284 + $0xa0] sm:$0xf] 0
        %296 = vst [vmem:[%s284 + $0xb0] sm:$0xf] 0
        %297 = vst [vmem:[%s284 + $0xc0] sm:$0xf] 0
        %298 = vst [vmem:[%s284 + $0xd0] sm:$0xf] 0
        %299 = vst [vmem:[%s284 + $0xe0] sm:$0xf] 0
        %300 = vst [vmem:[%s284 + $0xf0] sm:$0xf] 0
        %301 = vst [vmem:[%s284 + $0x8] sm:$0xf0] 0
        %302 = vst [vmem:[%s284 + $0x18] sm:$0xf0] 0
        %303 = vst [vmem:[%s284 + $0x28] sm:$0xf0] 0
        %304 = vst [vmem:[%s284 + $0x38] sm:$0xf0] 0
        %305 = vst [vmem:[%s284 + $0x48] sm:$0xf0] 0
        %306 = vst [vmem:[%s284 + $0x58] sm:$0xf0] 0
        %307 = vst [vmem:[%s284 + $0x68] sm:$0xf0] 0
        %308 = vst [vmem:[%s284 + $0x78] sm:$0xf0] 0
        %309 = vst [vmem:[%s284 + $0x88] sm:$0xf0] 0
        %310 = vst [vmem:[%s284 + $0x98] sm:$0xf0] 0
        %311 = vst [vmem:[%s284 + $0xa8] sm:$0xf0] 0
        %312 = vst [vmem:[%s284 + $0xb8] sm:$0xf0] 0
        %313 = vst [vmem:[%s284 + $0xc8] sm:$0xf0] 0
        %314 = vst [vmem:[%s284 + $0xd8] sm:$0xf0] 0
        %315 = vst [vmem:[%s284 + $0xe8] sm:$0xf0] 0
        %316 = vst [vmem:[%s284 + $0xf8] sm:$0xf0] 0
        %v317 = vld [vmem:[%s234] sm:$0xff]
        %v318 = vld [vmem:[%s234 + $0x8] sm:$0xff]
        %v319 = vld [vmem:[%s234 + $0x10] sm:$0xff]
        %v320 = vld [vmem:[%s234 + $0x18] sm:$0xff]
        %v321 = vld [vmem:[%s234 + $0x20] sm:$0xff]
        %v322 = vld [vmem:[%s234 + $0x28] sm:$0xff]
        %v323 = vld [vmem:[%s234 + $0x30] sm:$0xff]
        %v324 = vld [vmem:[%s234 + $0x38] sm:$0xff]
        %v325 = vld [vmem:[%s234 + $0x40] sm:$0xff]
        %v326 = vld [vmem:[%s234 + $0x48] sm:$0xff]
        %v327 = vld [vmem:[%s234 + $0x50] sm:$0xff]
        %v328 = vld [vmem:[%s234 + $0x58] sm:$0xff]
        %v329 = vld [vmem:[%s234 + $0x60] sm:$0xff]
        %v330 = vld [vmem:[%s234 + $0x68] sm:$0xff]
        %v331 = vld [vmem:[%s234 + $0x70] sm:$0xff]
        %v332 = vld [vmem:[%s234 + $0x78] sm:$0xff]
        %v333 = vld [vmem:[%s234 + $0x80] sm:$0xff]
        %v334 = vld [vmem:[%s234 + $0x88] sm:$0xff]
        %v335 = vld [vmem:[%s234 + $0x90] sm:$0xff]
        %v336 = vld [vmem:[%s234 + $0x98] sm:$0xff]
        %v337 = vld [vmem:[%s234 + $0xa0] sm:$0xff]
        %v338 = vld [vmem:[%s234 + $0xa8] sm:$0xff]
        %v339 = vld [vmem:[%s234 + $0xb0] sm:$0xff]
        %v340 = vld [vmem:[%s234 + $0xb8] sm:$0xff]
        %v341 = vld [vmem:[%s234 + $0xc0] sm:$0xff]
        %v342 = vld [vmem:[%s234 + $0xc8] sm:$0xff]
        %v343 = vld [vmem:[%s234 + $0xd0] sm:$0xff]
        %v344 = vld [vmem:[%s234 + $0xd8] sm:$0xff]
        %v345 = vld [vmem:[%s234 + $0xe0] sm:$0xff]
        %v346 = vld [vmem:[%s234 + $0xe8] sm:$0xff]
        %v347 = vld [vmem:[%s234 + $0xf0] sm:$0xff]
        %v348 = vld [vmem:[%s234 + $0xf8] sm:$0xff]
        %v349 = vpack.c.bf16 %v318, %v317
        %v350 = vpack.c.bf16 %v320, %v319
        %v351 = vpack.c.bf16 %v322, %v321
        %v352 = vpack.c.bf16 %v324, %v323
        %v353 = vpack.c.bf16 %v326, %v325
        %v354 = vpack.c.bf16 %v328, %v327
        %v355 = vpack.c.bf16 %v330, %v329
        %v356 = vpack.c.bf16 %v332, %v331
        %v357 = vpack.c.bf16 %v334, %v333
        %v358 = vpack.c.bf16 %v336, %v335
        %v359 = vpack.c.bf16 %v338, %v337
        %v360 = vpack.c.bf16 %v340, %v339
        %v361 = vpack.c.bf16 %v342, %v341
        %v362 = vpack.c.bf16 %v344, %v343
        %v363 = vpack.c.bf16 %v346, %v345
        %v364 = vpack.c.bf16 %v348, %v347
        %v381 = vrot.slane %v349, 4
        %v382 = vrot.slane %v350, 4
        %v383 = vrot.slane %v351, 4
        %v384 = vrot.slane %v352, 4
        %v385 = vrot.slane %v353, 4
        %v386 = vrot.slane %v354, 4
        %v387 = vrot.slane %v355, 4
        %v388 = vrot.slane %v356, 4
        %v389 = vrot.slane %v357, 4
        %v390 = vrot.slane %v358, 4
        %v391 = vrot.slane %v359, 4
        %v392 = vrot.slane %v360, 4
        %v393 = vrot.slane %v361, 4
        %v394 = vrot.slane %v362, 4
        %v395 = vrot.slane %v363, 4
        %v396 = vrot.slane %v364, 4
        %vm413 = vcmask 31748
        %414 = vst.msk [vmem:[%s246] sm:$0xf0] %vm413, %v381
        %vm415 = vcmask 27648
        %416 = vst.msk [vmem:[%s246 + $0x8] sm:$0xf] %vm415, %v381
        %417 = vst.msk [vmem:[%s246 + $0x10] sm:$0xf0] %vm413, %v382
        %418 = vst.msk [vmem:[%s246 + $0x18] sm:$0xf] %vm415, %v382
        %419 = vst.msk [vmem:[%s246 + $0x20] sm:$0xf0] %vm413, %v383
        %420 = vst.msk [vmem:[%s246 + $0x28] sm:$0xf] %vm415, %v383
        %421 = vst.msk [vmem:[%s246 + $0x30] sm:$0xf0] %vm413, %v384
        %422 = vst.msk [vmem:[%s246 + $0x38] sm:$0xf] %vm415, %v384
        %423 = vst.msk [vmem:[%s246 + $0x40] sm:$0xf0] %vm413, %v385
        %424 = vst.msk [vmem:[%s246 + $0x48] sm:$0xf] %vm415, %v385
        %425 = vst.msk [vmem:[%s246 + $0x50] sm:$0xf0] %vm413, %v386
        %426 = vst.msk [vmem:[%s246 + $0x58] sm:$0xf] %vm415, %v386
        %427 = vst.msk [vmem:[%s246 + $0x60] sm:$0xf0] %vm413, %v387
        %428 = vst.msk [vmem:[%s246 + $0x68] sm:$0xf] %vm415, %v387
        %429 = vst.msk [vmem:[%s246 + $0x70] sm:$0xf0] %vm413, %v388
        %430 = vst.msk [vmem:[%s246 + $0x78] sm:$0xf] %vm415, %v388
        %431 = vst.msk [vmem:[%s246 + $0x80] sm:$0xf0] %vm413, %v389
        %432 = vst.msk [vmem:[%s246 + $0x88] sm:$0xf] %vm415, %v389
        %433 = vst.msk [vmem:[%s246 + $0x90] sm:$0xf0] %vm413, %v390
        %434 = vst.msk [vmem:[%s246 + $0x98] sm:$0xf] %vm415, %v390
        %435 = vst.msk [vmem:[%s246 + $0xa0] sm:$0xf0] %vm413, %v391
        %436 = vst.msk [vmem:[%s246 + $0xa8] sm:$0xf] %vm415, %v391
        %437 = vst.msk [vmem:[%s246 + $0xb0] sm:$0xf0] %vm413, %v392
        %438 = vst.msk [vmem:[%s246 + $0xb8] sm:$0xf] %vm415, %v392
        %439 = vst.msk [vmem:[%s246 + $0xc0] sm:$0xf0] %vm413, %v393
        %440 = vst.msk [vmem:[%s246 + $0xc8] sm:$0xf] %vm415, %v393
        %441 = vst.msk [vmem:[%s246 + $0xd0] sm:$0xf0] %vm413, %v394
        %442 = vst.msk [vmem:[%s246 + $0xd8] sm:$0xf] %vm415, %v394
        %443 = vst.msk [vmem:[%s246 + $0xe0] sm:$0xf0] %vm413, %v395
        %444 = vst.msk [vmem:[%s246 + $0xe8] sm:$0xf] %vm415, %v395
        %445 = vst.msk [vmem:[%s246 + $0xf0] sm:$0xf0] %vm413, %v396
        %446 = vst.msk [vmem:[%s246 + $0xf8] sm:$0xf] %vm415, %v396
        %vm447 = vcmask 1047588
        %448 = vst.msk [vmem:[%s246] sm:$0xf0] %vm447, 0
        %vm449 = vcmask 1043488
        %450 = vst.msk [vmem:[%s246 + $0x8] sm:$0xf] %vm449, 0
        %451 = vst.msk [vmem:[%s246 + $0x10] sm:$0xf0] %vm447, 0
        %452 = vst.msk [vmem:[%s246 + $0x18] sm:$0xf] %vm449, 0
        %453 = vst.msk [vmem:[%s246 + $0x20] sm:$0xf0] %vm447, 0
        %454 = vst.msk [vmem:[%s246 + $0x28] sm:$0xf] %vm449, 0
        %455 = vst.msk [vmem:[%s246 + $0x30] sm:$0xf0] %vm447, 0
        %456 = vst.msk [vmem:[%s246 + $0x38] sm:$0xf] %vm449, 0
        %457 = vst.msk [vmem:[%s246 + $0x40] sm:$0xf0] %vm447, 0
        %458 = vst.msk [vmem:[%s246 + $0x48] sm:$0xf] %vm449, 0
        %459 = vst.msk [vmem:[%s246 + $0x50] sm:$0xf0] %vm447, 0
        %460 = vst.msk [vmem:[%s246 + $0x58] sm:$0xf] %vm449, 0
        %461 = vst.msk [vmem:[%s246 + $0x60] sm:$0xf0] %vm447, 0
        %462 = vst.msk [vmem:[%s246 + $0x68] sm:$0xf] %vm449, 0
        %463 = vst.msk [vmem:[%s246 + $0x70] sm:$0xf0] %vm447, 0
        %464 = vst.msk [vmem:[%s246 + $0x78] sm:$0xf] %vm449, 0
        %465 = vst.msk [vmem:[%s246 + $0x80] sm:$0xf0] %vm447, 0
        %466 = vst.msk [vmem:[%s246 + $0x88] sm:$0xf] %vm449, 0
        %467 = vst.msk [vmem:[%s246 + $0x90] sm:$0xf0] %vm447, 0
        %468 = vst.msk [vmem:[%s246 + $0x98] sm:$0xf] %vm449, 0
        %469 = vst.msk [vmem:[%s246 + $0xa0] sm:$0xf0] %vm447, 0
        %470 = vst.msk [vmem:[%s246 + $0xa8] sm:$0xf] %vm449, 0
        %471 = vst.msk [vmem:[%s246 + $0xb0] sm:$0xf0] %vm447, 0
        %472 = vst.msk [vmem:[%s246 + $0xb8] sm:$0xf] %vm449, 0
        %473 = vst.msk [vmem:[%s246 + $0xc0] sm:$0xf0] %vm447, 0
        %474 = vst.msk [vmem:[%s246 + $0xc8] sm:$0xf] %vm449, 0
        %475 = vst.msk [vmem:[%s246 + $0xd0] sm:$0xf0] %vm447, 0
        %476 = vst.msk [vmem:[%s246 + $0xd8] sm:$0xf] %vm449, 0
        %477 = vst.msk [vmem:[%s246 + $0xe0] sm:$0xf0] %vm447, 0
        %478 = vst.msk [vmem:[%s246 + $0xe8] sm:$0xf] %vm449, 0
        %479 = vst.msk [vmem:[%s246 + $0xf0] sm:$0xf0] %vm447, 0
        %480 = vst.msk [vmem:[%s246 + $0xf8] sm:$0xf] %vm449, 0
        %v481 = vld [vmem:[%s2] sm:$0x1]
        %v482 = vld [vmem:[#allocation2] sm:$0xf8]
        %v483 = vld [vmem:[#allocation2 + $0x8] sm:$0xf]
        %v484 = vld [vmem:[#allocation2 + $0x10] sm:$0xf8]
        %v485 = vld [vmem:[#allocation2 + $0x18] sm:$0xf]
        %v486 = vld [vmem:[#allocation2 + $0x20] sm:$0xf8]
        %v487 = vld [vmem:[#allocation2 + $0x28] sm:$0xf]
        %v488 = vld [vmem:[#allocation2 + $0x30] sm:$0xf8]
        %v489 = vld [vmem:[#allocation2 + $0x38] sm:$0xf]
        %v490 = vld [vmem:[#allocation2 + $0x40] sm:$0xf8]
        %v491 = vld [vmem:[#allocation2 + $0x48] sm:$0xf]
        %v492 = vld [vmem:[#allocation2 + $0x50] sm:$0xf8]
        %v493 = vld [vmem:[#allocation2 + $0x58] sm:$0xf]
        %v494 = vld [vmem:[#allocation2 + $0x60] sm:$0xf8]
        %v495 = vld [vmem:[#allocation2 + $0x68] sm:$0xf]
        %v496 = vld [vmem:[#allocation2 + $0x70] sm:$0xf8]
        %v497 = vld [vmem:[#allocation2 + $0x78] sm:$0xf]
        %v498 = vld [vmem:[#allocation2 + $0x80] sm:$0xf8]
        %v499 = vld [vmem:[#allocation2 + $0x88] sm:$0xf]
        %v500 = vld [vmem:[#allocation2 + $0x90] sm:$0xf8]
        %v501 = vld [vmem:[#allocation2 + $0x98] sm:$0xf]
        %v502 = vld [vmem:[#allocation2 + $0xa0] sm:$0xf8]
        %v503 = vld [vmem:[#allocation2 + $0xa8] sm:$0xf]
        %v504 = vld [vmem:[#allocation2 + $0xb0] sm:$0xf8]
        %v505 = vld [vmem:[#allocation2 + $0xb8] sm:$0xf]
        %v506 = vld [vmem:[#allocation2 + $0xc0] sm:$0xf8]
        %v507 = vld [vmem:[#allocation2 + $0xc8] sm:$0xf]
        %v508 = vld [vmem:[#allocation2 + $0xd0] sm:$0xf8]
        %v509 = vld [vmem:[#allocation2 + $0xd8] sm:$0xf]
        %v510 = vld [vmem:[#allocation2 + $0xe0] sm:$0xf8]
        %v511 = vld [vmem:[#allocation2 + $0xe8] sm:$0xf]
        %v512 = vld [vmem:[#allocation2 + $0xf0] sm:$0xf8]
        %v513 = vld [vmem:[#allocation2 + $0xf8] sm:$0xf]
        %vm514 = vsmask.f32 4352
        %v516 = vshrl.u32 %v482, 16
        %v518 = vrot.slane %v516, 3
        %v519 = vshll.u32 %v482, 16
        %v521 = vrot.slane %v519, 4
        %v522 = vor.u32 %v518, %v521
        %v524 = vshrl.u32 %v483, 16
        %v526 = vrot.slane %v524, 3
        %v527 = vshll.u32 %v483, 16
        %v529 = vrot.slane %v527, 4
        %v530 = vor.u32 %v526, %v529
        %v531 = vsel %vm514, %v522, %v530
        %v533 = vshrl.u32 %v484, 16
        %v535 = vrot.slane %v533, 3
        %v536 = vshll.u32 %v484, 16
        %v538 = vrot.slane %v536, 4
        %v539 = vor.u32 %v535, %v538
        %v541 = vshrl.u32 %v485, 16
        %v543 = vrot.slane %v541, 3
        %v544 = vshll.u32 %v485, 16
        %v546 = vrot.slane %v544, 4
        %v547 = vor.u32 %v543, %v546
        %v548 = vsel %vm514, %v539, %v547
        %v550 = vshrl.u32 %v486, 16
        %v552 = vrot.slane %v550, 3
        %v553 = vshll.u32 %v486, 16
        %v555 = vrot.slane %v553, 4
        %v556 = vor.u32 %v552, %v555
        %v558 = vshrl.u32 %v487, 16
        %v560 = vrot.slane %v558, 3
        %v561 = vshll.u32 %v487, 16
        %v563 = vrot.slane %v561, 4
        %v564 = vor.u32 %v560, %v563
        %v565 = vsel %vm514, %v556, %v564
        %v567 = vshrl.u32 %v488, 16
        %v569 = vrot.slane %v567, 3
        %v570 = vshll.u32 %v488, 16
        %v572 = vrot.slane %v570, 4
        %v573 = vor.u32 %v569, %v572
        %v575 = vshrl.u32 %v489, 16
        %v577 = vrot.slane %v575, 3
        %v578 = vshll.u32 %v489, 16
        %v580 = vrot.slane %v578, 4
        %v581 = vor.u32 %v577, %v580
        %v582 = vsel %vm514, %v573, %v581
        %v584 = vshrl.u32 %v490, 16
        %v586 = vrot.slane %v584, 3
        %v587 = vshll.u32 %v490, 16
        %v589 = vrot.slane %v587, 4
        %v590 = vor.u32 %v586, %v589
        %v592 = vshrl.u32 %v491, 16
        %v594 = vrot.slane %v592, 3
        %v595 = vshll.u32 %v491, 16
        %v597 = vrot.slane %v595, 4
        %v598 = vor.u32 %v594, %v597
        %v599 = vsel %vm514, %v590, %v598
        %v601 = vshrl.u32 %v492, 16
        %v603 = vrot.slane %v601, 3
        %v604 = vshll.u32 %v492, 16
        %v606 = vrot.slane %v604, 4
        %v607 = vor.u32 %v603, %v606
        %v609 = vshrl.u32 %v493, 16
        %v611 = vrot.slane %v609, 3
        %v612 = vshll.u32 %v493, 16
        %v614 = vrot.slane %v612, 4
        %v615 = vor.u32 %v611, %v614
        %v616 = vsel %vm514, %v607, %v615
        %v618 = vshrl.u32 %v494, 16
        %v620 = vrot.slane %v618, 3
        %v621 = vshll.u32 %v494, 16
        %v623 = vrot.slane %v621, 4
        %v624 = vor.u32 %v620, %v623
        %v626 = vshrl.u32 %v495, 16
        %v628 = vrot.slane %v626, 3
        %v629 = vshll.u32 %v495, 16
        %v631 = vrot.slane %v629, 4
        %v632 = vor.u32 %v628, %v631
        %v633 = vsel %vm514, %v624, %v632
        %v635 = vshrl.u32 %v496, 16
        %v637 = vrot.slane %v635, 3
        %v638 = vshll.u32 %v496, 16
        %v640 = vrot.slane %v638, 4
        %v641 = vor.u32 %v637, %v640
        %v643 = vshrl.u32 %v497, 16
        %v645 = vrot.slane %v643, 3
        %v646 = vshll.u32 %v497, 16
        %v648 = vrot.slane %v646, 4
        %v649 = vor.u32 %v645, %v648
        %v650 = vsel %vm514, %v641, %v649
        %v652 = vshrl.u32 %v498, 16
        %v654 = vrot.slane %v652, 3
        %v655 = vshll.u32 %v498, 16
        %v657 = vrot.slane %v655, 4
        %v658 = vor.u32 %v654, %v657
        %v660 = vshrl.u32 %v499, 16
        %v662 = vrot.slane %v660, 3
        %v663 = vshll.u32 %v499, 16
        %v665 = vrot.slane %v663, 4
        %v666 = vor.u32 %v662, %v665
        %v667 = vsel %vm514, %v658, %v666
        %v669 = vshrl.u32 %v500, 16
        %v671 = vrot.slane %v669, 3
        %v672 = vshll.u32 %v500, 16
        %v674 = vrot.slane %v672, 4
        %v675 = vor.u32 %v671, %v674
        %v677 = vshrl.u32 %v501, 16
        %v679 = vrot.slane %v677, 3
        %v680 = vshll.u32 %v501, 16
        %v682 = vrot.slane %v680, 4
        %v683 = vor.u32 %v679, %v682
        %v684 = vsel %vm514, %v675, %v683
        %v686 = vshrl.u32 %v502, 16
        %v688 = vrot.slane %v686, 3
        %v689 = vshll.u32 %v502, 16
        %v691 = vrot.slane %v689, 4
        %v692 = vor.u32 %v688, %v691
        %v694 = vshrl.u32 %v503, 16
        %v696 = vrot.slane %v694, 3
        %v697 = vshll.u32 %v503, 16
        %v699 = vrot.slane %v697, 4
        %v700 = vor.u32 %v696, %v699
        %v701 = vsel %vm514, %v692, %v700
        %v703 = vshrl.u32 %v504, 16
        %v705 = vrot.slane %v703, 3
        %v706 = vshll.u32 %v504, 16
        %v708 = vrot.slane %v706, 4
        %v709 = vor.u32 %v705, %v708
        %v711 = vshrl.u32 %v505, 16
        %v713 = vrot.slane %v711, 3
        %v714 = vshll.u32 %v505, 16
        %v716 = vrot.slane %v714, 4
        %v717 = vor.u32 %v713, %v716
        %v718 = vsel %vm514, %v709, %v717
        %v720 = vshrl.u32 %v506, 16
        %v722 = vrot.slane %v720, 3
        %v723 = vshll.u32 %v506, 16
        %v725 = vrot.slane %v723, 4
        %v726 = vor.u32 %v722, %v725
        %v728 = vshrl.u32 %v507, 16
        %v730 = vrot.slane %v728, 3
        %v731 = vshll.u32 %v507, 16
        %v733 = vrot.slane %v731, 4
        %v734 = vor.u32 %v730, %v733
        %v735 = vsel %vm514, %v726, %v734
        %v737 = vshrl.u32 %v508, 16
        %v739 = vrot.slane %v737, 3
        %v740 = vshll.u32 %v508, 16
        %v742 = vrot.slane %v740, 4
        %v743 = vor.u32 %v739, %v742
        %v745 = vshrl.u32 %v509, 16
        %v747 = vrot.slane %v745, 3
        %v748 = vshll.u32 %v509, 16
        %v750 = vrot.slane %v748, 4
        %v751 = vor.u32 %v747, %v750
        %v752 = vsel %vm514, %v743, %v751
        %v754 = vshrl.u32 %v510, 16
        %v756 = vrot.slane %v754, 3
        %v757 = vshll.u32 %v510, 16
        %v759 = vrot.slane %v757, 4
        %v760 = vor.u32 %v756, %v759
        %v762 = vshrl.u32 %v511, 16
        %v764 = vrot.slane %v762, 3
        %v765 = vshll.u32 %v511, 16
        %v767 = vrot.slane %v765, 4
        %v768 = vor.u32 %v764, %v767
        %v769 = vsel %vm514, %v760, %v768
        %v771 = vshrl.u32 %v512, 16
        %v773 = vrot.slane %v771, 3
        %v774 = vshll.u32 %v512, 16
        %v776 = vrot.slane %v774, 4
        %v777 = vor.u32 %v773, %v776
        %v779 = vshrl.u32 %v513, 16
        %v781 = vrot.slane %v779, 3
        %v782 = vshll.u32 %v513, 16
        %v784 = vrot.slane %v782, 4
        %v785 = vor.u32 %v781, %v784
        %v786 = vsel %vm514, %v777, %v785
        %v803 = vld [vmem:[#allocation4] sm:$0xf]
        %v804 = vld [vmem:[#allocation4 + $0x4] sm:$0xf]
        %v805 = vld [vmem:[#allocation4 + $0x8] sm:$0xf]
        %v806 = vld [vmem:[#allocation4 + $0xc] sm:$0xf]
        %v807 = vld [vmem:[#allocation4 + $0x10] sm:$0xf]
        %v808 = vld [vmem:[#allocation4 + $0x14] sm:$0xf]
        %v809 = vld [vmem:[#allocation4 + $0x18] sm:$0xf]
        %v810 = vld [vmem:[#allocation4 + $0x1c] sm:$0xf]
        %v811 = vld [vmem:[#allocation4 + $0x20] sm:$0xf]
        %v812 = vld [vmem:[#allocation4 + $0x24] sm:$0xf]
        %v813 = vld [vmem:[#allocation4 + $0x28] sm:$0xf]
        %v814 = vld [vmem:[#allocation4 + $0x2c] sm:$0xf]
        %v815 = vld [vmem:[#allocation4 + $0x30] sm:$0xf]
        %v816 = vld [vmem:[#allocation4 + $0x34] sm:$0xf]
        %v817 = vld [vmem:[#allocation4 + $0x38] sm:$0xf]
        %v818 = vld [vmem:[#allocation4 + $0x3c] sm:$0xf]
        %v819 = vld [vmem:[#allocation2] sm:$0xf0]
        %v820 = vld [vmem:[#allocation2 + $0x10] sm:$0xf0]
        %v821 = vld [vmem:[#allocation2 + $0x20] sm:$0xf0]
        %v822 = vld [vmem:[#allocation2 + $0x30] sm:$0xf0]
        %v823 = vld [vmem:[#allocation2 + $0x40] sm:$0xf0]
        %v824 = vld [vmem:[#allocation2 + $0x50] sm:$0xf0]
        %v825 = vld [vmem:[#allocation2 + $0x60] sm:$0xf0]
        %v826 = vld [vmem:[#allocation2 + $0x70] sm:$0xf0]
        %v827 = vld [vmem:[#allocation2 + $0x80] sm:$0xf0]
        %v828 = vld [vmem:[#allocation2 + $0x90] sm:$0xf0]
        %v829 = vld [vmem:[#allocation2 + $0xa0] sm:$0xf0]
        %v830 = vld [vmem:[#allocation2 + $0xb0] sm:$0xf0]
        %v831 = vld [vmem:[#allocation2 + $0xc0] sm:$0xf0]
        %v832 = vld [vmem:[#allocation2 + $0xd0] sm:$0xf0]
        %v833 = vld [vmem:[#allocation2 + $0xe0] sm:$0xf0]
        %v834 = vld [vmem:[#allocation2 + $0xf0] sm:$0xf0]
        %vm867 = vcmask 1043456
        %v868 = vrot.slane %v819, 4
        %v869 = vrot.slane %v483, 4
        %v870 = vsel %vm867, %v868, %v869
        %v871 = vrot.slane %v820, 4
        %v872 = vrot.slane %v485, 4
        %v873 = vsel %vm867, %v871, %v872
        %v874 = vrot.slane %v821, 4
        %v875 = vrot.slane %v487, 4
        %v876 = vsel %vm867, %v874, %v875
        %v877 = vrot.slane %v822, 4
        %v878 = vrot.slane %v489, 4
        %v879 = vsel %vm867, %v877, %v878
        %v880 = vrot.slane %v823, 4
        %v881 = vrot.slane %v491, 4
        %v882 = vsel %vm867, %v880, %v881
        %v883 = vrot.slane %v824, 4
        %v884 = vrot.slane %v493, 4
        %v885 = vsel %vm867, %v883, %v884
        %v886 = vrot.slane %v825, 4
        %v887 = vrot.slane %v495, 4
        %v888 = vsel %vm867, %v886, %v887
        %v889 = vrot.slane %v826, 4
        %v890 = vrot.slane %v497, 4
        %v891 = vsel %vm867, %v889, %v890
        %v892 = vrot.slane %v827, 4
        %v893 = vrot.slane %v499, 4
        %v894 = vsel %vm867, %v892, %v893
        %v895 = vrot.slane %v828, 4
        %v896 = vrot.slane %v501, 4
        %v897 = vsel %vm867, %v895, %v896
        %v898 = vrot.slane %v829, 4
        %v899 = vrot.slane %v503, 4
        %v900 = vsel %vm867, %v898, %v899
        %v901 = vrot.slane %v830, 4
        %v902 = vrot.slane %v505, 4
        %v903 = vsel %vm867, %v901, %v902
        %v904 = vrot.slane %v831, 4
        %v905 = vrot.slane %v507, 4
        %v906 = vsel %vm867, %v904, %v905
        %v907 = vrot.slane %v832, 4
        %v908 = vrot.slane %v509, 4
        %v909 = vsel %vm867, %v907, %v908
        %v910 = vrot.slane %v833, 4
        %v911 = vrot.slane %v511, 4
        %v912 = vsel %vm867, %v910, %v911
        %v913 = vrot.slane %v834, 4
        %v914 = vrot.slane %v513, 4
        %v915 = vsel %vm867, %v913, %v914
        %s932 = scalar_lea.vmem [#allocation4], 64
        %v933 = vld [vmem:[%s932] sm:$0xf]
        %v934 = vld [vmem:[%s932 + $0x4] sm:$0xf]
        %v935 = vld [vmem:[%s932 + $0x8] sm:$0xf]
        %v936 = vld [vmem:[%s932 + $0xc] sm:$0xf]
        %v937 = vld [vmem:[%s932 + $0x10] sm:$0xf]
        %v938 = vld [vmem:[%s932 + $0x14] sm:$0xf]
        %v939 = vld [vmem:[%s932 + $0x18] sm:$0xf]
        %v940 = vld [vmem:[%s932 + $0x1c] sm:$0xf]
        %v941 = vld [vmem:[%s932 + $0x20] sm:$0xf]
        %v942 = vld [vmem:[%s932 + $0x24] sm:$0xf]
        %v943 = vld [vmem:[%s932 + $0x28] sm:$0xf]
        %v944 = vld [vmem:[%s932 + $0x2c] sm:$0xf]
        %v945 = vld [vmem:[%s932 + $0x30] sm:$0xf]
        %v946 = vld [vmem:[%s932 + $0x34] sm:$0xf]
        %v947 = vld [vmem:[%s932 + $0x38] sm:$0xf]
        %v948 = vld [vmem:[%s932 + $0x3c] sm:$0xf]
        %v965 = vunpack.c.l.b16 %v933
        %v966 = vunpack.c.l.b16 %v934
        %v967 = vunpack.c.l.b16 %v935
        %v968 = vunpack.c.l.b16 %v936
        %v969 = vunpack.c.l.b16 %v937
        %v970 = vunpack.c.l.b16 %v938
        %v971 = vunpack.c.l.b16 %v939
        %v972 = vunpack.c.l.b16 %v940
        %v973 = vunpack.c.l.b16 %v941
        %v974 = vunpack.c.l.b16 %v942
        %v975 = vunpack.c.l.b16 %v943
        %v976 = vunpack.c.l.b16 %v944
        %v977 = vunpack.c.l.b16 %v945
        %v978 = vunpack.c.l.b16 %v946
        %v979 = vunpack.c.l.b16 %v947
        %v980 = vunpack.c.l.b16 %v948
        %v981 = vpack.c.b16 %v966, %v965
        %v982 = vpack.c.b16 %v968, %v967
        %v983 = vpack.c.b16 %v970, %v969
        %v984 = vpack.c.b16 %v972, %v971
        %v985 = vpack.c.b16 %v974, %v973
        %v986 = vpack.c.b16 %v976, %v975
        %v987 = vpack.c.b16 %v978, %v977
        %v988 = vpack.c.b16 %v980, %v979
        %997 = vmatprep.subr.bf16.mxu0 0
        %998 = vmatpush1.bf16.msra.mxu0 %v981
        %999 = vmatprep.subr.bf16.mxu0 0
        %1000 = vmatpush1.bf16.msra.mxu0 %v982
        %1001 = vmatprep.subr.bf16.mxu0 0
        %1002 = vmatpush1.bf16.msra.mxu0 %v983
        %1003 = vmatprep.subr.bf16.mxu0 0
        %1004 = vmatpush1.bf16.msra.mxu0 %v984
        %1005 = vmatprep.subr.bf16.mxu0 0
        %1006 = vmatpush1.bf16.msra.mxu0 %v985
        %1007 = vmatprep.subr.bf16.mxu0 0
        %1008 = vmatpush1.bf16.msra.mxu0 %v986
        %1009 = vmatprep.subr.bf16.mxu0 0
        %1010 = vmatpush1.bf16.msra.mxu0 %v987
        %1011 = vmatprep.subr.bf16.mxu0 0
        %1012 = vmatpush1.bf16.msra.mxu0 %v988
        %1013 = vmatprep.subr.bf16.mxu0 0
        %1014 = vmatpush1.bf16.msra.mxu0 0
        %1015 = vmatprep.subr.bf16.mxu0 0
        %1016 = vmatpush1.bf16.msra.mxu0 0
        %1017 = vmatprep.subr.bf16.mxu0 0
        %1018 = vmatpush1.bf16.msra.mxu0 0
        %1019 = vmatprep.subr.bf16.mxu0 0
        %1020 = vmatpush1.bf16.msra.mxu0 0
        %1021 = vmatprep.subr.bf16.mxu0 0
        %1022 = vmatpush1.bf16.msra.mxu0 0
        %1023 = vmatprep.subr.bf16.mxu0 0
        %1024 = vmatpush1.bf16.msra.mxu0 0
        %1025 = vmatprep.subr.bf16.mxu0 0
        %1026 = vmatpush1.bf16.msra.mxu0 0
        %1027 = vmatprep.subr.bf16.mxu0 0
        %1028 = vmatpush1.bf16.msra.mxu0 0
        %1029 = vmatprep.mubr.bf16.mxu0 0
        %1030 = vmatmul.mubr.bf16.gmra.mrb[0].mxu0 %v870
        %v1031 = vpop.f32.mrb[0].mxu0
        %v1032 = vadd.f32 0.0, %v1031
        %v1033 = vpop.f32.mrb[0].mxu0
        %v1034 = vpop.f32.mrb[0].mxu0
        %v1035 = vadd.f32 0.0, %v1034
        %v1036 = vpop.f32.mrb[0].mxu0
        %1037 = vmatprep.mubr.bf16.mxu0 0
        %1038 = vmatmul.mubr.bf16.gmra.mrb[0].mxu0 %v873
        %v1039 = vpop.f32.mrb[0].mxu0
        %v1040 = vadd.f32 0.0, %v1039
        %v1041 = vpop.f32.mrb[0].mxu0
        %v1042 = vpop.f32.mrb[0].mxu0
        %v1043 = vadd.f32 0.0, %v1042
        %v1044 = vpop.f32.mrb[0].mxu0
        %1045 = vmatprep.mubr.bf16.mxu0 0
        %1046 = vmatmul.mubr.bf16.gmra.mrb[0].mxu0 %v876
        %v1047 = vpop.f32.mrb[0].mxu0
        %v1048 = vadd.f32 0.0, %v1047
        %v1049 = vpop.f32.mrb[0].mxu0
        %v1050 = vpop.f32.mrb[0].mxu0
        %v1051 = vadd.f32 0.0, %v1050
        %v1052 = vpop.f32.mrb[0].mxu0
        %1053 = vmatprep.mubr.bf16.mxu0 0
        %1054 = vmatmul.mubr.bf16.gmra.mrb[0].mxu0 %v879
        %v1055 = vpop.f32.mrb[0].mxu0
        %v1056 = vadd.f32 0.0, %v1055
        %v1057 = vpop.f32.mrb[0].mxu0
        %v1058 = vpop.f32.mrb[0].mxu0
        %v1059 = vadd.f32 0.0, %v1058
        %v1060 = vpop.f32.mrb[0].mxu0
        %1061 = vmatprep.mubr.bf16.mxu0 0
        %1062 = vmatmul.mubr.bf16.gmra.mrb[0].mxu0 %v882
        %v1063 = vpop.f32.mrb[0].mxu0
        %v1064 = vadd.f32 0.0, %v1063
        %v1065 = vpop.f32.mrb[0].mxu0
        %v1066 = vpop.f32.mrb[0].mxu0
        %v1067 = vadd.f32 0.0, %v1066
        %v1068 = vpop.f32.mrb[0].mxu0
        %1069 = vmatprep.mubr.bf16.mxu0 0
        %1070 = vmatmul.mubr.bf16.gmra.mrb[0].mxu0 %v885
        %v1071 = vpop.f32.mrb[0].mxu0
        %v1072 = vadd.f32 0.0, %v1071
        %v1073 = vpop.f32.mrb[0].mxu0
        %v1074 = vpop.f32.mrb[0].mxu0
        %v1075 = vadd.f32 0.0, %v1074
        %v1076 = vpop.f32.mrb[0].mxu0
        %1077 = vmatprep.mubr.bf16.mxu0 0
        %1078 = vmatmul.mubr.bf16.gmra.mrb[0].mxu0 %v888
        %v1079 = vpop.f32.mrb[0].mxu0
        %v1080 = vadd.f32 0.0, %v1079
        %v1081 = vpop.f32.mrb[0].mxu0
        %v1082 = vpop.f32.mrb[0].mxu0
        %v1083 = vadd.f32 0.0, %v1082
        %v1084 = vpop.f32.mrb[0].mxu0
        %1085 = vmatprep.mubr.bf16.mxu0 0
        %1086 = vmatmul.mubr.bf16.gmra.mrb[0].mxu0 %v891
        %v1087 = vpop.f32.mrb[0].mxu0
        %v1088 = vadd.f32 0.0, %v1087
        %v1089 = vpop.f32.mrb[0].mxu0
        %v1090 = vpop.f32.mrb[0].mxu0
        %v1091 = vadd.f32 0.0, %v1090
        %v1092 = vpop.f32.mrb[0].mxu0
        %1093 = vmatprep.mubr.bf16.mxu0 0
        %1094 = vmatmul.mubr.bf16.gmra.mrb[0].mxu0 %v894
        %v1095 = vpop.f32.mrb[0].mxu0
        %v1096 = vadd.f32 0.0, %v1095
        %v1097 = vpop.f32.mrb[0].mxu0
        %v1098 = vpop.f32.mrb[0].mxu0
        %v1099 = vadd.f32 0.0, %v1098
        %v1100 = vpop.f32.mrb[0].mxu0
        %1101 = vmatprep.mubr.bf16.mxu0 0
        %1102 = vmatmul.mubr.bf16.gmra.mrb[0].mxu0 %v897
        %v1103 = vpop.f32.mrb[0].mxu0
        %v1104 = vadd.f32 0.0, %v1103
        %v1105 = vpop.f32.mrb[0].mxu0
        %v1106 = vpop.f32.mrb[0].mxu0
        %v1107 = vadd.f32 0.0, %v1106
        %v1108 = vpop.f32.mrb[0].mxu0
        %1109 = vmatprep.mubr.bf16.mxu0 0
        %1110 = vmatmul.mubr.bf16.gmra.mrb[0].mxu0 %v900
        %v1111 = vpop.f32.mrb[0].mxu0
        %v1112 = vadd.f32 0.0, %v1111
        %v1113 = vpop.f32.mrb[0].mxu0
        %v1114 = vpop.f32.mrb[0].mxu0
        %v1115 = vadd.f32 0.0, %v1114
        %v1116 = vpop.f32.mrb[0].mxu0
        %1117 = vmatprep.mubr.bf16.mxu0 0
        %1118 = vmatmul.mubr.bf16.gmra.mrb[0].mxu0 %v903
        %v1119 = vpop.f32.mrb[0].mxu0
        %v1120 = vadd.f32 0.0, %v1119
        %v1121 = vpop.f32.mrb[0].mxu0
        %v1122 = vpop.f32.mrb[0].mxu0
        %v1123 = vadd.f32 0.0, %v1122
        %v1124 = vpop.f32.mrb[0].mxu0
        %1125 = vmatprep.mubr.bf16.mxu0 0
        %1126 = vmatmul.mubr.bf16.gmra.mrb[0].mxu0 %v906
        %v1127 = vpop.f32.mrb[0].mxu0
        %v1128 = vadd.f32 0.0, %v1127
        %v1129 = vpop.f32.mrb[0].mxu0
        %v1130 = vpop.f32.mrb[0].mxu0
        %v1131 = vadd.f32 0.0, %v1130
        %v1132 = vpop.f32.mrb[0].mxu0
        %1133 = vmatprep.mubr.bf16.mxu0 0
        %1134 = vmatmul.mubr.bf16.gmra.mrb[0].mxu0 %v909
        %v1135 = vpop.f32.mrb[0].mxu0
        %v1136 = vadd.f32 0.0, %v1135
        %v1137 = vpop.f32.mrb[0].mxu0
        %v1138 = vpop.f32.mrb[0].mxu0
        %v1139 = vadd.f32 0.0, %v1138
        %v1140 = vpop.f32.mrb[0].mxu0
        %1141 = vmatprep.mubr.bf16.mxu0 0
        %1142 = vmatmul.mubr.bf16.gmra.mrb[0].mxu0 %v912
        %v1143 = vpop.f32.mrb[0].mxu0
        %v1144 = vadd.f32 0.0, %v1143
        %v1145 = vpop.f32.mrb[0].mxu0
        %v1146 = vpop.f32.mrb[0].mxu0
        %v1147 = vadd.f32 0.0, %v1146
        %v1148 = vpop.f32.mrb[0].mxu0
        %1149 = vmatprep.mubr.bf16.mxu0 0
        %1150 = vmatmul.mubr.bf16.gmra.mrb[0].mxu0 %v915
        %v1151 = vpop.f32.mrb[0].mxu0
        %v1152 = vadd.f32 0.0, %v1151
        %v1153 = vpop.f32.mrb[0].mxu0
        %v1154 = vpop.f32.mrb[0].mxu0
        %v1155 = vadd.f32 0.0, %v1154
        %v1156 = vpop.f32.mrb[0].mxu0
        %1157 = vdwg.mxu0
        %v1174 = vunpack.c.l.b16 %v803
        %v1175 = vunpack.c.l.b16 %v804
        %v1176 = vunpack.c.l.b16 %v805
        %v1177 = vunpack.c.l.b16 %v806
        %v1178 = vunpack.c.l.b16 %v807
        %v1179 = vunpack.c.l.b16 %v808
        %v1180 = vunpack.c.l.b16 %v809
        %v1181 = vunpack.c.l.b16 %v810
        %v1182 = vunpack.c.l.b16 %v811
        %v1183 = vunpack.c.l.b16 %v812
        %v1184 = vunpack.c.l.b16 %v813
        %v1185 = vunpack.c.l.b16 %v814
        %v1186 = vunpack.c.l.b16 %v815
        %v1187 = vunpack.c.l.b16 %v816
        %v1188 = vunpack.c.l.b16 %v817
        %v1189 = vunpack.c.l.b16 %v818
        %v1190 = vpack.c.b16 %v1175, %v1174
        %v1191 = vpack.c.b16 %v1177, %v1176
        %v1192 = vpack.c.b16 %v1179, %v1178
        %v1193 = vpack.c.b16 %v1181, %v1180
        %v1194 = vpack.c.b16 %v1183, %v1182
        %v1195 = vpack.c.b16 %v1185, %v1184
        %v1196 = vpack.c.b16 %v1187, %v1186
        %v1197 = vpack.c.b16 %v1189, %v1188
        %1206 = vmatprep.subr.bf16.mxu0 0
        %1207 = vmatpush1.bf16.msra.mxu0 %v1190
        %1208 = vmatprep.subr.bf16.mxu0 0
        %1209 = vmatpush1.bf16.msra.mxu0 %v1191
        %1210 = vmatprep.subr.bf16.mxu0 0
        %1211 = vmatpush1.bf16.msra.mxu0 %v1192
        %1212 = vmatprep.subr.bf16.mxu0 0
        %1213 = vmatpush1.bf16.msra.mxu0 %v1193
        %1214 = vmatprep.subr.bf16.mxu0 0
        %1215 = vmatpush1.bf16.msra.mxu0 %v1194
        %1216 = vmatprep.subr.bf16.mxu0 0
        %1217 = vmatpush1.bf16.msra.mxu0 %v1195
        %1218 = vmatprep.subr.bf16.mxu0 0
        %1219 = vmatpush1.bf16.msra.mxu0 %v1196
        %1220 = vmatprep.subr.bf16.mxu0 0
        %1221 = vmatpush1.bf16.msra.mxu0 %v1197
        %1222 = vmatprep.subr.bf16.mxu0 0
        %1223 = vmatpush1.bf16.msra.mxu0 0
        %1224 = vmatprep.subr.bf16.mxu0 0
        %1225 = vmatpush1.bf16.msra.mxu0 0
        %1226 = vmatprep.subr.bf16.mxu0 0
        %1227 = vmatpush1.bf16.msra.mxu0 0
        %1228 = vmatprep.subr.bf16.mxu0 0
        %1229 = vmatpush1.bf16.msra.mxu0 0
        %1230 = vmatprep.subr.bf16.mxu0 0
        %1231 = vmatpush1.bf16.msra.mxu0 0
        %1232 = vmatprep.subr.bf16.mxu0 0
        %1233 = vmatpush1.bf16.msra.mxu0 0
        %1234 = vmatprep.subr.bf16.mxu0 0
        %1235 = vmatpush1.bf16.msra.mxu0 0
        %1236 = vmatprep.subr.bf16.mxu0 0
        %1237 = vmatpush1.bf16.msra.mxu0 0
        %1238 = vmatprep.mubr.bf16.mxu0 0
        %1239 = vmatmul.mubr.bf16.gmra.mrb[0].mxu0 %v531
        %v1240 = vpop.f32.mrb[0].mxu0
        %v1241 = vadd.f32 %v1032, %v1240
        %v1242 = vpop.f32.mrb[0].mxu0
        %v1243 = vpop.f32.mrb[0].mxu0
        %v1244 = vadd.f32 %v1035, %v1243
        %v1245 = vpop.f32.mrb[0].mxu0
        %1246 = vmatprep.mubr.bf16.mxu0 0
        %1247 = vmatmul.mubr.bf16.gmra.mrb[0].mxu0 %v548
        %v1248 = vpop.f32.mrb[0].mxu0
        %v1249 = vadd.f32 %v1040, %v1248
        %v1250 = vpop.f32.mrb[0].mxu0
        %v1251 = vpop.f32.mrb[0].mxu0
        %v1252 = vadd.f32 %v1043, %v1251
        %v1253 = vpop.f32.mrb[0].mxu0
        %1254 = vmatprep.mubr.bf16.mxu0 0
        %1255 = vmatmul.mubr.bf16.gmra.mrb[0].mxu0 %v565
        %v1256 = vpop.f32.mrb[0].mxu0
        %v1257 = vadd.f32 %v1048, %v1256
        %v1258 = vpop.f32.mrb[0].mxu0
        %v1259 = vpop.f32.mrb[0].mxu0
        %v1260 = vadd.f32 %v1051, %v1259
        %v1261 = vpop.f32.mrb[0].mxu0
        %1262 = vmatprep.mubr.bf16.mxu0 0
        %1263 = vmatmul.mubr.bf16.gmra.mrb[0].mxu0 %v582
        %v1264 = vpop.f32.mrb[0].mxu0
        %v1265 = vadd.f32 %v1056, %v1264
        %v1266 = vpop.f32.mrb[0].mxu0
        %v1267 = vpop.f32.mrb[0].mxu0
        %v1268 = vadd.f32 %v1059, %v1267
        %v1269 = vpop.f32.mrb[0].mxu0
        %1270 = vmatprep.mubr.bf16.mxu0 0
        %1271 = vmatmul.mubr.bf16.gmra.mrb[0].mxu0 %v599
        %v1272 = vpop.f32.mrb[0].mxu0
        %v1273 = vadd.f32 %v1064, %v1272
        %v1274 = vpop.f32.mrb[0].mxu0
        %v1275 = vpop.f32.mrb[0].mxu0
        %v1276 = vadd.f32 %v1067, %v1275
        %v1277 = vpop.f32.mrb[0].mxu0
        %1278 = vmatprep.mubr.bf16.mxu0 0
        %1279 = vmatmul.mubr.bf16.gmra.mrb[0].mxu0 %v616
        %v1280 = vpop.f32.mrb[0].mxu0
        %v1281 = vadd.f32 %v1072, %v1280
        %v1282 = vpop.f32.mrb[0].mxu0
        %v1283 = vpop.f32.mrb[0].mxu0
        %v1284 = vadd.f32 %v1075, %v1283
        %v1285 = vpop.f32.mrb[0].mxu0
        %1286 = vmatprep.mubr.bf16.mxu0 0
        %1287 = vmatmul.mubr.bf16.gmra.mrb[0].mxu0 %v633
        %v1288 = vpop.f32.mrb[0].mxu0
        %v1289 = vadd.f32 %v1080, %v1288
        %v1290 = vpop.f32.mrb[0].mxu0
        %v1291 = vpop.f32.mrb[0].mxu0
        %v1292 = vadd.f32 %v1083, %v1291
        %v1293 = vpop.f32.mrb[0].mxu0
        %1294 = vmatprep.mubr.bf16.mxu0 0
        %1295 = vmatmul.mubr.bf16.gmra.mrb[0].mxu0 %v650
        %v1296 = vpop.f32.mrb[0].mxu0
        %v1297 = vadd.f32 %v1088, %v1296
        %v1298 = vpop.f32.mrb[0].mxu0
        %v1299 = vpop.f32.mrb[0].mxu0
        %v1300 = vadd.f32 %v1091, %v1299
        %v1301 = vpop.f32.mrb[0].mxu0
        %1302 = vmatprep.mubr.bf16.mxu0 0
        %1303 = vmatmul.mubr.bf16.gmra.mrb[0].mxu0 %v667
        %v1304 = vpop.f32.mrb[0].mxu0
        %v1305 = vadd.f32 %v1096, %v1304
        %v1306 = vpop.f32.mrb[0].mxu0
        %v1307 = vpop.f32.mrb[0].mxu0
        %v1308 = vadd.f32 %v1099, %v1307
        %v1309 = vpop.f32.mrb[0].mxu0
        %1310 = vmatprep.mubr.bf16.mxu0 0
        %1311 = vmatmul.mubr.bf16.gmra.mrb[0].mxu0 %v684
        %v1312 = vpop.f32.mrb[0].mxu0
        %v1313 = vadd.f32 %v1104, %v1312
        %v1314 = vpop.f32.mrb[0].mxu0
        %v1315 = vpop.f32.mrb[0].mxu0
        %v1316 = vadd.f32 %v1107, %v1315
        %v1317 = vpop.f32.mrb[0].mxu0
        %1318 = vmatprep.mubr.bf16.mxu0 0
        %1319 = vmatmul.mubr.bf16.gmra.mrb[0].mxu0 %v701
        %v1320 = vpop.f32.mrb[0].mxu0
        %v1321 = vadd.f32 %v1112, %v1320
        %v1322 = vpop.f32.mrb[0].mxu0
        %v1323 = vpop.f32.mrb[0].mxu0
        %v1324 = vadd.f32 %v1115, %v1323
        %v1325 = vpop.f32.mrb[0].mxu0
        %1326 = vmatprep.mubr.bf16.mxu0 0
        %1327 = vmatmul.mubr.bf16.gmra.mrb[0].mxu0 %v718
        %v1328 = vpop.f32.mrb[0].mxu0
        %v1329 = vadd.f32 %v1120, %v1328
        %v1330 = vpop.f32.mrb[0].mxu0
        %v1331 = vpop.f32.mrb[0].mxu0
        %v1332 = vadd.f32 %v1123, %v1331
        %v1333 = vpop.f32.mrb[0].mxu0
        %1334 = vmatprep.mubr.bf16.mxu0 0
        %1335 = vmatmul.mubr.bf16.gmra.mrb[0].mxu0 %v735
        %v1336 = vpop.f32.mrb[0].mxu0
        %v1337 = vadd.f32 %v1128, %v1336
        %v1338 = vpop.f32.mrb[0].mxu0
        %v1339 = vpop.f32.mrb[0].mxu0
        %v1340 = vadd.f32 %v1131, %v1339
        %v1341 = vpop.f32.mrb[0].mxu0
        %1342 = vmatprep.mubr.bf16.mxu0 0
        %1343 = vmatmul.mubr.bf16.gmra.mrb[0].mxu0 %v752
        %v1344 = vpop.f32.mrb[0].mxu0
        %v1345 = vadd.f32 %v1136, %v1344
        %v1346 = vpop.f32.mrb[0].mxu0
        %v1347 = vpop.f32.mrb[0].mxu0
        %v1348 = vadd.f32 %v1139, %v1347
        %v1349 = vpop.f32.mrb[0].mxu0
        %1350 = vmatprep.mubr.bf16.mxu0 0
        %1351 = vmatmul.mubr.bf16.gmra.mrb[0].mxu0 %v769
        %v1352 = vpop.f32.mrb[0].mxu0
        %v1353 = vadd.f32 %v1144, %v1352
        %v1354 = vpop.f32.mrb[0].mxu0
        %v1355 = vpop.f32.mrb[0].mxu0
        %v1356 = vadd.f32 %v1147, %v1355
        %v1357 = vpop.f32.mrb[0].mxu0
        %1358 = vmatprep.mubr.bf16.mxu0 0
        %1359 = vmatmul.mubr.bf16.gmra.mrb[0].mxu0 %v786
        %v1360 = vpop.f32.mrb[0].mxu0
        %v1361 = vadd.f32 %v1152, %v1360
        %v1362 = vpop.f32.mrb[0].mxu0
        %v1363 = vpop.f32.mrb[0].mxu0
        %v1364 = vadd.f32 %v1155, %v1363
        %v1365 = vpop.f32.mrb[0].mxu0
        %1366 = vdwg.mxu0
        %v1367 = vld [vmem:[#allocation2 + $0x8] sm:$0x1f]
        %v1368 = vld [vmem:[#allocation2 + $0x18] sm:$0x1f]
        %v1369 = vld [vmem:[#allocation2 + $0x28] sm:$0x1f]
        %v1370 = vld [vmem:[#allocation2 + $0x38] sm:$0x1f]
        %v1371 = vld [vmem:[#allocation2 + $0x48] sm:$0x1f]
        %v1372 = vld [vmem:[#allocation2 + $0x58] sm:$0x1f]
        %v1373 = vld [vmem:[#allocation2 + $0x68] sm:$0x1f]
        %v1374 = vld [vmem:[#allocation2 + $0x78] sm:$0x1f]
        %v1375 = vld [vmem:[#allocation2 + $0x88] sm:$0x1f]
        %v1376 = vld [vmem:[#allocation2 + $0x98] sm:$0x1f]
        %v1377 = vld [vmem:[#allocation2 + $0xa8] sm:$0x1f]
        %v1378 = vld [vmem:[#allocation2 + $0xb8] sm:$0x1f]
        %v1379 = vld [vmem:[#allocation2 + $0xc8] sm:$0x1f]
        %v1380 = vld [vmem:[#allocation2 + $0xd8] sm:$0x1f]
        %v1381 = vld [vmem:[#allocation2 + $0xe8] sm:$0x1f]
        %v1382 = vld [vmem:[#allocation2 + $0xf8] sm:$0x1f]
        %vm1383 = vsmask.f32 3328
        %v1385 = vshrl.u32 %v819, 16
        %v1387 = vrot.slane %v1385, 4
        %v1388 = vshll.u32 %v819, 16
        %v1390 = vrot.slane %v1388, 5
        %v1391 = vor.u32 %v1387, %v1390
        %v1393 = vshrl.u32 %v1367, 16
        %v1395 = vrot.slane %v1393, 4
        %v1396 = vshll.u32 %v1367, 16
        %v1398 = vrot.slane %v1396, 5
        %v1399 = vor.u32 %v1395, %v1398
        %v1400 = vsel %vm1383, %v1391, %v1399
        %v1402 = vshrl.u32 %v820, 16
        %v1404 = vrot.slane %v1402, 4
        %v1405 = vshll.u32 %v820, 16
        %v1407 = vrot.slane %v1405, 5
        %v1408 = vor.u32 %v1404, %v1407
        %v1410 = vshrl.u32 %v1368, 16
        %v1412 = vrot.slane %v1410, 4
        %v1413 = vshll.u32 %v1368, 16
        %v1415 = vrot.slane %v1413, 5
        %v1416 = vor.u32 %v1412, %v1415
        %v1417 = vsel %vm1383, %v1408, %v1416
        %v1419 = vshrl.u32 %v821, 16
        %v1421 = vrot.slane %v1419, 4
        %v1422 = vshll.u32 %v821, 16
        %v1424 = vrot.slane %v1422, 5
        %v1425 = vor.u32 %v1421, %v1424
        %v1427 = vshrl.u32 %v1369, 16
        %v1429 = vrot.slane %v1427, 4
        %v1430 = vshll.u32 %v1369, 16
        %v1432 = vrot.slane %v1430, 5
        %v1433 = vor.u32 %v1429, %v1432
        %v1434 = vsel %vm1383, %v1425, %v1433
        %v1436 = vshrl.u32 %v822, 16
        %v1438 = vrot.slane %v1436, 4
        %v1439 = vshll.u32 %v822, 16
        %v1441 = vrot.slane %v1439, 5
        %v1442 = vor.u32 %v1438, %v1441
        %v1444 = vshrl.u32 %v1370, 16
        %v1446 = vrot.slane %v1444, 4
        %v1447 = vshll.u32 %v1370, 16
        %v1449 = vrot.slane %v1447, 5
        %v1450 = vor.u32 %v1446, %v1449
        %v1451 = vsel %vm1383, %v1442, %v1450
        %v1453 = vshrl.u32 %v823, 16
        %v1455 = vrot.slane %v1453, 4
        %v1456 = vshll.u32 %v823, 16
        %v1458 = vrot.slane %v1456, 5
        %v1459 = vor.u32 %v1455, %v1458
        %v1461 = vshrl.u32 %v1371, 16
        %v1463 = vrot.slane %v1461, 4
        %v1464 = vshll.u32 %v1371, 16
        %v1466 = vrot.slane %v1464, 5
        %v1467 = vor.u32 %v1463, %v1466
        %v1468 = vsel %vm1383, %v1459, %v1467
        %v1470 = vshrl.u32 %v824, 16
        %v1472 = vrot.slane %v1470, 4
        %v1473 = vshll.u32 %v824, 16
        %v1475 = vrot.slane %v1473, 5
        %v1476 = vor.u32 %v1472, %v1475
        %v1478 = vshrl.u32 %v1372, 16
        %v1480 = vrot.slane %v1478, 4
        %v1481 = vshll.u32 %v1372, 16
        %v1483 = vrot.slane %v1481, 5
        %v1484 = vor.u32 %v1480, %v1483
        %v1485 = vsel %vm1383, %v1476, %v1484
        %v1487 = vshrl.u32 %v825, 16
        %v1489 = vrot.slane %v1487, 4
        %v1490 = vshll.u32 %v825, 16
        %v1492 = vrot.slane %v1490, 5
        %v1493 = vor.u32 %v1489, %v1492
        %v1495 = vshrl.u32 %v1373, 16
        %v1497 = vrot.slane %v1495, 4
        %v1498 = vshll.u32 %v1373, 16
        %v1500 = vrot.slane %v1498, 5
        %v1501 = vor.u32 %v1497, %v1500
        %v1502 = vsel %vm1383, %v1493, %v1501
        %v1504 = vshrl.u32 %v826, 16
        %v1506 = vrot.slane %v1504, 4
        %v1507 = vshll.u32 %v826, 16
        %v1509 = vrot.slane %v1507, 5
        %v1510 = vor.u32 %v1506, %v1509
        %v1512 = vshrl.u32 %v1374, 16
        %v1514 = vrot.slane %v1512, 4
        %v1515 = vshll.u32 %v1374, 16
        %v1517 = vrot.slane %v1515, 5
        %v1518 = vor.u32 %v1514, %v1517
        %v1519 = vsel %vm1383, %v1510, %v1518
        %v1521 = vshrl.u32 %v827, 16
        %v1523 = vrot.slane %v1521, 4
        %v1524 = vshll.u32 %v827, 16
        %v1526 = vrot.slane %v1524, 5
        %v1527 = vor.u32 %v1523, %v1526
        %v1529 = vshrl.u32 %v1375, 16
        %v1531 = vrot.slane %v1529, 4
        %v1532 = vshll.u32 %v1375, 16
        %v1534 = vrot.slane %v1532, 5
        %v1535 = vor.u32 %v1531, %v1534
        %v1536 = vsel %vm1383, %v1527, %v1535
        %v1538 = vshrl.u32 %v828, 16
        %v1540 = vrot.slane %v1538, 4
        %v1541 = vshll.u32 %v828, 16
        %v1543 = vrot.slane %v1541, 5
        %v1544 = vor.u32 %v1540, %v1543
        %v1546 = vshrl.u32 %v1376, 16
        %v1548 = vrot.slane %v1546, 4
        %v1549 = vshll.u32 %v1376, 16
        %v1551 = vrot.slane %v1549, 5
        %v1552 = vor.u32 %v1548, %v1551
        %v1553 = vsel %vm1383, %v1544, %v1552
        %v1555 = vshrl.u32 %v829, 16
        %v1557 = vrot.slane %v1555, 4
        %v1558 = vshll.u32 %v829, 16
        %v1560 = vrot.slane %v1558, 5
        %v1561 = vor.u32 %v1557, %v1560
        %v1563 = vshrl.u32 %v1377, 16
        %v1565 = vrot.slane %v1563, 4
        %v1566 = vshll.u32 %v1377, 16
        %v1568 = vrot.slane %v1566, 5
        %v1569 = vor.u32 %v1565, %v1568
        %v1570 = vsel %vm1383, %v1561, %v1569
        %v1572 = vshrl.u32 %v830, 16
        %v1574 = vrot.slane %v1572, 4
        %v1575 = vshll.u32 %v830, 16
        %v1577 = vrot.slane %v1575, 5
        %v1578 = vor.u32 %v1574, %v1577
        %v1580 = vshrl.u32 %v1378, 16
        %v1582 = vrot.slane %v1580, 4
        %v1583 = vshll.u32 %v1378, 16
        %v1585 = vrot.slane %v1583, 5
        %v1586 = vor.u32 %v1582, %v1585
        %v1587 = vsel %vm1383, %v1578, %v1586
        %v1589 = vshrl.u32 %v831, 16
        %v1591 = vrot.slane %v1589, 4
        %v1592 = vshll.u32 %v831, 16
        %v1594 = vrot.slane %v1592, 5
        %v1595 = vor.u32 %v1591, %v1594
        %v1597 = vshrl.u32 %v1379, 16
        %v1599 = vrot.slane %v1597, 4
        %v1600 = vshll.u32 %v1379, 16
        %v1602 = vrot.slane %v1600, 5
        %v1603 = vor.u32 %v1599, %v1602
        %v1604 = vsel %vm1383, %v1595, %v1603
        %v1606 = vshrl.u32 %v832, 16
        %v1608 = vrot.slane %v1606, 4
        %v1609 = vshll.u32 %v832, 16
        %v1611 = vrot.slane %v1609, 5
        %v1612 = vor.u32 %v1608, %v1611
        %v1614 = vshrl.u32 %v1380, 16
        %v1616 = vrot.slane %v1614, 4
        %v1617 = vshll.u32 %v1380, 16
        %v1619 = vrot.slane %v1617, 5
        %v1620 = vor.u32 %v1616, %v1619
        %v1621 = vsel %vm1383, %v1612, %v1620
        %v1623 = vshrl.u32 %v833, 16
        %v1625 = vrot.slane %v1623, 4
        %v1626 = vshll.u32 %v833, 16
        %v1628 = vrot.slane %v1626, 5
        %v1629 = vor.u32 %v1625, %v1628
        %v1631 = vshrl.u32 %v1381, 16
        %v1633 = vrot.slane %v1631, 4
        %v1634 = vshll.u32 %v1381, 16
        %v1636 = vrot.slane %v1634, 5
        %v1637 = vor.u32 %v1633, %v1636
        %v1638 = vsel %vm1383, %v1629, %v1637
        %v1640 = vshrl.u32 %v834, 16
        %v1642 = vrot.slane %v1640, 4
        %v1643 = vshll.u32 %v834, 16
        %v1645 = vrot.slane %v1643, 5
        %v1646 = vor.u32 %v1642, %v1645
        %v1648 = vshrl.u32 %v1382, 16
        %v1650 = vrot.slane %v1648, 4
        %v1651 = vshll.u32 %v1382, 16
        %v1653 = vrot.slane %v1651, 5
        %v1654 = vor.u32 %v1650, %v1653
        %v1655 = vsel %vm1383, %v1646, %v1654
        %s1672 = scalar_lea.vmem [#allocation4], 128
        %v1673 = vld [vmem:[%s1672] sm:$0xf]
        %v1674 = vld [vmem:[%s1672 + $0x4] sm:$0xf]
        %v1675 = vld [vmem:[%s1672 + $0x8] sm:$0xf]
        %v1676 = vld [vmem:[%s1672 + $0xc] sm:$0xf]
        %v1677 = vld [vmem:[%s1672 + $0x10] sm:$0xf]
        %v1678 = vld [vmem:[%s1672 + $0x14] sm:$0xf]
        %v1679 = vld [vmem:[%s1672 + $0x18] sm:$0xf]
        %v1680 = vld [vmem:[%s1672 + $0x1c] sm:$0xf]
        %v1681 = vld [vmem:[%s1672 + $0x20] sm:$0xf]
        %v1682 = vld [vmem:[%s1672 + $0x24] sm:$0xf]
        %v1683 = vld [vmem:[%s1672 + $0x28] sm:$0xf]
        %v1684 = vld [vmem:[%s1672 + $0x2c] sm:$0xf]
        %v1685 = vld [vmem:[%s1672 + $0x30] sm:$0xf]
        %v1686 = vld [vmem:[%s1672 + $0x34] sm:$0xf]
        %v1687 = vld [vmem:[%s1672 + $0x38] sm:$0xf]
        %v1688 = vld [vmem:[%s1672 + $0x3c] sm:$0xf]
        %v1705 = vunpack.c.l.b16 %v1673
        %v1706 = vunpack.c.l.b16 %v1674
        %v1707 = vunpack.c.l.b16 %v1675
        %v1708 = vunpack.c.l.b16 %v1676
        %v1709 = vunpack.c.l.b16 %v1677
        %v1710 = vunpack.c.l.b16 %v1678
        %v1711 = vunpack.c.l.b16 %v1679
        %v1712 = vunpack.c.l.b16 %v1680
        %v1713 = vunpack.c.l.b16 %v1681
        %v1714 = vunpack.c.l.b16 %v1682
        %v1715 = vunpack.c.l.b16 %v1683
        %v1716 = vunpack.c.l.b16 %v1684
        %v1717 = vunpack.c.l.b16 %v1685
        %v1718 = vunpack.c.l.b16 %v1686
        %v1719 = vunpack.c.l.b16 %v1687
        %v1720 = vunpack.c.l.b16 %v1688
        %v1721 = vpack.c.b16 %v1706, %v1705
        %v1722 = vpack.c.b16 %v1708, %v1707
        %v1723 = vpack.c.b16 %v1710, %v1709
        %v1724 = vpack.c.b16 %v1712, %v1711
        %v1725 = vpack.c.b16 %v1714, %v1713
        %v1726 = vpack.c.b16 %v1716, %v1715
        %v1727 = vpack.c.b16 %v1718, %v1717
        %v1728 = vpack.c.b16 %v1720, %v1719
        %1737 = vmatprep.subr.bf16.mxu0 0
        %1738 = vmatpush1.bf16.msra.mxu0 %v1721
        %1739 = vmatprep.subr.bf16.mxu0 0
        %1740 = vmatpush1.bf16.msra.mxu0 %v1722
        %1741 = vmatprep.subr.bf16.mxu0 0
        %1742 = vmatpush1.bf16.msra.mxu0 %v1723
        %1743 = vmatprep.subr.bf16.mxu0 0
        %1744 = vmatpush1.bf16.msra.mxu0 %v1724
        %1745 = vmatprep.subr.bf16.mxu0 0
        %1746 = vmatpush1.bf16.msra.mxu0 %v1725
        %1747 = vmatprep.subr.bf16.mxu0 0
        %1748 = vmatpush1.bf16.msra.mxu0 %v1726
        %1749 = vmatprep.subr.bf16.mxu0 0
        %1750 = vmatpush1.bf16.msra.mxu0 %v1727
        %1751 = vmatprep.subr.bf16.mxu0 0
        %1752 = vmatpush1.bf16.msra.mxu0 %v1728
        %1753 = vmatprep.subr.bf16.mxu0 0
        %1754 = vmatpush1.bf16.msra.mxu0 0
        %1755 = vmatprep.subr.bf16.mxu0 0
        %1756 = vmatpush1.bf16.msra.mxu0 0
        %1757 = vmatprep.subr.bf16.mxu0 0
        %1758 = vmatpush1.bf16.msra.mxu0 0
        %1759 = vmatprep.subr.bf16.mxu0 0
        %1760 = vmatpush1.bf16.msra.mxu0 0
        %1761 = vmatprep.subr.bf16.mxu0 0
        %1762 = vmatpush1.bf16.msra.mxu0 0
        %1763 = vmatprep.subr.bf16.mxu0 0
        %1764 = vmatpush1.bf16.msra.mxu0 0
        %1765 = vmatprep.subr.bf16.mxu0 0
        %1766 = vmatpush1.bf16.msra.mxu0 0
        %1767 = vmatprep.subr.bf16.mxu0 0
        %1768 = vmatpush1.bf16.msra.mxu0 0
        %1769 = vmatprep.mubr.bf16.mxu0 0
        %1770 = vmatmul.mubr.bf16.gmra.mrb[0].mxu0 %v1400
        %v1771 = vpop.f32.mrb[0].mxu0
        %v1772 = vadd.f32 0.0, %v1771
        %v1773 = vpop.f32.mrb[0].mxu0
        %v1774 = vpop.f32.mrb[0].mxu0
        %v1775 = vadd.f32 0.0, %v1774
        %v1776 = vpop.f32.mrb[0].mxu0
        %1777 = vmatprep.mubr.bf16.mxu0 0
        %1778 = vmatmul.mubr.bf16.gmra.mrb[0].mxu0 %v1417
        %v1779 = vpop.f32.mrb[0].mxu0
        %v1780 = vadd.f32 0.0, %v1779
        %v1781 = vpop.f32.mrb[0].mxu0
        %v1782 = vpop.f32.mrb[0].mxu0
        %v1783 = vadd.f32 0.0, %v1782
        %v1784 = vpop.f32.mrb[0].mxu0
        %1785 = vmatprep.mubr.bf16.mxu0 0
        %1786 = vmatmul.mubr.bf16.gmra.mrb[0].mxu0 %v1434
        %v1787 = vpop.f32.mrb[0].mxu0
        %v1788 = vadd.f32 0.0, %v1787
        %v1789 = vpop.f32.mrb[0].mxu0
        %v1790 = vpop.f32.mrb[0].mxu0
        %v1791 = vadd.f32 0.0, %v1790
        %v1792 = vpop.f32.mrb[0].mxu0
        %1793 = vmatprep.mubr.bf16.mxu0 0
        %1794 = vmatmul.mubr.bf16.gmra.mrb[0].mxu0 %v1451
        %v1795 = vpop.f32.mrb[0].mxu0
        %v1796 = vadd.f32 0.0, %v1795
        %v1797 = vpop.f32.mrb[0].mxu0
        %v1798 = vpop.f32.mrb[0].mxu0
        %v1799 = vadd.f32 0.0, %v1798
        %v1800 = vpop.f32.mrb[0].mxu0
        %1801 = vmatprep.mubr.bf16.mxu0 0
        %1802 = vmatmul.mubr.bf16.gmra.mrb[0].mxu0 %v1468
        %v1803 = vpop.f32.mrb[0].mxu0
        %v1804 = vadd.f32 0.0, %v1803
        %v1805 = vpop.f32.mrb[0].mxu0
        %v1806 = vpop.f32.mrb[0].mxu0
        %v1807 = vadd.f32 0.0, %v1806
        %v1808 = vpop.f32.mrb[0].mxu0
        %1809 = vmatprep.mubr.bf16.mxu0 0
        %1810 = vmatmul.mubr.bf16.gmra.mrb[0].mxu0 %v1485
        %v1811 = vpop.f32.mrb[0].mxu0
        %v1812 = vadd.f32 0.0, %v1811
        %v1813 = vpop.f32.mrb[0].mxu0
        %v1814 = vpop.f32.mrb[0].mxu0
        %v1815 = vadd.f32 0.0, %v1814
        %v1816 = vpop.f32.mrb[0].mxu0
        %1817 = vmatprep.mubr.bf16.mxu0 0
        %1818 = vmatmul.mubr.bf16.gmra.mrb[0].mxu0 %v1502
        %v1819 = vpop.f32.mrb[0].mxu0
        %v1820 = vadd.f32 0.0, %v1819
        %v1821 = vpop.f32.mrb[0].mxu0
        %v1822 = vpop.f32.mrb[0].mxu0
        %v1823 = vadd.f32 0.0, %v1822
        %v1824 = vpop.f32.mrb[0].mxu0
        %1825 = vmatprep.mubr.bf16.mxu0 0
        %1826 = vmatmul.mubr.bf16.gmra.mrb[0].mxu0 %v1519
        %v1827 = vpop.f32.mrb[0].mxu0
        %v1828 = vadd.f32 0.0, %v1827
        %v1829 = vpop.f32.mrb[0].mxu0
        %v1830 = vpop.f32.mrb[0].mxu0
        %v1831 = vadd.f32 0.0, %v1830
        %v1832 = vpop.f32.mrb[0].mxu0
        %1833 = vmatprep.mubr.bf16.mxu0 0
        %1834 = vmatmul.mubr.bf16.gmra.mrb[0].mxu0 %v1536
        %v1835 = vpop.f32.mrb[0].mxu0
        %v1836 = vadd.f32 0.0, %v1835
        %v1837 = vpop.f32.mrb[0].mxu0
        %v1838 = vpop.f32.mrb[0].mxu0
        %v1839 = vadd.f32 0.0, %v1838
        %v1840 = vpop.f32.mrb[0].mxu0
        %1841 = vmatprep.mubr.bf16.mxu0 0
        %1842 = vmatmul.mubr.bf16.gmra.mrb[0].mxu0 %v1553
        %v1843 = vpop.f32.mrb[0].mxu0
        %v1844 = vadd.f32 0.0, %v1843
        %v1845 = vpop.f32.mrb[0].mxu0
        %v1846 = vpop.f32.mrb[0].mxu0
        %v1847 = vadd.f32 0.0, %v1846
        %v1848 = vpop.f32.mrb[0].mxu0
        %1849 = vmatprep.mubr.bf16.mxu0 0
        %1850 = vmatmul.mubr.bf16.gmra.mrb[0].mxu0 %v1570
        %v1851 = vpop.f32.mrb[0].mxu0
        %v1852 = vadd.f32 0.0, %v1851
        %v1853 = vpop.f32.mrb[0].mxu0
        %v1854 = vpop.f32.mrb[0].mxu0
        %v1855 = vadd.f32 0.0, %v1854
        %v1856 = vpop.f32.mrb[0].mxu0
        %1857 = vmatprep.mubr.bf16.mxu0 0
        %1858 = vmatmul.mubr.bf16.gmra.mrb[0].mxu0 %v1587
        %v1859 = vpop.f32.mrb[0].mxu0
        %v1860 = vadd.f32 0.0, %v1859
        %v1861 = vpop.f32.mrb[0].mxu0
        %v1862 = vpop.f32.mrb[0].mxu0
        %v1863 = vadd.f32 0.0, %v1862
        %v1864 = vpop.f32.mrb[0].mxu0
        %1865 = vmatprep.mubr.bf16.mxu0 0
        %1866 = vmatmul.mubr.bf16.gmra.mrb[0].mxu0 %v1604
        %v1867 = vpop.f32.mrb[0].mxu0
        %v1868 = vadd.f32 0.0, %v1867
        %v1869 = vpop.f32.mrb[0].mxu0
        %v1870 = vpop.f32.mrb[0].mxu0
        %v1871 = vadd.f32 0.0, %v1870
        %v1872 = vpop.f32.mrb[0].mxu0
        %1873 = vmatprep.mubr.bf16.mxu0 0
        %1874 = vmatmul.mubr.bf16.gmra.mrb[0].mxu0 %v1621
        %v1875 = vpop.f32.mrb[0].mxu0
        %v1876 = vadd.f32 0.0, %v1875
        %v1877 = vpop.f32.mrb[0].mxu0
        %v1878 = vpop.f32.mrb[0].mxu0
        %v1879 = vadd.f32 0.0, %v1878
        %v1880 = vpop.f32.mrb[0].mxu0
        %1881 = vmatprep.mubr.bf16.mxu0 0
        %1882 = vmatmul.mubr.bf16.gmra.mrb[0].mxu0 %v1638
        %v1883 = vpop.f32.mrb[0].mxu0
        %v1884 = vadd.f32 0.0, %v1883
        %v1885 = vpop.f32.mrb[0].mxu0
        %v1886 = vpop.f32.mrb[0].mxu0
        %v1887 = vadd.f32 0.0, %v1886
        %v1888 = vpop.f32.mrb[0].mxu0
        %1889 = vmatprep.mubr.bf16.mxu0 0
        %1890 = vmatmul.mubr.bf16.gmra.mrb[0].mxu0 %v1655
        %v1891 = vpop.f32.mrb[0].mxu0
        %v1892 = vadd.f32 0.0, %v1891
        %v1893 = vpop.f32.mrb[0].mxu0
        %v1894 = vpop.f32.mrb[0].mxu0
        %v1895 = vadd.f32 0.0, %v1894
        %v1896 = vpop.f32.mrb[0].mxu0
        %1897 = vdwg.mxu0
        %v1898 = vadd.f32 %v1241, %v1772
        %v1899 = vadd.f32 %v1244, %v1775
        %v1900 = vadd.f32 %v1249, %v1780
        %v1901 = vadd.f32 %v1252, %v1783
        %v1902 = vadd.f32 %v1257, %v1788
        %v1903 = vadd.f32 %v1260, %v1791
        %v1904 = vadd.f32 %v1265, %v1796
        %v1905 = vadd.f32 %v1268, %v1799
        %v1906 = vadd.f32 %v1273, %v1804
        %v1907 = vadd.f32 %v1276, %v1807
        %v1908 = vadd.f32 %v1281, %v1812
        %v1909 = vadd.f32 %v1284, %v1815
        %v1910 = vadd.f32 %v1289, %v1820
        %v1911 = vadd.f32 %v1292, %v1823
        %v1912 = vadd.f32 %v1297, %v1828
        %v1913 = vadd.f32 %v1300, %v1831
        %v1914 = vadd.f32 %v1305, %v1836
        %v1915 = vadd.f32 %v1308, %v1839
        %v1916 = vadd.f32 %v1313, %v1844
        %v1917 = vadd.f32 %v1316, %v1847
        %v1918 = vadd.f32 %v1321, %v1852
        %v1919 = vadd.f32 %v1324, %v1855
        %v1920 = vadd.f32 %v1329, %v1860
        %v1921 = vadd.f32 %v1332, %v1863
        %v1922 = vadd.f32 %v1337, %v1868
        %v1923 = vadd.f32 %v1340, %v1871
        %v1924 = vadd.f32 %v1345, %v1876
        %v1925 = vadd.f32 %v1348, %v1879
        %v1926 = vadd.f32 %v1353, %v1884
        %v1927 = vadd.f32 %v1356, %v1887
        %v1928 = vadd.f32 %v1361, %v1892
        %v1929 = vadd.f32 %v1364, %v1895
        %v1930 = vld [vmem:[%s246] sm:$0xf8]
        %v1931 = vld [vmem:[%s246 + $0x8] sm:$0xf]
        %v1932 = vld [vmem:[%s246 + $0x10] sm:$0xf8]
        %v1933 = vld [vmem:[%s246 + $0x18] sm:$0xf]
        %v1934 = vld [vmem:[%s246 + $0x20] sm:$0xf8]
        %v1935 = vld [vmem:[%s246 + $0x28] sm:$0xf]
        %v1936 = vld [vmem:[%s246 + $0x30] sm:$0xf8]
        %v1937 = vld [vmem:[%s246 + $0x38] sm:$0xf]
        %v1938 = vld [vmem:[%s246 + $0x40] sm:$0xf8]
        %v1939 = vld [vmem:[%s246 + $0x48] sm:$0xf]
        %v1940 = vld [vmem:[%s246 + $0x50] sm:$0xf8]
        %v1941 = vld [vmem:[%s246 + $0x58] sm:$0xf]
        %v1942 = vld [vmem:[%s246 + $0x60] sm:$0xf8]
        %v1943 = vld [vmem:[%s246 + $0x68] sm:$0xf]
        %v1944 = vld [vmem:[%s246 + $0x70] sm:$0xf8]
        %v1945 = vld [vmem:[%s246 + $0x78] sm:$0xf]
        %v1946 = vld [vmem:[%s246 + $0x80] sm:$0xf8]
        %v1947 = vld [vmem:[%s246 + $0x88] sm:$0xf]
        %v1948 = vld [vmem:[%s246 + $0x90] sm:$0xf8]
        %v1949 = vld [vmem:[%s246 + $0x98] sm:$0xf]
        %v1950 = vld [vmem:[%s246 + $0xa0] sm:$0xf8]
        %v1951 = vld [vmem:[%s246 + $0xa8] sm:$0xf]
        %v1952 = vld [vmem:[%s246 + $0xb0] sm:$0xf8]
        %v1953 = vld [vmem:[%s246 + $0xb8] sm:$0xf]
        %v1954 = vld [vmem:[%s246 + $0xc0] sm:$0xf8]
        %v1955 = vld [vmem:[%s246 + $0xc8] sm:$0xf]
        %v1956 = vld [vmem:[%s246 + $0xd0] sm:$0xf8]
        %v1957 = vld [vmem:[%s246 + $0xd8] sm:$0xf]
        %v1958 = vld [vmem:[%s246 + $0xe0] sm:$0xf8]
        %v1959 = vld [vmem:[%s246 + $0xe8] sm:$0xf]
        %v1960 = vld [vmem:[%s246 + $0xf0] sm:$0xf8]
        %v1961 = vld [vmem:[%s246 + $0xf8] sm:$0xf]
        %v1963 = vshrl.u32 %v1930, 16
        %v1965 = vrot.slane %v1963, 3
        %v1966 = vshll.u32 %v1930, 16
        %v1968 = vrot.slane %v1966, 4
        %v1969 = vor.u32 %v1965, %v1968
        %v1971 = vshrl.u32 %v1931, 16
        %v1973 = vrot.slane %v1971, 3
        %v1974 = vshll.u32 %v1931, 16
        %v1976 = vrot.slane %v1974, 4
        %v1977 = vor.u32 %v1973, %v1976
        %v1978 = vsel %vm514, %v1969, %v1977
        %v1980 = vshrl.u32 %v1932, 16
        %v1982 = vrot.slane %v1980, 3
        %v1983 = vshll.u32 %v1932, 16
        %v1985 = vrot.slane %v1983, 4
        %v1986 = vor.u32 %v1982, %v1985
        %v1988 = vshrl.u32 %v1933, 16
        %v1990 = vrot.slane %v1988, 3
        %v1991 = vshll.u32 %v1933, 16
        %v1993 = vrot.slane %v1991, 4
        %v1994 = vor.u32 %v1990, %v1993
        %v1995 = vsel %vm514, %v1986, %v1994
        %v1997 = vshrl.u32 %v1934, 16
        %v1999 = vrot.slane %v1997, 3
        %v2000 = vshll.u32 %v1934, 16
        %v2002 = vrot.slane %v2000, 4
        %v2003 = vor.u32 %v1999, %v2002
        %v2005 = vshrl.u32 %v1935, 16
        %v2007 = vrot.slane %v2005, 3
        %v2008 = vshll.u32 %v1935, 16
        %v2010 = vrot.slane %v2008, 4
        %v2011 = vor.u32 %v2007, %v2010
        %v2012 = vsel %vm514, %v2003, %v2011
        %v2014 = vshrl.u32 %v1936, 16
        %v2016 = vrot.slane %v2014, 3
        %v2017 = vshll.u32 %v1936, 16
        %v2019 = vrot.slane %v2017, 4
        %v2020 = vor.u32 %v2016, %v2019
        %v2022 = vshrl.u32 %v1937, 16
        %v2024 = vrot.slane %v2022, 3
        %v2025 = vshll.u32 %v1937, 16
        %v2027 = vrot.slane %v2025, 4
        %v2028 = vor.u32 %v2024, %v2027
        %v2029 = vsel %vm514, %v2020, %v2028
        %v2031 = vshrl.u32 %v1938, 16
        %v2033 = vrot.slane %v2031, 3
        %v2034 = vshll.u32 %v1938, 16
        %v2036 = vrot.slane %v2034, 4
        %v2037 = vor.u32 %v2033, %v2036
        %v2039 = vshrl.u32 %v1939, 16
        %v2041 = vrot.slane %v2039, 3
        %v2042 = vshll.u32 %v1939, 16
        %v2044 = vrot.slane %v2042, 4
        %v2045 = vor.u32 %v2041, %v2044
        %v2046 = vsel %vm514, %v2037, %v2045
        %v2048 = vshrl.u32 %v1940, 16
        %v2050 = vrot.slane %v2048, 3
        %v2051 = vshll.u32 %v1940, 16
        %v2053 = vrot.slane %v2051, 4
        %v2054 = vor.u32 %v2050, %v2053
        %v2056 = vshrl.u32 %v1941, 16
        %v2058 = vrot.slane %v2056, 3
        %v2059 = vshll.u32 %v1941, 16
        %v2061 = vrot.slane %v2059, 4
        %v2062 = vor.u32 %v2058, %v2061
        %v2063 = vsel %vm514, %v2054, %v2062
        %v2065 = vshrl.u32 %v1942, 16
        %v2067 = vrot.slane %v2065, 3
        %v2068 = vshll.u32 %v1942, 16
        %v2070 = vrot.slane %v2068, 4
        %v2071 = vor.u32 %v2067, %v2070
        %v2073 = vshrl.u32 %v1943, 16
        %v2075 = vrot.slane %v2073, 3
        %v2076 = vshll.u32 %v1943, 16
        %v2078 = vrot.slane %v2076, 4
        %v2079 = vor.u32 %v2075, %v2078
        %v2080 = vsel %vm514, %v2071, %v2079
        %v2082 = vshrl.u32 %v1944, 16
        %v2084 = vrot.slane %v2082, 3
        %v2085 = vshll.u32 %v1944, 16
        %v2087 = vrot.slane %v2085, 4
        %v2088 = vor.u32 %v2084, %v2087
        %v2090 = vshrl.u32 %v1945, 16
        %v2092 = vrot.slane %v2090, 3
        %v2093 = vshll.u32 %v1945, 16
        %v2095 = vrot.slane %v2093, 4
        %v2096 = vor.u32 %v2092, %v2095
        %v2097 = vsel %vm514, %v2088, %v2096
        %v2099 = vshrl.u32 %v1946, 16
        %v2101 = vrot.slane %v2099, 3
        %v2102 = vshll.u32 %v1946, 16
        %v2104 = vrot.slane %v2102, 4
        %v2105 = vor.u32 %v2101, %v2104
        %v2107 = vshrl.u32 %v1947, 16
        %v2109 = vrot.slane %v2107, 3
        %v2110 = vshll.u32 %v1947, 16
        %v2112 = vrot.slane %v2110, 4
        %v2113 = vor.u32 %v2109, %v2112
        %v2114 = vsel %vm514, %v2105, %v2113
        %v2116 = vshrl.u32 %v1948, 16
        %v2118 = vrot.slane %v2116, 3
        %v2119 = vshll.u32 %v1948, 16
        %v2121 = vrot.slane %v2119, 4
        %v2122 = vor.u32 %v2118, %v2121
        %v2124 = vshrl.u32 %v1949, 16
        %v2126 = vrot.slane %v2124, 3
        %v2127 = vshll.u32 %v1949, 16
        %v2129 = vrot.slane %v2127, 4
        %v2130 = vor.u32 %v2126, %v2129
        %v2131 = vsel %vm514, %v2122, %v2130
        %v2133 = vshrl.u32 %v1950, 16
        %v2135 = vrot.slane %v2133, 3
        %v2136 = vshll.u32 %v1950, 16
        %v2138 = vrot.slane %v2136, 4
        %v2139 = vor.u32 %v2135, %v2138
        %v2141 = vshrl.u32 %v1951, 16
        %v2143 = vrot.slane %v2141, 3
        %v2144 = vshll.u32 %v1951, 16
        %v2146 = vrot.slane %v2144, 4
        %v2147 = vor.u32 %v2143, %v2146
        %v2148 = vsel %vm514, %v2139, %v2147
        %v2150 = vshrl.u32 %v1952, 16
        %v2152 = vrot.slane %v2150, 3
        %v2153 = vshll.u32 %v1952, 16
        %v2155 = vrot.slane %v2153, 4
        %v2156 = vor.u32 %v2152, %v2155
        %v2158 = vshrl.u32 %v1953, 16
        %v2160 = vrot.slane %v2158, 3
        %v2161 = vshll.u32 %v1953, 16
        %v2163 = vrot.slane %v2161, 4
        %v2164 = vor.u32 %v2160, %v2163
        %v2165 = vsel %vm514, %v2156, %v2164
        %v2167 = vshrl.u32 %v1954, 16
        %v2169 = vrot.slane %v2167, 3
        %v2170 = vshll.u32 %v1954, 16
        %v2172 = vrot.slane %v2170, 4
        %v2173 = vor.u32 %v2169, %v2172
        %v2175 = vshrl.u32 %v1955, 16
        %v2177 = vrot.slane %v2175, 3
        %v2178 = vshll.u32 %v1955, 16
        %v2180 = vrot.slane %v2178, 4
        %v2181 = vor.u32 %v2177, %v2180
        %v2182 = vsel %vm514, %v2173, %v2181
        %v2184 = vshrl.u32 %v1956, 16
        %v2186 = vrot.slane %v2184, 3
        %v2187 = vshll.u32 %v1956, 16
        %v2189 = vrot.slane %v2187, 4
        %v2190 = vor.u32 %v2186, %v2189
        %v2192 = vshrl.u32 %v1957, 16
        %v2194 = vrot.slane %v2192, 3
        %v2195 = vshll.u32 %v1957, 16
        %v2197 = vrot.slane %v2195, 4
        %v2198 = vor.u32 %v2194, %v2197
        %v2199 = vsel %vm514, %v2190, %v2198
        %v2201 = vshrl.u32 %v1958, 16
        %v2203 = vrot.slane %v2201, 3
        %v2204 = vshll.u32 %v1958, 16
        %v2206 = vrot.slane %v2204, 4
        %v2207 = vor.u32 %v2203, %v2206
        %v2209 = vshrl.u32 %v1959, 16
        %v2211 = vrot.slane %v2209, 3
        %v2212 = vshll.u32 %v1959, 16
        %v2214 = vrot.slane %v2212, 4
        %v2215 = vor.u32 %v2211, %v2214
        %v2216 = vsel %vm514, %v2207, %v2215
        %v2218 = vshrl.u32 %v1960, 16
        %v2220 = vrot.slane %v2218, 3
        %v2221 = vshll.u32 %v1960, 16
        %v2223 = vrot.slane %v2221, 4
        %v2224 = vor.u32 %v2220, %v2223
        %v2226 = vshrl.u32 %v1961, 16
        %v2228 = vrot.slane %v2226, 3
        %v2229 = vshll.u32 %v1961, 16
        %v2231 = vrot.slane %v2229, 4
        %v2232 = vor.u32 %v2228, %v2231
        %v2233 = vsel %vm514, %v2224, %v2232
        %s2250 = scalar_lea.vmem [#allocation4], 192
        %v2251 = vld [vmem:[%s2250] sm:$0xf]
        %v2252 = vld [vmem:[%s2250 + $0x4] sm:$0xf]
        %v2253 = vld [vmem:[%s2250 + $0x8] sm:$0xf]
        %v2254 = vld [vmem:[%s2250 + $0xc] sm:$0xf]
        %v2255 = vld [vmem:[%s2250 + $0x10] sm:$0xf]
        %v2256 = vld [vmem:[%s2250 + $0x14] sm:$0xf]
        %v2257 = vld [vmem:[%s2250 + $0x18] sm:$0xf]
        %v2258 = vld [vmem:[%s2250 + $0x1c] sm:$0xf]
        %v2259 = vld [vmem:[%s2250 + $0x20] sm:$0xf]
        %v2260 = vld [vmem:[%s2250 + $0x24] sm:$0xf]
        %v2261 = vld [vmem:[%s2250 + $0x28] sm:$0xf]
        %v2262 = vld [vmem:[%s2250 + $0x2c] sm:$0xf]
        %v2263 = vld [vmem:[%s2250 + $0x30] sm:$0xf]
        %v2264 = vld [vmem:[%s2250 + $0x34] sm:$0xf]
        %v2265 = vld [vmem:[%s2250 + $0x38] sm:$0xf]
        %v2266 = vld [vmem:[%s2250 + $0x3c] sm:$0xf]
        %v2283 = vunpack.c.l.b16 %v2251
        %v2284 = vunpack.c.l.b16 %v2252
        %v2285 = vunpack.c.l.b16 %v2253
        %v2286 = vunpack.c.l.b16 %v2254
        %v2287 = vunpack.c.l.b16 %v2255
        %v2288 = vunpack.c.l.b16 %v2256
        %v2289 = vunpack.c.l.b16 %v2257
        %v2290 = vunpack.c.l.b16 %v2258
        %v2291 = vunpack.c.l.b16 %v2259
        %v2292 = vunpack.c.l.b16 %v2260
        %v2293 = vunpack.c.l.b16 %v2261
        %v2294 = vunpack.c.l.b16 %v2262
        %v2295 = vunpack.c.l.b16 %v2263
        %v2296 = vunpack.c.l.b16 %v2264
        %v2297 = vunpack.c.l.b16 %v2265
        %v2298 = vunpack.c.l.b16 %v2266
        %v2299 = vpack.c.b16 %v2284, %v2283
        %v2300 = vpack.c.b16 %v2286, %v2285
        %v2301 = vpack.c.b16 %v2288, %v2287
        %v2302 = vpack.c.b16 %v2290, %v2289
        %v2303 = vpack.c.b16 %v2292, %v2291
        %v2304 = vpack.c.b16 %v2294, %v2293
        %v2305 = vpack.c.b16 %v2296, %v2295
        %v2306 = vpack.c.b16 %v2298, %v2297
        %2315 = vmatprep.subr.bf16.mxu0 0
        %2316 = vmatpush1.bf16.msra.mxu0 %v2299
        %2317 = vmatprep.subr.bf16.mxu0 0
        %2318 = vmatpush1.bf16.msra.mxu0 %v2300
        %2319 = vmatprep.subr.bf16.mxu0 0
        %2320 = vmatpush1.bf16.msra.mxu0 %v2301
        %2321 = vmatprep.subr.bf16.mxu0 0
        %2322 = vmatpush1.bf16.msra.mxu0 %v2302
        %2323 = vmatprep.subr.bf16.mxu0 0
        %2324 = vmatpush1.bf16.msra.mxu0 %v2303
        %2325 = vmatprep.subr.bf16.mxu0 0
        %2326 = vmatpush1.bf16.msra.mxu0 %v2304
        %2327 = vmatprep.subr.bf16.mxu0 0
        %2328 = vmatpush1.bf16.msra.mxu0 %v2305
        %2329 = vmatprep.subr.bf16.mxu0 0
        %2330 = vmatpush1.bf16.msra.mxu0 %v2306
        %2331 = vmatprep.subr.bf16.mxu0 0
        %2332 = vmatpush1.bf16.msra.mxu0 0
        %2333 = vmatprep.subr.bf16.mxu0 0
        %2334 = vmatpush1.bf16.msra.mxu0 0
        %2335 = vmatprep.subr.bf16.mxu0 0
        %2336 = vmatpush1.bf16.msra.mxu0 0
        %2337 = vmatprep.subr.bf16.mxu0 0
        %2338 = vmatpush1.bf16.msra.mxu0 0
        %2339 = vmatprep.subr.bf16.mxu0 0
        %2340 = vmatpush1.bf16.msra.mxu0 0
        %2341 = vmatprep.subr.bf16.mxu0 0
        %2342 = vmatpush1.bf16.msra.mxu0 0
        %2343 = vmatprep.subr.bf16.mxu0 0
        %2344 = vmatpush1.bf16.msra.mxu0 0
        %2345 = vmatprep.subr.bf16.mxu0 0
        %2346 = vmatpush1.bf16.msra.mxu0 0
        %2347 = vmatprep.mubr.bf16.mxu0 0
        %2348 = vmatmul.mubr.bf16.gmra.mrb[0].mxu0 %v1978
        %v2349 = vpop.f32.mrb[0].mxu0
        %v2350 = vadd.f32 0.0, %v2349
        %v2351 = vpop.f32.mrb[0].mxu0
        %v2352 = vpop.f32.mrb[0].mxu0
        %v2353 = vadd.f32 0.0, %v2352
        %v2354 = vpop.f32.mrb[0].mxu0
        %2355 = vmatprep.mubr.bf16.mxu0 0
        %2356 = vmatmul.mubr.bf16.gmra.mrb[0].mxu0 %v1995
        %v2357 = vpop.f32.mrb[0].mxu0
        %v2358 = vadd.f32 0.0, %v2357
        %v2359 = vpop.f32.mrb[0].mxu0
        %v2360 = vpop.f32.mrb[0].mxu0
        %v2361 = vadd.f32 0.0, %v2360
        %v2362 = vpop.f32.mrb[0].mxu0
        %2363 = vmatprep.mubr.bf16.mxu0 0
        %2364 = vmatmul.mubr.bf16.gmra.mrb[0].mxu0 %v2012
        %v2365 = vpop.f32.mrb[0].mxu0
        %v2366 = vadd.f32 0.0, %v2365
        %v2367 = vpop.f32.mrb[0].mxu0
        %v2368 = vpop.f32.mrb[0].mxu0
        %v2369 = vadd.f32 0.0, %v2368
        %v2370 = vpop.f32.mrb[0].mxu0
        %2371 = vmatprep.mubr.bf16.mxu0 0
        %2372 = vmatmul.mubr.bf16.gmra.mrb[0].mxu0 %v2029
        %v2373 = vpop.f32.mrb[0].mxu0
        %v2374 = vadd.f32 0.0, %v2373
        %v2375 = vpop.f32.mrb[0].mxu0
        %v2376 = vpop.f32.mrb[0].mxu0
        %v2377 = vadd.f32 0.0, %v2376
        %v2378 = vpop.f32.mrb[0].mxu0
        %2379 = vmatprep.mubr.bf16.mxu0 0
        %2380 = vmatmul.mubr.bf16.gmra.mrb[0].mxu0 %v2046
        %v2381 = vpop.f32.mrb[0].mxu0
        %v2382 = vadd.f32 0.0, %v2381
        %v2383 = vpop.f32.mrb[0].mxu0
        %v2384 = vpop.f32.mrb[0].mxu0
        %v2385 = vadd.f32 0.0, %v2384
        %v2386 = vpop.f32.mrb[0].mxu0
        %2387 = vmatprep.mubr.bf16.mxu0 0
        %2388 = vmatmul.mubr.bf16.gmra.mrb[0].mxu0 %v2063
        %v2389 = vpop.f32.mrb[0].mxu0
        %v2390 = vadd.f32 0.0, %v2389
        %v2391 = vpop.f32.mrb[0].mxu0
        %v2392 = vpop.f32.mrb[0].mxu0
        %v2393 = vadd.f32 0.0, %v2392
        %v2394 = vpop.f32.mrb[0].mxu0
        %2395 = vmatprep.mubr.bf16.mxu0 0
        %2396 = vmatmul.mubr.bf16.gmra.mrb[0].mxu0 %v2080
        %v2397 = vpop.f32.mrb[0].mxu0
        %v2398 = vadd.f32 0.0, %v2397
        %v2399 = vpop.f32.mrb[0].mxu0
        %v2400 = vpop.f32.mrb[0].mxu0
        %v2401 = vadd.f32 0.0, %v2400
        %v2402 = vpop.f32.mrb[0].mxu0
        %2403 = vmatprep.mubr.bf16.mxu0 0
        %2404 = vmatmul.mubr.bf16.gmra.mrb[0].mxu0 %v2097
        %v2405 = vpop.f32.mrb[0].mxu0
        %v2406 = vadd.f32 0.0, %v2405
        %v2407 = vpop.f32.mrb[0].mxu0
        %v2408 = vpop.f32.mrb[0].mxu0
        %v2409 = vadd.f32 0.0, %v2408
        %v2410 = vpop.f32.mrb[0].mxu0
        %2411 = vmatprep.mubr.bf16.mxu0 0
        %2412 = vmatmul.mubr.bf16.gmra.mrb[0].mxu0 %v2114
        %v2413 = vpop.f32.mrb[0].mxu0
        %v2414 = vadd.f32 0.0, %v2413
        %v2415 = vpop.f32.mrb[0].mxu0
        %v2416 = vpop.f32.mrb[0].mxu0
        %v2417 = vadd.f32 0.0, %v2416
        %v2418 = vpop.f32.mrb[0].mxu0
        %2419 = vmatprep.mubr.bf16.mxu0 0
        %2420 = vmatmul.mubr.bf16.gmra.mrb[0].mxu0 %v2131
        %v2421 = vpop.f32.mrb[0].mxu0
        %v2422 = vadd.f32 0.0, %v2421
        %v2423 = vpop.f32.mrb[0].mxu0
        %v2424 = vpop.f32.mrb[0].mxu0
        %v2425 = vadd.f32 0.0, %v2424
        %v2426 = vpop.f32.mrb[0].mxu0
        %2427 = vmatprep.mubr.bf16.mxu0 0
        %2428 = vmatmul.mubr.bf16.gmra.mrb[0].mxu0 %v2148
        %v2429 = vpop.f32.mrb[0].mxu0
        %v2430 = vadd.f32 0.0, %v2429
        %v2431 = vpop.f32.mrb[0].mxu0
        %v2432 = vpop.f32.mrb[0].mxu0
        %v2433 = vadd.f32 0.0, %v2432
        %v2434 = vpop.f32.mrb[0].mxu0
        %2435 = vmatprep.mubr.bf16.mxu0 0
        %2436 = vmatmul.mubr.bf16.gmra.mrb[0].mxu0 %v2165
        %v2437 = vpop.f32.mrb[0].mxu0
        %v2438 = vadd.f32 0.0, %v2437
        %v2439 = vpop.f32.mrb[0].mxu0
        %v2440 = vpop.f32.mrb[0].mxu0
        %v2441 = vadd.f32 0.0, %v2440
        %v2442 = vpop.f32.mrb[0].mxu0
        %2443 = vmatprep.mubr.bf16.mxu0 0
        %2444 = vmatmul.mubr.bf16.gmra.mrb[0].mxu0 %v2182
        %v2445 = vpop.f32.mrb[0].mxu0
        %v2446 = vadd.f32 0.0, %v2445
        %v2447 = vpop.f32.mrb[0].mxu0
        %v2448 = vpop.f32.mrb[0].mxu0
        %v2449 = vadd.f32 0.0, %v2448
        %v2450 = vpop.f32.mrb[0].mxu0
        %2451 = vmatprep.mubr.bf16.mxu0 0
        %2452 = vmatmul.mubr.bf16.gmra.mrb[0].mxu0 %v2199
        %v2453 = vpop.f32.mrb[0].mxu0
        %v2454 = vadd.f32 0.0, %v2453
        %v2455 = vpop.f32.mrb[0].mxu0
        %v2456 = vpop.f32.mrb[0].mxu0
        %v2457 = vadd.f32 0.0, %v2456
        %v2458 = vpop.f32.mrb[0].mxu0
        %2459 = vmatprep.mubr.bf16.mxu0 0
        %2460 = vmatmul.mubr.bf16.gmra.mrb[0].mxu0 %v2216
        %v2461 = vpop.f32.mrb[0].mxu0
        %v2462 = vadd.f32 0.0, %v2461
        %v2463 = vpop.f32.mrb[0].mxu0
        %v2464 = vpop.f32.mrb[0].mxu0
        %v2465 = vadd.f32 0.0, %v2464
        %v2466 = vpop.f32.mrb[0].mxu0
        %2467 = vmatprep.mubr.bf16.mxu0 0
        %2468 = vmatmul.mubr.bf16.gmra.mrb[0].mxu0 %v2233
        %v2469 = vpop.f32.mrb[0].mxu0
        %v2470 = vadd.f32 0.0, %v2469
        %v2471 = vpop.f32.mrb[0].mxu0
        %v2472 = vpop.f32.mrb[0].mxu0
        %v2473 = vadd.f32 0.0, %v2472
        %v2474 = vpop.f32.mrb[0].mxu0
        %2475 = vdwg.mxu0
        %v2476 = vadd.f32 %v1898, %v2350
        %v2477 = vadd.f32 %v1899, %v2353
        %v2478 = vadd.f32 %v1900, %v2358
        %v2479 = vadd.f32 %v1901, %v2361
        %v2480 = vadd.f32 %v1902, %v2366
        %v2481 = vadd.f32 %v1903, %v2369
        %v2482 = vadd.f32 %v1904, %v2374
        %v2483 = vadd.f32 %v1905, %v2377
        %v2484 = vadd.f32 %v1906, %v2382
        %v2485 = vadd.f32 %v1907, %v2385
        %v2486 = vadd.f32 %v1908, %v2390
        %v2487 = vadd.f32 %v1909, %v2393
        %v2488 = vadd.f32 %v1910, %v2398
        %v2489 = vadd.f32 %v1911, %v2401
        %v2490 = vadd.f32 %v1912, %v2406
        %v2491 = vadd.f32 %v1913, %v2409
        %v2492 = vadd.f32 %v1914, %v2414
        %v2493 = vadd.f32 %v1915, %v2417
        %v2494 = vadd.f32 %v1916, %v2422
        %v2495 = vadd.f32 %v1917, %v2425
        %v2496 = vadd.f32 %v1918, %v2430
        %v2497 = vadd.f32 %v1919, %v2433
        %v2498 = vadd.f32 %v1920, %v2438
        %v2499 = vadd.f32 %v1921, %v2441
        %v2500 = vadd.f32 %v1922, %v2446
        %v2501 = vadd.f32 %v1923, %v2449
        %v2502 = vadd.f32 %v1924, %v2454
        %v2503 = vadd.f32 %v1925, %v2457
        %v2504 = vadd.f32 %v1926, %v2462
        %v2505 = vadd.f32 %v1927, %v2465
        %v2506 = vadd.f32 %v1928, %v2470
        %v2507 = vadd.f32 %v1929, %v2473
        %v2508 = vld [vmem:[%s246] sm:$0xf0]
        %v2509 = vld [vmem:[%s246 + $0x10] sm:$0xf0]
        %v2510 = vld [vmem:[%s246 + $0x20] sm:$0xf0]
        %v2511 = vld [vmem:[%s246 + $0x30] sm:$0xf0]
        %v2512 = vld [vmem:[%s246 + $0x40] sm:$0xf0]
        %v2513 = vld [vmem:[%s246 + $0x50] sm:$0xf0]
        %v2514 = vld [vmem:[%s246 + $0x60] sm:$0xf0]
        %v2515 = vld [vmem:[%s246 + $0x70] sm:$0xf0]
        %v2516 = vld [vmem:[%s246 + $0x80] sm:$0xf0]
        %v2517 = vld [vmem:[%s246 + $0x90] sm:$0xf0]
        %v2518 = vld [vmem:[%s246 + $0xa0] sm:$0xf0]
        %v2519 = vld [vmem:[%s246 + $0xb0] sm:$0xf0]
        %v2520 = vld [vmem:[%s246 + $0xc0] sm:$0xf0]
        %v2521 = vld [vmem:[%s246 + $0xd0] sm:$0xf0]
        %v2522 = vld [vmem:[%s246 + $0xe0] sm:$0xf0]
        %v2523 = vld [vmem:[%s246 + $0xf0] sm:$0xf0]
        %v2556 = vrot.slane %v2508, 4
        %v2557 = vrot.slane %v1931, 4
        %v2558 = vsel %vm867, %v2556, %v2557
        %v2559 = vrot.slane %v2509, 4
        %v2560 = vrot.slane %v1933, 4
        %v2561 = vsel %vm867, %v2559, %v2560
        %v2562 = vrot.slane %v2510, 4
        %v2563 = vrot.slane %v1935, 4
        %v2564 = vsel %vm867, %v2562, %v2563
        %v2565 = vrot.slane %v2511, 4
        %v2566 = vrot.slane %v1937, 4
        %v2567 = vsel %vm867, %v2565, %v2566
        %v2568 = vrot.slane %v2512, 4
        %v2569 = vrot.slane %v1939, 4
        %v2570 = vsel %vm867, %v2568, %v2569
        %v2571 = vrot.slane %v2513, 4
        %v2572 = vrot.slane %v1941, 4
        %v2573 = vsel %vm867, %v2571, %v2572
        %v2574 = vrot.slane %v2514, 4
        %v2575 = vrot.slane %v1943, 4
        %v2576 = vsel %vm867, %v2574, %v2575
        %v2577 = vrot.slane %v2515, 4
        %v2578 = vrot.slane %v1945, 4
        %v2579 = vsel %vm867, %v2577, %v2578
        %v2580 = vrot.slane %v2516, 4
        %v2581 = vrot.slane %v1947, 4
        %v2582 = vsel %vm867, %v2580, %v2581
        %v2583 = vrot.slane %v2517, 4
        %v2584 = vrot.slane %v1949, 4
        %v2585 = vsel %vm867, %v2583, %v2584
        %v2586 = vrot.slane %v2518, 4
        %v2587 = vrot.slane %v1951, 4
        %v2588 = vsel %vm867, %v2586, %v2587
        %v2589 = vrot.slane %v2519, 4
        %v2590 = vrot.slane %v1953, 4
        %v2591 = vsel %vm867, %v2589, %v2590
        %v2592 = vrot.slane %v2520, 4
        %v2593 = vrot.slane %v1955, 4
        %v2594 = vsel %vm867, %v2592, %v2593
        %v2595 = vrot.slane %v2521, 4
        %v2596 = vrot.slane %v1957, 4
        %v2597 = vsel %vm867, %v2595, %v2596
        %v2598 = vrot.slane %v2522, 4
        %v2599 = vrot.slane %v1959, 4
        %v2600 = vsel %vm867, %v2598, %v2599
        %v2601 = vrot.slane %v2523, 4
        %v2602 = vrot.slane %v1961, 4
        %v2603 = vsel %vm867, %v2601, %v2602
        %s2620 = scalar_lea.vmem [#allocation4], 256
        %v2621 = vld [vmem:[%s2620] sm:$0xf]
        %v2622 = vld [vmem:[%s2620 + $0x4] sm:$0xf]
        %v2623 = vld [vmem:[%s2620 + $0x8] sm:$0xf]
        %v2624 = vld [vmem:[%s2620 + $0xc] sm:$0xf]
        %v2625 = vld [vmem:[%s2620 + $0x10] sm:$0xf]
        %v2626 = vld [vmem:[%s2620 + $0x14] sm:$0xf]
        %v2627 = vld [vmem:[%s2620 + $0x18] sm:$0xf]
        %v2628 = vld [vmem:[%s2620 + $0x1c] sm:$0xf]
        %v2629 = vld [vmem:[%s2620 + $0x20] sm:$0xf]
        %v2630 = vld [vmem:[%s2620 + $0x24] sm:$0xf]
        %v2631 = vld [vmem:[%s2620 + $0x28] sm:$0xf]
        %v2632 = vld [vmem:[%s2620 + $0x2c] sm:$0xf]
        %v2633 = vld [vmem:[%s2620 + $0x30] sm:$0xf]
        %v2634 = vld [vmem:[%s2620 + $0x34] sm:$0xf]
        %v2635 = vld [vmem:[%s2620 + $0x38] sm:$0xf]
        %v2636 = vld [vmem:[%s2620 + $0x3c] sm:$0xf]
        %v2653 = vunpack.c.l.b16 %v2621
        %v2654 = vunpack.c.l.b16 %v2622
        %v2655 = vunpack.c.l.b16 %v2623
        %v2656 = vunpack.c.l.b16 %v2624
        %v2657 = vunpack.c.l.b16 %v2625
        %v2658 = vunpack.c.l.b16 %v2626
        %v2659 = vunpack.c.l.b16 %v2627
        %v2660 = vunpack.c.l.b16 %v2628
        %v2661 = vunpack.c.l.b16 %v2629
        %v2662 = vunpack.c.l.b16 %v2630
        %v2663 = vunpack.c.l.b16 %v2631
        %v2664 = vunpack.c.l.b16 %v2632
        %v2665 = vunpack.c.l.b16 %v2633
        %v2666 = vunpack.c.l.b16 %v2634
        %v2667 = vunpack.c.l.b16 %v2635
        %v2668 = vunpack.c.l.b16 %v2636
        %v2669 = vpack.c.b16 %v2654, %v2653
        %v2670 = vpack.c.b16 %v2656, %v2655
        %v2671 = vpack.c.b16 %v2658, %v2657
        %v2672 = vpack.c.b16 %v2660, %v2659
        %v2673 = vpack.c.b16 %v2662, %v2661
        %v2674 = vpack.c.b16 %v2664, %v2663
        %v2675 = vpack.c.b16 %v2666, %v2665
        %v2676 = vpack.c.b16 %v2668, %v2667
        %2685 = vmatprep.subr.bf16.mxu0 0
        %2686 = vmatpush1.bf16.msra.mxu0 %v2669
        %2687 = vmatprep.subr.bf16.mxu0 0
        %2688 = vmatpush1.bf16.msra.mxu0 %v2670
        %2689 = vmatprep.subr.bf16.mxu0 0
        %2690 = vmatpush1.bf16.msra.mxu0 %v2671
        %2691 = vmatprep.subr.bf16.mxu0 0
        %2692 = vmatpush1.bf16.msra.mxu0 %v2672
        %2693 = vmatprep.subr.bf16.mxu0 0
        %2694 = vmatpush1.bf16.msra.mxu0 %v2673
        %2695 = vmatprep.subr.bf16.mxu0 0
        %2696 = vmatpush1.bf16.msra.mxu0 %v2674
        %2697 = vmatprep.subr.bf16.mxu0 0
        %2698 = vmatpush1.bf16.msra.mxu0 %v2675
        %2699 = vmatprep.subr.bf16.mxu0 0
        %2700 = vmatpush1.bf16.msra.mxu0 %v2676
        %2701 = vmatprep.subr.bf16.mxu0 0
        %2702 = vmatpush1.bf16.msra.mxu0 0
        %2703 = vmatprep.subr.bf16.mxu0 0
        %2704 = vmatpush1.bf16.msra.mxu0 0
        %2705 = vmatprep.subr.bf16.mxu0 0
        %2706 = vmatpush1.bf16.msra.mxu0 0
        %2707 = vmatprep.subr.bf16.mxu0 0
        %2708 = vmatpush1.bf16.msra.mxu0 0
        %2709 = vmatprep.subr.bf16.mxu0 0
        %2710 = vmatpush1.bf16.msra.mxu0 0
        %2711 = vmatprep.subr.bf16.mxu0 0
        %2712 = vmatpush1.bf16.msra.mxu0 0
        %2713 = vmatprep.subr.bf16.mxu0 0
        %2714 = vmatpush1.bf16.msra.mxu0 0
        %2715 = vmatprep.subr.bf16.mxu0 0
        %2716 = vmatpush1.bf16.msra.mxu0 0
        %2717 = vmatprep.mubr.bf16.mxu0 0
        %2718 = vmatmul.mubr.bf16.gmra.mrb[0].mxu0 %v2558
        %v2719 = vpop.f32.mrb[0].mxu0
        %v2720 = vadd.f32 0.0, %v2719
        %v2721 = vpop.f32.mrb[0].mxu0
        %v2722 = vpop.f32.mrb[0].mxu0
        %v2723 = vadd.f32 0.0, %v2722
        %v2724 = vpop.f32.mrb[0].mxu0
        %2725 = vmatprep.mubr.bf16.mxu0 0
        %2726 = vmatmul.mubr.bf16.gmra.mrb[0].mxu0 %v2561
        %v2727 = vpop.f32.mrb[0].mxu0
        %v2728 = vadd.f32 0.0, %v2727
        %v2729 = vpop.f32.mrb[0].mxu0
        %v2730 = vpop.f32.mrb[0].mxu0
        %v2731 = vadd.f32 0.0, %v2730
        %v2732 = vpop.f32.mrb[0].mxu0
        %2733 = vmatprep.mubr.bf16.mxu0 0
        %2734 = vmatmul.mubr.bf16.gmra.mrb[0].mxu0 %v2564
        %v2735 = vpop.f32.mrb[0].mxu0
        %v2736 = vadd.f32 0.0, %v2735
        %v2737 = vpop.f32.mrb[0].mxu0
        %v2738 = vpop.f32.mrb[0].mxu0
        %v2739 = vadd.f32 0.0, %v2738
        %v2740 = vpop.f32.mrb[0].mxu0
        %2741 = vmatprep.mubr.bf16.mxu0 0
        %2742 = vmatmul.mubr.bf16.gmra.mrb[0].mxu0 %v2567
        %v2743 = vpop.f32.mrb[0].mxu0
        %v2744 = vadd.f32 0.0, %v2743
        %v2745 = vpop.f32.mrb[0].mxu0
        %v2746 = vpop.f32.mrb[0].mxu0
        %v2747 = vadd.f32 0.0, %v2746
        %v2748 = vpop.f32.mrb[0].mxu0
        %2749 = vmatprep.mubr.bf16.mxu0 0
        %2750 = vmatmul.mubr.bf16.gmra.mrb[0].mxu0 %v2570
        %v2751 = vpop.f32.mrb[0].mxu0
        %v2752 = vadd.f32 0.0, %v2751
        %v2753 = vpop.f32.mrb[0].mxu0
        %v2754 = vpop.f32.mrb[0].mxu0
        %v2755 = vadd.f32 0.0, %v2754
        %v2756 = vpop.f32.mrb[0].mxu0
        %2757 = vmatprep.mubr.bf16.mxu0 0
        %2758 = vmatmul.mubr.bf16.gmra.mrb[0].mxu0 %v2573
        %v2759 = vpop.f32.mrb[0].mxu0
        %v2760 = vadd.f32 0.0, %v2759
        %v2761 = vpop.f32.mrb[0].mxu0
        %v2762 = vpop.f32.mrb[0].mxu0
        %v2763 = vadd.f32 0.0, %v2762
        %v2764 = vpop.f32.mrb[0].mxu0
        %2765 = vmatprep.mubr.bf16.mxu0 0
        %2766 = vmatmul.mubr.bf16.gmra.mrb[0].mxu0 %v2576
        %v2767 = vpop.f32.mrb[0].mxu0
        %v2768 = vadd.f32 0.0, %v2767
        %v2769 = vpop.f32.mrb[0].mxu0
        %v2770 = vpop.f32.mrb[0].mxu0
        %v2771 = vadd.f32 0.0, %v2770
        %v2772 = vpop.f32.mrb[0].mxu0
        %2773 = vmatprep.mubr.bf16.mxu0 0
        %2774 = vmatmul.mubr.bf16.gmra.mrb[0].mxu0 %v2579
        %v2775 = vpop.f32.mrb[0].mxu0
        %v2776 = vadd.f32 0.0, %v2775
        %v2777 = vpop.f32.mrb[0].mxu0
        %v2778 = vpop.f32.mrb[0].mxu0
        %v2779 = vadd.f32 0.0, %v2778
        %v2780 = vpop.f32.mrb[0].mxu0
        %2781 = vmatprep.mubr.bf16.mxu0 0
        %2782 = vmatmul.mubr.bf16.gmra.mrb[0].mxu0 %v2582
        %v2783 = vpop.f32.mrb[0].mxu0
        %v2784 = vadd.f32 0.0, %v2783
        %v2785 = vpop.f32.mrb[0].mxu0
        %v2786 = vpop.f32.mrb[0].mxu0
        %v2787 = vadd.f32 0.0, %v2786
        %v2788 = vpop.f32.mrb[0].mxu0
        %2789 = vmatprep.mubr.bf16.mxu0 0
        %2790 = vmatmul.mubr.bf16.gmra.mrb[0].mxu0 %v2585
        %v2791 = vpop.f32.mrb[0].mxu0
        %v2792 = vadd.f32 0.0, %v2791
        %v2793 = vpop.f32.mrb[0].mxu0
        %v2794 = vpop.f32.mrb[0].mxu0
        %v2795 = vadd.f32 0.0, %v2794
        %v2796 = vpop.f32.mrb[0].mxu0
        %2797 = vmatprep.mubr.bf16.mxu0 0
        %2798 = vmatmul.mubr.bf16.gmra.mrb[0].mxu0 %v2588
        %v2799 = vpop.f32.mrb[0].mxu0
        %v2800 = vadd.f32 0.0, %v2799
        %v2801 = vpop.f32.mrb[0].mxu0
        %v2802 = vpop.f32.mrb[0].mxu0
        %v2803 = vadd.f32 0.0, %v2802
        %v2804 = vpop.f32.mrb[0].mxu0
        %2805 = vmatprep.mubr.bf16.mxu0 0
        %2806 = vmatmul.mubr.bf16.gmra.mrb[0].mxu0 %v2591
        %v2807 = vpop.f32.mrb[0].mxu0
        %v2808 = vadd.f32 0.0, %v2807
        %v2809 = vpop.f32.mrb[0].mxu0
        %v2810 = vpop.f32.mrb[0].mxu0
        %v2811 = vadd.f32 0.0, %v2810
        %v2812 = vpop.f32.mrb[0].mxu0
        %2813 = vmatprep.mubr.bf16.mxu0 0
        %2814 = vmatmul.mubr.bf16.gmra.mrb[0].mxu0 %v2594
        %v2815 = vpop.f32.mrb[0].mxu0
        %v2816 = vadd.f32 0.0, %v2815
        %v2817 = vpop.f32.mrb[0].mxu0
        %v2818 = vpop.f32.mrb[0].mxu0
        %v2819 = vadd.f32 0.0, %v2818
        %v2820 = vpop.f32.mrb[0].mxu0
        %2821 = vmatprep.mubr.bf16.mxu0 0
        %2822 = vmatmul.mubr.bf16.gmra.mrb[0].mxu0 %v2597
        %v2823 = vpop.f32.mrb[0].mxu0
        %v2824 = vadd.f32 0.0, %v2823
        %v2825 = vpop.f32.mrb[0].mxu0
        %v2826 = vpop.f32.mrb[0].mxu0
        %v2827 = vadd.f32 0.0, %v2826
        %v2828 = vpop.f32.mrb[0].mxu0
        %2829 = vmatprep.mubr.bf16.mxu0 0
        %2830 = vmatmul.mubr.bf16.gmra.mrb[0].mxu0 %v2600
        %v2831 = vpop.f32.mrb[0].mxu0
        %v2832 = vadd.f32 0.0, %v2831
        %v2833 = vpop.f32.mrb[0].mxu0
        %v2834 = vpop.f32.mrb[0].mxu0
        %v2835 = vadd.f32 0.0, %v2834
        %v2836 = vpop.f32.mrb[0].mxu0
        %2837 = vmatprep.mubr.bf16.mxu0 0
        %2838 = vmatmul.mubr.bf16.gmra.mrb[0].mxu0 %v2603
        %v2839 = vpop.f32.mrb[0].mxu0
        %v2840 = vadd.f32 0.0, %v2839
        %v2841 = vpop.f32.mrb[0].mxu0
        %v2842 = vpop.f32.mrb[0].mxu0
        %v2843 = vadd.f32 0.0, %v2842
        %v2844 = vpop.f32.mrb[0].mxu0
        %2845 = vdwg.mxu0
        %v2846 = vadd.f32 %v2476, %v2720
        %v2847 = vadd.f32 %v2477, %v2723
        %v2848 = vadd.f32 %v2478, %v2728
        %v2849 = vadd.f32 %v2479, %v2731
        %v2850 = vadd.f32 %v2480, %v2736
        %v2851 = vadd.f32 %v2481, %v2739
        %v2852 = vadd.f32 %v2482, %v2744
        %v2853 = vadd.f32 %v2483, %v2747
        %v2854 = vadd.f32 %v2484, %v2752
        %v2855 = vadd.f32 %v2485, %v2755
        %v2856 = vadd.f32 %v2486, %v2760
        %v2857 = vadd.f32 %v2487, %v2763
        %v2858 = vadd.f32 %v2488, %v2768
        %v2859 = vadd.f32 %v2489, %v2771
        %v2860 = vadd.f32 %v2490, %v2776
        %v2861 = vadd.f32 %v2491, %v2779
        %v2862 = vadd.f32 %v2492, %v2784
        %v2863 = vadd.f32 %v2493, %v2787
        %v2864 = vadd.f32 %v2494, %v2792
        %v2865 = vadd.f32 %v2495, %v2795
        %v2866 = vadd.f32 %v2496, %v2800
        %v2867 = vadd.f32 %v2497, %v2803
        %v2868 = vadd.f32 %v2498, %v2808
        %v2869 = vadd.f32 %v2499, %v2811
        %v2870 = vadd.f32 %v2500, %v2816
        %v2871 = vadd.f32 %v2501, %v2819
        %v2872 = vadd.f32 %v2502, %v2824
        %v2873 = vadd.f32 %v2503, %v2827
        %v2874 = vadd.f32 %v2504, %v2832
        %v2875 = vadd.f32 %v2505, %v2835
        %v2876 = vadd.f32 %v2506, %v2840
        %v2877 = vadd.f32 %v2507, %v2843
        %v2878 = vld [vmem:[%s246 + $0x8] sm:$0x1f]
        %v2879 = vld [vmem:[%s246 + $0x18] sm:$0x1f]
        %v2880 = vld [vmem:[%s246 + $0x28] sm:$0x1f]
        %v2881 = vld [vmem:[%s246 + $0x38] sm:$0x1f]
        %v2882 = vld [vmem:[%s246 + $0x48] sm:$0x1f]
        %v2883 = vld [vmem:[%s246 + $0x58] sm:$0x1f]
        %v2884 = vld [vmem:[%s246 + $0x68] sm:$0x1f]
        %v2885 = vld [vmem:[%s246 + $0x78] sm:$0x1f]
        %v2886 = vld [vmem:[%s246 + $0x88] sm:$0x1f]
        %v2887 = vld [vmem:[%s246 + $0x98] sm:$0x1f]
        %v2888 = vld [vmem:[%s246 + $0xa8] sm:$0x1f]
        %v2889 = vld [vmem:[%s246 + $0xb8] sm:$0x1f]
        %v2890 = vld [vmem:[%s246 + $0xc8] sm:$0x1f]
        %v2891 = vld [vmem:[%s246 + $0xd8] sm:$0x1f]
        %v2892 = vld [vmem:[%s246 + $0xe8] sm:$0x1f]
        %v2893 = vld [vmem:[%s246 + $0xf8] sm:$0x1f]
        %v2895 = vshrl.u32 %v2508, 16
        %v2897 = vrot.slane %v2895, 4
        %v2898 = vshll.u32 %v2508, 16
        %v2900 = vrot.slane %v2898, 5
        %v2901 = vor.u32 %v2897, %v2900
        %v2903 = vshrl.u32 %v2878, 16
        %v2905 = vrot.slane %v2903, 4
        %v2906 = vshll.u32 %v2878, 16
        %v2908 = vrot.slane %v2906, 5
        %v2909 = vor.u32 %v2905, %v2908
        %v2910 = vsel %vm1383, %v2901, %v2909
        %v2912 = vshrl.u32 %v2509, 16
        %v2914 = vrot.slane %v2912, 4
        %v2915 = vshll.u32 %v2509, 16
        %v2917 = vrot.slane %v2915, 5
        %v2918 = vor.u32 %v2914, %v2917
        %v2920 = vshrl.u32 %v2879, 16
        %v2922 = vrot.slane %v2920, 4
        %v2923 = vshll.u32 %v2879, 16
        %v2925 = vrot.slane %v2923, 5
        %v2926 = vor.u32 %v2922, %v2925
        %v2927 = vsel %vm1383, %v2918, %v2926
        %v2929 = vshrl.u32 %v2510, 16
        %v2931 = vrot.slane %v2929, 4
        %v2932 = vshll.u32 %v2510, 16
        %v2934 = vrot.slane %v2932, 5
        %v2935 = vor.u32 %v2931, %v2934
        %v2937 = vshrl.u32 %v2880, 16
        %v2939 = vrot.slane %v2937, 4
        %v2940 = vshll.u32 %v2880, 16
        %v2942 = vrot.slane %v2940, 5
        %v2943 = vor.u32 %v2939, %v2942
        %v2944 = vsel %vm1383, %v2935, %v2943
        %v2946 = vshrl.u32 %v2511, 16
        %v2948 = vrot.slane %v2946, 4
        %v2949 = vshll.u32 %v2511, 16
        %v2951 = vrot.slane %v2949, 5
        %v2952 = vor.u32 %v2948, %v2951
        %v2954 = vshrl.u32 %v2881, 16
        %v2956 = vrot.slane %v2954, 4
        %v2957 = vshll.u32 %v2881, 16
        %v2959 = vrot.slane %v2957, 5
        %v2960 = vor.u32 %v2956, %v2959
        %v2961 = vsel %vm1383, %v2952, %v2960
        %v2963 = vshrl.u32 %v2512, 16
        %v2965 = vrot.slane %v2963, 4
        %v2966 = vshll.u32 %v2512, 16
        %v2968 = vrot.slane %v2966, 5
        %v2969 = vor.u32 %v2965, %v2968
        %v2971 = vshrl.u32 %v2882, 16
        %v2973 = vrot.slane %v2971, 4
        %v2974 = vshll.u32 %v2882, 16
        %v2976 = vrot.slane %v2974, 5
        %v2977 = vor.u32 %v2973, %v2976
        %v2978 = vsel %vm1383, %v2969, %v2977
        %v2980 = vshrl.u32 %v2513, 16
        %v2982 = vrot.slane %v2980, 4
        %v2983 = vshll.u32 %v2513, 16
        %v2985 = vrot.slane %v2983, 5
        %v2986 = vor.u32 %v2982, %v2985
        %v2988 = vshrl.u32 %v2883, 16
        %v2990 = vrot.slane %v2988, 4
        %v2991 = vshll.u32 %v2883, 16
        %v2993 = vrot.slane %v2991, 5
        %v2994 = vor.u32 %v2990, %v2993
        %v2995 = vsel %vm1383, %v2986, %v2994
        %v2997 = vshrl.u32 %v2514, 16
        %v2999 = vrot.slane %v2997, 4
        %v3000 = vshll.u32 %v2514, 16
        %v3002 = vrot.slane %v3000, 5
        %v3003 = vor.u32 %v2999, %v3002
        %v3005 = vshrl.u32 %v2884, 16
        %v3007 = vrot.slane %v3005, 4
        %v3008 = vshll.u32 %v2884, 16
        %v3010 = vrot.slane %v3008, 5
        %v3011 = vor.u32 %v3007, %v3010
        %v3012 = vsel %vm1383, %v3003, %v3011
        %v3014 = vshrl.u32 %v2515, 16
        %v3016 = vrot.slane %v3014, 4
        %v3017 = vshll.u32 %v2515, 16
        %v3019 = vrot.slane %v3017, 5
        %v3020 = vor.u32 %v3016, %v3019
        %v3022 = vshrl.u32 %v2885, 16
        %v3024 = vrot.slane %v3022, 4
        %v3025 = vshll.u32 %v2885, 16
        %v3027 = vrot.slane %v3025, 5
        %v3028 = vor.u32 %v3024, %v3027
        %v3029 = vsel %vm1383, %v3020, %v3028
        %v3031 = vshrl.u32 %v2516, 16
        %v3033 = vrot.slane %v3031, 4
        %v3034 = vshll.u32 %v2516, 16
        %v3036 = vrot.slane %v3034, 5
        %v3037 = vor.u32 %v3033, %v3036
        %v3039 = vshrl.u32 %v2886, 16
        %v3041 = vrot.slane %v3039, 4
        %v3042 = vshll.u32 %v2886, 16
        %v3044 = vrot.slane %v3042, 5
        %v3045 = vor.u32 %v3041, %v3044
        %v3046 = vsel %vm1383, %v3037, %v3045
        %v3048 = vshrl.u32 %v2517, 16
        %v3050 = vrot.slane %v3048, 4
        %v3051 = vshll.u32 %v2517, 16
        %v3053 = vrot.slane %v3051, 5
        %v3054 = vor.u32 %v3050, %v3053
        %v3056 = vshrl.u32 %v2887, 16
        %v3058 = vrot.slane %v3056, 4
        %v3059 = vshll.u32 %v2887, 16
        %v3061 = vrot.slane %v3059, 5
        %v3062 = vor.u32 %v3058, %v3061
        %v3063 = vsel %vm1383, %v3054, %v3062
        %v3065 = vshrl.u32 %v2518, 16
        %v3067 = vrot.slane %v3065, 4
        %v3068 = vshll.u32 %v2518, 16
        %v3070 = vrot.slane %v3068, 5
        %v3071 = vor.u32 %v3067, %v3070
        %v3073 = vshrl.u32 %v2888, 16
        %v3075 = vrot.slane %v3073, 4
        %v3076 = vshll.u32 %v2888, 16
        %v3078 = vrot.slane %v3076, 5
        %v3079 = vor.u32 %v3075, %v3078
        %v3080 = vsel %vm1383, %v3071, %v3079
        %v3082 = vshrl.u32 %v2519, 16
        %v3084 = vrot.slane %v3082, 4
        %v3085 = vshll.u32 %v2519, 16
        %v3087 = vrot.slane %v3085, 5
        %v3088 = vor.u32 %v3084, %v3087
        %v3090 = vshrl.u32 %v2889, 16
        %v3092 = vrot.slane %v3090, 4
        %v3093 = vshll.u32 %v2889, 16
        %v3095 = vrot.slane %v3093, 5
        %v3096 = vor.u32 %v3092, %v3095
        %v3097 = vsel %vm1383, %v3088, %v3096
        %v3099 = vshrl.u32 %v2520, 16
        %v3101 = vrot.slane %v3099, 4
        %v3102 = vshll.u32 %v2520, 16
        %v3104 = vrot.slane %v3102, 5
        %v3105 = vor.u32 %v3101, %v3104
        %v3107 = vshrl.u32 %v2890, 16
        %v3109 = vrot.slane %v3107, 4
        %v3110 = vshll.u32 %v2890, 16
        %v3112 = vrot.slane %v3110, 5
        %v3113 = vor.u32 %v3109, %v3112
        %v3114 = vsel %vm1383, %v3105, %v3113
        %v3116 = vshrl.u32 %v2521, 16
        %v3118 = vrot.slane %v3116, 4
        %v3119 = vshll.u32 %v2521, 16
        %v3121 = vrot.slane %v3119, 5
        %v3122 = vor.u32 %v3118, %v3121
        %v3124 = vshrl.u32 %v2891, 16
        %v3126 = vrot.slane %v3124, 4
        %v3127 = vshll.u32 %v2891, 16
        %v3129 = vrot.slane %v3127, 5
        %v3130 = vor.u32 %v3126, %v3129
        %v3131 = vsel %vm1383, %v3122, %v3130
        %v3133 = vshrl.u32 %v2522, 16
        %v3135 = vrot.slane %v3133, 4
        %v3136 = vshll.u32 %v2522, 16
        %v3138 = vrot.slane %v3136, 5
        %v3139 = vor.u32 %v3135, %v3138
        %v3141 = vshrl.u32 %v2892, 16
        %v3143 = vrot.slane %v3141, 4
        %v3144 = vshll.u32 %v2892, 16
        %v3146 = vrot.slane %v3144, 5
        %v3147 = vor.u32 %v3143, %v3146
        %v3148 = vsel %vm1383, %v3139, %v3147
        %v3150 = vshrl.u32 %v2523, 16
        %v3152 = vrot.slane %v3150, 4
        %v3153 = vshll.u32 %v2523, 16
        %v3155 = vrot.slane %v3153, 5
        %v3156 = vor.u32 %v3152, %v3155
        %v3158 = vshrl.u32 %v2893, 16
        %v3160 = vrot.slane %v3158, 4
        %v3161 = vshll.u32 %v2893, 16
        %v3163 = vrot.slane %v3161, 5
        %v3164 = vor.u32 %v3160, %v3163
        %v3165 = vsel %vm1383, %v3156, %v3164
        %s3182 = scalar_lea.vmem [#allocation4], 320
        %v3183 = vld [vmem:[%s3182] sm:$0xf]
        %v3184 = vld [vmem:[%s3182 + $0x4] sm:$0xf]
        %v3185 = vld [vmem:[%s3182 + $0x8] sm:$0xf]
        %v3186 = vld [vmem:[%s3182 + $0xc] sm:$0xf]
        %v3187 = vld [vmem:[%s3182 + $0x10] sm:$0xf]
        %v3188 = vld [vmem:[%s3182 + $0x14] sm:$0xf]
        %v3189 = vld [vmem:[%s3182 + $0x18] sm:$0xf]
        %v3190 = vld [vmem:[%s3182 + $0x1c] sm:$0xf]
        %v3191 = vld [vmem:[%s3182 + $0x20] sm:$0xf]
        %v3192 = vld [vmem:[%s3182 + $0x24] sm:$0xf]
        %v3193 = vld [vmem:[%s3182 + $0x28] sm:$0xf]
        %v3194 = vld [vmem:[%s3182 + $0x2c] sm:$0xf]
        %v3195 = vld [vmem:[%s3182 + $0x30] sm:$0xf]
        %v3196 = vld [vmem:[%s3182 + $0x34] sm:$0xf]
        %v3197 = vld [vmem:[%s3182 + $0x38] sm:$0xf]
        %v3198 = vld [vmem:[%s3182 + $0x3c] sm:$0xf]
        %v3215 = vunpack.c.l.b16 %v3183
        %v3216 = vunpack.c.l.b16 %v3184
        %v3217 = vunpack.c.l.b16 %v3185
        %v3218 = vunpack.c.l.b16 %v3186
        %v3219 = vunpack.c.l.b16 %v3187
        %v3220 = vunpack.c.l.b16 %v3188
        %v3221 = vunpack.c.l.b16 %v3189
        %v3222 = vunpack.c.l.b16 %v3190
        %v3223 = vunpack.c.l.b16 %v3191
        %v3224 = vunpack.c.l.b16 %v3192
        %v3225 = vunpack.c.l.b16 %v3193
        %v3226 = vunpack.c.l.b16 %v3194
        %v3227 = vunpack.c.l.b16 %v3195
        %v3228 = vunpack.c.l.b16 %v3196
        %v3229 = vunpack.c.l.b16 %v3197
        %v3230 = vunpack.c.l.b16 %v3198
        %v3231 = vpack.c.b16 %v3216, %v3215
        %v3232 = vpack.c.b16 %v3218, %v3217
        %v3233 = vpack.c.b16 %v3220, %v3219
        %v3234 = vpack.c.b16 %v3222, %v3221
        %v3235 = vpack.c.b16 %v3224, %v3223
        %v3236 = vpack.c.b16 %v3226, %v3225
        %v3237 = vpack.c.b16 %v3228, %v3227
        %v3238 = vpack.c.b16 %v3230, %v3229
        %3247 = vmatprep.subr.bf16.mxu0 0
        %3248 = vmatpush1.bf16.msra.mxu0 %v3231
        %3249 = vmatprep.subr.bf16.mxu0 0
        %3250 = vmatpush1.bf16.msra.mxu0 %v3232
        %3251 = vmatprep.subr.bf16.mxu0 0
        %3252 = vmatpush1.bf16.msra.mxu0 %v3233
        %3253 = vmatprep.subr.bf16.mxu0 0
        %3254 = vmatpush1.bf16.msra.mxu0 %v3234
        %3255 = vmatprep.subr.bf16.mxu0 0
        %3256 = vmatpush1.bf16.msra.mxu0 %v3235
        %3257 = vmatprep.subr.bf16.mxu0 0
        %3258 = vmatpush1.bf16.msra.mxu0 %v3236
        %3259 = vmatprep.subr.bf16.mxu0 0
        %3260 = vmatpush1.bf16.msra.mxu0 %v3237
        %3261 = vmatprep.subr.bf16.mxu0 0
        %3262 = vmatpush1.bf16.msra.mxu0 %v3238
        %3263 = vmatprep.subr.bf16.mxu0 0
        %3264 = vmatpush1.bf16.msra.mxu0 0
        %3265 = vmatprep.subr.bf16.mxu0 0
        %3266 = vmatpush1.bf16.msra.mxu0 0
        %3267 = vmatprep.subr.bf16.mxu0 0
        %3268 = vmatpush1.bf16.msra.mxu0 0
        %3269 = vmatprep.subr.bf16.mxu0 0
        %3270 = vmatpush1.bf16.msra.mxu0 0
        %3271 = vmatprep.subr.bf16.mxu0 0
        %3272 = vmatpush1.bf16.msra.mxu0 0
        %3273 = vmatprep.subr.bf16.mxu0 0
        %3274 = vmatpush1.bf16.msra.mxu0 0
        %3275 = vmatprep.subr.bf16.mxu0 0
        %3276 = vmatpush1.bf16.msra.mxu0 0
        %3277 = vmatprep.subr.bf16.mxu0 0
        %3278 = vmatpush1.bf16.msra.mxu0 0
        %3279 = vmatprep.mubr.bf16.mxu0 0
        %3280 = vmatmul.mubr.bf16.gmra.mrb[0].mxu0 %v2910
        %v3281 = vpop.f32.mrb[0].mxu0
        %v3282 = vadd.f32 0.0, %v3281
        %v3283 = vpop.f32.mrb[0].mxu0
        %v3284 = vpop.f32.mrb[0].mxu0
        %v3285 = vadd.f32 0.0, %v3284
        %v3286 = vpop.f32.mrb[0].mxu0
        %3287 = vmatprep.mubr.bf16.mxu0 0
        %3288 = vmatmul.mubr.bf16.gmra.mrb[0].mxu0 %v2927
        %v3289 = vpop.f32.mrb[0].mxu0
        %v3290 = vadd.f32 0.0, %v3289
        %v3291 = vpop.f32.mrb[0].mxu0
        %v3292 = vpop.f32.mrb[0].mxu0
        %v3293 = vadd.f32 0.0, %v3292
        %v3294 = vpop.f32.mrb[0].mxu0
        %3295 = vmatprep.mubr.bf16.mxu0 0
        %3296 = vmatmul.mubr.bf16.gmra.mrb[0].mxu0 %v2944
        %v3297 = vpop.f32.mrb[0].mxu0
        %v3298 = vadd.f32 0.0, %v3297
        %v3299 = vpop.f32.mrb[0].mxu0
        %v3300 = vpop.f32.mrb[0].mxu0
        %v3301 = vadd.f32 0.0, %v3300
        %v3302 = vpop.f32.mrb[0].mxu0
        %3303 = vmatprep.mubr.bf16.mxu0 0
        %3304 = vmatmul.mubr.bf16.gmra.mrb[0].mxu0 %v2961
        %v3305 = vpop.f32.mrb[0].mxu0
        %v3306 = vadd.f32 0.0, %v3305
        %v3307 = vpop.f32.mrb[0].mxu0
        %v3308 = vpop.f32.mrb[0].mxu0
        %v3309 = vadd.f32 0.0, %v3308
        %v3310 = vpop.f32.mrb[0].mxu0
        %3311 = vmatprep.mubr.bf16.mxu0 0
        %3312 = vmatmul.mubr.bf16.gmra.mrb[0].mxu0 %v2978
        %v3313 = vpop.f32.mrb[0].mxu0
        %v3314 = vadd.f32 0.0, %v3313
        %v3315 = vpop.f32.mrb[0].mxu0
        %v3316 = vpop.f32.mrb[0].mxu0
        %v3317 = vadd.f32 0.0, %v3316
        %v3318 = vpop.f32.mrb[0].mxu0
        %3319 = vmatprep.mubr.bf16.mxu0 0
        %3320 = vmatmul.mubr.bf16.gmra.mrb[0].mxu0 %v2995
        %v3321 = vpop.f32.mrb[0].mxu0
        %v3322 = vadd.f32 0.0, %v3321
        %v3323 = vpop.f32.mrb[0].mxu0
        %v3324 = vpop.f32.mrb[0].mxu0
        %v3325 = vadd.f32 0.0, %v3324
        %v3326 = vpop.f32.mrb[0].mxu0
        %3327 = vmatprep.mubr.bf16.mxu0 0
        %3328 = vmatmul.mubr.bf16.gmra.mrb[0].mxu0 %v3012
        %v3329 = vpop.f32.mrb[0].mxu0
        %v3330 = vadd.f32 0.0, %v3329
        %v3331 = vpop.f32.mrb[0].mxu0
        %v3332 = vpop.f32.mrb[0].mxu0
        %v3333 = vadd.f32 0.0, %v3332
        %v3334 = vpop.f32.mrb[0].mxu0
        %3335 = vmatprep.mubr.bf16.mxu0 0
        %3336 = vmatmul.mubr.bf16.gmra.mrb[0].mxu0 %v3029
        %v3337 = vpop.f32.mrb[0].mxu0
        %v3338 = vadd.f32 0.0, %v3337
        %v3339 = vpop.f32.mrb[0].mxu0
        %v3340 = vpop.f32.mrb[0].mxu0
        %v3341 = vadd.f32 0.0, %v3340
        %v3342 = vpop.f32.mrb[0].mxu0
        %3343 = vmatprep.mubr.bf16.mxu0 0
        %3344 = vmatmul.mubr.bf16.gmra.mrb[0].mxu0 %v3046
        %v3345 = vpop.f32.mrb[0].mxu0
        %v3346 = vadd.f32 0.0, %v3345
        %v3347 = vpop.f32.mrb[0].mxu0
        %v3348 = vpop.f32.mrb[0].mxu0
        %v3349 = vadd.f32 0.0, %v3348
        %v3350 = vpop.f32.mrb[0].mxu0
        %3351 = vmatprep.mubr.bf16.mxu0 0
        %3352 = vmatmul.mubr.bf16.gmra.mrb[0].mxu0 %v3063
        %v3353 = vpop.f32.mrb[0].mxu0
        %v3354 = vadd.f32 0.0, %v3353
        %v3355 = vpop.f32.mrb[0].mxu0
        %v3356 = vpop.f32.mrb[0].mxu0
        %v3357 = vadd.f32 0.0, %v3356
        %v3358 = vpop.f32.mrb[0].mxu0
        %3359 = vmatprep.mubr.bf16.mxu0 0
        %3360 = vmatmul.mubr.bf16.gmra.mrb[0].mxu0 %v3080
        %v3361 = vpop.f32.mrb[0].mxu0
        %v3362 = vadd.f32 0.0, %v3361
        %v3363 = vpop.f32.mrb[0].mxu0
        %v3364 = vpop.f32.mrb[0].mxu0
        %v3365 = vadd.f32 0.0, %v3364
        %v3366 = vpop.f32.mrb[0].mxu0
        %3367 = vmatprep.mubr.bf16.mxu0 0
        %3368 = vmatmul.mubr.bf16.gmra.mrb[0].mxu0 %v3097
        %v3369 = vpop.f32.mrb[0].mxu0
        %v3370 = vadd.f32 0.0, %v3369
        %v3371 = vpop.f32.mrb[0].mxu0
        %v3372 = vpop.f32.mrb[0].mxu0
        %v3373 = vadd.f32 0.0, %v3372
        %v3374 = vpop.f32.mrb[0].mxu0
        %3375 = vmatprep.mubr.bf16.mxu0 0
        %3376 = vmatmul.mubr.bf16.gmra.mrb[0].mxu0 %v3114
        %v3377 = vpop.f32.mrb[0].mxu0
        %v3378 = vadd.f32 0.0, %v3377
        %v3379 = vpop.f32.mrb[0].mxu0
        %v3380 = vpop.f32.mrb[0].mxu0
        %v3381 = vadd.f32 0.0, %v3380
        %v3382 = vpop.f32.mrb[0].mxu0
        %3383 = vmatprep.mubr.bf16.mxu0 0
        %3384 = vmatmul.mubr.bf16.gmra.mrb[0].mxu0 %v3131
        %v3385 = vpop.f32.mrb[0].mxu0
        %v3386 = vadd.f32 0.0, %v3385
        %v3387 = vpop.f32.mrb[0].mxu0
        %v3388 = vpop.f32.mrb[0].mxu0
        %v3389 = vadd.f32 0.0, %v3388
        %v3390 = vpop.f32.mrb[0].mxu0
        %3391 = vmatprep.mubr.bf16.mxu0 0
        %3392 = vmatmul.mubr.bf16.gmra.mrb[0].mxu0 %v3148
        %v3393 = vpop.f32.mrb[0].mxu0
        %v3394 = vadd.f32 0.0, %v3393
        %v3395 = vpop.f32.mrb[0].mxu0
        %v3396 = vpop.f32.mrb[0].mxu0
        %v3397 = vadd.f32 0.0, %v3396
        %v3398 = vpop.f32.mrb[0].mxu0
        %3399 = vmatprep.mubr.bf16.mxu0 0
        %3400 = vmatmul.mubr.bf16.gmra.mrb[0].mxu0 %v3165
        %v3401 = vpop.f32.mrb[0].mxu0
        %v3402 = vadd.f32 0.0, %v3401
        %v3403 = vpop.f32.mrb[0].mxu0
        %v3404 = vpop.f32.mrb[0].mxu0
        %v3405 = vadd.f32 0.0, %v3404
        %v3406 = vpop.f32.mrb[0].mxu0
        %3407 = vdwg.mxu0
        %v3408 = vadd.f32 %v2846, %v3282
        %v3409 = vadd.f32 %v2847, %v3285
        %v3410 = vadd.f32 %v2848, %v3290
        %v3411 = vadd.f32 %v2849, %v3293
        %v3412 = vadd.f32 %v2850, %v3298
        %v3413 = vadd.f32 %v2851, %v3301
        %v3414 = vadd.f32 %v2852, %v3306
        %v3415 = vadd.f32 %v2853, %v3309
        %v3416 = vadd.f32 %v2854, %v3314
        %v3417 = vadd.f32 %v2855, %v3317
        %v3418 = vadd.f32 %v2856, %v3322
        %v3419 = vadd.f32 %v2857, %v3325
        %v3420 = vadd.f32 %v2858, %v3330
        %v3421 = vadd.f32 %v2859, %v3333
        %v3422 = vadd.f32 %v2860, %v3338
        %v3423 = vadd.f32 %v2861, %v3341
        %v3424 = vadd.f32 %v2862, %v3346
        %v3425 = vadd.f32 %v2863, %v3349
        %v3426 = vadd.f32 %v2864, %v3354
        %v3427 = vadd.f32 %v2865, %v3357
        %v3428 = vadd.f32 %v2866, %v3362
        %v3429 = vadd.f32 %v2867, %v3365
        %v3430 = vadd.f32 %v2868, %v3370
        %v3431 = vadd.f32 %v2869, %v3373
        %v3432 = vadd.f32 %v2870, %v3378
        %v3433 = vadd.f32 %v2871, %v3381
        %v3434 = vadd.f32 %v2872, %v3386
        %v3435 = vadd.f32 %v2873, %v3389
        %v3436 = vadd.f32 %v2874, %v3394
        %v3437 = vadd.f32 %v2875, %v3397
        %v3438 = vadd.f32 %v2876, %v3402
        %v3439 = vadd.f32 %v2877, %v3405
        %s3440 = scalar_lea.vmem [#allocation2], 32
        %v3441 = vld [vmem:[%s3440] sm:$0xf8]
        %v3442 = vld [vmem:[%s3440 + $0x8] sm:$0xf]
        %v3443 = vld [vmem:[%s3440 + $0x10] sm:$0xf8]
        %v3444 = vld [vmem:[%s3440 + $0x18] sm:$0xf]
        %v3445 = vld [vmem:[%s3440 + $0x20] sm:$0xf8]
        %v3446 = vld [vmem:[%s3440 + $0x28] sm:$0xf]
        %v3447 = vld [vmem:[%s3440 + $0x30] sm:$0xf8]
        %v3448 = vld [vmem:[%s3440 + $0x38] sm:$0xf]
        %v3449 = vld [vmem:[%s3440 + $0x40] sm:$0xf8]
        %v3450 = vld [vmem:[%s3440 + $0x48] sm:$0xf]
        %v3451 = vld [vmem:[%s3440 + $0x50] sm:$0xf8]
        %v3452 = vld [vmem:[%s3440 + $0x58] sm:$0xf]
        %v3453 = vld [vmem:[%s3440 + $0x60] sm:$0xf8]
        %v3454 = vld [vmem:[%s3440 + $0x68] sm:$0xf]
        %v3455 = vld [vmem:[%s3440 + $0x70] sm:$0xf8]
        %v3456 = vld [vmem:[%s3440 + $0x78] sm:$0xf]
        %v3457 = vld [vmem:[%s3440 + $0x80] sm:$0xf8]
        %v3458 = vld [vmem:[%s3440 + $0x88] sm:$0xf]
        %v3459 = vld [vmem:[%s3440 + $0x90] sm:$0xf8]
        %v3460 = vld [vmem:[%s3440 + $0x98] sm:$0xf]
        %v3461 = vld [vmem:[%s3440 + $0xa0] sm:$0xf8]
        %v3462 = vld [vmem:[%s3440 + $0xa8] sm:$0xf]
        %v3463 = vld [vmem:[%s3440 + $0xb0] sm:$0xf8]
        %v3464 = vld [vmem:[%s3440 + $0xb8] sm:$0xf]
        %v3465 = vld [vmem:[%s3440 + $0xc0] sm:$0xf8]
        %v3466 = vld [vmem:[%s3440 + $0xc8] sm:$0xf]
        %v3467 = vld [vmem:[%s3440 + $0xd0] sm:$0xf8]
        %v3468 = vld [vmem:[%s3440 + $0xd8] sm:$0xf]
        %v3469 = vld [vmem:[%s3440 + $0xe0] sm:$0xf8]
        %v3470 = vld [vmem:[%s3440 + $0xe8] sm:$0xf]
        %v3471 = vld [vmem:[%s3440 + $0xf0] sm:$0xf8]
        %v3472 = vld [vmem:[%s3440 + $0xf8] sm:$0xf]
        %v3474 = vshrl.u32 %v3441, 16
        %v3476 = vrot.slane %v3474, 3
        %v3477 = vshll.u32 %v3441, 16
        %v3479 = vrot.slane %v3477, 4
        %v3480 = vor.u32 %v3476, %v3479
        %v3482 = vshrl.u32 %v3442, 16
        %v3484 = vrot.slane %v3482, 3
        %v3485 = vshll.u32 %v3442, 16
        %v3487 = vrot.slane %v3485, 4
        %v3488 = vor.u32 %v3484, %v3487
        %v3489 = vsel %vm514, %v3480, %v3488
        %v3491 = vshrl.u32 %v3443, 16
        %v3493 = vrot.slane %v3491, 3
        %v3494 = vshll.u32 %v3443, 16
        %v3496 = vrot.slane %v3494, 4
        %v3497 = vor.u32 %v3493, %v3496
        %v3499 = vshrl.u32 %v3444, 16
        %v3501 = vrot.slane %v3499, 3
        %v3502 = vshll.u32 %v3444, 16
        %v3504 = vrot.slane %v3502, 4
        %v3505 = vor.u32 %v3501, %v3504
        %v3506 = vsel %vm514, %v3497, %v3505
        %v3508 = vshrl.u32 %v3445, 16
        %v3510 = vrot.slane %v3508, 3
        %v3511 = vshll.u32 %v3445, 16
        %v3513 = vrot.slane %v3511, 4
        %v3514 = vor.u32 %v3510, %v3513
        %v3516 = vshrl.u32 %v3446, 16
        %v3518 = vrot.slane %v3516, 3
        %v3519 = vshll.u32 %v3446, 16
        %v3521 = vrot.slane %v3519, 4
        %v3522 = vor.u32 %v3518, %v3521
        %v3523 = vsel %vm514, %v3514, %v3522
        %v3525 = vshrl.u32 %v3447, 16
        %v3527 = vrot.slane %v3525, 3
        %v3528 = vshll.u32 %v3447, 16
        %v3530 = vrot.slane %v3528, 4
        %v3531 = vor.u32 %v3527, %v3530
        %v3533 = vshrl.u32 %v3448, 16
        %v3535 = vrot.slane %v3533, 3
        %v3536 = vshll.u32 %v3448, 16
        %v3538 = vrot.slane %v3536, 4
        %v3539 = vor.u32 %v3535, %v3538
        %v3540 = vsel %vm514, %v3531, %v3539
        %v3542 = vshrl.u32 %v3449, 16
        %v3544 = vrot.slane %v3542, 3
        %v3545 = vshll.u32 %v3449, 16
        %v3547 = vrot.slane %v3545, 4
        %v3548 = vor.u32 %v3544, %v3547
        %v3550 = vshrl.u32 %v3450, 16
        %v3552 = vrot.slane %v3550, 3
        %v3553 = vshll.u32 %v3450, 16
        %v3555 = vrot.slane %v3553, 4
        %v3556 = vor.u32 %v3552, %v3555
        %v3557 = vsel %vm514, %v3548, %v3556
        %v3559 = vshrl.u32 %v3451, 16
        %v3561 = vrot.slane %v3559, 3
        %v3562 = vshll.u32 %v3451, 16
        %v3564 = vrot.slane %v3562, 4
        %v3565 = vor.u32 %v3561, %v3564
        %v3567 = vshrl.u32 %v3452, 16
        %v3569 = vrot.slane %v3567, 3
        %v3570 = vshll.u32 %v3452, 16
        %v3572 = vrot.slane %v3570, 4
        %v3573 = vor.u32 %v3569, %v3572
        %v3574 = vsel %vm514, %v3565, %v3573
        %v3576 = vshrl.u32 %v3453, 16
        %v3578 = vrot.slane %v3576, 3
        %v3579 = vshll.u32 %v3453, 16
        %v3581 = vrot.slane %v3579, 4
        %v3582 = vor.u32 %v3578, %v3581
        %v3584 = vshrl.u32 %v3454, 16
        %v3586 = vrot.slane %v3584, 3
        %v3587 = vshll.u32 %v3454, 16
        %v3589 = vrot.slane %v3587, 4
        %v3590 = vor.u32 %v3586, %v3589
        %v3591 = vsel %vm514, %v3582, %v3590
        %v3593 = vshrl.u32 %v3455, 16
        %v3595 = vrot.slane %v3593, 3
        %v3596 = vshll.u32 %v3455, 16
        %v3598 = vrot.slane %v3596, 4
        %v3599 = vor.u32 %v3595, %v3598
        %v3601 = vshrl.u32 %v3456, 16
        %v3603 = vrot.slane %v3601, 3
        %v3604 = vshll.u32 %v3456, 16
        %v3606 = vrot.slane %v3604, 4
        %v3607 = vor.u32 %v3603, %v3606
        %v3608 = vsel %vm514, %v3599, %v3607
        %v3610 = vshrl.u32 %v3457, 16
        %v3612 = vrot.slane %v3610, 3
        %v3613 = vshll.u32 %v3457, 16
        %v3615 = vrot.slane %v3613, 4
        %v3616 = vor.u32 %v3612, %v3615
        %v3618 = vshrl.u32 %v3458, 16
        %v3620 = vrot.slane %v3618, 3
        %v3621 = vshll.u32 %v3458, 16
        %v3623 = vrot.slane %v3621, 4
        %v3624 = vor.u32 %v3620, %v3623
        %v3625 = vsel %vm514, %v3616, %v3624
        %v3627 = vshrl.u32 %v3459, 16
        %v3629 = vrot.slane %v3627, 3
        %v3630 = vshll.u32 %v3459, 16
        %v3632 = vrot.slane %v3630, 4
        %v3633 = vor.u32 %v3629, %v3632
        %v3635 = vshrl.u32 %v3460, 16
        %v3637 = vrot.slane %v3635, 3
        %v3638 = vshll.u32 %v3460, 16
        %v3640 = vrot.slane %v3638, 4
        %v3641 = vor.u32 %v3637, %v3640
        %v3642 = vsel %vm514, %v3633, %v3641
        %v3644 = vshrl.u32 %v3461, 16
        %v3646 = vrot.slane %v3644, 3
        %v3647 = vshll.u32 %v3461, 16
        %v3649 = vrot.slane %v3647, 4
        %v3650 = vor.u32 %v3646, %v3649
        %v3652 = vshrl.u32 %v3462, 16
        %v3654 = vrot.slane %v3652, 3
        %v3655 = vshll.u32 %v3462, 16
        %v3657 = vrot.slane %v3655, 4
        %v3658 = vor.u32 %v3654, %v3657
        %v3659 = vsel %vm514, %v3650, %v3658
        %v3661 = vshrl.u32 %v3463, 16
        %v3663 = vrot.slane %v3661, 3
        %v3664 = vshll.u32 %v3463, 16
        %v3666 = vrot.slane %v3664, 4
        %v3667 = vor.u32 %v3663, %v3666
        %v3669 = vshrl.u32 %v3464, 16
        %v3671 = vrot.slane %v3669, 3
        %v3672 = vshll.u32 %v3464, 16
        %v3674 = vrot.slane %v3672, 4
        %v3675 = vor.u32 %v3671, %v3674
        %v3676 = vsel %vm514, %v3667, %v3675
        %v3678 = vshrl.u32 %v3465, 16
        %v3680 = vrot.slane %v3678, 3
        %v3681 = vshll.u32 %v3465, 16
        %v3683 = vrot.slane %v3681, 4
        %v3684 = vor.u32 %v3680, %v3683
        %v3686 = vshrl.u32 %v3466, 16
        %v3688 = vrot.slane %v3686, 3
        %v3689 = vshll.u32 %v3466, 16
        %v3691 = vrot.slane %v3689, 4
        %v3692 = vor.u32 %v3688, %v3691
        %v3693 = vsel %vm514, %v3684, %v3692
        %v3695 = vshrl.u32 %v3467, 16
        %v3697 = vrot.slane %v3695, 3
        %v3698 = vshll.u32 %v3467, 16
        %v3700 = vrot.slane %v3698, 4
        %v3701 = vor.u32 %v3697, %v3700
        %v3703 = vshrl.u32 %v3468, 16
        %v3705 = vrot.slane %v3703, 3
        %v3706 = vshll.u32 %v3468, 16
        %v3708 = vrot.slane %v3706, 4
        %v3709 = vor.u32 %v3705, %v3708
        %v3710 = vsel %vm514, %v3701, %v3709
        %v3712 = vshrl.u32 %v3469, 16
        %v3714 = vrot.slane %v3712, 3
        %v3715 = vshll.u32 %v3469, 16
        %v3717 = vrot.slane %v3715, 4
        %v3718 = vor.u32 %v3714, %v3717
        %v3720 = vshrl.u32 %v3470, 16
        %v3722 = vrot.slane %v3720, 3
        %v3723 = vshll.u32 %v3470, 16
        %v3725 = vrot.slane %v3723, 4
        %v3726 = vor.u32 %v3722, %v3725
        %v3727 = vsel %vm514, %v3718, %v3726
        %v3729 = vshrl.u32 %v3471, 16
        %v3731 = vrot.slane %v3729, 3
        %v3732 = vshll.u32 %v3471, 16
        %v3734 = vrot.slane %v3732, 4
        %v3735 = vor.u32 %v3731, %v3734
        %v3737 = vshrl.u32 %v3472, 16
        %v3739 = vrot.slane %v3737, 3
        %v3740 = vshll.u32 %v3472, 16
        %v3742 = vrot.slane %v3740, 4
        %v3743 = vor.u32 %v3739, %v3742
        %v3744 = vsel %vm514, %v3735, %v3743
        %s3761 = scalar_lea.vmem [#allocation4], 384
        %v3762 = vld [vmem:[%s3761] sm:$0xf]
        %v3763 = vld [vmem:[%s3761 + $0x4] sm:$0xf]
        %v3764 = vld [vmem:[%s3761 + $0x8] sm:$0xf]
        %v3765 = vld [vmem:[%s3761 + $0xc] sm:$0xf]
        %v3766 = vld [vmem:[%s3761 + $0x10] sm:$0xf]
        %v3767 = vld [vmem:[%s3761 + $0x14] sm:$0xf]
        %v3768 = vld [vmem:[%s3761 + $0x18] sm:$0xf]
        %v3769 = vld [vmem:[%s3761 + $0x1c] sm:$0xf]
        %v3770 = vld [vmem:[%s3761 + $0x20] sm:$0xf]
        %v3771 = vld [vmem:[%s3761 + $0x24] sm:$0xf]
        %v3772 = vld [vmem:[%s3761 + $0x28] sm:$0xf]
        %v3773 = vld [vmem:[%s3761 + $0x2c] sm:$0xf]
        %v3774 = vld [vmem:[%s3761 + $0x30] sm:$0xf]
        %v3775 = vld [vmem:[%s3761 + $0x34] sm:$0xf]
        %v3776 = vld [vmem:[%s3761 + $0x38] sm:$0xf]
        %v3777 = vld [vmem:[%s3761 + $0x3c] sm:$0xf]
        %v3794 = vunpack.c.l.b16 %v3762
        %v3795 = vunpack.c.l.b16 %v3763
        %v3796 = vunpack.c.l.b16 %v3764
        %v3797 = vunpack.c.l.b16 %v3765
        %v3798 = vunpack.c.l.b16 %v3766
        %v3799 = vunpack.c.l.b16 %v3767
        %v3800 = vunpack.c.l.b16 %v3768
        %v3801 = vunpack.c.l.b16 %v3769
        %v3802 = vunpack.c.l.b16 %v3770
        %v3803 = vunpack.c.l.b16 %v3771
        %v3804 = vunpack.c.l.b16 %v3772
        %v3805 = vunpack.c.l.b16 %v3773
        %v3806 = vunpack.c.l.b16 %v3774
        %v3807 = vunpack.c.l.b16 %v3775
        %v3808 = vunpack.c.l.b16 %v3776
        %v3809 = vunpack.c.l.b16 %v3777
        %v3810 = vpack.c.b16 %v3795, %v3794
        %v3811 = vpack.c.b16 %v3797, %v3796
        %v3812 = vpack.c.b16 %v3799, %v3798
        %v3813 = vpack.c.b16 %v3801, %v3800
        %v3814 = vpack.c.b16 %v3803, %v3802
        %v3815 = vpack.c.b16 %v3805, %v3804
        %v3816 = vpack.c.b16 %v3807, %v3806
        %v3817 = vpack.c.b16 %v3809, %v3808
        %3826 = vmatprep.subr.bf16.mxu0 0
        %3827 = vmatpush1.bf16.msra.mxu0 %v3810
        %3828 = vmatprep.subr.bf16.mxu0 0
        %3829 = vmatpush1.bf16.msra.mxu0 %v3811
        %3830 = vmatprep.subr.bf16.mxu0 0
        %3831 = vmatpush1.bf16.msra.mxu0 %v3812
        %3832 = vmatprep.subr.bf16.mxu0 0
        %3833 = vmatpush1.bf16.msra.mxu0 %v3813
        %3834 = vmatprep.subr.bf16.mxu0 0
        %3835 = vmatpush1.bf16.msra.mxu0 %v3814
        %3836 = vmatprep.subr.bf16.mxu0 0
        %3837 = vmatpush1.bf16.msra.mxu0 %v3815
        %3838 = vmatprep.subr.bf16.mxu0 0
        %3839 = vmatpush1.bf16.msra.mxu0 %v3816
        %3840 = vmatprep.subr.bf16.mxu0 0
        %3841 = vmatpush1.bf16.msra.mxu0 %v3817
        %3842 = vmatprep.subr.bf16.mxu0 0
        %3843 = vmatpush1.bf16.msra.mxu0 0
        %3844 = vmatprep.subr.bf16.mxu0 0
        %3845 = vmatpush1.bf16.msra.mxu0 0
        %3846 = vmatprep.subr.bf16.mxu0 0
        %3847 = vmatpush1.bf16.msra.mxu0 0
        %3848 = vmatprep.subr.bf16.mxu0 0
        %3849 = vmatpush1.bf16.msra.mxu0 0
        %3850 = vmatprep.subr.bf16.mxu0 0
        %3851 = vmatpush1.bf16.msra.mxu0 0
        %3852 = vmatprep.subr.bf16.mxu0 0
        %3853 = vmatpush1.bf16.msra.mxu0 0
        %3854 = vmatprep.subr.bf16.mxu0 0
        %3855 = vmatpush1.bf16.msra.mxu0 0
        %3856 = vmatprep.subr.bf16.mxu0 0
        %3857 = vmatpush1.bf16.msra.mxu0 0
        %3858 = vmatprep.mubr.bf16.mxu0 0
        %3859 = vmatmul.mubr.bf16.gmra.mrb[0].mxu0 %v3489
        %v3860 = vpop.f32.mrb[0].mxu0
        %v3861 = vadd.f32 0.0, %v3860
        %v3862 = vpop.f32.mrb[0].mxu0
        %v3863 = vpop.f32.mrb[0].mxu0
        %v3864 = vadd.f32 0.0, %v3863
        %v3865 = vpop.f32.mrb[0].mxu0
        %3866 = vmatprep.mubr.bf16.mxu0 0
        %3867 = vmatmul.mubr.bf16.gmra.mrb[0].mxu0 %v3506
        %v3868 = vpop.f32.mrb[0].mxu0
        %v3869 = vadd.f32 0.0, %v3868
        %v3870 = vpop.f32.mrb[0].mxu0
        %v3871 = vpop.f32.mrb[0].mxu0
        %v3872 = vadd.f32 0.0, %v3871
        %v3873 = vpop.f32.mrb[0].mxu0
        %3874 = vmatprep.mubr.bf16.mxu0 0
        %3875 = vmatmul.mubr.bf16.gmra.mrb[0].mxu0 %v3523
        %v3876 = vpop.f32.mrb[0].mxu0
        %v3877 = vadd.f32 0.0, %v3876
        %v3878 = vpop.f32.mrb[0].mxu0
        %v3879 = vpop.f32.mrb[0].mxu0
        %v3880 = vadd.f32 0.0, %v3879
        %v3881 = vpop.f32.mrb[0].mxu0
        %3882 = vmatprep.mubr.bf16.mxu0 0
        %3883 = vmatmul.mubr.bf16.gmra.mrb[0].mxu0 %v3540
        %v3884 = vpop.f32.mrb[0].mxu0
        %v3885 = vadd.f32 0.0, %v3884
        %v3886 = vpop.f32.mrb[0].mxu0
        %v3887 = vpop.f32.mrb[0].mxu0
        %v3888 = vadd.f32 0.0, %v3887
        %v3889 = vpop.f32.mrb[0].mxu0
        %3890 = vmatprep.mubr.bf16.mxu0 0
        %3891 = vmatmul.mubr.bf16.gmra.mrb[0].mxu0 %v3557
        %v3892 = vpop.f32.mrb[0].mxu0
        %v3893 = vadd.f32 0.0, %v3892
        %v3894 = vpop.f32.mrb[0].mxu0
        %v3895 = vpop.f32.mrb[0].mxu0
        %v3896 = vadd.f32 0.0, %v3895
        %v3897 = vpop.f32.mrb[0].mxu0
        %3898 = vmatprep.mubr.bf16.mxu0 0
        %3899 = vmatmul.mubr.bf16.gmra.mrb[0].mxu0 %v3574
        %v3900 = vpop.f32.mrb[0].mxu0
        %v3901 = vadd.f32 0.0, %v3900
        %v3902 = vpop.f32.mrb[0].mxu0
        %v3903 = vpop.f32.mrb[0].mxu0
        %v3904 = vadd.f32 0.0, %v3903
        %v3905 = vpop.f32.mrb[0].mxu0
        %3906 = vmatprep.mubr.bf16.mxu0 0
        %3907 = vmatmul.mubr.bf16.gmra.mrb[0].mxu0 %v3591
        %v3908 = vpop.f32.mrb[0].mxu0
        %v3909 = vadd.f32 0.0, %v3908
        %v3910 = vpop.f32.mrb[0].mxu0
        %v3911 = vpop.f32.mrb[0].mxu0
        %v3912 = vadd.f32 0.0, %v3911
        %v3913 = vpop.f32.mrb[0].mxu0
        %3914 = vmatprep.mubr.bf16.mxu0 0
        %3915 = vmatmul.mubr.bf16.gmra.mrb[0].mxu0 %v3608
        %v3916 = vpop.f32.mrb[0].mxu0
        %v3917 = vadd.f32 0.0, %v3916
        %v3918 = vpop.f32.mrb[0].mxu0
        %v3919 = vpop.f32.mrb[0].mxu0
        %v3920 = vadd.f32 0.0, %v3919
        %v3921 = vpop.f32.mrb[0].mxu0
        %3922 = vmatprep.mubr.bf16.mxu0 0
        %3923 = vmatmul.mubr.bf16.gmra.mrb[0].mxu0 %v3625
        %v3924 = vpop.f32.mrb[0].mxu0
        %v3925 = vadd.f32 0.0, %v3924
        %v3926 = vpop.f32.mrb[0].mxu0
        %v3927 = vpop.f32.mrb[0].mxu0
        %v3928 = vadd.f32 0.0, %v3927
        %v3929 = vpop.f32.mrb[0].mxu0
        %3930 = vmatprep.mubr.bf16.mxu0 0
        %3931 = vmatmul.mubr.bf16.gmra.mrb[0].mxu0 %v3642
        %v3932 = vpop.f32.mrb[0].mxu0
        %v3933 = vadd.f32 0.0, %v3932
        %v3934 = vpop.f32.mrb[0].mxu0
        %v3935 = vpop.f32.mrb[0].mxu0
        %v3936 = vadd.f32 0.0, %v3935
        %v3937 = vpop.f32.mrb[0].mxu0
        %3938 = vmatprep.mubr.bf16.mxu0 0
        %3939 = vmatmul.mubr.bf16.gmra.mrb[0].mxu0 %v3659
        %v3940 = vpop.f32.mrb[0].mxu0
        %v3941 = vadd.f32 0.0, %v3940
        %v3942 = vpop.f32.mrb[0].mxu0
        %v3943 = vpop.f32.mrb[0].mxu0
        %v3944 = vadd.f32 0.0, %v3943
        %v3945 = vpop.f32.mrb[0].mxu0
        %3946 = vmatprep.mubr.bf16.mxu0 0
        %3947 = vmatmul.mubr.bf16.gmra.mrb[0].mxu0 %v3676
        %v3948 = vpop.f32.mrb[0].mxu0
        %v3949 = vadd.f32 0.0, %v3948
        %v3950 = vpop.f32.mrb[0].mxu0
        %v3951 = vpop.f32.mrb[0].mxu0
        %v3952 = vadd.f32 0.0, %v3951
        %v3953 = vpop.f32.mrb[0].mxu0
        %3954 = vmatprep.mubr.bf16.mxu0 0
        %3955 = vmatmul.mubr.bf16.gmra.mrb[0].mxu0 %v3693
        %v3956 = vpop.f32.mrb[0].mxu0
        %v3957 = vadd.f32 0.0, %v3956
        %v3958 = vpop.f32.mrb[0].mxu0
        %v3959 = vpop.f32.mrb[0].mxu0
        %v3960 = vadd.f32 0.0, %v3959
        %v3961 = vpop.f32.mrb[0].mxu0
        %3962 = vmatprep.mubr.bf16.mxu0 0
        %3963 = vmatmul.mubr.bf16.gmra.mrb[0].mxu0 %v3710
        %v3964 = vpop.f32.mrb[0].mxu0
        %v3965 = vadd.f32 0.0, %v3964
        %v3966 = vpop.f32.mrb[0].mxu0
        %v3967 = vpop.f32.mrb[0].mxu0
        %v3968 = vadd.f32 0.0, %v3967
        %v3969 = vpop.f32.mrb[0].mxu0
        %3970 = vmatprep.mubr.bf16.mxu0 0
        %3971 = vmatmul.mubr.bf16.gmra.mrb[0].mxu0 %v3727
        %v3972 = vpop.f32.mrb[0].mxu0
        %v3973 = vadd.f32 0.0, %v3972
        %v3974 = vpop.f32.mrb[0].mxu0
        %v3975 = vpop.f32.mrb[0].mxu0
        %v3976 = vadd.f32 0.0, %v3975
        %v3977 = vpop.f32.mrb[0].mxu0
        %3978 = vmatprep.mubr.bf16.mxu0 0
        %3979 = vmatmul.mubr.bf16.gmra.mrb[0].mxu0 %v3744
        %v3980 = vpop.f32.mrb[0].mxu0
        %v3981 = vadd.f32 0.0, %v3980
        %v3982 = vpop.f32.mrb[0].mxu0
        %v3983 = vpop.f32.mrb[0].mxu0
        %v3984 = vadd.f32 0.0, %v3983
        %v3985 = vpop.f32.mrb[0].mxu0
        %3986 = vdwg.mxu0
        %v3987 = vadd.f32 %v3408, %v3861
        %v3988 = vadd.f32 %v3409, %v3864
        %v3989 = vadd.f32 %v3410, %v3869
        %v3990 = vadd.f32 %v3411, %v3872
        %v3991 = vadd.f32 %v3412, %v3877
        %v3992 = vadd.f32 %v3413, %v3880
        %v3993 = vadd.f32 %v3414, %v3885
        %v3994 = vadd.f32 %v3415, %v3888
        %v3995 = vadd.f32 %v3416, %v3893
        %v3996 = vadd.f32 %v3417, %v3896
        %v3997 = vadd.f32 %v3418, %v3901
        %v3998 = vadd.f32 %v3419, %v3904
        %v3999 = vadd.f32 %v3420, %v3909
        %v4000 = vadd.f32 %v3421, %v3912
        %v4001 = vadd.f32 %v3422, %v3917
        %v4002 = vadd.f32 %v3423, %v3920
        %v4003 = vadd.f32 %v3424, %v3925
        %v4004 = vadd.f32 %v3425, %v3928
        %v4005 = vadd.f32 %v3426, %v3933
        %v4006 = vadd.f32 %v3427, %v3936
        %v4007 = vadd.f32 %v3428, %v3941
        %v4008 = vadd.f32 %v3429, %v3944
        %v4009 = vadd.f32 %v3430, %v3949
        %v4010 = vadd.f32 %v3431, %v3952
        %v4011 = vadd.f32 %v3432, %v3957
        %v4012 = vadd.f32 %v3433, %v3960
        %v4013 = vadd.f32 %v3434, %v3965
        %v4014 = vadd.f32 %v3435, %v3968
        %v4015 = vadd.f32 %v3436, %v3973
        %v4016 = vadd.f32 %v3437, %v3976
        %v4017 = vadd.f32 %v3438, %v3981
        %v4018 = vadd.f32 %v3439, %v3984
        %v4019 = vld [vmem:[%s3440] sm:$0xf0]
        %v4020 = vld [vmem:[%s3440 + $0x10] sm:$0xf0]
        %v4021 = vld [vmem:[%s3440 + $0x20] sm:$0xf0]
        %v4022 = vld [vmem:[%s3440 + $0x30] sm:$0xf0]
        %v4023 = vld [vmem:[%s3440 + $0x40] sm:$0xf0]
        %v4024 = vld [vmem:[%s3440 + $0x50] sm:$0xf0]
        %v4025 = vld [vmem:[%s3440 + $0x60] sm:$0xf0]
        %v4026 = vld [vmem:[%s3440 + $0x70] sm:$0xf0]
        %v4027 = vld [vmem:[%s3440 + $0x80] sm:$0xf0]
        %v4028 = vld [vmem:[%s3440 + $0x90] sm:$0xf0]
        %v4029 = vld [vmem:[%s3440 + $0xa0] sm:$0xf0]
        %v4030 = vld [vmem:[%s3440 + $0xb0] sm:$0xf0]
        %v4031 = vld [vmem:[%s3440 + $0xc0] sm:$0xf0]
        %v4032 = vld [vmem:[%s3440 + $0xd0] sm:$0xf0]
        %v4033 = vld [vmem:[%s3440 + $0xe0] sm:$0xf0]
        %v4034 = vld [vmem:[%s3440 + $0xf0] sm:$0xf0]
        %v4067 = vrot.slane %v4019, 4
        %v4068 = vrot.slane %v3442, 4
        %v4069 = vsel %vm867, %v4067, %v4068
        %v4070 = vrot.slane %v4020, 4
        %v4071 = vrot.slane %v3444, 4
        %v4072 = vsel %vm867, %v4070, %v4071
        %v4073 = vrot.slane %v4021, 4
        %v4074 = vrot.slane %v3446, 4
        %v4075 = vsel %vm867, %v4073, %v4074
        %v4076 = vrot.slane %v4022, 4
        %v4077 = vrot.slane %v3448, 4
        %v4078 = vsel %vm867, %v4076, %v4077
        %v4079 = vrot.slane %v4023, 4
        %v4080 = vrot.slane %v3450, 4
        %v4081 = vsel %vm867, %v4079, %v4080
        %v4082 = vrot.slane %v4024, 4
        %v4083 = vrot.slane %v3452, 4
        %v4084 = vsel %vm867, %v4082, %v4083
        %v4085 = vrot.slane %v4025, 4
        %v4086 = vrot.slane %v3454, 4
        %v4087 = vsel %vm867, %v4085, %v4086
        %v4088 = vrot.slane %v4026, 4
        %v4089 = vrot.slane %v3456, 4
        %v4090 = vsel %vm867, %v4088, %v4089
        %v4091 = vrot.slane %v4027, 4
        %v4092 = vrot.slane %v3458, 4
        %v4093 = vsel %vm867, %v4091, %v4092
        %v4094 = vrot.slane %v4028, 4
        %v4095 = vrot.slane %v3460, 4
        %v4096 = vsel %vm867, %v4094, %v4095
        %v4097 = vrot.slane %v4029, 4
        %v4098 = vrot.slane %v3462, 4
        %v4099 = vsel %vm867, %v4097, %v4098
        %v4100 = vrot.slane %v4030, 4
        %v4101 = vrot.slane %v3464, 4
        %v4102 = vsel %vm867, %v4100, %v4101
        %v4103 = vrot.slane %v4031, 4
        %v4104 = vrot.slane %v3466, 4
        %v4105 = vsel %vm867, %v4103, %v4104
        %v4106 = vrot.slane %v4032, 4
        %v4107 = vrot.slane %v3468, 4
        %v4108 = vsel %vm867, %v4106, %v4107
        %v4109 = vrot.slane %v4033, 4
        %v4110 = vrot.slane %v3470, 4
        %v4111 = vsel %vm867, %v4109, %v4110
        %v4112 = vrot.slane %v4034, 4
        %v4113 = vrot.slane %v3472, 4
        %v4114 = vsel %vm867, %v4112, %v4113
        %s4131 = scalar_lea.vmem [#allocation4], 448
        %v4132 = vld [vmem:[%s4131] sm:$0xf]
        %v4133 = vld [vmem:[%s4131 + $0x4] sm:$0xf]
        %v4134 = vld [vmem:[%s4131 + $0x8] sm:$0xf]
        %v4135 = vld [vmem:[%s4131 + $0xc] sm:$0xf]
        %v4136 = vld [vmem:[%s4131 + $0x10] sm:$0xf]
        %v4137 = vld [vmem:[%s4131 + $0x14] sm:$0xf]
        %v4138 = vld [vmem:[%s4131 + $0x18] sm:$0xf]
        %v4139 = vld [vmem:[%s4131 + $0x1c] sm:$0xf]
        %v4140 = vld [vmem:[%s4131 + $0x20] sm:$0xf]
        %v4141 = vld [vmem:[%s4131 + $0x24] sm:$0xf]
        %v4142 = vld [vmem:[%s4131 + $0x28] sm:$0xf]
        %v4143 = vld [vmem:[%s4131 + $0x2c] sm:$0xf]
        %v4144 = vld [vmem:[%s4131 + $0x30] sm:$0xf]
        %v4145 = vld [vmem:[%s4131 + $0x34] sm:$0xf]
        %v4146 = vld [vmem:[%s4131 + $0x38] sm:$0xf]
        %v4147 = vld [vmem:[%s4131 + $0x3c] sm:$0xf]
        %v4164 = vunpack.c.l.b16 %v4132
        %v4165 = vunpack.c.l.b16 %v4133
        %v4166 = vunpack.c.l.b16 %v4134
        %v4167 = vunpack.c.l.b16 %v4135
        %v4168 = vunpack.c.l.b16 %v4136
        %v4169 = vunpack.c.l.b16 %v4137
        %v4170 = vunpack.c.l.b16 %v4138
        %v4171 = vunpack.c.l.b16 %v4139
        %v4172 = vunpack.c.l.b16 %v4140
        %v4173 = vunpack.c.l.b16 %v4141
        %v4174 = vunpack.c.l.b16 %v4142
        %v4175 = vunpack.c.l.b16 %v4143
        %v4176 = vunpack.c.l.b16 %v4144
        %v4177 = vunpack.c.l.b16 %v4145
        %v4178 = vunpack.c.l.b16 %v4146
        %v4179 = vunpack.c.l.b16 %v4147
        %v4180 = vpack.c.b16 %v4165, %v4164
        %v4181 = vpack.c.b16 %v4167, %v4166
        %v4182 = vpack.c.b16 %v4169, %v4168
        %v4183 = vpack.c.b16 %v4171, %v4170
        %v4184 = vpack.c.b16 %v4173, %v4172
        %v4185 = vpack.c.b16 %v4175, %v4174
        %v4186 = vpack.c.b16 %v4177, %v4176
        %v4187 = vpack.c.b16 %v4179, %v4178
        %4196 = vmatprep.subr.bf16.mxu0 0
        %4197 = vmatpush1.bf16.msra.mxu0 %v4180
        %4198 = vmatprep.subr.bf16.mxu0 0
        %4199 = vmatpush1.bf16.msra.mxu0 %v4181
        %4200 = vmatprep.subr.bf16.mxu0 0
        %4201 = vmatpush1.bf16.msra.mxu0 %v4182
        %4202 = vmatprep.subr.bf16.mxu0 0
        %4203 = vmatpush1.bf16.msra.mxu0 %v4183
        %4204 = vmatprep.subr.bf16.mxu0 0
        %4205 = vmatpush1.bf16.msra.mxu0 %v4184
        %4206 = vmatprep.subr.bf16.mxu0 0
        %4207 = vmatpush1.bf16.msra.mxu0 %v4185
        %4208 = vmatprep.subr.bf16.mxu0 0
        %4209 = vmatpush1.bf16.msra.mxu0 %v4186
        %4210 = vmatprep.subr.bf16.mxu0 0
        %4211 = vmatpush1.bf16.msra.mxu0 %v4187
        %4212 = vmatprep.subr.bf16.mxu0 0
        %4213 = vmatpush1.bf16.msra.mxu0 0
        %4214 = vmatprep.subr.bf16.mxu0 0
        %4215 = vmatpush1.bf16.msra.mxu0 0
        %4216 = vmatprep.subr.bf16.mxu0 0
        %4217 = vmatpush1.bf16.msra.mxu0 0
        %4218 = vmatprep.subr.bf16.mxu0 0
        %4219 = vmatpush1.bf16.msra.mxu0 0
        %4220 = vmatprep.subr.bf16.mxu0 0
        %4221 = vmatpush1.bf16.msra.mxu0 0
        %4222 = vmatprep.subr.bf16.mxu0 0
        %4223 = vmatpush1.bf16.msra.mxu0 0
        %4224 = vmatprep.subr.bf16.mxu0 0
        %4225 = vmatpush1.bf16.msra.mxu0 0
        %4226 = vmatprep.subr.bf16.mxu0 0
        %4227 = vmatpush1.bf16.msra.mxu0 0
        %4228 = vmatprep.mubr.bf16.mxu0 0
        %4229 = vmatmul.mubr.bf16.gmra.mrb[0].mxu0 %v4069
        %v4230 = vpop.f32.mrb[0].mxu0
        %v4231 = vadd.f32 0.0, %v4230
        %v4232 = vpop.f32.mrb[0].mxu0
        %v4233 = vpop.f32.mrb[0].mxu0
        %v4234 = vadd.f32 0.0, %v4233
        %v4235 = vpop.f32.mrb[0].mxu0
        %4236 = vmatprep.mubr.bf16.mxu0 0
        %4237 = vmatmul.mubr.bf16.gmra.mrb[0].mxu0 %v4072
        %v4238 = vpop.f32.mrb[0].mxu0
        %v4239 = vadd.f32 0.0, %v4238
        %v4240 = vpop.f32.mrb[0].mxu0
        %v4241 = vpop.f32.mrb[0].mxu0
        %v4242 = vadd.f32 0.0, %v4241
        %v4243 = vpop.f32.mrb[0].mxu0
        %4244 = vmatprep.mubr.bf16.mxu0 0
        %4245 = vmatmul.mubr.bf16.gmra.mrb[0].mxu0 %v4075
        %v4246 = vpop.f32.mrb[0].mxu0
        %v4247 = vadd.f32 0.0, %v4246
        %v4248 = vpop.f32.mrb[0].mxu0
        %v4249 = vpop.f32.mrb[0].mxu0
        %v4250 = vadd.f32 0.0, %v4249
        %v4251 = vpop.f32.mrb[0].mxu0
        %4252 = vmatprep.mubr.bf16.mxu0 0
        %4253 = vmatmul.mubr.bf16.gmra.mrb[0].mxu0 %v4078
        %v4254 = vpop.f32.mrb[0].mxu0
        %v4255 = vadd.f32 0.0, %v4254
        %v4256 = vpop.f32.mrb[0].mxu0
        %v4257 = vpop.f32.mrb[0].mxu0
        %v4258 = vadd.f32 0.0, %v4257
        %v4259 = vpop.f32.mrb[0].mxu0
        %4260 = vmatprep.mubr.bf16.mxu0 0
        %4261 = vmatmul.mubr.bf16.gmra.mrb[0].mxu0 %v4081
        %v4262 = vpop.f32.mrb[0].mxu0
        %v4263 = vadd.f32 0.0, %v4262
        %v4264 = vpop.f32.mrb[0].mxu0
        %v4265 = vpop.f32.mrb[0].mxu0
        %v4266 = vadd.f32 0.0, %v4265
        %v4267 = vpop.f32.mrb[0].mxu0
        %4268 = vmatprep.mubr.bf16.mxu0 0
        %4269 = vmatmul.mubr.bf16.gmra.mrb[0].mxu0 %v4084
        %v4270 = vpop.f32.mrb[0].mxu0
        %v4271 = vadd.f32 0.0, %v4270
        %v4272 = vpop.f32.mrb[0].mxu0
        %v4273 = vpop.f32.mrb[0].mxu0
        %v4274 = vadd.f32 0.0, %v4273
        %v4275 = vpop.f32.mrb[0].mxu0
        %4276 = vmatprep.mubr.bf16.mxu0 0
        %4277 = vmatmul.mubr.bf16.gmra.mrb[0].mxu0 %v4087
        %v4278 = vpop.f32.mrb[0].mxu0
        %v4279 = vadd.f32 0.0, %v4278
        %v4280 = vpop.f32.mrb[0].mxu0
        %v4281 = vpop.f32.mrb[0].mxu0
        %v4282 = vadd.f32 0.0, %v4281
        %v4283 = vpop.f32.mrb[0].mxu0
        %4284 = vmatprep.mubr.bf16.mxu0 0
        %4285 = vmatmul.mubr.bf16.gmra.mrb[0].mxu0 %v4090
        %v4286 = vpop.f32.mrb[0].mxu0
        %v4287 = vadd.f32 0.0, %v4286
        %v4288 = vpop.f32.mrb[0].mxu0
        %v4289 = vpop.f32.mrb[0].mxu0
        %v4290 = vadd.f32 0.0, %v4289
        %v4291 = vpop.f32.mrb[0].mxu0
        %4292 = vmatprep.mubr.bf16.mxu0 0
        %4293 = vmatmul.mubr.bf16.gmra.mrb[0].mxu0 %v4093
        %v4294 = vpop.f32.mrb[0].mxu0
        %v4295 = vadd.f32 0.0, %v4294
        %v4296 = vpop.f32.mrb[0].mxu0
        %v4297 = vpop.f32.mrb[0].mxu0
        %v4298 = vadd.f32 0.0, %v4297
        %v4299 = vpop.f32.mrb[0].mxu0
        %4300 = vmatprep.mubr.bf16.mxu0 0
        %4301 = vmatmul.mubr.bf16.gmra.mrb[0].mxu0 %v4096
        %v4302 = vpop.f32.mrb[0].mxu0
        %v4303 = vadd.f32 0.0, %v4302
        %v4304 = vpop.f32.mrb[0].mxu0
        %v4305 = vpop.f32.mrb[0].mxu0
        %v4306 = vadd.f32 0.0, %v4305
        %v4307 = vpop.f32.mrb[0].mxu0
        %4308 = vmatprep.mubr.bf16.mxu0 0
        %4309 = vmatmul.mubr.bf16.gmra.mrb[0].mxu0 %v4099
        %v4310 = vpop.f32.mrb[0].mxu0
        %v4311 = vadd.f32 0.0, %v4310
        %v4312 = vpop.f32.mrb[0].mxu0
        %v4313 = vpop.f32.mrb[0].mxu0
        %v4314 = vadd.f32 0.0, %v4313
        %v4315 = vpop.f32.mrb[0].mxu0
        %4316 = vmatprep.mubr.bf16.mxu0 0
        %4317 = vmatmul.mubr.bf16.gmra.mrb[0].mxu0 %v4102
        %v4318 = vpop.f32.mrb[0].mxu0
        %v4319 = vadd.f32 0.0, %v4318
        %v4320 = vpop.f32.mrb[0].mxu0
        %v4321 = vpop.f32.mrb[0].mxu0
        %v4322 = vadd.f32 0.0, %v4321
        %v4323 = vpop.f32.mrb[0].mxu0
        %4324 = vmatprep.mubr.bf16.mxu0 0
        %4325 = vmatmul.mubr.bf16.gmra.mrb[0].mxu0 %v4105
        %v4326 = vpop.f32.mrb[0].mxu0
        %v4327 = vadd.f32 0.0, %v4326
        %v4328 = vpop.f32.mrb[0].mxu0
        %v4329 = vpop.f32.mrb[0].mxu0
        %v4330 = vadd.f32 0.0, %v4329
        %v4331 = vpop.f32.mrb[0].mxu0
        %4332 = vmatprep.mubr.bf16.mxu0 0
        %4333 = vmatmul.mubr.bf16.gmra.mrb[0].mxu0 %v4108
        %v4334 = vpop.f32.mrb[0].mxu0
        %v4335 = vadd.f32 0.0, %v4334
        %v4336 = vpop.f32.mrb[0].mxu0
        %v4337 = vpop.f32.mrb[0].mxu0
        %v4338 = vadd.f32 0.0, %v4337
        %v4339 = vpop.f32.mrb[0].mxu0
        %4340 = vmatprep.mubr.bf16.mxu0 0
        %4341 = vmatmul.mubr.bf16.gmra.mrb[0].mxu0 %v4111
        %v4342 = vpop.f32.mrb[0].mxu0
        %v4343 = vadd.f32 0.0, %v4342
        %v4344 = vpop.f32.mrb[0].mxu0
        %v4345 = vpop.f32.mrb[0].mxu0
        %v4346 = vadd.f32 0.0, %v4345
        %v4347 = vpop.f32.mrb[0].mxu0
        %4348 = vmatprep.mubr.bf16.mxu0 0
        %4349 = vmatmul.mubr.bf16.gmra.mrb[0].mxu0 %v4114
        %v4350 = vpop.f32.mrb[0].mxu0
        %v4351 = vadd.f32 0.0, %v4350
        %v4352 = vpop.f32.mrb[0].mxu0
        %v4353 = vpop.f32.mrb[0].mxu0
        %v4354 = vadd.f32 0.0, %v4353
        %v4355 = vpop.f32.mrb[0].mxu0
        %4356 = vdwg.mxu0
        %v4357 = vadd.f32 %v3987, %v4231
        %v4358 = vadd.f32 %v3988, %v4234
        %v4359 = vadd.f32 %v3989, %v4239
        %v4360 = vadd.f32 %v3990, %v4242
        %v4361 = vadd.f32 %v3991, %v4247
        %v4362 = vadd.f32 %v3992, %v4250
        %v4363 = vadd.f32 %v3993, %v4255
        %v4364 = vadd.f32 %v3994, %v4258
        %v4365 = vadd.f32 %v3995, %v4263
        %v4366 = vadd.f32 %v3996, %v4266
        %v4367 = vadd.f32 %v3997, %v4271
        %v4368 = vadd.f32 %v3998, %v4274
        %v4369 = vadd.f32 %v3999, %v4279
        %v4370 = vadd.f32 %v4000, %v4282
        %v4371 = vadd.f32 %v4001, %v4287
        %v4372 = vadd.f32 %v4002, %v4290
        %v4373 = vadd.f32 %v4003, %v4295
        %v4374 = vadd.f32 %v4004, %v4298
        %v4375 = vadd.f32 %v4005, %v4303
        %v4376 = vadd.f32 %v4006, %v4306
        %v4377 = vadd.f32 %v4007, %v4311
        %v4378 = vadd.f32 %v4008, %v4314
        %v4379 = vadd.f32 %v4009, %v4319
        %v4380 = vadd.f32 %v4010, %v4322
        %v4381 = vadd.f32 %v4011, %v4327
        %v4382 = vadd.f32 %v4012, %v4330
        %v4383 = vadd.f32 %v4013, %v4335
        %v4384 = vadd.f32 %v4014, %v4338
        %v4385 = vadd.f32 %v4015, %v4343
        %v4386 = vadd.f32 %v4016, %v4346
        %v4387 = vadd.f32 %v4017, %v4351
        %v4388 = vadd.f32 %v4018, %v4354
        %v4389 = vld [vmem:[%s3440 + $0x8] sm:$0x1f]
        %v4390 = vld [vmem:[%s3440 + $0x18] sm:$0x1f]
        %v4391 = vld [vmem:[%s3440 + $0x28] sm:$0x1f]
        %v4392 = vld [vmem:[%s3440 + $0x38] sm:$0x1f]
        %v4393 = vld [vmem:[%s3440 + $0x48] sm:$0x1f]
        %v4394 = vld [vmem:[%s3440 + $0x58] sm:$0x1f]
        %v4395 = vld [vmem:[%s3440 + $0x68] sm:$0x1f]
        %v4396 = vld [vmem:[%s3440 + $0x78] sm:$0x1f]
        %v4397 = vld [vmem:[%s3440 + $0x88] sm:$0x1f]
        %v4398 = vld [vmem:[%s3440 + $0x98] sm:$0x1f]
        %v4399 = vld [vmem:[%s3440 + $0xa8] sm:$0x1f]
        %v4400 = vld [vmem:[%s3440 + $0xb8] sm:$0x1f]
        %v4401 = vld [vmem:[%s3440 + $0xc8] sm:$0x1f]
        %v4402 = vld [vmem:[%s3440 + $0xd8] sm:$0x1f]
        %v4403 = vld [vmem:[%s3440 + $0xe8] sm:$0x1f]
        %v4404 = vld [vmem:[%s3440 + $0xf8] sm:$0x1f]
        %v4406 = vshrl.u32 %v4019, 16
        %v4408 = vrot.slane %v4406, 4
        %v4409 = vshll.u32 %v4019, 16
        %v4411 = vrot.slane %v4409, 5
        %v4412 = vor.u32 %v4408, %v4411
        %v4414 = vshrl.u32 %v4389, 16
        %v4416 = vrot.slane %v4414, 4
        %v4417 = vshll.u32 %v4389, 16
        %v4419 = vrot.slane %v4417, 5
        %v4420 = vor.u32 %v4416, %v4419
        %v4421 = vsel %vm1383, %v4412, %v4420
        %v4423 = vshrl.u32 %v4020, 16
        %v4425 = vrot.slane %v4423, 4
        %v4426 = vshll.u32 %v4020, 16
        %v4428 = vrot.slane %v4426, 5
        %v4429 = vor.u32 %v4425, %v4428
        %v4431 = vshrl.u32 %v4390, 16
        %v4433 = vrot.slane %v4431, 4
        %v4434 = vshll.u32 %v4390, 16
        %v4436 = vrot.slane %v4434, 5
        %v4437 = vor.u32 %v4433, %v4436
        %v4438 = vsel %vm1383, %v4429, %v4437
        %v4440 = vshrl.u32 %v4021, 16
        %v4442 = vrot.slane %v4440, 4
        %v4443 = vshll.u32 %v4021, 16
        %v4445 = vrot.slane %v4443, 5
        %v4446 = vor.u32 %v4442, %v4445
        %v4448 = vshrl.u32 %v4391, 16
        %v4450 = vrot.slane %v4448, 4
        %v4451 = vshll.u32 %v4391, 16
        %v4453 = vrot.slane %v4451, 5
        %v4454 = vor.u32 %v4450, %v4453
        %v4455 = vsel %vm1383, %v4446, %v4454
        %v4457 = vshrl.u32 %v4022, 16
        %v4459 = vrot.slane %v4457, 4
        %v4460 = vshll.u32 %v4022, 16
        %v4462 = vrot.slane %v4460, 5
        %v4463 = vor.u32 %v4459, %v4462
        %v4465 = vshrl.u32 %v4392, 16
        %v4467 = vrot.slane %v4465, 4
        %v4468 = vshll.u32 %v4392, 16
        %v4470 = vrot.slane %v4468, 5
        %v4471 = vor.u32 %v4467, %v4470
        %v4472 = vsel %vm1383, %v4463, %v4471
        %v4474 = vshrl.u32 %v4023, 16
        %v4476 = vrot.slane %v4474, 4
        %v4477 = vshll.u32 %v4023, 16
        %v4479 = vrot.slane %v4477, 5
        %v4480 = vor.u32 %v4476, %v4479
        %v4482 = vshrl.u32 %v4393, 16
        %v4484 = vrot.slane %v4482, 4
        %v4485 = vshll.u32 %v4393, 16
        %v4487 = vrot.slane %v4485, 5
        %v4488 = vor.u32 %v4484, %v4487
        %v4489 = vsel %vm1383, %v4480, %v4488
        %v4491 = vshrl.u32 %v4024, 16
        %v4493 = vrot.slane %v4491, 4
        %v4494 = vshll.u32 %v4024, 16
        %v4496 = vrot.slane %v4494, 5
        %v4497 = vor.u32 %v4493, %v4496
        %v4499 = vshrl.u32 %v4394, 16
        %v4501 = vrot.slane %v4499, 4
        %v4502 = vshll.u32 %v4394, 16
        %v4504 = vrot.slane %v4502, 5
        %v4505 = vor.u32 %v4501, %v4504
        %v4506 = vsel %vm1383, %v4497, %v4505
        %v4508 = vshrl.u32 %v4025, 16
        %v4510 = vrot.slane %v4508, 4
        %v4511 = vshll.u32 %v4025, 16
        %v4513 = vrot.slane %v4511, 5
        %v4514 = vor.u32 %v4510, %v4513
        %v4516 = vshrl.u32 %v4395, 16
        %v4518 = vrot.slane %v4516, 4
        %v4519 = vshll.u32 %v4395, 16
        %v4521 = vrot.slane %v4519, 5
        %v4522 = vor.u32 %v4518, %v4521
        %v4523 = vsel %vm1383, %v4514, %v4522
        %v4525 = vshrl.u32 %v4026, 16
        %v4527 = vrot.slane %v4525, 4
        %v4528 = vshll.u32 %v4026, 16
        %v4530 = vrot.slane %v4528, 5
        %v4531 = vor.u32 %v4527, %v4530
        %v4533 = vshrl.u32 %v4396, 16
        %v4535 = vrot.slane %v4533, 4
        %v4536 = vshll.u32 %v4396, 16
        %v4538 = vrot.slane %v4536, 5
        %v4539 = vor.u32 %v4535, %v4538
        %v4540 = vsel %vm1383, %v4531, %v4539
        %v4542 = vshrl.u32 %v4027, 16
        %v4544 = vrot.slane %v4542, 4
        %v4545 = vshll.u32 %v4027, 16
        %v4547 = vrot.slane %v4545, 5
        %v4548 = vor.u32 %v4544, %v4547
        %v4550 = vshrl.u32 %v4397, 16
        %v4552 = vrot.slane %v4550, 4
        %v4553 = vshll.u32 %v4397, 16
        %v4555 = vrot.slane %v4553, 5
        %v4556 = vor.u32 %v4552, %v4555
        %v4557 = vsel %vm1383, %v4548, %v4556
        %v4559 = vshrl.u32 %v4028, 16
        %v4561 = vrot.slane %v4559, 4
        %v4562 = vshll.u32 %v4028, 16
        %v4564 = vrot.slane %v4562, 5
        %v4565 = vor.u32 %v4561, %v4564
        %v4567 = vshrl.u32 %v4398, 16
        %v4569 = vrot.slane %v4567, 4
        %v4570 = vshll.u32 %v4398, 16
        %v4572 = vrot.slane %v4570, 5
        %v4573 = vor.u32 %v4569, %v4572
        %v4574 = vsel %vm1383, %v4565, %v4573
        %v4576 = vshrl.u32 %v4029, 16
        %v4578 = vrot.slane %v4576, 4
        %v4579 = vshll.u32 %v4029, 16
        %v4581 = vrot.slane %v4579, 5
        %v4582 = vor.u32 %v4578, %v4581
        %v4584 = vshrl.u32 %v4399, 16
        %v4586 = vrot.slane %v4584, 4
        %v4587 = vshll.u32 %v4399, 16
        %v4589 = vrot.slane %v4587, 5
        %v4590 = vor.u32 %v4586, %v4589
        %v4591 = vsel %vm1383, %v4582, %v4590
        %v4593 = vshrl.u32 %v4030, 16
        %v4595 = vrot.slane %v4593, 4
        %v4596 = vshll.u32 %v4030, 16
        %v4598 = vrot.slane %v4596, 5
        %v4599 = vor.u32 %v4595, %v4598
        %v4601 = vshrl.u32 %v4400, 16
        %v4603 = vrot.slane %v4601, 4
        %v4604 = vshll.u32 %v4400, 16
        %v4606 = vrot.slane %v4604, 5
        %v4607 = vor.u32 %v4603, %v4606
        %v4608 = vsel %vm1383, %v4599, %v4607
        %v4610 = vshrl.u32 %v4031, 16
        %v4612 = vrot.slane %v4610, 4
        %v4613 = vshll.u32 %v4031, 16
        %v4615 = vrot.slane %v4613, 5
        %v4616 = vor.u32 %v4612, %v4615
        %v4618 = vshrl.u32 %v4401, 16
        %v4620 = vrot.slane %v4618, 4
        %v4621 = vshll.u32 %v4401, 16
        %v4623 = vrot.slane %v4621, 5
        %v4624 = vor.u32 %v4620, %v4623
        %v4625 = vsel %vm1383, %v4616, %v4624
        %v4627 = vshrl.u32 %v4032, 16
        %v4629 = vrot.slane %v4627, 4
        %v4630 = vshll.u32 %v4032, 16
        %v4632 = vrot.slane %v4630, 5
        %v4633 = vor.u32 %v4629, %v4632
        %v4635 = vshrl.u32 %v4402, 16
        %v4637 = vrot.slane %v4635, 4
        %v4638 = vshll.u32 %v4402, 16
        %v4640 = vrot.slane %v4638, 5
        %v4641 = vor.u32 %v4637, %v4640
        %v4642 = vsel %vm1383, %v4633, %v4641
        %v4644 = vshrl.u32 %v4033, 16
        %v4646 = vrot.slane %v4644, 4
        %v4647 = vshll.u32 %v4033, 16
        %v4649 = vrot.slane %v4647, 5
        %v4650 = vor.u32 %v4646, %v4649
        %v4652 = vshrl.u32 %v4403, 16
        %v4654 = vrot.slane %v4652, 4
        %v4655 = vshll.u32 %v4403, 16
        %v4657 = vrot.slane %v4655, 5
        %v4658 = vor.u32 %v4654, %v4657
        %v4659 = vsel %vm1383, %v4650, %v4658
        %v4661 = vshrl.u32 %v4034, 16
        %v4663 = vrot.slane %v4661, 4
        %v4664 = vshll.u32 %v4034, 16
        %v4666 = vrot.slane %v4664, 5
        %v4667 = vor.u32 %v4663, %v4666
        %v4669 = vshrl.u32 %v4404, 16
        %v4671 = vrot.slane %v4669, 4
        %v4672 = vshll.u32 %v4404, 16
        %v4674 = vrot.slane %v4672, 5
        %v4675 = vor.u32 %v4671, %v4674
        %v4676 = vsel %vm1383, %v4667, %v4675
        %s4693 = scalar_lea.vmem [#allocation4], 512
        %v4694 = vld [vmem:[%s4693] sm:$0xf]
        %v4695 = vld [vmem:[%s4693 + $0x4] sm:$0xf]
        %v4696 = vld [vmem:[%s4693 + $0x8] sm:$0xf]
        %v4697 = vld [vmem:[%s4693 + $0xc] sm:$0xf]
        %v4698 = vld [vmem:[%s4693 + $0x10] sm:$0xf]
        %v4699 = vld [vmem:[%s4693 + $0x14] sm:$0xf]
        %v4700 = vld [vmem:[%s4693 + $0x18] sm:$0xf]
        %v4701 = vld [vmem:[%s4693 + $0x1c] sm:$0xf]
        %v4702 = vld [vmem:[%s4693 + $0x20] sm:$0xf]
        %v4703 = vld [vmem:[%s4693 + $0x24] sm:$0xf]
        %v4704 = vld [vmem:[%s4693 + $0x28] sm:$0xf]
        %v4705 = vld [vmem:[%s4693 + $0x2c] sm:$0xf]
        %v4706 = vld [vmem:[%s4693 + $0x30] sm:$0xf]
        %v4707 = vld [vmem:[%s4693 + $0x34] sm:$0xf]
        %v4708 = vld [vmem:[%s4693 + $0x38] sm:$0xf]
        %v4709 = vld [vmem:[%s4693 + $0x3c] sm:$0xf]
        %v4726 = vunpack.c.l.b16 %v4694
        %v4727 = vunpack.c.l.b16 %v4695
        %v4728 = vunpack.c.l.b16 %v4696
        %v4729 = vunpack.c.l.b16 %v4697
        %v4730 = vunpack.c.l.b16 %v4698
        %v4731 = vunpack.c.l.b16 %v4699
        %v4732 = vunpack.c.l.b16 %v4700
        %v4733 = vunpack.c.l.b16 %v4701
        %v4734 = vunpack.c.l.b16 %v4702
        %v4735 = vunpack.c.l.b16 %v4703
        %v4736 = vunpack.c.l.b16 %v4704
        %v4737 = vunpack.c.l.b16 %v4705
        %v4738 = vunpack.c.l.b16 %v4706
        %v4739 = vunpack.c.l.b16 %v4707
        %v4740 = vunpack.c.l.b16 %v4708
        %v4741 = vunpack.c.l.b16 %v4709
        %v4742 = vpack.c.b16 %v4727, %v4726
        %v4743 = vpack.c.b16 %v4729, %v4728
        %v4744 = vpack.c.b16 %v4731, %v4730
        %v4745 = vpack.c.b16 %v4733, %v4732
        %v4746 = vpack.c.b16 %v4735, %v4734
        %v4747 = vpack.c.b16 %v4737, %v4736
        %v4748 = vpack.c.b16 %v4739, %v4738
        %v4749 = vpack.c.b16 %v4741, %v4740
        %4758 = vmatprep.subr.bf16.mxu0 0
        %4759 = vmatpush1.bf16.msra.mxu0 %v4742
        %4760 = vmatprep.subr.bf16.mxu0 0
        %4761 = vmatpush1.bf16.msra.mxu0 %v4743
        %4762 = vmatprep.subr.bf16.mxu0 0
        %4763 = vmatpush1.bf16.msra.mxu0 %v4744
        %4764 = vmatprep.subr.bf16.mxu0 0
        %4765 = vmatpush1.bf16.msra.mxu0 %v4745
        %4766 = vmatprep.subr.bf16.mxu0 0
        %4767 = vmatpush1.bf16.msra.mxu0 %v4746
        %4768 = vmatprep.subr.bf16.mxu0 0
        %4769 = vmatpush1.bf16.msra.mxu0 %v4747
        %4770 = vmatprep.subr.bf16.mxu0 0
        %4771 = vmatpush1.bf16.msra.mxu0 %v4748
        %4772 = vmatprep.subr.bf16.mxu0 0
        %4773 = vmatpush1.bf16.msra.mxu0 %v4749
        %4774 = vmatprep.subr.bf16.mxu0 0
        %4775 = vmatpush1.bf16.msra.mxu0 0
        %4776 = vmatprep.subr.bf16.mxu0 0
        %4777 = vmatpush1.bf16.msra.mxu0 0
        %4778 = vmatprep.subr.bf16.mxu0 0
        %4779 = vmatpush1.bf16.msra.mxu0 0
        %4780 = vmatprep.subr.bf16.mxu0 0
        %4781 = vmatpush1.bf16.msra.mxu0 0
        %4782 = vmatprep.subr.bf16.mxu0 0
        %4783 = vmatpush1.bf16.msra.mxu0 0
        %4784 = vmatprep.subr.bf16.mxu0 0
        %4785 = vmatpush1.bf16.msra.mxu0 0
        %4786 = vmatprep.subr.bf16.mxu0 0
        %4787 = vmatpush1.bf16.msra.mxu0 0
        %4788 = vmatprep.subr.bf16.mxu0 0
        %4789 = vmatpush1.bf16.msra.mxu0 0
        %4790 = vmatprep.mubr.bf16.mxu0 0
        %4791 = vmatmul.mubr.bf16.gmra.mrb[0].mxu0 %v4421
        %v4792 = vpop.f32.mrb[0].mxu0
        %v4793 = vadd.f32 0.0, %v4792
        %v4794 = vpop.f32.mrb[0].mxu0
        %v4795 = vpop.f32.mrb[0].mxu0
        %v4796 = vadd.f32 0.0, %v4795
        %v4797 = vpop.f32.mrb[0].mxu0
        %4798 = vmatprep.mubr.bf16.mxu0 0
        %4799 = vmatmul.mubr.bf16.gmra.mrb[0].mxu0 %v4438
        %v4800 = vpop.f32.mrb[0].mxu0
        %v4801 = vadd.f32 0.0, %v4800
        %v4802 = vpop.f32.mrb[0].mxu0
        %v4803 = vpop.f32.mrb[0].mxu0
        %v4804 = vadd.f32 0.0, %v4803
        %v4805 = vpop.f32.mrb[0].mxu0
        %4806 = vmatprep.mubr.bf16.mxu0 0
        %4807 = vmatmul.mubr.bf16.gmra.mrb[0].mxu0 %v4455
        %v4808 = vpop.f32.mrb[0].mxu0
        %v4809 = vadd.f32 0.0, %v4808
        %v4810 = vpop.f32.mrb[0].mxu0
        %v4811 = vpop.f32.mrb[0].mxu0
        %v4812 = vadd.f32 0.0, %v4811
        %v4813 = vpop.f32.mrb[0].mxu0
        %4814 = vmatprep.mubr.bf16.mxu0 0
        %4815 = vmatmul.mubr.bf16.gmra.mrb[0].mxu0 %v4472
        %v4816 = vpop.f32.mrb[0].mxu0
        %v4817 = vadd.f32 0.0, %v4816
        %v4818 = vpop.f32.mrb[0].mxu0
        %v4819 = vpop.f32.mrb[0].mxu0
        %v4820 = vadd.f32 0.0, %v4819
        %v4821 = vpop.f32.mrb[0].mxu0
        %4822 = vmatprep.mubr.bf16.mxu0 0
        %4823 = vmatmul.mubr.bf16.gmra.mrb[0].mxu0 %v4489
        %v4824 = vpop.f32.mrb[0].mxu0
        %v4825 = vadd.f32 0.0, %v4824
        %v4826 = vpop.f32.mrb[0].mxu0
        %v4827 = vpop.f32.mrb[0].mxu0
        %v4828 = vadd.f32 0.0, %v4827
        %v4829 = vpop.f32.mrb[0].mxu0
        %4830 = vmatprep.mubr.bf16.mxu0 0
        %4831 = vmatmul.mubr.bf16.gmra.mrb[0].mxu0 %v4506
        %v4832 = vpop.f32.mrb[0].mxu0
        %v4833 = vadd.f32 0.0, %v4832
        %v4834 = vpop.f32.mrb[0].mxu0
        %v4835 = vpop.f32.mrb[0].mxu0
        %v4836 = vadd.f32 0.0, %v4835
        %v4837 = vpop.f32.mrb[0].mxu0
        %4838 = vmatprep.mubr.bf16.mxu0 0
        %4839 = vmatmul.mubr.bf16.gmra.mrb[0].mxu0 %v4523
        %v4840 = vpop.f32.mrb[0].mxu0
        %v4841 = vadd.f32 0.0, %v4840
        %v4842 = vpop.f32.mrb[0].mxu0
        %v4843 = vpop.f32.mrb[0].mxu0
        %v4844 = vadd.f32 0.0, %v4843
        %v4845 = vpop.f32.mrb[0].mxu0
        %4846 = vmatprep.mubr.bf16.mxu0 0
        %4847 = vmatmul.mubr.bf16.gmra.mrb[0].mxu0 %v4540
        %v4848 = vpop.f32.mrb[0].mxu0
        %v4849 = vadd.f32 0.0, %v4848
        %v4850 = vpop.f32.mrb[0].mxu0
        %v4851 = vpop.f32.mrb[0].mxu0
        %v4852 = vadd.f32 0.0, %v4851
        %v4853 = vpop.f32.mrb[0].mxu0
        %4854 = vmatprep.mubr.bf16.mxu0 0
        %4855 = vmatmul.mubr.bf16.gmra.mrb[0].mxu0 %v4557
        %v4856 = vpop.f32.mrb[0].mxu0
        %v4857 = vadd.f32 0.0, %v4856
        %v4858 = vpop.f32.mrb[0].mxu0
        %v4859 = vpop.f32.mrb[0].mxu0
        %v4860 = vadd.f32 0.0, %v4859
        %v4861 = vpop.f32.mrb[0].mxu0
        %4862 = vmatprep.mubr.bf16.mxu0 0
        %4863 = vmatmul.mubr.bf16.gmra.mrb[0].mxu0 %v4574
        %v4864 = vpop.f32.mrb[0].mxu0
        %v4865 = vadd.f32 0.0, %v4864
        %v4866 = vpop.f32.mrb[0].mxu0
        %v4867 = vpop.f32.mrb[0].mxu0
        %v4868 = vadd.f32 0.0, %v4867
        %v4869 = vpop.f32.mrb[0].mxu0
        %4870 = vmatprep.mubr.bf16.mxu0 0
        %4871 = vmatmul.mubr.bf16.gmra.mrb[0].mxu0 %v4591
        %v4872 = vpop.f32.mrb[0].mxu0
        %v4873 = vadd.f32 0.0, %v4872
        %v4874 = vpop.f32.mrb[0].mxu0
        %v4875 = vpop.f32.mrb[0].mxu0
        %v4876 = vadd.f32 0.0, %v4875
        %v4877 = vpop.f32.mrb[0].mxu0
        %4878 = vmatprep.mubr.bf16.mxu0 0
        %4879 = vmatmul.mubr.bf16.gmra.mrb[0].mxu0 %v4608
        %v4880 = vpop.f32.mrb[0].mxu0
        %v4881 = vadd.f32 0.0, %v4880
        %v4882 = vpop.f32.mrb[0].mxu0
        %v4883 = vpop.f32.mrb[0].mxu0
        %v4884 = vadd.f32 0.0, %v4883
        %v4885 = vpop.f32.mrb[0].mxu0
        %4886 = vmatprep.mubr.bf16.mxu0 0
        %4887 = vmatmul.mubr.bf16.gmra.mrb[0].mxu0 %v4625
        %v4888 = vpop.f32.mrb[0].mxu0
        %v4889 = vadd.f32 0.0, %v4888
        %v4890 = vpop.f32.mrb[0].mxu0
        %v4891 = vpop.f32.mrb[0].mxu0
        %v4892 = vadd.f32 0.0, %v4891
        %v4893 = vpop.f32.mrb[0].mxu0
        %4894 = vmatprep.mubr.bf16.mxu0 0
        %4895 = vmatmul.mubr.bf16.gmra.mrb[0].mxu0 %v4642
        %v4896 = vpop.f32.mrb[0].mxu0
        %v4897 = vadd.f32 0.0, %v4896
        %v4898 = vpop.f32.mrb[0].mxu0
        %v4899 = vpop.f32.mrb[0].mxu0
        %v4900 = vadd.f32 0.0, %v4899
        %v4901 = vpop.f32.mrb[0].mxu0
        %4902 = vmatprep.mubr.bf16.mxu0 0
        %4903 = vmatmul.mubr.bf16.gmra.mrb[0].mxu0 %v4659
        %v4904 = vpop.f32.mrb[0].mxu0
        %v4905 = vadd.f32 0.0, %v4904
        %v4906 = vpop.f32.mrb[0].mxu0
        %v4907 = vpop.f32.mrb[0].mxu0
        %v4908 = vadd.f32 0.0, %v4907
        %v4909 = vpop.f32.mrb[0].mxu0
        %4910 = vmatprep.mubr.bf16.mxu0 0
        %4911 = vmatmul.mubr.bf16.gmra.mrb[0].mxu0 %v4676
        %v4912 = vpop.f32.mrb[0].mxu0
        %v4913 = vadd.f32 0.0, %v4912
        %v4914 = vpop.f32.mrb[0].mxu0
        %v4915 = vpop.f32.mrb[0].mxu0
        %v4916 = vadd.f32 0.0, %v4915
        %v4917 = vpop.f32.mrb[0].mxu0
        %4918 = vdwg.mxu0
        %v4919 = vadd.f32 %v4357, %v4793
        %v4920 = vadd.f32 %v4358, %v4796
        %v4921 = vadd.f32 %v4359, %v4801
        %v4922 = vadd.f32 %v4360, %v4804
        %v4923 = vadd.f32 %v4361, %v4809
        %v4924 = vadd.f32 %v4362, %v4812
        %v4925 = vadd.f32 %v4363, %v4817
        %v4926 = vadd.f32 %v4364, %v4820
        %v4927 = vadd.f32 %v4365, %v4825
        %v4928 = vadd.f32 %v4366, %v4828
        %v4929 = vadd.f32 %v4367, %v4833
        %v4930 = vadd.f32 %v4368, %v4836
        %v4931 = vadd.f32 %v4369, %v4841
        %v4932 = vadd.f32 %v4370, %v4844
        %v4933 = vadd.f32 %v4371, %v4849
        %v4934 = vadd.f32 %v4372, %v4852
        %v4935 = vadd.f32 %v4373, %v4857
        %v4936 = vadd.f32 %v4374, %v4860
        %v4937 = vadd.f32 %v4375, %v4865
        %v4938 = vadd.f32 %v4376, %v4868
        %v4939 = vadd.f32 %v4377, %v4873
        %v4940 = vadd.f32 %v4378, %v4876
        %v4941 = vadd.f32 %v4379, %v4881
        %v4942 = vadd.f32 %v4380, %v4884
        %v4943 = vadd.f32 %v4381, %v4889
        %v4944 = vadd.f32 %v4382, %v4892
        %v4945 = vadd.f32 %v4383, %v4897
        %v4946 = vadd.f32 %v4384, %v4900
        %v4947 = vadd.f32 %v4385, %v4905
        %v4948 = vadd.f32 %v4386, %v4908
        %v4949 = vadd.f32 %v4387, %v4913
        %v4950 = vadd.f32 %v4388, %v4916
        %v4952 = vlaneseq
        %v4953 = vshrl.u32 %v4952, 7
        %v4954 = vsub.s32 0, %v4953
        %v4955 = vrot.slane %v481, %v4954
        %v4957 = vadd.f32 %v4919, %v4955
        %v4958 = vadd.f32 %v4920, %v4955
        %v4959 = vadd.f32 %v4921, %v4955
        %v4960 = vadd.f32 %v4922, %v4955
        %v4961 = vadd.f32 %v4923, %v4955
        %v4962 = vadd.f32 %v4924, %v4955
        %v4963 = vadd.f32 %v4925, %v4955
        %v4964 = vadd.f32 %v4926, %v4955
        %v4965 = vadd.f32 %v4927, %v4955
        %v4966 = vadd.f32 %v4928, %v4955
        %v4967 = vadd.f32 %v4929, %v4955
        %v4968 = vadd.f32 %v4930, %v4955
        %v4969 = vadd.f32 %v4931, %v4955
        %v4970 = vadd.f32 %v4932, %v4955
        %v4971 = vadd.f32 %v4933, %v4955
        %v4972 = vadd.f32 %v4934, %v4955
        %v4973 = vadd.f32 %v4935, %v4955
        %v4974 = vadd.f32 %v4936, %v4955
        %v4975 = vadd.f32 %v4937, %v4955
        %v4976 = vadd.f32 %v4938, %v4955
        %v4977 = vadd.f32 %v4939, %v4955
        %v4978 = vadd.f32 %v4940, %v4955
        %v4979 = vadd.f32 %v4941, %v4955
        %v4980 = vadd.f32 %v4942, %v4955
        %v4981 = vadd.f32 %v4943, %v4955
        %v4982 = vadd.f32 %v4944, %v4955
        %v4983 = vadd.f32 %v4945, %v4955
        %v4984 = vadd.f32 %v4946, %v4955
        %v4985 = vadd.f32 %v4947, %v4955
        %v4986 = vadd.f32 %v4948, %v4955
        %v4987 = vadd.f32 %v4949, %v4955
        %v4988 = vadd.f32 %v4950, %v4955
        %v4989 = vmax.f32 %v4957, 0.0
        %v4990 = vmax.f32 %v4958, 0.0
        %v4991 = vmax.f32 %v4959, 0.0
        %v4992 = vmax.f32 %v4960, 0.0
        %v4993 = vmax.f32 %v4961, 0.0
        %v4994 = vmax.f32 %v4962, 0.0
        %v4995 = vmax.f32 %v4963, 0.0
        %v4996 = vmax.f32 %v4964, 0.0
        %v4997 = vmax.f32 %v4965, 0.0
        %v4998 = vmax.f32 %v4966, 0.0
        %v4999 = vmax.f32 %v4967, 0.0
        %v5000 = vmax.f32 %v4968, 0.0
        %v5001 = vmax.f32 %v4969, 0.0
        %v5002 = vmax.f32 %v4970, 0.0
        %v5003 = vmax.f32 %v4971, 0.0
        %v5004 = vmax.f32 %v4972, 0.0
        %v5005 = vmax.f32 %v4973, 0.0
        %v5006 = vmax.f32 %v4974, 0.0
        %v5007 = vmax.f32 %v4975, 0.0
        %v5008 = vmax.f32 %v4976, 0.0
        %v5009 = vmax.f32 %v4977, 0.0
        %v5010 = vmax.f32 %v4978, 0.0
        %v5011 = vmax.f32 %v4979, 0.0
        %v5012 = vmax.f32 %v4980, 0.0
        %v5013 = vmax.f32 %v4981, 0.0
        %v5014 = vmax.f32 %v4982, 0.0
        %v5015 = vmax.f32 %v4983, 0.0
        %v5016 = vmax.f32 %v4984, 0.0
        %v5017 = vmax.f32 %v4985, 0.0
        %v5018 = vmax.f32 %v4986, 0.0
        %v5019 = vmax.f32 %v4987, 0.0
        %v5020 = vmax.f32 %v4988, 0.0
        %v5021 = vpack.c.bf16 %v4990, %v4989
        %v5022 = vpack.c.bf16 %v4992, %v4991
        %v5023 = vpack.c.bf16 %v4994, %v4993
        %v5024 = vpack.c.bf16 %v4996, %v4995
        %v5025 = vpack.c.bf16 %v4998, %v4997
        %v5026 = vpack.c.bf16 %v5000, %v4999
        %v5027 = vpack.c.bf16 %v5002, %v5001
        %v5028 = vpack.c.bf16 %v5004, %v5003
        %v5029 = vpack.c.bf16 %v5006, %v5005
        %v5030 = vpack.c.bf16 %v5008, %v5007
        %v5031 = vpack.c.bf16 %v5010, %v5009
        %v5032 = vpack.c.bf16 %v5012, %v5011
        %v5033 = vpack.c.bf16 %v5014, %v5013
        %v5034 = vpack.c.bf16 %v5016, %v5015
        %v5035 = vpack.c.bf16 %v5018, %v5017
        %v5036 = vpack.c.bf16 %v5020, %v5019
        %v5053 = vrot.slane %v5021, 4
        %v5054 = vrot.slane %v5022, 4
        %v5055 = vrot.slane %v5023, 4
        %v5056 = vrot.slane %v5024, 4
        %v5057 = vrot.slane %v5025, 4
        %v5058 = vrot.slane %v5026, 4
        %v5059 = vrot.slane %v5027, 4
        %v5060 = vrot.slane %v5028, 4
        %v5061 = vrot.slane %v5029, 4
        %v5062 = vrot.slane %v5030, 4
        %v5063 = vrot.slane %v5031, 4
        %v5064 = vrot.slane %v5032, 4
        %v5065 = vrot.slane %v5033, 4
        %v5066 = vrot.slane %v5034, 4
        %v5067 = vrot.slane %v5035, 4
        %v5068 = vrot.slane %v5036, 4
        %5085 = vst [vmem:[%s284] sm:$0xf0] %v5053
        %5086 = vst [vmem:[%s284 + $0x8] sm:$0xf] %v5053
        %5087 = vst [vmem:[%s284 + $0x10] sm:$0xf0] %v5054
        %5088 = vst [vmem:[%s284 + $0x18] sm:$0xf] %v5054
        %5089 = vst [vmem:[%s284 + $0x20] sm:$0xf0] %v5055
        %5090 = vst [vmem:[%s284 + $0x28] sm:$0xf] %v5055
        %5091 = vst [vmem:[%s284 + $0x30] sm:$0xf0] %v5056
        %5092 = vst [vmem:[%s284 + $0x38] sm:$0xf] %v5056
        %5093 = vst [vmem:[%s284 + $0x40] sm:$0xf0] %v5057
        %5094 = vst [vmem:[%s284 + $0x48] sm:$0xf] %v5057
        %5095 = vst [vmem:[%s284 + $0x50] sm:$0xf0] %v5058
        %5096 = vst [vmem:[%s284 + $0x58] sm:$0xf] %v5058
        %5097 = vst [vmem:[%s284 + $0x60] sm:$0xf0] %v5059
        %5098 = vst [vmem:[%s284 + $0x68] sm:$0xf] %v5059
        %5099 = vst [vmem:[%s284 + $0x70] sm:$0xf0] %v5060
        %5100 = vst [vmem:[%s284 + $0x78] sm:$0xf] %v5060
        %5101 = vst [vmem:[%s284 + $0x80] sm:$0xf0] %v5061
        %5102 = vst [vmem:[%s284 + $0x88] sm:$0xf] %v5061
        %5103 = vst [vmem:[%s284 + $0x90] sm:$0xf0] %v5062
        %5104 = vst [vmem:[%s284 + $0x98] sm:$0xf] %v5062
        %5105 = vst [vmem:[%s284 + $0xa0] sm:$0xf0] %v5063
        %5106 = vst [vmem:[%s284 + $0xa8] sm:$0xf] %v5063
        %5107 = vst [vmem:[%s284 + $0xb0] sm:$0xf0] %v5064
        %5108 = vst [vmem:[%s284 + $0xb8] sm:$0xf] %v5064
        %5109 = vst [vmem:[%s284 + $0xc0] sm:$0xf0] %v5065
        %5110 = vst [vmem:[%s284 + $0xc8] sm:$0xf] %v5065
        %5111 = vst [vmem:[%s284 + $0xd0] sm:$0xf0] %v5066
        %5112 = vst [vmem:[%s284 + $0xd8] sm:$0xf] %v5066
        %5113 = vst [vmem:[%s284 + $0xe0] sm:$0xf0] %v5067
        %5114 = vst [vmem:[%s284 + $0xe8] sm:$0xf] %v5067
        %5115 = vst [vmem:[%s284 + $0xf0] sm:$0xf0] %v5068
        %5116 = vst [vmem:[%s284 + $0xf8] sm:$0xf] %v5068
        %v5117 = vld [vmem:[%s4] sm:$0x1]
        %v5118 = vld [vmem:[#allocation3] sm:$0xf8]
        %v5119 = vld [vmem:[#allocation3 + $0x8] sm:$0xf]
        %v5120 = vld [vmem:[#allocation3 + $0x10] sm:$0xf8]
        %v5121 = vld [vmem:[#allocation3 + $0x18] sm:$0xf]
        %v5122 = vld [vmem:[#allocation3 + $0x20] sm:$0xf8]
        %v5123 = vld [vmem:[#allocation3 + $0x28] sm:$0xf]
        %v5124 = vld [vmem:[#allocation3 + $0x30] sm:$0xf8]
        %v5125 = vld [vmem:[#allocation3 + $0x38] sm:$0xf]
        %v5126 = vld [vmem:[#allocation3 + $0x40] sm:$0xf8]
        %v5127 = vld [vmem:[#allocation3 + $0x48] sm:$0xf]
        %v5128 = vld [vmem:[#allocation3 + $0x50] sm:$0xf8]
        %v5129 = vld [vmem:[#allocation3 + $0x58] sm:$0xf]
        %v5130 = vld [vmem:[#allocation3 + $0x60] sm:$0xf8]
        %v5131 = vld [vmem:[#allocation3 + $0x68] sm:$0xf]
        %v5132 = vld [vmem:[#allocation3 + $0x70] sm:$0xf8]
        %v5133 = vld [vmem:[#allocation3 + $0x78] sm:$0xf]
        %v5134 = vld [vmem:[#allocation3 + $0x80] sm:$0xf8]
        %v5135 = vld [vmem:[#allocation3 + $0x88] sm:$0xf]
        %v5136 = vld [vmem:[#allocation3 + $0x90] sm:$0xf8]
        %v5137 = vld [vmem:[#allocation3 + $0x98] sm:$0xf]
        %v5138 = vld [vmem:[#allocation3 + $0xa0] sm:$0xf8]
        %v5139 = vld [vmem:[#allocation3 + $0xa8] sm:$0xf]
        %v5140 = vld [vmem:[#allocation3 + $0xb0] sm:$0xf8]
        %v5141 = vld [vmem:[#allocation3 + $0xb8] sm:$0xf]
        %v5142 = vld [vmem:[#allocation3 + $0xc0] sm:$0xf8]
        %v5143 = vld [vmem:[#allocation3 + $0xc8] sm:$0xf]
        %v5144 = vld [vmem:[#allocation3 + $0xd0] sm:$0xf8]
        %v5145 = vld [vmem:[#allocation3 + $0xd8] sm:$0xf]
        %v5146 = vld [vmem:[#allocation3 + $0xe0] sm:$0xf8]
        %v5147 = vld [vmem:[#allocation3 + $0xe8] sm:$0xf]
        %v5148 = vld [vmem:[#allocation3 + $0xf0] sm:$0xf8]
        %v5149 = vld [vmem:[#allocation3 + $0xf8] sm:$0xf]
        %v5151 = vshrl.u32 %v5118, 16
        %v5153 = vrot.slane %v5151, 3
        %v5154 = vshll.u32 %v5118, 16
        %v5156 = vrot.slane %v5154, 4
        %v5157 = vor.u32 %v5153, %v5156
        %v5159 = vshrl.u32 %v5119, 16
        %v5161 = vrot.slane %v5159, 3
        %v5162 = vshll.u32 %v5119, 16
        %v5164 = vrot.slane %v5162, 4
        %v5165 = vor.u32 %v5161, %v5164
        %v5166 = vsel %vm514, %v5157, %v5165
        %v5168 = vshrl.u32 %v5120, 16
        %v5170 = vrot.slane %v5168, 3
        %v5171 = vshll.u32 %v5120, 16
        %v5173 = vrot.slane %v5171, 4
        %v5174 = vor.u32 %v5170, %v5173
        %v5176 = vshrl.u32 %v5121, 16
        %v5178 = vrot.slane %v5176, 3
        %v5179 = vshll.u32 %v5121, 16
        %v5181 = vrot.slane %v5179, 4
        %v5182 = vor.u32 %v5178, %v5181
        %v5183 = vsel %vm514, %v5174, %v5182
        %v5185 = vshrl.u32 %v5122, 16
        %v5187 = vrot.slane %v5185, 3
        %v5188 = vshll.u32 %v5122, 16
        %v5190 = vrot.slane %v5188, 4
        %v5191 = vor.u32 %v5187, %v5190
        %v5193 = vshrl.u32 %v5123, 16
        %v5195 = vrot.slane %v5193, 3
        %v5196 = vshll.u32 %v5123, 16
        %v5198 = vrot.slane %v5196, 4
        %v5199 = vor.u32 %v5195, %v5198
        %v5200 = vsel %vm514, %v5191, %v5199
        %v5202 = vshrl.u32 %v5124, 16
        %v5204 = vrot.slane %v5202, 3
        %v5205 = vshll.u32 %v5124, 16
        %v5207 = vrot.slane %v5205, 4
        %v5208 = vor.u32 %v5204, %v5207
        %v5210 = vshrl.u32 %v5125, 16
        %v5212 = vrot.slane %v5210, 3
        %v5213 = vshll.u32 %v5125, 16
        %v5215 = vrot.slane %v5213, 4
        %v5216 = vor.u32 %v5212, %v5215
        %v5217 = vsel %vm514, %v5208, %v5216
        %v5219 = vshrl.u32 %v5126, 16
        %v5221 = vrot.slane %v5219, 3
        %v5222 = vshll.u32 %v5126, 16
        %v5224 = vrot.slane %v5222, 4
        %v5225 = vor.u32 %v5221, %v5224
        %v5227 = vshrl.u32 %v5127, 16
        %v5229 = vrot.slane %v5227, 3
        %v5230 = vshll.u32 %v5127, 16
        %v5232 = vrot.slane %v5230, 4
        %v5233 = vor.u32 %v5229, %v5232
        %v5234 = vsel %vm514, %v5225, %v5233
        %v5236 = vshrl.u32 %v5128, 16
        %v5238 = vrot.slane %v5236, 3
        %v5239 = vshll.u32 %v5128, 16
        %v5241 = vrot.slane %v5239, 4
        %v5242 = vor.u32 %v5238, %v5241
        %v5244 = vshrl.u32 %v5129, 16
        %v5246 = vrot.slane %v5244, 3
        %v5247 = vshll.u32 %v5129, 16
        %v5249 = vrot.slane %v5247, 4
        %v5250 = vor.u32 %v5246, %v5249
        %v5251 = vsel %vm514, %v5242, %v5250
        %v5253 = vshrl.u32 %v5130, 16
        %v5255 = vrot.slane %v5253, 3
        %v5256 = vshll.u32 %v5130, 16
        %v5258 = vrot.slane %v5256, 4
        %v5259 = vor.u32 %v5255, %v5258
        %v5261 = vshrl.u32 %v5131, 16
        %v5263 = vrot.slane %v5261, 3
        %v5264 = vshll.u32 %v5131, 16
        %v5266 = vrot.slane %v5264, 4
        %v5267 = vor.u32 %v5263, %v5266
        %v5268 = vsel %vm514, %v5259, %v5267
        %v5270 = vshrl.u32 %v5132, 16
        %v5272 = vrot.slane %v5270, 3
        %v5273 = vshll.u32 %v5132, 16
        %v5275 = vrot.slane %v5273, 4
        %v5276 = vor.u32 %v5272, %v5275
        %v5278 = vshrl.u32 %v5133, 16
        %v5280 = vrot.slane %v5278, 3
        %v5281 = vshll.u32 %v5133, 16
        %v5283 = vrot.slane %v5281, 4
        %v5284 = vor.u32 %v5280, %v5283
        %v5285 = vsel %vm514, %v5276, %v5284
        %v5287 = vshrl.u32 %v5134, 16
        %v5289 = vrot.slane %v5287, 3
        %v5290 = vshll.u32 %v5134, 16
        %v5292 = vrot.slane %v5290, 4
        %v5293 = vor.u32 %v5289, %v5292
        %v5295 = vshrl.u32 %v5135, 16
        %v5297 = vrot.slane %v5295, 3
        %v5298 = vshll.u32 %v5135, 16
        %v5300 = vrot.slane %v5298, 4
        %v5301 = vor.u32 %v5297, %v5300
        %v5302 = vsel %vm514, %v5293, %v5301
        %v5304 = vshrl.u32 %v5136, 16
        %v5306 = vrot.slane %v5304, 3
        %v5307 = vshll.u32 %v5136, 16
        %v5309 = vrot.slane %v5307, 4
        %v5310 = vor.u32 %v5306, %v5309
        %v5312 = vshrl.u32 %v5137, 16
        %v5314 = vrot.slane %v5312, 3
        %v5315 = vshll.u32 %v5137, 16
        %v5317 = vrot.slane %v5315, 4
        %v5318 = vor.u32 %v5314, %v5317
        %v5319 = vsel %vm514, %v5310, %v5318
        %v5321 = vshrl.u32 %v5138, 16
        %v5323 = vrot.slane %v5321, 3
        %v5324 = vshll.u32 %v5138, 16
        %v5326 = vrot.slane %v5324, 4
        %v5327 = vor.u32 %v5323, %v5326
        %v5329 = vshrl.u32 %v5139, 16
        %v5331 = vrot.slane %v5329, 3
        %v5332 = vshll.u32 %v5139, 16
        %v5334 = vrot.slane %v5332, 4
        %v5335 = vor.u32 %v5331, %v5334
        %v5336 = vsel %vm514, %v5327, %v5335
        %v5338 = vshrl.u32 %v5140, 16
        %v5340 = vrot.slane %v5338, 3
        %v5341 = vshll.u32 %v5140, 16
        %v5343 = vrot.slane %v5341, 4
        %v5344 = vor.u32 %v5340, %v5343
        %v5346 = vshrl.u32 %v5141, 16
        %v5348 = vrot.slane %v5346, 3
        %v5349 = vshll.u32 %v5141, 16
        %v5351 = vrot.slane %v5349, 4
        %v5352 = vor.u32 %v5348, %v5351
        %v5353 = vsel %vm514, %v5344, %v5352
        %v5355 = vshrl.u32 %v5142, 16
        %v5357 = vrot.slane %v5355, 3
        %v5358 = vshll.u32 %v5142, 16
        %v5360 = vrot.slane %v5358, 4
        %v5361 = vor.u32 %v5357, %v5360
        %v5363 = vshrl.u32 %v5143, 16
        %v5365 = vrot.slane %v5363, 3
        %v5366 = vshll.u32 %v5143, 16
        %v5368 = vrot.slane %v5366, 4
        %v5369 = vor.u32 %v5365, %v5368
        %v5370 = vsel %vm514, %v5361, %v5369
        %v5372 = vshrl.u32 %v5144, 16
        %v5374 = vrot.slane %v5372, 3
        %v5375 = vshll.u32 %v5144, 16
        %v5377 = vrot.slane %v5375, 4
        %v5378 = vor.u32 %v5374, %v5377
        %v5380 = vshrl.u32 %v5145, 16
        %v5382 = vrot.slane %v5380, 3
        %v5383 = vshll.u32 %v5145, 16
        %v5385 = vrot.slane %v5383, 4
        %v5386 = vor.u32 %v5382, %v5385
        %v5387 = vsel %vm514, %v5378, %v5386
        %v5389 = vshrl.u32 %v5146, 16
        %v5391 = vrot.slane %v5389, 3
        %v5392 = vshll.u32 %v5146, 16
        %v5394 = vrot.slane %v5392, 4
        %v5395 = vor.u32 %v5391, %v5394
        %v5397 = vshrl.u32 %v5147, 16
        %v5399 = vrot.slane %v5397, 3
        %v5400 = vshll.u32 %v5147, 16
        %v5402 = vrot.slane %v5400, 4
        %v5403 = vor.u32 %v5399, %v5402
        %v5404 = vsel %vm514, %v5395, %v5403
        %v5406 = vshrl.u32 %v5148, 16
        %v5408 = vrot.slane %v5406, 3
        %v5409 = vshll.u32 %v5148, 16
        %v5411 = vrot.slane %v5409, 4
        %v5412 = vor.u32 %v5408, %v5411
        %v5414 = vshrl.u32 %v5149, 16
        %v5416 = vrot.slane %v5414, 3
        %v5417 = vshll.u32 %v5149, 16
        %v5419 = vrot.slane %v5417, 4
        %v5420 = vor.u32 %v5416, %v5419
        %v5421 = vsel %vm514, %v5412, %v5420
        %v5438 = vld [vmem:[%s3] sm:$0xf]
        %v5439 = vld [vmem:[%s3 + $0x4] sm:$0xf]
        %v5440 = vld [vmem:[%s3 + $0x8] sm:$0xf]
        %v5441 = vld [vmem:[%s3 + $0xc] sm:$0xf]
        %v5442 = vld [vmem:[%s3 + $0x10] sm:$0xf]
        %v5443 = vld [vmem:[%s3 + $0x14] sm:$0xf]
        %v5444 = vld [vmem:[%s3 + $0x18] sm:$0xf]
        %v5445 = vld [vmem:[%s3 + $0x1c] sm:$0xf]
        %v5446 = vld [vmem:[%s3 + $0x20] sm:$0xf]
        %v5447 = vld [vmem:[%s3 + $0x24] sm:$0xf]
        %v5448 = vld [vmem:[%s3 + $0x28] sm:$0xf]
        %v5449 = vld [vmem:[%s3 + $0x2c] sm:$0xf]
        %v5450 = vld [vmem:[%s3 + $0x30] sm:$0xf]
        %v5451 = vld [vmem:[%s3 + $0x34] sm:$0xf]
        %v5452 = vld [vmem:[%s3 + $0x38] sm:$0xf]
        %v5453 = vld [vmem:[%s3 + $0x3c] sm:$0xf]
        %v5454 = vld [vmem:[#allocation3] sm:$0xf0]
        %v5455 = vld [vmem:[#allocation3 + $0x10] sm:$0xf0]
        %v5456 = vld [vmem:[#allocation3 + $0x20] sm:$0xf0]
        %v5457 = vld [vmem:[#allocation3 + $0x30] sm:$0xf0]
        %v5458 = vld [vmem:[#allocation3 + $0x40] sm:$0xf0]
        %v5459 = vld [vmem:[#allocation3 + $0x50] sm:$0xf0]
        %v5460 = vld [vmem:[#allocation3 + $0x60] sm:$0xf0]
        %v5461 = vld [vmem:[#allocation3 + $0x70] sm:$0xf0]
        %v5462 = vld [vmem:[#allocation3 + $0x80] sm:$0xf0]
        %v5463 = vld [vmem:[#allocation3 + $0x90] sm:$0xf0]
        %v5464 = vld [vmem:[#allocation3 + $0xa0] sm:$0xf0]
        %v5465 = vld [vmem:[#allocation3 + $0xb0] sm:$0xf0]
        %v5466 = vld [vmem:[#allocation3 + $0xc0] sm:$0xf0]
        %v5467 = vld [vmem:[#allocation3 + $0xd0] sm:$0xf0]
        %v5468 = vld [vmem:[#allocation3 + $0xe0] sm:$0xf0]
        %v5469 = vld [vmem:[#allocation3 + $0xf0] sm:$0xf0]
        %v5502 = vrot.slane %v5454, 4
        %v5503 = vrot.slane %v5119, 4
        %v5504 = vsel %vm867, %v5502, %v5503
        %v5505 = vrot.slane %v5455, 4
        %v5506 = vrot.slane %v5121, 4
        %v5507 = vsel %vm867, %v5505, %v5506
        %v5508 = vrot.slane %v5456, 4
        %v5509 = vrot.slane %v5123, 4
        %v5510 = vsel %vm867, %v5508, %v5509
        %v5511 = vrot.slane %v5457, 4
        %v5512 = vrot.slane %v5125, 4
        %v5513 = vsel %vm867, %v5511, %v5512
        %v5514 = vrot.slane %v5458, 4
        %v5515 = vrot.slane %v5127, 4
        %v5516 = vsel %vm867, %v5514, %v5515
        %v5517 = vrot.slane %v5459, 4
        %v5518 = vrot.slane %v5129, 4
        %v5519 = vsel %vm867, %v5517, %v5518
        %v5520 = vrot.slane %v5460, 4
        %v5521 = vrot.slane %v5131, 4
        %v5522 = vsel %vm867, %v5520, %v5521
        %v5523 = vrot.slane %v5461, 4
        %v5524 = vrot.slane %v5133, 4
        %v5525 = vsel %vm867, %v5523, %v5524
        %v5526 = vrot.slane %v5462, 4
        %v5527 = vrot.slane %v5135, 4
        %v5528 = vsel %vm867, %v5526, %v5527
        %v5529 = vrot.slane %v5463, 4
        %v5530 = vrot.slane %v5137, 4
        %v5531 = vsel %vm867, %v5529, %v5530
        %v5532 = vrot.slane %v5464, 4
        %v5533 = vrot.slane %v5139, 4
        %v5534 = vsel %vm867, %v5532, %v5533
        %v5535 = vrot.slane %v5465, 4
        %v5536 = vrot.slane %v5141, 4
        %v5537 = vsel %vm867, %v5535, %v5536
        %v5538 = vrot.slane %v5466, 4
        %v5539 = vrot.slane %v5143, 4
        %v5540 = vsel %vm867, %v5538, %v5539
        %v5541 = vrot.slane %v5467, 4
        %v5542 = vrot.slane %v5145, 4
        %v5543 = vsel %vm867, %v5541, %v5542
        %v5544 = vrot.slane %v5468, 4
        %v5545 = vrot.slane %v5147, 4
        %v5546 = vsel %vm867, %v5544, %v5545
        %v5547 = vrot.slane %v5469, 4
        %v5548 = vrot.slane %v5149, 4
        %v5549 = vsel %vm867, %v5547, %v5548
        %s5566 = scalar_lea.vmem %s3, 64
        %v5567 = vld [vmem:[%s5566] sm:$0xf]
        %v5568 = vld [vmem:[%s5566 + $0x4] sm:$0xf]
        %v5569 = vld [vmem:[%s5566 + $0x8] sm:$0xf]
        %v5570 = vld [vmem:[%s5566 + $0xc] sm:$0xf]
        %v5571 = vld [vmem:[%s5566 + $0x10] sm:$0xf]
        %v5572 = vld [vmem:[%s5566 + $0x14] sm:$0xf]
        %v5573 = vld [vmem:[%s5566 + $0x18] sm:$0xf]
        %v5574 = vld [vmem:[%s5566 + $0x1c] sm:$0xf]
        %v5575 = vld [vmem:[%s5566 + $0x20] sm:$0xf]
        %v5576 = vld [vmem:[%s5566 + $0x24] sm:$0xf]
        %v5577 = vld [vmem:[%s5566 + $0x28] sm:$0xf]
        %v5578 = vld [vmem:[%s5566 + $0x2c] sm:$0xf]
        %v5579 = vld [vmem:[%s5566 + $0x30] sm:$0xf]
        %v5580 = vld [vmem:[%s5566 + $0x34] sm:$0xf]
        %v5581 = vld [vmem:[%s5566 + $0x38] sm:$0xf]
        %v5582 = vld [vmem:[%s5566 + $0x3c] sm:$0xf]
        %v5599 = vunpack.c.l.b16 %v5567
        %v5600 = vunpack.c.l.b16 %v5568
        %v5601 = vunpack.c.l.b16 %v5569
        %v5602 = vunpack.c.l.b16 %v5570
        %v5603 = vunpack.c.l.b16 %v5571
        %v5604 = vunpack.c.l.b16 %v5572
        %v5605 = vunpack.c.l.b16 %v5573
        %v5606 = vunpack.c.l.b16 %v5574
        %v5607 = vunpack.c.l.b16 %v5575
        %v5608 = vunpack.c.l.b16 %v5576
        %v5609 = vunpack.c.l.b16 %v5577
        %v5610 = vunpack.c.l.b16 %v5578
        %v5611 = vunpack.c.l.b16 %v5579
        %v5612 = vunpack.c.l.b16 %v5580
        %v5613 = vunpack.c.l.b16 %v5581
        %v5614 = vunpack.c.l.b16 %v5582
        %v5615 = vpack.c.b16 %v5600, %v5599
        %v5616 = vpack.c.b16 %v5602, %v5601
        %v5617 = vpack.c.b16 %v5604, %v5603
        %v5618 = vpack.c.b16 %v5606, %v5605
        %v5619 = vpack.c.b16 %v5608, %v5607
        %v5620 = vpack.c.b16 %v5610, %v5609
        %v5621 = vpack.c.b16 %v5612, %v5611
        %v5622 = vpack.c.b16 %v5614, %v5613
        %5631 = vmatprep.subr.bf16.mxu0 0
        %5632 = vmatpush1.bf16.msra.mxu0 %v5615
        %5633 = vmatprep.subr.bf16.mxu0 0
        %5634 = vmatpush1.bf16.msra.mxu0 %v5616
        %5635 = vmatprep.subr.bf16.mxu0 0
        %5636 = vmatpush1.bf16.msra.mxu0 %v5617
        %5637 = vmatprep.subr.bf16.mxu0 0
        %5638 = vmatpush1.bf16.msra.mxu0 %v5618
        %5639 = vmatprep.subr.bf16.mxu0 0
        %5640 = vmatpush1.bf16.msra.mxu0 %v5619
        %5641 = vmatprep.subr.bf16.mxu0 0
        %5642 = vmatpush1.bf16.msra.mxu0 %v5620
        %5643 = vmatprep.subr.bf16.mxu0 0
        %5644 = vmatpush1.bf16.msra.mxu0 %v5621
        %5645 = vmatprep.subr.bf16.mxu0 0
        %5646 = vmatpush1.bf16.msra.mxu0 %v5622
        %5647 = vmatprep.subr.bf16.mxu0 0
        %5648 = vmatpush1.bf16.msra.mxu0 0
        %5649 = vmatprep.subr.bf16.mxu0 0
        %5650 = vmatpush1.bf16.msra.mxu0 0
        %5651 = vmatprep.subr.bf16.mxu0 0
        %5652 = vmatpush1.bf16.msra.mxu0 0
        %5653 = vmatprep.subr.bf16.mxu0 0
        %5654 = vmatpush1.bf16.msra.mxu0 0
        %5655 = vmatprep.subr.bf16.mxu0 0
        %5656 = vmatpush1.bf16.msra.mxu0 0
        %5657 = vmatprep.subr.bf16.mxu0 0
        %5658 = vmatpush1.bf16.msra.mxu0 0
        %5659 = vmatprep.subr.bf16.mxu0 0
        %5660 = vmatpush1.bf16.msra.mxu0 0
        %5661 = vmatprep.subr.bf16.mxu0 0
        %5662 = vmatpush1.bf16.msra.mxu0 0
        %5663 = vmatprep.mubr.bf16.mxu0 0
        %5664 = vmatmul.mubr.bf16.gmra.mrb[0].mxu0 %v5504
        %v5665 = vpop.f32.mrb[0].mxu0
        %v5666 = vadd.f32 0.0, %v5665
        %v5667 = vpop.f32.mrb[0].mxu0
        %v5668 = vpop.f32.mrb[0].mxu0
        %v5669 = vadd.f32 0.0, %v5668
        %v5670 = vpop.f32.mrb[0].mxu0
        %5671 = vmatprep.mubr.bf16.mxu0 0
        %5672 = vmatmul.mubr.bf16.gmra.mrb[0].mxu0 %v5507
        %v5673 = vpop.f32.mrb[0].mxu0
        %v5674 = vadd.f32 0.0, %v5673
        %v5675 = vpop.f32.mrb[0].mxu0
        %v5676 = vpop.f32.mrb[0].mxu0
        %v5677 = vadd.f32 0.0, %v5676
        %v5678 = vpop.f32.mrb[0].mxu0
        %5679 = vmatprep.mubr.bf16.mxu0 0
        %5680 = vmatmul.mubr.bf16.gmra.mrb[0].mxu0 %v5510
        %v5681 = vpop.f32.mrb[0].mxu0
        %v5682 = vadd.f32 0.0, %v5681
        %v5683 = vpop.f32.mrb[0].mxu0
        %v5684 = vpop.f32.mrb[0].mxu0
        %v5685 = vadd.f32 0.0, %v5684
        %v5686 = vpop.f32.mrb[0].mxu0
        %5687 = vmatprep.mubr.bf16.mxu0 0
        %5688 = vmatmul.mubr.bf16.gmra.mrb[0].mxu0 %v5513
        %v5689 = vpop.f32.mrb[0].mxu0
        %v5690 = vadd.f32 0.0, %v5689
        %v5691 = vpop.f32.mrb[0].mxu0
        %v5692 = vpop.f32.mrb[0].mxu0
        %v5693 = vadd.f32 0.0, %v5692
        %v5694 = vpop.f32.mrb[0].mxu0
        %5695 = vmatprep.mubr.bf16.mxu0 0
        %5696 = vmatmul.mubr.bf16.gmra.mrb[0].mxu0 %v5516
        %v5697 = vpop.f32.mrb[0].mxu0
        %v5698 = vadd.f32 0.0, %v5697
        %v5699 = vpop.f32.mrb[0].mxu0
        %v5700 = vpop.f32.mrb[0].mxu0
        %v5701 = vadd.f32 0.0, %v5700
        %v5702 = vpop.f32.mrb[0].mxu0
        %5703 = vmatprep.mubr.bf16.mxu0 0
        %5704 = vmatmul.mubr.bf16.gmra.mrb[0].mxu0 %v5519
        %v5705 = vpop.f32.mrb[0].mxu0
        %v5706 = vadd.f32 0.0, %v5705
        %v5707 = vpop.f32.mrb[0].mxu0
        %v5708 = vpop.f32.mrb[0].mxu0
        %v5709 = vadd.f32 0.0, %v5708
        %v5710 = vpop.f32.mrb[0].mxu0
        %5711 = vmatprep.mubr.bf16.mxu0 0
        %5712 = vmatmul.mubr.bf16.gmra.mrb[0].mxu0 %v5522
        %v5713 = vpop.f32.mrb[0].mxu0
        %v5714 = vadd.f32 0.0, %v5713
        %v5715 = vpop.f32.mrb[0].mxu0
        %v5716 = vpop.f32.mrb[0].mxu0
        %v5717 = vadd.f32 0.0, %v5716
        %v5718 = vpop.f32.mrb[0].mxu0
        %5719 = vmatprep.mubr.bf16.mxu0 0
        %5720 = vmatmul.mubr.bf16.gmra.mrb[0].mxu0 %v5525
        %v5721 = vpop.f32.mrb[0].mxu0
        %v5722 = vadd.f32 0.0, %v5721
        %v5723 = vpop.f32.mrb[0].mxu0
        %v5724 = vpop.f32.mrb[0].mxu0
        %v5725 = vadd.f32 0.0, %v5724
        %v5726 = vpop.f32.mrb[0].mxu0
        %5727 = vmatprep.mubr.bf16.mxu0 0
        %5728 = vmatmul.mubr.bf16.gmra.mrb[0].mxu0 %v5528
        %v5729 = vpop.f32.mrb[0].mxu0
        %v5730 = vadd.f32 0.0, %v5729
        %v5731 = vpop.f32.mrb[0].mxu0
        %v5732 = vpop.f32.mrb[0].mxu0
        %v5733 = vadd.f32 0.0, %v5732
        %v5734 = vpop.f32.mrb[0].mxu0
        %5735 = vmatprep.mubr.bf16.mxu0 0
        %5736 = vmatmul.mubr.bf16.gmra.mrb[0].mxu0 %v5531
        %v5737 = vpop.f32.mrb[0].mxu0
        %v5738 = vadd.f32 0.0, %v5737
        %v5739 = vpop.f32.mrb[0].mxu0
        %v5740 = vpop.f32.mrb[0].mxu0
        %v5741 = vadd.f32 0.0, %v5740
        %v5742 = vpop.f32.mrb[0].mxu0
        %5743 = vmatprep.mubr.bf16.mxu0 0
        %5744 = vmatmul.mubr.bf16.gmra.mrb[0].mxu0 %v5534
        %v5745 = vpop.f32.mrb[0].mxu0
        %v5746 = vadd.f32 0.0, %v5745
        %v5747 = vpop.f32.mrb[0].mxu0
        %v5748 = vpop.f32.mrb[0].mxu0
        %v5749 = vadd.f32 0.0, %v5748
        %v5750 = vpop.f32.mrb[0].mxu0
        %5751 = vmatprep.mubr.bf16.mxu0 0
        %5752 = vmatmul.mubr.bf16.gmra.mrb[0].mxu0 %v5537
        %v5753 = vpop.f32.mrb[0].mxu0
        %v5754 = vadd.f32 0.0, %v5753
        %v5755 = vpop.f32.mrb[0].mxu0
        %v5756 = vpop.f32.mrb[0].mxu0
        %v5757 = vadd.f32 0.0, %v5756
        %v5758 = vpop.f32.mrb[0].mxu0
        %5759 = vmatprep.mubr.bf16.mxu0 0
        %5760 = vmatmul.mubr.bf16.gmra.mrb[0].mxu0 %v5540
        %v5761 = vpop.f32.mrb[0].mxu0
        %v5762 = vadd.f32 0.0, %v5761
        %v5763 = vpop.f32.mrb[0].mxu0
        %v5764 = vpop.f32.mrb[0].mxu0
        %v5765 = vadd.f32 0.0, %v5764
        %v5766 = vpop.f32.mrb[0].mxu0
        %5767 = vmatprep.mubr.bf16.mxu0 0
        %5768 = vmatmul.mubr.bf16.gmra.mrb[0].mxu0 %v5543
        %v5769 = vpop.f32.mrb[0].mxu0
        %v5770 = vadd.f32 0.0, %v5769
        %v5771 = vpop.f32.mrb[0].mxu0
        %v5772 = vpop.f32.mrb[0].mxu0
        %v5773 = vadd.f32 0.0, %v5772
        %v5774 = vpop.f32.mrb[0].mxu0
        %5775 = vmatprep.mubr.bf16.mxu0 0
        %5776 = vmatmul.mubr.bf16.gmra.mrb[0].mxu0 %v5546
        %v5777 = vpop.f32.mrb[0].mxu0
        %v5778 = vadd.f32 0.0, %v5777
        %v5779 = vpop.f32.mrb[0].mxu0
        %v5780 = vpop.f32.mrb[0].mxu0
        %v5781 = vadd.f32 0.0, %v5780
        %v5782 = vpop.f32.mrb[0].mxu0
        %5783 = vmatprep.mubr.bf16.mxu0 0
        %5784 = vmatmul.mubr.bf16.gmra.mrb[0].mxu0 %v5549
        %v5785 = vpop.f32.mrb[0].mxu0
        %v5786 = vadd.f32 0.0, %v5785
        %v5787 = vpop.f32.mrb[0].mxu0
        %v5788 = vpop.f32.mrb[0].mxu0
        %v5789 = vadd.f32 0.0, %v5788
        %v5790 = vpop.f32.mrb[0].mxu0
        %5791 = vdwg.mxu0
        %v5808 = vunpack.c.l.b16 %v5438
        %v5809 = vunpack.c.l.b16 %v5439
        %v5810 = vunpack.c.l.b16 %v5440
        %v5811 = vunpack.c.l.b16 %v5441
        %v5812 = vunpack.c.l.b16 %v5442
        %v5813 = vunpack.c.l.b16 %v5443
        %v5814 = vunpack.c.l.b16 %v5444
        %v5815 = vunpack.c.l.b16 %v5445
        %v5816 = vunpack.c.l.b16 %v5446
        %v5817 = vunpack.c.l.b16 %v5447
        %v5818 = vunpack.c.l.b16 %v5448
        %v5819 = vunpack.c.l.b16 %v5449
        %v5820 = vunpack.c.l.b16 %v5450
        %v5821 = vunpack.c.l.b16 %v5451
        %v5822 = vunpack.c.l.b16 %v5452
        %v5823 = vunpack.c.l.b16 %v5453
        %v5824 = vpack.c.b16 %v5809, %v5808
        %v5825 = vpack.c.b16 %v5811, %v5810
        %v5826 = vpack.c.b16 %v5813, %v5812
        %v5827 = vpack.c.b16 %v5815, %v5814
        %v5828 = vpack.c.b16 %v5817, %v5816
        %v5829 = vpack.c.b16 %v5819, %v5818
        %v5830 = vpack.c.b16 %v5821, %v5820
        %v5831 = vpack.c.b16 %v5823, %v5822
        %5840 = vmatprep.subr.bf16.mxu0 0
        %5841 = vmatpush1.bf16.msra.mxu0 %v5824
        %5842 = vmatprep.subr.bf16.mxu0 0
        %5843 = vmatpush1.bf16.msra.mxu0 %v5825
        %5844 = vmatprep.subr.bf16.mxu0 0
        %5845 = vmatpush1.bf16.msra.mxu0 %v5826
        %5846 = vmatprep.subr.bf16.mxu0 0
        %5847 = vmatpush1.bf16.msra.mxu0 %v5827
        %5848 = vmatprep.subr.bf16.mxu0 0
        %5849 = vmatpush1.bf16.msra.mxu0 %v5828
        %5850 = vmatprep.subr.bf16.mxu0 0
        %5851 = vmatpush1.bf16.msra.mxu0 %v5829
        %5852 = vmatprep.subr.bf16.mxu0 0
        %5853 = vmatpush1.bf16.msra.mxu0 %v5830
        %5854 = vmatprep.subr.bf16.mxu0 0
        %5855 = vmatpush1.bf16.msra.mxu0 %v5831
        %5856 = vmatprep.subr.bf16.mxu0 0
        %5857 = vmatpush1.bf16.msra.mxu0 0
        %5858 = vmatprep.subr.bf16.mxu0 0
        %5859 = vmatpush1.bf16.msra.mxu0 0
        %5860 = vmatprep.subr.bf16.mxu0 0
        %5861 = vmatpush1.bf16.msra.mxu0 0
        %5862 = vmatprep.subr.bf16.mxu0 0
        %5863 = vmatpush1.bf16.msra.mxu0 0
        %5864 = vmatprep.subr.bf16.mxu0 0
        %5865 = vmatpush1.bf16.msra.mxu0 0
        %5866 = vmatprep.subr.bf16.mxu0 0
        %5867 = vmatpush1.bf16.msra.mxu0 0
        %5868 = vmatprep.subr.bf16.mxu0 0
        %5869 = vmatpush1.bf16.msra.mxu0 0
        %5870 = vmatprep.subr.bf16.mxu0 0
        %5871 = vmatpush1.bf16.msra.mxu0 0
        %5872 = vmatprep.mubr.bf16.mxu0 0
        %5873 = vmatmul.mubr.bf16.gmra.mrb[0].mxu0 %v5166
        %v5874 = vpop.f32.mrb[0].mxu0
        %v5875 = vadd.f32 %v5666, %v5874
        %v5876 = vpop.f32.mrb[0].mxu0
        %v5877 = vpop.f32.mrb[0].mxu0
        %v5878 = vadd.f32 %v5669, %v5877
        %v5879 = vpop.f32.mrb[0].mxu0
        %5880 = vmatprep.mubr.bf16.mxu0 0
        %5881 = vmatmul.mubr.bf16.gmra.mrb[0].mxu0 %v5183
        %v5882 = vpop.f32.mrb[0].mxu0
        %v5883 = vadd.f32 %v5674, %v5882
        %v5884 = vpop.f32.mrb[0].mxu0
        %v5885 = vpop.f32.mrb[0].mxu0
        %v5886 = vadd.f32 %v5677, %v5885
        %v5887 = vpop.f32.mrb[0].mxu0
        %5888 = vmatprep.mubr.bf16.mxu0 0
        %5889 = vmatmul.mubr.bf16.gmra.mrb[0].mxu0 %v5200
        %v5890 = vpop.f32.mrb[0].mxu0
        %v5891 = vadd.f32 %v5682, %v5890
        %v5892 = vpop.f32.mrb[0].mxu0
        %v5893 = vpop.f32.mrb[0].mxu0
        %v5894 = vadd.f32 %v5685, %v5893
        %v5895 = vpop.f32.mrb[0].mxu0
        %5896 = vmatprep.mubr.bf16.mxu0 0
        %5897 = vmatmul.mubr.bf16.gmra.mrb[0].mxu0 %v5217
        %v5898 = vpop.f32.mrb[0].mxu0
        %v5899 = vadd.f32 %v5690, %v5898
        %v5900 = vpop.f32.mrb[0].mxu0
        %v5901 = vpop.f32.mrb[0].mxu0
        %v5902 = vadd.f32 %v5693, %v5901
        %v5903 = vpop.f32.mrb[0].mxu0
        %5904 = vmatprep.mubr.bf16.mxu0 0
        %5905 = vmatmul.mubr.bf16.gmra.mrb[0].mxu0 %v5234
        %v5906 = vpop.f32.mrb[0].mxu0
        %v5907 = vadd.f32 %v5698, %v5906
        %v5908 = vpop.f32.mrb[0].mxu0
        %v5909 = vpop.f32.mrb[0].mxu0
        %v5910 = vadd.f32 %v5701, %v5909
        %v5911 = vpop.f32.mrb[0].mxu0
        %5912 = vmatprep.mubr.bf16.mxu0 0
        %5913 = vmatmul.mubr.bf16.gmra.mrb[0].mxu0 %v5251
        %v5914 = vpop.f32.mrb[0].mxu0
        %v5915 = vadd.f32 %v5706, %v5914
        %v5916 = vpop.f32.mrb[0].mxu0
        %v5917 = vpop.f32.mrb[0].mxu0
        %v5918 = vadd.f32 %v5709, %v5917
        %v5919 = vpop.f32.mrb[0].mxu0
        %5920 = vmatprep.mubr.bf16.mxu0 0
        %5921 = vmatmul.mubr.bf16.gmra.mrb[0].mxu0 %v5268
        %v5922 = vpop.f32.mrb[0].mxu0
        %v5923 = vadd.f32 %v5714, %v5922
        %v5924 = vpop.f32.mrb[0].mxu0
        %v5925 = vpop.f32.mrb[0].mxu0
        %v5926 = vadd.f32 %v5717, %v5925
        %v5927 = vpop.f32.mrb[0].mxu0
        %5928 = vmatprep.mubr.bf16.mxu0 0
        %5929 = vmatmul.mubr.bf16.gmra.mrb[0].mxu0 %v5285
        %v5930 = vpop.f32.mrb[0].mxu0
        %v5931 = vadd.f32 %v5722, %v5930
        %v5932 = vpop.f32.mrb[0].mxu0
        %v5933 = vpop.f32.mrb[0].mxu0
        %v5934 = vadd.f32 %v5725, %v5933
        %v5935 = vpop.f32.mrb[0].mxu0
        %5936 = vmatprep.mubr.bf16.mxu0 0
        %5937 = vmatmul.mubr.bf16.gmra.mrb[0].mxu0 %v5302
        %v5938 = vpop.f32.mrb[0].mxu0
        %v5939 = vadd.f32 %v5730, %v5938
        %v5940 = vpop.f32.mrb[0].mxu0
        %v5941 = vpop.f32.mrb[0].mxu0
        %v5942 = vadd.f32 %v5733, %v5941
        %v5943 = vpop.f32.mrb[0].mxu0
        %5944 = vmatprep.mubr.bf16.mxu0 0
        %5945 = vmatmul.mubr.bf16.gmra.mrb[0].mxu0 %v5319
        %v5946 = vpop.f32.mrb[0].mxu0
        %v5947 = vadd.f32 %v5738, %v5946
        %v5948 = vpop.f32.mrb[0].mxu0
        %v5949 = vpop.f32.mrb[0].mxu0
        %v5950 = vadd.f32 %v5741, %v5949
        %v5951 = vpop.f32.mrb[0].mxu0
        %5952 = vmatprep.mubr.bf16.mxu0 0
        %5953 = vmatmul.mubr.bf16.gmra.mrb[0].mxu0 %v5336
        %v5954 = vpop.f32.mrb[0].mxu0
        %v5955 = vadd.f32 %v5746, %v5954
        %v5956 = vpop.f32.mrb[0].mxu0
        %v5957 = vpop.f32.mrb[0].mxu0
        %v5958 = vadd.f32 %v5749, %v5957
        %v5959 = vpop.f32.mrb[0].mxu0
        %5960 = vmatprep.mubr.bf16.mxu0 0
        %5961 = vmatmul.mubr.bf16.gmra.mrb[0].mxu0 %v5353
        %v5962 = vpop.f32.mrb[0].mxu0
        %v5963 = vadd.f32 %v5754, %v5962
        %v5964 = vpop.f32.mrb[0].mxu0
        %v5965 = vpop.f32.mrb[0].mxu0
        %v5966 = vadd.f32 %v5757, %v5965
        %v5967 = vpop.f32.mrb[0].mxu0
        %5968 = vmatprep.mubr.bf16.mxu0 0
        %5969 = vmatmul.mubr.bf16.gmra.mrb[0].mxu0 %v5370
        %v5970 = vpop.f32.mrb[0].mxu0
        %v5971 = vadd.f32 %v5762, %v5970
        %v5972 = vpop.f32.mrb[0].mxu0
        %v5973 = vpop.f32.mrb[0].mxu0
        %v5974 = vadd.f32 %v5765, %v5973
        %v5975 = vpop.f32.mrb[0].mxu0
        %5976 = vmatprep.mubr.bf16.mxu0 0
        %5977 = vmatmul.mubr.bf16.gmra.mrb[0].mxu0 %v5387
        %v5978 = vpop.f32.mrb[0].mxu0
        %v5979 = vadd.f32 %v5770, %v5978
        %v5980 = vpop.f32.mrb[0].mxu0
        %v5981 = vpop.f32.mrb[0].mxu0
        %v5982 = vadd.f32 %v5773, %v5981
        %v5983 = vpop.f32.mrb[0].mxu0
        %5984 = vmatprep.mubr.bf16.mxu0 0
        %5985 = vmatmul.mubr.bf16.gmra.mrb[0].mxu0 %v5404
        %v5986 = vpop.f32.mrb[0].mxu0
        %v5987 = vadd.f32 %v5778, %v5986
        %v5988 = vpop.f32.mrb[0].mxu0
        %v5989 = vpop.f32.mrb[0].mxu0
        %v5990 = vadd.f32 %v5781, %v5989
        %v5991 = vpop.f32.mrb[0].mxu0
        %5992 = vmatprep.mubr.bf16.mxu0 0
        %5993 = vmatmul.mubr.bf16.gmra.mrb[0].mxu0 %v5421
        %v5994 = vpop.f32.mrb[0].mxu0
        %v5995 = vadd.f32 %v5786, %v5994
        %v5996 = vpop.f32.mrb[0].mxu0
        %v5997 = vpop.f32.mrb[0].mxu0
        %v5998 = vadd.f32 %v5789, %v5997
        %v5999 = vpop.f32.mrb[0].mxu0
        %6000 = vdwg.mxu0
        %v6001 = vld [vmem:[#allocation3 + $0x8] sm:$0x1f]
        %v6002 = vld [vmem:[#allocation3 + $0x18] sm:$0x1f]
        %v6003 = vld [vmem:[#allocation3 + $0x28] sm:$0x1f]
        %v6004 = vld [vmem:[#allocation3 + $0x38] sm:$0x1f]
        %v6005 = vld [vmem:[#allocation3 + $0x48] sm:$0x1f]
        %v6006 = vld [vmem:[#allocation3 + $0x58] sm:$0x1f]
        %v6007 = vld [vmem:[#allocation3 + $0x68] sm:$0x1f]
        %v6008 = vld [vmem:[#allocation3 + $0x78] sm:$0x1f]
        %v6009 = vld [vmem:[#allocation3 + $0x88] sm:$0x1f]
        %v6010 = vld [vmem:[#allocation3 + $0x98] sm:$0x1f]
        %v6011 = vld [vmem:[#allocation3 + $0xa8] sm:$0x1f]
        %v6012 = vld [vmem:[#allocation3 + $0xb8] sm:$0x1f]
        %v6013 = vld [vmem:[#allocation3 + $0xc8] sm:$0x1f]
        %v6014 = vld [vmem:[#allocation3 + $0xd8] sm:$0x1f]
        %v6015 = vld [vmem:[#allocation3 + $0xe8] sm:$0x1f]
        %v6016 = vld [vmem:[#allocation3 + $0xf8] sm:$0x1f]
        %v6018 = vshrl.u32 %v5454, 16
        %v6020 = vrot.slane %v6018, 4
        %v6021 = vshll.u32 %v5454, 16
        %v6023 = vrot.slane %v6021, 5
        %v6024 = vor.u32 %v6020, %v6023
        %v6026 = vshrl.u32 %v6001, 16
        %v6028 = vrot.slane %v6026, 4
        %v6029 = vshll.u32 %v6001, 16
        %v6031 = vrot.slane %v6029, 5
        %v6032 = vor.u32 %v6028, %v6031
        %v6033 = vsel %vm1383, %v6024, %v6032
        %v6035 = vshrl.u32 %v5455, 16
        %v6037 = vrot.slane %v6035, 4
        %v6038 = vshll.u32 %v5455, 16
        %v6040 = vrot.slane %v6038, 5
        %v6041 = vor.u32 %v6037, %v6040
        %v6043 = vshrl.u32 %v6002, 16
        %v6045 = vrot.slane %v6043, 4
        %v6046 = vshll.u32 %v6002, 16
        %v6048 = vrot.slane %v6046, 5
        %v6049 = vor.u32 %v6045, %v6048
        %v6050 = vsel %vm1383, %v6041, %v6049
        %v6052 = vshrl.u32 %v5456, 16
        %v6054 = vrot.slane %v6052, 4
        %v6055 = vshll.u32 %v5456, 16
        %v6057 = vrot.slane %v6055, 5
        %v6058 = vor.u32 %v6054, %v6057
        %v6060 = vshrl.u32 %v6003, 16
        %v6062 = vrot.slane %v6060, 4
        %v6063 = vshll.u32 %v6003, 16
        %v6065 = vrot.slane %v6063, 5
        %v6066 = vor.u32 %v6062, %v6065
        %v6067 = vsel %vm1383, %v6058, %v6066
        %v6069 = vshrl.u32 %v5457, 16
        %v6071 = vrot.slane %v6069, 4
        %v6072 = vshll.u32 %v5457, 16
        %v6074 = vrot.slane %v6072, 5
        %v6075 = vor.u32 %v6071, %v6074
        %v6077 = vshrl.u32 %v6004, 16
        %v6079 = vrot.slane %v6077, 4
        %v6080 = vshll.u32 %v6004, 16
        %v6082 = vrot.slane %v6080, 5
        %v6083 = vor.u32 %v6079, %v6082
        %v6084 = vsel %vm1383, %v6075, %v6083
        %v6086 = vshrl.u32 %v5458, 16
        %v6088 = vrot.slane %v6086, 4
        %v6089 = vshll.u32 %v5458, 16
        %v6091 = vrot.slane %v6089, 5
        %v6092 = vor.u32 %v6088, %v6091
        %v6094 = vshrl.u32 %v6005, 16
        %v6096 = vrot.slane %v6094, 4
        %v6097 = vshll.u32 %v6005, 16
        %v6099 = vrot.slane %v6097, 5
        %v6100 = vor.u32 %v6096, %v6099
        %v6101 = vsel %vm1383, %v6092, %v6100
        %v6103 = vshrl.u32 %v5459, 16
        %v6105 = vrot.slane %v6103, 4
        %v6106 = vshll.u32 %v5459, 16
        %v6108 = vrot.slane %v6106, 5
        %v6109 = vor.u32 %v6105, %v6108
        %v6111 = vshrl.u32 %v6006, 16
        %v6113 = vrot.slane %v6111, 4
        %v6114 = vshll.u32 %v6006, 16
        %v6116 = vrot.slane %v6114, 5
        %v6117 = vor.u32 %v6113, %v6116
        %v6118 = vsel %vm1383, %v6109, %v6117
        %v6120 = vshrl.u32 %v5460, 16
        %v6122 = vrot.slane %v6120, 4
        %v6123 = vshll.u32 %v5460, 16
        %v6125 = vrot.slane %v6123, 5
        %v6126 = vor.u32 %v6122, %v6125
        %v6128 = vshrl.u32 %v6007, 16
        %v6130 = vrot.slane %v6128, 4
        %v6131 = vshll.u32 %v6007, 16
        %v6133 = vrot.slane %v6131, 5
        %v6134 = vor.u32 %v6130, %v6133
        %v6135 = vsel %vm1383, %v6126, %v6134
        %v6137 = vshrl.u32 %v5461, 16
        %v6139 = vrot.slane %v6137, 4
        %v6140 = vshll.u32 %v5461, 16
        %v6142 = vrot.slane %v6140, 5
        %v6143 = vor.u32 %v6139, %v6142
        %v6145 = vshrl.u32 %v6008, 16
        %v6147 = vrot.slane %v6145, 4
        %v6148 = vshll.u32 %v6008, 16
        %v6150 = vrot.slane %v6148, 5
        %v6151 = vor.u32 %v6147, %v6150
        %v6152 = vsel %vm1383, %v6143, %v6151
        %v6154 = vshrl.u32 %v5462, 16
        %v6156 = vrot.slane %v6154, 4
        %v6157 = vshll.u32 %v5462, 16
        %v6159 = vrot.slane %v6157, 5
        %v6160 = vor.u32 %v6156, %v6159
        %v6162 = vshrl.u32 %v6009, 16
        %v6164 = vrot.slane %v6162, 4
        %v6165 = vshll.u32 %v6009, 16
        %v6167 = vrot.slane %v6165, 5
        %v6168 = vor.u32 %v6164, %v6167
        %v6169 = vsel %vm1383, %v6160, %v6168
        %v6171 = vshrl.u32 %v5463, 16
        %v6173 = vrot.slane %v6171, 4
        %v6174 = vshll.u32 %v5463, 16
        %v6176 = vrot.slane %v6174, 5
        %v6177 = vor.u32 %v6173, %v6176
        %v6179 = vshrl.u32 %v6010, 16
        %v6181 = vrot.slane %v6179, 4
        %v6182 = vshll.u32 %v6010, 16
        %v6184 = vrot.slane %v6182, 5
        %v6185 = vor.u32 %v6181, %v6184
        %v6186 = vsel %vm1383, %v6177, %v6185
        %v6188 = vshrl.u32 %v5464, 16
        %v6190 = vrot.slane %v6188, 4
        %v6191 = vshll.u32 %v5464, 16
        %v6193 = vrot.slane %v6191, 5
        %v6194 = vor.u32 %v6190, %v6193
        %v6196 = vshrl.u32 %v6011, 16
        %v6198 = vrot.slane %v6196, 4
        %v6199 = vshll.u32 %v6011, 16
        %v6201 = vrot.slane %v6199, 5
        %v6202 = vor.u32 %v6198, %v6201
        %v6203 = vsel %vm1383, %v6194, %v6202
        %v6205 = vshrl.u32 %v5465, 16
        %v6207 = vrot.slane %v6205, 4
        %v6208 = vshll.u32 %v5465, 16
        %v6210 = vrot.slane %v6208, 5
        %v6211 = vor.u32 %v6207, %v6210
        %v6213 = vshrl.u32 %v6012, 16
        %v6215 = vrot.slane %v6213, 4
        %v6216 = vshll.u32 %v6012, 16
        %v6218 = vrot.slane %v6216, 5
        %v6219 = vor.u32 %v6215, %v6218
        %v6220 = vsel %vm1383, %v6211, %v6219
        %v6222 = vshrl.u32 %v5466, 16
        %v6224 = vrot.slane %v6222, 4
        %v6225 = vshll.u32 %v5466, 16
        %v6227 = vrot.slane %v6225, 5
        %v6228 = vor.u32 %v6224, %v6227
        %v6230 = vshrl.u32 %v6013, 16
        %v6232 = vrot.slane %v6230, 4
        %v6233 = vshll.u32 %v6013, 16
        %v6235 = vrot.slane %v6233, 5
        %v6236 = vor.u32 %v6232, %v6235
        %v6237 = vsel %vm1383, %v6228, %v6236
        %v6239 = vshrl.u32 %v5467, 16
        %v6241 = vrot.slane %v6239, 4
        %v6242 = vshll.u32 %v5467, 16
        %v6244 = vrot.slane %v6242, 5
        %v6245 = vor.u32 %v6241, %v6244
        %v6247 = vshrl.u32 %v6014, 16
        %v6249 = vrot.slane %v6247, 4
        %v6250 = vshll.u32 %v6014, 16
        %v6252 = vrot.slane %v6250, 5
        %v6253 = vor.u32 %v6249, %v6252
        %v6254 = vsel %vm1383, %v6245, %v6253
        %v6256 = vshrl.u32 %v5468, 16
        %v6258 = vrot.slane %v6256, 4
        %v6259 = vshll.u32 %v5468, 16
        %v6261 = vrot.slane %v6259, 5
        %v6262 = vor.u32 %v6258, %v6261
        %v6264 = vshrl.u32 %v6015, 16
        %v6266 = vrot.slane %v6264, 4
        %v6267 = vshll.u32 %v6015, 16
        %v6269 = vrot.slane %v6267, 5
        %v6270 = vor.u32 %v6266, %v6269
        %v6271 = vsel %vm1383, %v6262, %v6270
        %v6273 = vshrl.u32 %v5469, 16
        %v6275 = vrot.slane %v6273, 4
        %v6276 = vshll.u32 %v5469, 16
        %v6278 = vrot.slane %v6276, 5
        %v6279 = vor.u32 %v6275, %v6278
        %v6281 = vshrl.u32 %v6016, 16
        %v6283 = vrot.slane %v6281, 4
        %v6284 = vshll.u32 %v6016, 16
        %v6286 = vrot.slane %v6284, 5
        %v6287 = vor.u32 %v6283, %v6286
        %v6288 = vsel %vm1383, %v6279, %v6287
        %s6305 = scalar_lea.vmem %s3, 128
        %v6306 = vld [vmem:[%s6305] sm:$0xf]
        %v6307 = vld [vmem:[%s6305 + $0x4] sm:$0xf]
        %v6308 = vld [vmem:[%s6305 + $0x8] sm:$0xf]
        %v6309 = vld [vmem:[%s6305 + $0xc] sm:$0xf]
        %v6310 = vld [vmem:[%s6305 + $0x10] sm:$0xf]
        %v6311 = vld [vmem:[%s6305 + $0x14] sm:$0xf]
        %v6312 = vld [vmem:[%s6305 + $0x18] sm:$0xf]
        %v6313 = vld [vmem:[%s6305 + $0x1c] sm:$0xf]
        %v6314 = vld [vmem:[%s6305 + $0x20] sm:$0xf]
        %v6315 = vld [vmem:[%s6305 + $0x24] sm:$0xf]
        %v6316 = vld [vmem:[%s6305 + $0x28] sm:$0xf]
        %v6317 = vld [vmem:[%s6305 + $0x2c] sm:$0xf]
        %v6318 = vld [vmem:[%s6305 + $0x30] sm:$0xf]
        %v6319 = vld [vmem:[%s6305 + $0x34] sm:$0xf]
        %v6320 = vld [vmem:[%s6305 + $0x38] sm:$0xf]
        %v6321 = vld [vmem:[%s6305 + $0x3c] sm:$0xf]
        %v6338 = vunpack.c.l.b16 %v6306
        %v6339 = vunpack.c.l.b16 %v6307
        %v6340 = vunpack.c.l.b16 %v6308
        %v6341 = vunpack.c.l.b16 %v6309
        %v6342 = vunpack.c.l.b16 %v6310
        %v6343 = vunpack.c.l.b16 %v6311
        %v6344 = vunpack.c.l.b16 %v6312
        %v6345 = vunpack.c.l.b16 %v6313
        %v6346 = vunpack.c.l.b16 %v6314
        %v6347 = vunpack.c.l.b16 %v6315
        %v6348 = vunpack.c.l.b16 %v6316
        %v6349 = vunpack.c.l.b16 %v6317
        %v6350 = vunpack.c.l.b16 %v6318
        %v6351 = vunpack.c.l.b16 %v6319
        %v6352 = vunpack.c.l.b16 %v6320
        %v6353 = vunpack.c.l.b16 %v6321
        %v6354 = vpack.c.b16 %v6339, %v6338
        %v6355 = vpack.c.b16 %v6341, %v6340
        %v6356 = vpack.c.b16 %v6343, %v6342
        %v6357 = vpack.c.b16 %v6345, %v6344
        %v6358 = vpack.c.b16 %v6347, %v6346
        %v6359 = vpack.c.b16 %v6349, %v6348
        %v6360 = vpack.c.b16 %v6351, %v6350
        %v6361 = vpack.c.b16 %v6353, %v6352
        %6370 = vmatprep.subr.bf16.mxu0 0
        %6371 = vmatpush1.bf16.msra.mxu0 %v6354
        %6372 = vmatprep.subr.bf16.mxu0 0
        %6373 = vmatpush1.bf16.msra.mxu0 %v6355
        %6374 = vmatprep.subr.bf16.mxu0 0
        %6375 = vmatpush1.bf16.msra.mxu0 %v6356
        %6376 = vmatprep.subr.bf16.mxu0 0
        %6377 = vmatpush1.bf16.msra.mxu0 %v6357
        %6378 = vmatprep.subr.bf16.mxu0 0
        %6379 = vmatpush1.bf16.msra.mxu0 %v6358
        %6380 = vmatprep.subr.bf16.mxu0 0
        %6381 = vmatpush1.bf16.msra.mxu0 %v6359
        %6382 = vmatprep.subr.bf16.mxu0 0
        %6383 = vmatpush1.bf16.msra.mxu0 %v6360
        %6384 = vmatprep.subr.bf16.mxu0 0
        %6385 = vmatpush1.bf16.msra.mxu0 %v6361
        %6386 = vmatprep.subr.bf16.mxu0 0
        %6387 = vmatpush1.bf16.msra.mxu0 0
        %6388 = vmatprep.subr.bf16.mxu0 0
        %6389 = vmatpush1.bf16.msra.mxu0 0
        %6390 = vmatprep.subr.bf16.mxu0 0
        %6391 = vmatpush1.bf16.msra.mxu0 0
        %6392 = vmatprep.subr.bf16.mxu0 0
        %6393 = vmatpush1.bf16.msra.mxu0 0
        %6394 = vmatprep.subr.bf16.mxu0 0
        %6395 = vmatpush1.bf16.msra.mxu0 0
        %6396 = vmatprep.subr.bf16.mxu0 0
        %6397 = vmatpush1.bf16.msra.mxu0 0
        %6398 = vmatprep.subr.bf16.mxu0 0
        %6399 = vmatpush1.bf16.msra.mxu0 0
        %6400 = vmatprep.subr.bf16.mxu0 0
        %6401 = vmatpush1.bf16.msra.mxu0 0
        %6402 = vmatprep.mubr.bf16.mxu0 0
        %6403 = vmatmul.mubr.bf16.gmra.mrb[0].mxu0 %v6033
        %v6404 = vpop.f32.mrb[0].mxu0
        %v6405 = vadd.f32 0.0, %v6404
        %v6406 = vpop.f32.mrb[0].mxu0
        %v6407 = vpop.f32.mrb[0].mxu0
        %v6408 = vadd.f32 0.0, %v6407
        %v6409 = vpop.f32.mrb[0].mxu0
        %6410 = vmatprep.mubr.bf16.mxu0 0
        %6411 = vmatmul.mubr.bf16.gmra.mrb[0].mxu0 %v6050
        %v6412 = vpop.f32.mrb[0].mxu0
        %v6413 = vadd.f32 0.0, %v6412
        %v6414 = vpop.f32.mrb[0].mxu0
        %v6415 = vpop.f32.mrb[0].mxu0
        %v6416 = vadd.f32 0.0, %v6415
        %v6417 = vpop.f32.mrb[0].mxu0
        %6418 = vmatprep.mubr.bf16.mxu0 0
        %6419 = vmatmul.mubr.bf16.gmra.mrb[0].mxu0 %v6067
        %v6420 = vpop.f32.mrb[0].mxu0
        %v6421 = vadd.f32 0.0, %v6420
        %v6422 = vpop.f32.mrb[0].mxu0
        %v6423 = vpop.f32.mrb[0].mxu0
        %v6424 = vadd.f32 0.0, %v6423
        %v6425 = vpop.f32.mrb[0].mxu0
        %6426 = vmatprep.mubr.bf16.mxu0 0
        %6427 = vmatmul.mubr.bf16.gmra.mrb[0].mxu0 %v6084
        %v6428 = vpop.f32.mrb[0].mxu0
        %v6429 = vadd.f32 0.0, %v6428
        %v6430 = vpop.f32.mrb[0].mxu0
        %v6431 = vpop.f32.mrb[0].mxu0
        %v6432 = vadd.f32 0.0, %v6431
        %v6433 = vpop.f32.mrb[0].mxu0
        %6434 = vmatprep.mubr.bf16.mxu0 0
        %6435 = vmatmul.mubr.bf16.gmra.mrb[0].mxu0 %v6101
        %v6436 = vpop.f32.mrb[0].mxu0
        %v6437 = vadd.f32 0.0, %v6436
        %v6438 = vpop.f32.mrb[0].mxu0
        %v6439 = vpop.f32.mrb[0].mxu0
        %v6440 = vadd.f32 0.0, %v6439
        %v6441 = vpop.f32.mrb[0].mxu0
        %6442 = vmatprep.mubr.bf16.mxu0 0
        %6443 = vmatmul.mubr.bf16.gmra.mrb[0].mxu0 %v6118
        %v6444 = vpop.f32.mrb[0].mxu0
        %v6445 = vadd.f32 0.0, %v6444
        %v6446 = vpop.f32.mrb[0].mxu0
        %v6447 = vpop.f32.mrb[0].mxu0
        %v6448 = vadd.f32 0.0, %v6447
        %v6449 = vpop.f32.mrb[0].mxu0
        %6450 = vmatprep.mubr.bf16.mxu0 0
        %6451 = vmatmul.mubr.bf16.gmra.mrb[0].mxu0 %v6135
        %v6452 = vpop.f32.mrb[0].mxu0
        %v6453 = vadd.f32 0.0, %v6452
        %v6454 = vpop.f32.mrb[0].mxu0
        %v6455 = vpop.f32.mrb[0].mxu0
        %v6456 = vadd.f32 0.0, %v6455
        %v6457 = vpop.f32.mrb[0].mxu0
        %6458 = vmatprep.mubr.bf16.mxu0 0
        %6459 = vmatmul.mubr.bf16.gmra.mrb[0].mxu0 %v6152
        %v6460 = vpop.f32.mrb[0].mxu0
        %v6461 = vadd.f32 0.0, %v6460
        %v6462 = vpop.f32.mrb[0].mxu0
        %v6463 = vpop.f32.mrb[0].mxu0
        %v6464 = vadd.f32 0.0, %v6463
        %v6465 = vpop.f32.mrb[0].mxu0
        %6466 = vmatprep.mubr.bf16.mxu0 0
        %6467 = vmatmul.mubr.bf16.gmra.mrb[0].mxu0 %v6169
        %v6468 = vpop.f32.mrb[0].mxu0
        %v6469 = vadd.f32 0.0, %v6468
        %v6470 = vpop.f32.mrb[0].mxu0
        %v6471 = vpop.f32.mrb[0].mxu0
        %v6472 = vadd.f32 0.0, %v6471
        %v6473 = vpop.f32.mrb[0].mxu0
        %6474 = vmatprep.mubr.bf16.mxu0 0
        %6475 = vmatmul.mubr.bf16.gmra.mrb[0].mxu0 %v6186
        %v6476 = vpop.f32.mrb[0].mxu0
        %v6477 = vadd.f32 0.0, %v6476
        %v6478 = vpop.f32.mrb[0].mxu0
        %v6479 = vpop.f32.mrb[0].mxu0
        %v6480 = vadd.f32 0.0, %v6479
        %v6481 = vpop.f32.mrb[0].mxu0
        %6482 = vmatprep.mubr.bf16.mxu0 0
        %6483 = vmatmul.mubr.bf16.gmra.mrb[0].mxu0 %v6203
        %v6484 = vpop.f32.mrb[0].mxu0
        %v6485 = vadd.f32 0.0, %v6484
        %v6486 = vpop.f32.mrb[0].mxu0
        %v6487 = vpop.f32.mrb[0].mxu0
        %v6488 = vadd.f32 0.0, %v6487
        %v6489 = vpop.f32.mrb[0].mxu0
        %6490 = vmatprep.mubr.bf16.mxu0 0
        %6491 = vmatmul.mubr.bf16.gmra.mrb[0].mxu0 %v6220
        %v6492 = vpop.f32.mrb[0].mxu0
        %v6493 = vadd.f32 0.0, %v6492
        %v6494 = vpop.f32.mrb[0].mxu0
        %v6495 = vpop.f32.mrb[0].mxu0
        %v6496 = vadd.f32 0.0, %v6495
        %v6497 = vpop.f32.mrb[0].mxu0
        %6498 = vmatprep.mubr.bf16.mxu0 0
        %6499 = vmatmul.mubr.bf16.gmra.mrb[0].mxu0 %v6237
        %v6500 = vpop.f32.mrb[0].mxu0
        %v6501 = vadd.f32 0.0, %v6500
        %v6502 = vpop.f32.mrb[0].mxu0
        %v6503 = vpop.f32.mrb[0].mxu0
        %v6504 = vadd.f32 0.0, %v6503
        %v6505 = vpop.f32.mrb[0].mxu0
        %6506 = vmatprep.mubr.bf16.mxu0 0
        %6507 = vmatmul.mubr.bf16.gmra.mrb[0].mxu0 %v6254
        %v6508 = vpop.f32.mrb[0].mxu0
        %v6509 = vadd.f32 0.0, %v6508
        %v6510 = vpop.f32.mrb[0].mxu0
        %v6511 = vpop.f32.mrb[0].mxu0
        %v6512 = vadd.f32 0.0, %v6511
        %v6513 = vpop.f32.mrb[0].mxu0
        %6514 = vmatprep.mubr.bf16.mxu0 0
        %6515 = vmatmul.mubr.bf16.gmra.mrb[0].mxu0 %v6271
        %v6516 = vpop.f32.mrb[0].mxu0
        %v6517 = vadd.f32 0.0, %v6516
        %v6518 = vpop.f32.mrb[0].mxu0
        %v6519 = vpop.f32.mrb[0].mxu0
        %v6520 = vadd.f32 0.0, %v6519
        %v6521 = vpop.f32.mrb[0].mxu0
        %6522 = vmatprep.mubr.bf16.mxu0 0
        %6523 = vmatmul.mubr.bf16.gmra.mrb[0].mxu0 %v6288
        %v6524 = vpop.f32.mrb[0].mxu0
        %v6525 = vadd.f32 0.0, %v6524
        %v6526 = vpop.f32.mrb[0].mxu0
        %v6527 = vpop.f32.mrb[0].mxu0
        %v6528 = vadd.f32 0.0, %v6527
        %v6529 = vpop.f32.mrb[0].mxu0
        %6530 = vdwg.mxu0
        %v6531 = vadd.f32 %v5875, %v6405
        %v6532 = vadd.f32 %v5878, %v6408
        %v6533 = vadd.f32 %v5883, %v6413
        %v6534 = vadd.f32 %v5886, %v6416
        %v6535 = vadd.f32 %v5891, %v6421
        %v6536 = vadd.f32 %v5894, %v6424
        %v6537 = vadd.f32 %v5899, %v6429
        %v6538 = vadd.f32 %v5902, %v6432
        %v6539 = vadd.f32 %v5907, %v6437
        %v6540 = vadd.f32 %v5910, %v6440
        %v6541 = vadd.f32 %v5915, %v6445
        %v6542 = vadd.f32 %v5918, %v6448
        %v6543 = vadd.f32 %v5923, %v6453
        %v6544 = vadd.f32 %v5926, %v6456
        %v6545 = vadd.f32 %v5931, %v6461
        %v6546 = vadd.f32 %v5934, %v6464
        %v6547 = vadd.f32 %v5939, %v6469
        %v6548 = vadd.f32 %v5942, %v6472
        %v6549 = vadd.f32 %v5947, %v6477
        %v6550 = vadd.f32 %v5950, %v6480
        %v6551 = vadd.f32 %v5955, %v6485
        %v6552 = vadd.f32 %v5958, %v6488
        %v6553 = vadd.f32 %v5963, %v6493
        %v6554 = vadd.f32 %v5966, %v6496
        %v6555 = vadd.f32 %v5971, %v6501
        %v6556 = vadd.f32 %v5974, %v6504
        %v6557 = vadd.f32 %v5979, %v6509
        %v6558 = vadd.f32 %v5982, %v6512
        %v6559 = vadd.f32 %v5987, %v6517
        %v6560 = vadd.f32 %v5990, %v6520
        %v6561 = vadd.f32 %v5995, %v6525
        %v6562 = vadd.f32 %v5998, %v6528
        %v6563 = vld [vmem:[%s284] sm:$0xf8]
        %v6564 = vld [vmem:[%s284 + $0x8] sm:$0xf]
        %v6565 = vld [vmem:[%s284 + $0x10] sm:$0xf8]
        %v6566 = vld [vmem:[%s284 + $0x18] sm:$0xf]
        %v6567 = vld [vmem:[%s284 + $0x20] sm:$0xf8]
        %v6568 = vld [vmem:[%s284 + $0x28] sm:$0xf]
        %v6569 = vld [vmem:[%s284 + $0x30] sm:$0xf8]
        %v6570 = vld [vmem:[%s284 + $0x38] sm:$0xf]
        %v6571 = vld [vmem:[%s284 + $0x40] sm:$0xf8]
        %v6572 = vld [vmem:[%s284 + $0x48] sm:$0xf]
        %v6573 = vld [vmem:[%s284 + $0x50] sm:$0xf8]
        %v6574 = vld [vmem:[%s284 + $0x58] sm:$0xf]
        %v6575 = vld [vmem:[%s284 + $0x60] sm:$0xf8]
        %v6576 = vld [vmem:[%s284 + $0x68] sm:$0xf]
        %v6577 = vld [vmem:[%s284 + $0x70] sm:$0xf8]
        %v6578 = vld [vmem:[%s284 + $0x78] sm:$0xf]
        %v6579 = vld [vmem:[%s284 + $0x80] sm:$0xf8]
        %v6580 = vld [vmem:[%s284 + $0x88] sm:$0xf]
        %v6581 = vld [vmem:[%s284 + $0x90] sm:$0xf8]
        %v6582 = vld [vmem:[%s284 + $0x98] sm:$0xf]
        %v6583 = vld [vmem:[%s284 + $0xa0] sm:$0xf8]
        %v6584 = vld [vmem:[%s284 + $0xa8] sm:$0xf]
        %v6585 = vld [vmem:[%s284 + $0xb0] sm:$0xf8]
        %v6586 = vld [vmem:[%s284 + $0xb8] sm:$0xf]
        %v6587 = vld [vmem:[%s284 + $0xc0] sm:$0xf8]
        %v6588 = vld [vmem:[%s284 + $0xc8] sm:$0xf]
        %v6589 = vld [vmem:[%s284 + $0xd0] sm:$0xf8]
        %v6590 = vld [vmem:[%s284 + $0xd8] sm:$0xf]
        %v6591 = vld [vmem:[%s284 + $0xe0] sm:$0xf8]
        %v6592 = vld [vmem:[%s284 + $0xe8] sm:$0xf]
        %v6593 = vld [vmem:[%s284 + $0xf0] sm:$0xf8]
        %v6594 = vld [vmem:[%s284 + $0xf8] sm:$0xf]
        %v6596 = vshrl.u32 %v6563, 16
        %v6598 = vrot.slane %v6596, 3
        %v6599 = vshll.u32 %v6563, 16
        %v6601 = vrot.slane %v6599, 4
        %v6602 = vor.u32 %v6598, %v6601
        %v6604 = vshrl.u32 %v6564, 16
        %v6606 = vrot.slane %v6604, 3
        %v6607 = vshll.u32 %v6564, 16
        %v6609 = vrot.slane %v6607, 4
        %v6610 = vor.u32 %v6606, %v6609
        %v6611 = vsel %vm514, %v6602, %v6610
        %v6613 = vshrl.u32 %v6565, 16
        %v6615 = vrot.slane %v6613, 3
        %v6616 = vshll.u32 %v6565, 16
        %v6618 = vrot.slane %v6616, 4
        %v6619 = vor.u32 %v6615, %v6618
        %v6621 = vshrl.u32 %v6566, 16
        %v6623 = vrot.slane %v6621, 3
        %v6624 = vshll.u32 %v6566, 16
        %v6626 = vrot.slane %v6624, 4
        %v6627 = vor.u32 %v6623, %v6626
        %v6628 = vsel %vm514, %v6619, %v6627
        %v6630 = vshrl.u32 %v6567, 16
        %v6632 = vrot.slane %v6630, 3
        %v6633 = vshll.u32 %v6567, 16
        %v6635 = vrot.slane %v6633, 4
        %v6636 = vor.u32 %v6632, %v6635
        %v6638 = vshrl.u32 %v6568, 16
        %v6640 = vrot.slane %v6638, 3
        %v6641 = vshll.u32 %v6568, 16
        %v6643 = vrot.slane %v6641, 4
        %v6644 = vor.u32 %v6640, %v6643
        %v6645 = vsel %vm514, %v6636, %v6644
        %v6647 = vshrl.u32 %v6569, 16
        %v6649 = vrot.slane %v6647, 3
        %v6650 = vshll.u32 %v6569, 16
        %v6652 = vrot.slane %v6650, 4
        %v6653 = vor.u32 %v6649, %v6652
        %v6655 = vshrl.u32 %v6570, 16
        %v6657 = vrot.slane %v6655, 3
        %v6658 = vshll.u32 %v6570, 16
        %v6660 = vrot.slane %v6658, 4
        %v6661 = vor.u32 %v6657, %v6660
        %v6662 = vsel %vm514, %v6653, %v6661
        %v6664 = vshrl.u32 %v6571, 16
        %v6666 = vrot.slane %v6664, 3
        %v6667 = vshll.u32 %v6571, 16
        %v6669 = vrot.slane %v6667, 4
        %v6670 = vor.u32 %v6666, %v6669
        %v6672 = vshrl.u32 %v6572, 16
        %v6674 = vrot.slane %v6672, 3
        %v6675 = vshll.u32 %v6572, 16
        %v6677 = vrot.slane %v6675, 4
        %v6678 = vor.u32 %v6674, %v6677
        %v6679 = vsel %vm514, %v6670, %v6678
        %v6681 = vshrl.u32 %v6573, 16
        %v6683 = vrot.slane %v6681, 3
        %v6684 = vshll.u32 %v6573, 16
        %v6686 = vrot.slane %v6684, 4
        %v6687 = vor.u32 %v6683, %v6686
        %v6689 = vshrl.u32 %v6574, 16
        %v6691 = vrot.slane %v6689, 3
        %v6692 = vshll.u32 %v6574, 16
        %v6694 = vrot.slane %v6692, 4
        %v6695 = vor.u32 %v6691, %v6694
        %v6696 = vsel %vm514, %v6687, %v6695
        %v6698 = vshrl.u32 %v6575, 16
        %v6700 = vrot.slane %v6698, 3
        %v6701 = vshll.u32 %v6575, 16
        %v6703 = vrot.slane %v6701, 4
        %v6704 = vor.u32 %v6700, %v6703
        %v6706 = vshrl.u32 %v6576, 16
        %v6708 = vrot.slane %v6706, 3
        %v6709 = vshll.u32 %v6576, 16
        %v6711 = vrot.slane %v6709, 4
        %v6712 = vor.u32 %v6708, %v6711
        %v6713 = vsel %vm514, %v6704, %v6712
        %v6715 = vshrl.u32 %v6577, 16
        %v6717 = vrot.slane %v6715, 3
        %v6718 = vshll.u32 %v6577, 16
        %v6720 = vrot.slane %v6718, 4
        %v6721 = vor.u32 %v6717, %v6720
        %v6723 = vshrl.u32 %v6578, 16
        %v6725 = vrot.slane %v6723, 3
        %v6726 = vshll.u32 %v6578, 16
        %v6728 = vrot.slane %v6726, 4
        %v6729 = vor.u32 %v6725, %v6728
        %v6730 = vsel %vm514, %v6721, %v6729
        %v6732 = vshrl.u32 %v6579, 16
        %v6734 = vrot.slane %v6732, 3
        %v6735 = vshll.u32 %v6579, 16
        %v6737 = vrot.slane %v6735, 4
        %v6738 = vor.u32 %v6734, %v6737
        %v6740 = vshrl.u32 %v6580, 16
        %v6742 = vrot.slane %v6740, 3
        %v6743 = vshll.u32 %v6580, 16
        %v6745 = vrot.slane %v6743, 4
        %v6746 = vor.u32 %v6742, %v6745
        %v6747 = vsel %vm514, %v6738, %v6746
        %v6749 = vshrl.u32 %v6581, 16
        %v6751 = vrot.slane %v6749, 3
        %v6752 = vshll.u32 %v6581, 16
        %v6754 = vrot.slane %v6752, 4
        %v6755 = vor.u32 %v6751, %v6754
        %v6757 = vshrl.u32 %v6582, 16
        %v6759 = vrot.slane %v6757, 3
        %v6760 = vshll.u32 %v6582, 16
        %v6762 = vrot.slane %v6760, 4
        %v6763 = vor.u32 %v6759, %v6762
        %v6764 = vsel %vm514, %v6755, %v6763
        %v6766 = vshrl.u32 %v6583, 16
        %v6768 = vrot.slane %v6766, 3
        %v6769 = vshll.u32 %v6583, 16
        %v6771 = vrot.slane %v6769, 4
        %v6772 = vor.u32 %v6768, %v6771
        %v6774 = vshrl.u32 %v6584, 16
        %v6776 = vrot.slane %v6774, 3
        %v6777 = vshll.u32 %v6584, 16
        %v6779 = vrot.slane %v6777, 4
        %v6780 = vor.u32 %v6776, %v6779
        %v6781 = vsel %vm514, %v6772, %v6780
        %v6783 = vshrl.u32 %v6585, 16
        %v6785 = vrot.slane %v6783, 3
        %v6786 = vshll.u32 %v6585, 16
        %v6788 = vrot.slane %v6786, 4
        %v6789 = vor.u32 %v6785, %v6788
        %v6791 = vshrl.u32 %v6586, 16
        %v6793 = vrot.slane %v6791, 3
        %v6794 = vshll.u32 %v6586, 16
        %v6796 = vrot.slane %v6794, 4
        %v6797 = vor.u32 %v6793, %v6796
        %v6798 = vsel %vm514, %v6789, %v6797
        %v6800 = vshrl.u32 %v6587, 16
        %v6802 = vrot.slane %v6800, 3
        %v6803 = vshll.u32 %v6587, 16
        %v6805 = vrot.slane %v6803, 4
        %v6806 = vor.u32 %v6802, %v6805
        %v6808 = vshrl.u32 %v6588, 16
        %v6810 = vrot.slane %v6808, 3
        %v6811 = vshll.u32 %v6588, 16
        %v6813 = vrot.slane %v6811, 4
        %v6814 = vor.u32 %v6810, %v6813
        %v6815 = vsel %vm514, %v6806, %v6814
        %v6817 = vshrl.u32 %v6589, 16
        %v6819 = vrot.slane %v6817, 3
        %v6820 = vshll.u32 %v6589, 16
        %v6822 = vrot.slane %v6820, 4
        %v6823 = vor.u32 %v6819, %v6822
        %v6825 = vshrl.u32 %v6590, 16
        %v6827 = vrot.slane %v6825, 3
        %v6828 = vshll.u32 %v6590, 16
        %v6830 = vrot.slane %v6828, 4
        %v6831 = vor.u32 %v6827, %v6830
        %v6832 = vsel %vm514, %v6823, %v6831
        %v6834 = vshrl.u32 %v6591, 16
        %v6836 = vrot.slane %v6834, 3
        %v6837 = vshll.u32 %v6591, 16
        %v6839 = vrot.slane %v6837, 4
        %v6840 = vor.u32 %v6836, %v6839
        %v6842 = vshrl.u32 %v6592, 16
        %v6844 = vrot.slane %v6842, 3
        %v6845 = vshll.u32 %v6592, 16
        %v6847 = vrot.slane %v6845, 4
        %v6848 = vor.u32 %v6844, %v6847
        %v6849 = vsel %vm514, %v6840, %v6848
        %v6851 = vshrl.u32 %v6593, 16
        %v6853 = vrot.slane %v6851, 3
        %v6854 = vshll.u32 %v6593, 16
        %v6856 = vrot.slane %v6854, 4
        %v6857 = vor.u32 %v6853, %v6856
        %v6859 = vshrl.u32 %v6594, 16
        %v6861 = vrot.slane %v6859, 3
        %v6862 = vshll.u32 %v6594, 16
        %v6864 = vrot.slane %v6862, 4
        %v6865 = vor.u32 %v6861, %v6864
        %v6866 = vsel %vm514, %v6857, %v6865
        %s6883 = scalar_lea.vmem %s3, 192
        %v6884 = vld [vmem:[%s6883] sm:$0xf]
        %v6885 = vld [vmem:[%s6883 + $0x4] sm:$0xf]
        %v6886 = vld [vmem:[%s6883 + $0x8] sm:$0xf]
        %v6887 = vld [vmem:[%s6883 + $0xc] sm:$0xf]
        %v6888 = vld [vmem:[%s6883 + $0x10] sm:$0xf]
        %v6889 = vld [vmem:[%s6883 + $0x14] sm:$0xf]
        %v6890 = vld [vmem:[%s6883 + $0x18] sm:$0xf]
        %v6891 = vld [vmem:[%s6883 + $0x1c] sm:$0xf]
        %v6892 = vld [vmem:[%s6883 + $0x20] sm:$0xf]
        %v6893 = vld [vmem:[%s6883 + $0x24] sm:$0xf]
        %v6894 = vld [vmem:[%s6883 + $0x28] sm:$0xf]
        %v6895 = vld [vmem:[%s6883 + $0x2c] sm:$0xf]
        %v6896 = vld [vmem:[%s6883 + $0x30] sm:$0xf]
        %v6897 = vld [vmem:[%s6883 + $0x34] sm:$0xf]
        %v6898 = vld [vmem:[%s6883 + $0x38] sm:$0xf]
        %v6899 = vld [vmem:[%s6883 + $0x3c] sm:$0xf]
        %v6916 = vunpack.c.l.b16 %v6884
        %v6917 = vunpack.c.l.b16 %v6885
        %v6918 = vunpack.c.l.b16 %v6886
        %v6919 = vunpack.c.l.b16 %v6887
        %v6920 = vunpack.c.l.b16 %v6888
        %v6921 = vunpack.c.l.b16 %v6889
        %v6922 = vunpack.c.l.b16 %v6890
        %v6923 = vunpack.c.l.b16 %v6891
        %v6924 = vunpack.c.l.b16 %v6892
        %v6925 = vunpack.c.l.b16 %v6893
        %v6926 = vunpack.c.l.b16 %v6894
        %v6927 = vunpack.c.l.b16 %v6895
        %v6928 = vunpack.c.l.b16 %v6896
        %v6929 = vunpack.c.l.b16 %v6897
        %v6930 = vunpack.c.l.b16 %v6898
        %v6931 = vunpack.c.l.b16 %v6899
        %v6932 = vpack.c.b16 %v6917, %v6916
        %v6933 = vpack.c.b16 %v6919, %v6918
        %v6934 = vpack.c.b16 %v6921, %v6920
        %v6935 = vpack.c.b16 %v6923, %v6922
        %v6936 = vpack.c.b16 %v6925, %v6924
        %v6937 = vpack.c.b16 %v6927, %v6926
        %v6938 = vpack.c.b16 %v6929, %v6928
        %v6939 = vpack.c.b16 %v6931, %v6930
        %6948 = vmatprep.subr.bf16.mxu0 0
        %6949 = vmatpush1.bf16.msra.mxu0 %v6932
        %6950 = vmatprep.subr.bf16.mxu0 0
        %6951 = vmatpush1.bf16.msra.mxu0 %v6933
        %6952 = vmatprep.subr.bf16.mxu0 0
        %6953 = vmatpush1.bf16.msra.mxu0 %v6934
        %6954 = vmatprep.subr.bf16.mxu0 0
        %6955 = vmatpush1.bf16.msra.mxu0 %v6935
        %6956 = vmatprep.subr.bf16.mxu0 0
        %6957 = vmatpush1.bf16.msra.mxu0 %v6936
        %6958 = vmatprep.subr.bf16.mxu0 0
        %6959 = vmatpush1.bf16.msra.mxu0 %v6937
        %6960 = vmatprep.subr.bf16.mxu0 0
        %6961 = vmatpush1.bf16.msra.mxu0 %v6938
        %6962 = vmatprep.subr.bf16.mxu0 0
        %6963 = vmatpush1.bf16.msra.mxu0 %v6939
        %6964 = vmatprep.subr.bf16.mxu0 0
        %6965 = vmatpush1.bf16.msra.mxu0 0
        %6966 = vmatprep.subr.bf16.mxu0 0
        %6967 = vmatpush1.bf16.msra.mxu0 0
        %6968 = vmatprep.subr.bf16.mxu0 0
        %6969 = vmatpush1.bf16.msra.mxu0 0
        %6970 = vmatprep.subr.bf16.mxu0 0
        %6971 = vmatpush1.bf16.msra.mxu0 0
        %6972 = vmatprep.subr.bf16.mxu0 0
        %6973 = vmatpush1.bf16.msra.mxu0 0
        %6974 = vmatprep.subr.bf16.mxu0 0
        %6975 = vmatpush1.bf16.msra.mxu0 0
        %6976 = vmatprep.subr.bf16.mxu0 0
        %6977 = vmatpush1.bf16.msra.mxu0 0
        %6978 = vmatprep.subr.bf16.mxu0 0
        %6979 = vmatpush1.bf16.msra.mxu0 0
        %6980 = vmatprep.mubr.bf16.mxu0 0
        %6981 = vmatmul.mubr.bf16.gmra.mrb[0].mxu0 %v6611
        %v6982 = vpop.f32.mrb[0].mxu0
        %v6983 = vadd.f32 0.0, %v6982
        %v6984 = vpop.f32.mrb[0].mxu0
        %v6985 = vpop.f32.mrb[0].mxu0
        %v6986 = vadd.f32 0.0, %v6985
        %v6987 = vpop.f32.mrb[0].mxu0
        %6988 = vmatprep.mubr.bf16.mxu0 0
        %6989 = vmatmul.mubr.bf16.gmra.mrb[0].mxu0 %v6628
        %v6990 = vpop.f32.mrb[0].mxu0
        %v6991 = vadd.f32 0.0, %v6990
        %v6992 = vpop.f32.mrb[0].mxu0
        %v6993 = vpop.f32.mrb[0].mxu0
        %v6994 = vadd.f32 0.0, %v6993
        %v6995 = vpop.f32.mrb[0].mxu0
        %6996 = vmatprep.mubr.bf16.mxu0 0
        %6997 = vmatmul.mubr.bf16.gmra.mrb[0].mxu0 %v6645
        %v6998 = vpop.f32.mrb[0].mxu0
        %v6999 = vadd.f32 0.0, %v6998
        %v7000 = vpop.f32.mrb[0].mxu0
        %v7001 = vpop.f32.mrb[0].mxu0
        %v7002 = vadd.f32 0.0, %v7001
        %v7003 = vpop.f32.mrb[0].mxu0
        %7004 = vmatprep.mubr.bf16.mxu0 0
        %7005 = vmatmul.mubr.bf16.gmra.mrb[0].mxu0 %v6662
        %v7006 = vpop.f32.mrb[0].mxu0
        %v7007 = vadd.f32 0.0, %v7006
        %v7008 = vpop.f32.mrb[0].mxu0
        %v7009 = vpop.f32.mrb[0].mxu0
        %v7010 = vadd.f32 0.0, %v7009
        %v7011 = vpop.f32.mrb[0].mxu0
        %7012 = vmatprep.mubr.bf16.mxu0 0
        %7013 = vmatmul.mubr.bf16.gmra.mrb[0].mxu0 %v6679
        %v7014 = vpop.f32.mrb[0].mxu0
        %v7015 = vadd.f32 0.0, %v7014
        %v7016 = vpop.f32.mrb[0].mxu0
        %v7017 = vpop.f32.mrb[0].mxu0
        %v7018 = vadd.f32 0.0, %v7017
        %v7019 = vpop.f32.mrb[0].mxu0
        %7020 = vmatprep.mubr.bf16.mxu0 0
        %7021 = vmatmul.mubr.bf16.gmra.mrb[0].mxu0 %v6696
        %v7022 = vpop.f32.mrb[0].mxu0
        %v7023 = vadd.f32 0.0, %v7022
        %v7024 = vpop.f32.mrb[0].mxu0
        %v7025 = vpop.f32.mrb[0].mxu0
        %v7026 = vadd.f32 0.0, %v7025
        %v7027 = vpop.f32.mrb[0].mxu0
        %7028 = vmatprep.mubr.bf16.mxu0 0
        %7029 = vmatmul.mubr.bf16.gmra.mrb[0].mxu0 %v6713
        %v7030 = vpop.f32.mrb[0].mxu0
        %v7031 = vadd.f32 0.0, %v7030
        %v7032 = vpop.f32.mrb[0].mxu0
        %v7033 = vpop.f32.mrb[0].mxu0
        %v7034 = vadd.f32 0.0, %v7033
        %v7035 = vpop.f32.mrb[0].mxu0
        %7036 = vmatprep.mubr.bf16.mxu0 0
        %7037 = vmatmul.mubr.bf16.gmra.mrb[0].mxu0 %v6730
        %v7038 = vpop.f32.mrb[0].mxu0
        %v7039 = vadd.f32 0.0, %v7038
        %v7040 = vpop.f32.mrb[0].mxu0
        %v7041 = vpop.f32.mrb[0].mxu0
        %v7042 = vadd.f32 0.0, %v7041
        %v7043 = vpop.f32.mrb[0].mxu0
        %7044 = vmatprep.mubr.bf16.mxu0 0
        %7045 = vmatmul.mubr.bf16.gmra.mrb[0].mxu0 %v6747
        %v7046 = vpop.f32.mrb[0].mxu0
        %v7047 = vadd.f32 0.0, %v7046
        %v7048 = vpop.f32.mrb[0].mxu0
        %v7049 = vpop.f32.mrb[0].mxu0
        %v7050 = vadd.f32 0.0, %v7049
        %v7051 = vpop.f32.mrb[0].mxu0
        %7052 = vmatprep.mubr.bf16.mxu0 0
        %7053 = vmatmul.mubr.bf16.gmra.mrb[0].mxu0 %v6764
        %v7054 = vpop.f32.mrb[0].mxu0
        %v7055 = vadd.f32 0.0, %v7054
        %v7056 = vpop.f32.mrb[0].mxu0
        %v7057 = vpop.f32.mrb[0].mxu0
        %v7058 = vadd.f32 0.0, %v7057
        %v7059 = vpop.f32.mrb[0].mxu0
        %7060 = vmatprep.mubr.bf16.mxu0 0
        %7061 = vmatmul.mubr.bf16.gmra.mrb[0].mxu0 %v6781
        %v7062 = vpop.f32.mrb[0].mxu0
        %v7063 = vadd.f32 0.0, %v7062
        %v7064 = vpop.f32.mrb[0].mxu0
        %v7065 = vpop.f32.mrb[0].mxu0
        %v7066 = vadd.f32 0.0, %v7065
        %v7067 = vpop.f32.mrb[0].mxu0
        %7068 = vmatprep.mubr.bf16.mxu0 0
        %7069 = vmatmul.mubr.bf16.gmra.mrb[0].mxu0 %v6798
        %v7070 = vpop.f32.mrb[0].mxu0
        %v7071 = vadd.f32 0.0, %v7070
        %v7072 = vpop.f32.mrb[0].mxu0
        %v7073 = vpop.f32.mrb[0].mxu0
        %v7074 = vadd.f32 0.0, %v7073
        %v7075 = vpop.f32.mrb[0].mxu0
        %7076 = vmatprep.mubr.bf16.mxu0 0
        %7077 = vmatmul.mubr.bf16.gmra.mrb[0].mxu0 %v6815
        %v7078 = vpop.f32.mrb[0].mxu0
        %v7079 = vadd.f32 0.0, %v7078
        %v7080 = vpop.f32.mrb[0].mxu0
        %v7081 = vpop.f32.mrb[0].mxu0
        %v7082 = vadd.f32 0.0, %v7081
        %v7083 = vpop.f32.mrb[0].mxu0
        %7084 = vmatprep.mubr.bf16.mxu0 0
        %7085 = vmatmul.mubr.bf16.gmra.mrb[0].mxu0 %v6832
        %v7086 = vpop.f32.mrb[0].mxu0
        %v7087 = vadd.f32 0.0, %v7086
        %v7088 = vpop.f32.mrb[0].mxu0
        %v7089 = vpop.f32.mrb[0].mxu0
        %v7090 = vadd.f32 0.0, %v7089
        %v7091 = vpop.f32.mrb[0].mxu0
        %7092 = vmatprep.mubr.bf16.mxu0 0
        %7093 = vmatmul.mubr.bf16.gmra.mrb[0].mxu0 %v6849
        %v7094 = vpop.f32.mrb[0].mxu0
        %v7095 = vadd.f32 0.0, %v7094
        %v7096 = vpop.f32.mrb[0].mxu0
        %v7097 = vpop.f32.mrb[0].mxu0
        %v7098 = vadd.f32 0.0, %v7097
        %v7099 = vpop.f32.mrb[0].mxu0
        %7100 = vmatprep.mubr.bf16.mxu0 0
        %7101 = vmatmul.mubr.bf16.gmra.mrb[0].mxu0 %v6866
        %v7102 = vpop.f32.mrb[0].mxu0
        %v7103 = vadd.f32 0.0, %v7102
        %v7104 = vpop.f32.mrb[0].mxu0
        %v7105 = vpop.f32.mrb[0].mxu0
        %v7106 = vadd.f32 0.0, %v7105
        %v7107 = vpop.f32.mrb[0].mxu0
        %7108 = vdwg.mxu0
        %v7109 = vadd.f32 %v6531, %v6983
        %v7110 = vadd.f32 %v6532, %v6986
        %v7111 = vadd.f32 %v6533, %v6991
        %v7112 = vadd.f32 %v6534, %v6994
        %v7113 = vadd.f32 %v6535, %v6999
        %v7114 = vadd.f32 %v6536, %v7002
        %v7115 = vadd.f32 %v6537, %v7007
        %v7116 = vadd.f32 %v6538, %v7010
        %v7117 = vadd.f32 %v6539, %v7015
        %v7118 = vadd.f32 %v6540, %v7018
        %v7119 = vadd.f32 %v6541, %v7023
        %v7120 = vadd.f32 %v6542, %v7026
        %v7121 = vadd.f32 %v6543, %v7031
        %v7122 = vadd.f32 %v6544, %v7034
        %v7123 = vadd.f32 %v6545, %v7039
        %v7124 = vadd.f32 %v6546, %v7042
        %v7125 = vadd.f32 %v6547, %v7047
        %v7126 = vadd.f32 %v6548, %v7050
        %v7127 = vadd.f32 %v6549, %v7055
        %v7128 = vadd.f32 %v6550, %v7058
        %v7129 = vadd.f32 %v6551, %v7063
        %v7130 = vadd.f32 %v6552, %v7066
        %v7131 = vadd.f32 %v6553, %v7071
        %v7132 = vadd.f32 %v6554, %v7074
        %v7133 = vadd.f32 %v6555, %v7079
        %v7134 = vadd.f32 %v6556, %v7082
        %v7135 = vadd.f32 %v6557, %v7087
        %v7136 = vadd.f32 %v6558, %v7090
        %v7137 = vadd.f32 %v6559, %v7095
        %v7138 = vadd.f32 %v6560, %v7098
        %v7139 = vadd.f32 %v6561, %v7103
        %v7140 = vadd.f32 %v6562, %v7106
        %v7141 = vld [vmem:[%s284] sm:$0xf0]
        %v7142 = vld [vmem:[%s284 + $0x10] sm:$0xf0]
        %v7143 = vld [vmem:[%s284 + $0x20] sm:$0xf0]
        %v7144 = vld [vmem:[%s284 + $0x30] sm:$0xf0]
        %v7145 = vld [vmem:[%s284 + $0x40] sm:$0xf0]
        %v7146 = vld [vmem:[%s284 + $0x50] sm:$0xf0]
        %v7147 = vld [vmem:[%s284 + $0x60] sm:$0xf0]
        %v7148 = vld [vmem:[%s284 + $0x70] sm:$0xf0]
        %v7149 = vld [vmem:[%s284 + $0x80] sm:$0xf0]
        %v7150 = vld [vmem:[%s284 + $0x90] sm:$0xf0]
        %v7151 = vld [vmem:[%s284 + $0xa0] sm:$0xf0]
        %v7152 = vld [vmem:[%s284 + $0xb0] sm:$0xf0]
        %v7153 = vld [vmem:[%s284 + $0xc0] sm:$0xf0]
        %v7154 = vld [vmem:[%s284 + $0xd0] sm:$0xf0]
        %v7155 = vld [vmem:[%s284 + $0xe0] sm:$0xf0]
        %v7156 = vld [vmem:[%s284 + $0xf0] sm:$0xf0]
        %v7189 = vrot.slane %v7141, 4
        %v7190 = vrot.slane %v6564, 4
        %v7191 = vsel %vm867, %v7189, %v7190
        %v7192 = vrot.slane %v7142, 4
        %v7193 = vrot.slane %v6566, 4
        %v7194 = vsel %vm867, %v7192, %v7193
        %v7195 = vrot.slane %v7143, 4
        %v7196 = vrot.slane %v6568, 4
        %v7197 = vsel %vm867, %v7195, %v7196
        %v7198 = vrot.slane %v7144, 4
        %v7199 = vrot.slane %v6570, 4
        %v7200 = vsel %vm867, %v7198, %v7199
        %v7201 = vrot.slane %v7145, 4
        %v7202 = vrot.slane %v6572, 4
        %v7203 = vsel %vm867, %v7201, %v7202
        %v7204 = vrot.slane %v7146, 4
        %v7205 = vrot.slane %v6574, 4
        %v7206 = vsel %vm867, %v7204, %v7205
        %v7207 = vrot.slane %v7147, 4
        %v7208 = vrot.slane %v6576, 4
        %v7209 = vsel %vm867, %v7207, %v7208
        %v7210 = vrot.slane %v7148, 4
        %v7211 = vrot.slane %v6578, 4
        %v7212 = vsel %vm867, %v7210, %v7211
        %v7213 = vrot.slane %v7149, 4
        %v7214 = vrot.slane %v6580, 4
        %v7215 = vsel %vm867, %v7213, %v7214
        %v7216 = vrot.slane %v7150, 4
        %v7217 = vrot.slane %v6582, 4
        %v7218 = vsel %vm867, %v7216, %v7217
        %v7219 = vrot.slane %v7151, 4
        %v7220 = vrot.slane %v6584, 4
        %v7221 = vsel %vm867, %v7219, %v7220
        %v7222 = vrot.slane %v7152, 4
        %v7223 = vrot.slane %v6586, 4
        %v7224 = vsel %vm867, %v7222, %v7223
        %v7225 = vrot.slane %v7153, 4
        %v7226 = vrot.slane %v6588, 4
        %v7227 = vsel %vm867, %v7225, %v7226
        %v7228 = vrot.slane %v7154, 4
        %v7229 = vrot.slane %v6590, 4
        %v7230 = vsel %vm867, %v7228, %v7229
        %v7231 = vrot.slane %v7155, 4
        %v7232 = vrot.slane %v6592, 4
        %v7233 = vsel %vm867, %v7231, %v7232
        %v7234 = vrot.slane %v7156, 4
        %v7235 = vrot.slane %v6594, 4
        %v7236 = vsel %vm867, %v7234, %v7235
        %s7253 = scalar_lea.vmem %s3, 256
        %v7254 = vld [vmem:[%s7253] sm:$0xf]
        %v7255 = vld [vmem:[%s7253 + $0x4] sm:$0xf]
        %v7256 = vld [vmem:[%s7253 + $0x8] sm:$0xf]
        %v7257 = vld [vmem:[%s7253 + $0xc] sm:$0xf]
        %v7258 = vld [vmem:[%s7253 + $0x10] sm:$0xf]
        %v7259 = vld [vmem:[%s7253 + $0x14] sm:$0xf]
        %v7260 = vld [vmem:[%s7253 + $0x18] sm:$0xf]
        %v7261 = vld [vmem:[%s7253 + $0x1c] sm:$0xf]
        %v7262 = vld [vmem:[%s7253 + $0x20] sm:$0xf]
        %v7263 = vld [vmem:[%s7253 + $0x24] sm:$0xf]
        %v7264 = vld [vmem:[%s7253 + $0x28] sm:$0xf]
        %v7265 = vld [vmem:[%s7253 + $0x2c] sm:$0xf]
        %v7266 = vld [vmem:[%s7253 + $0x30] sm:$0xf]
        %v7267 = vld [vmem:[%s7253 + $0x34] sm:$0xf]
        %v7268 = vld [vmem:[%s7253 + $0x38] sm:$0xf]
        %v7269 = vld [vmem:[%s7253 + $0x3c] sm:$0xf]
        %v7286 = vunpack.c.l.b16 %v7254
        %v7287 = vunpack.c.l.b16 %v7255
        %v7288 = vunpack.c.l.b16 %v7256
        %v7289 = vunpack.c.l.b16 %v7257
        %v7290 = vunpack.c.l.b16 %v7258
        %v7291 = vunpack.c.l.b16 %v7259
        %v7292 = vunpack.c.l.b16 %v7260
        %v7293 = vunpack.c.l.b16 %v7261
        %v7294 = vunpack.c.l.b16 %v7262
        %v7295 = vunpack.c.l.b16 %v7263
        %v7296 = vunpack.c.l.b16 %v7264
        %v7297 = vunpack.c.l.b16 %v7265
        %v7298 = vunpack.c.l.b16 %v7266
        %v7299 = vunpack.c.l.b16 %v7267
        %v7300 = vunpack.c.l.b16 %v7268
        %v7301 = vunpack.c.l.b16 %v7269
        %v7302 = vpack.c.b16 %v7287, %v7286
        %v7303 = vpack.c.b16 %v7289, %v7288
        %v7304 = vpack.c.b16 %v7291, %v7290
        %v7305 = vpack.c.b16 %v7293, %v7292
        %v7306 = vpack.c.b16 %v7295, %v7294
        %v7307 = vpack.c.b16 %v7297, %v7296
        %v7308 = vpack.c.b16 %v7299, %v7298
        %v7309 = vpack.c.b16 %v7301, %v7300
        %7318 = vmatprep.subr.bf16.mxu0 0
        %7319 = vmatpush1.bf16.msra.mxu0 %v7302
        %7320 = vmatprep.subr.bf16.mxu0 0
        %7321 = vmatpush1.bf16.msra.mxu0 %v7303
        %7322 = vmatprep.subr.bf16.mxu0 0
        %7323 = vmatpush1.bf16.msra.mxu0 %v7304
        %7324 = vmatprep.subr.bf16.mxu0 0
        %7325 = vmatpush1.bf16.msra.mxu0 %v7305
        %7326 = vmatprep.subr.bf16.mxu0 0
        %7327 = vmatpush1.bf16.msra.mxu0 %v7306
        %7328 = vmatprep.subr.bf16.mxu0 0
        %7329 = vmatpush1.bf16.msra.mxu0 %v7307
        %7330 = vmatprep.subr.bf16.mxu0 0
        %7331 = vmatpush1.bf16.msra.mxu0 %v7308
        %7332 = vmatprep.subr.bf16.mxu0 0
        %7333 = vmatpush1.bf16.msra.mxu0 %v7309
        %7334 = vmatprep.subr.bf16.mxu0 0
        %7335 = vmatpush1.bf16.msra.mxu0 0
        %7336 = vmatprep.subr.bf16.mxu0 0
        %7337 = vmatpush1.bf16.msra.mxu0 0
        %7338 = vmatprep.subr.bf16.mxu0 0
        %7339 = vmatpush1.bf16.msra.mxu0 0
        %7340 = vmatprep.subr.bf16.mxu0 0
        %7341 = vmatpush1.bf16.msra.mxu0 0
        %7342 = vmatprep.subr.bf16.mxu0 0
        %7343 = vmatpush1.bf16.msra.mxu0 0
        %7344 = vmatprep.subr.bf16.mxu0 0
        %7345 = vmatpush1.bf16.msra.mxu0 0
        %7346 = vmatprep.subr.bf16.mxu0 0
        %7347 = vmatpush1.bf16.msra.mxu0 0
        %7348 = vmatprep.subr.bf16.mxu0 0
        %7349 = vmatpush1.bf16.msra.mxu0 0
        %7350 = vmatprep.mubr.bf16.mxu0 0
        %7351 = vmatmul.mubr.bf16.gmra.mrb[0].mxu0 %v7191
        %v7352 = vpop.f32.mrb[0].mxu0
        %v7353 = vadd.f32 0.0, %v7352
        %v7354 = vpop.f32.mrb[0].mxu0
        %v7355 = vpop.f32.mrb[0].mxu0
        %v7356 = vadd.f32 0.0, %v7355
        %v7357 = vpop.f32.mrb[0].mxu0
        %7358 = vmatprep.mubr.bf16.mxu0 0
        %7359 = vmatmul.mubr.bf16.gmra.mrb[0].mxu0 %v7194
        %v7360 = vpop.f32.mrb[0].mxu0
        %v7361 = vadd.f32 0.0, %v7360
        %v7362 = vpop.f32.mrb[0].mxu0
        %v7363 = vpop.f32.mrb[0].mxu0
        %v7364 = vadd.f32 0.0, %v7363
        %v7365 = vpop.f32.mrb[0].mxu0
        %7366 = vmatprep.mubr.bf16.mxu0 0
        %7367 = vmatmul.mubr.bf16.gmra.mrb[0].mxu0 %v7197
        %v7368 = vpop.f32.mrb[0].mxu0
        %v7369 = vadd.f32 0.0, %v7368
        %v7370 = vpop.f32.mrb[0].mxu0
        %v7371 = vpop.f32.mrb[0].mxu0
        %v7372 = vadd.f32 0.0, %v7371
        %v7373 = vpop.f32.mrb[0].mxu0
        %7374 = vmatprep.mubr.bf16.mxu0 0
        %7375 = vmatmul.mubr.bf16.gmra.mrb[0].mxu0 %v7200
        %v7376 = vpop.f32.mrb[0].mxu0
        %v7377 = vadd.f32 0.0, %v7376
        %v7378 = vpop.f32.mrb[0].mxu0
        %v7379 = vpop.f32.mrb[0].mxu0
        %v7380 = vadd.f32 0.0, %v7379
        %v7381 = vpop.f32.mrb[0].mxu0
        %7382 = vmatprep.mubr.bf16.mxu0 0
        %7383 = vmatmul.mubr.bf16.gmra.mrb[0].mxu0 %v7203
        %v7384 = vpop.f32.mrb[0].mxu0
        %v7385 = vadd.f32 0.0, %v7384
        %v7386 = vpop.f32.mrb[0].mxu0
        %v7387 = vpop.f32.mrb[0].mxu0
        %v7388 = vadd.f32 0.0, %v7387
        %v7389 = vpop.f32.mrb[0].mxu0
        %7390 = vmatprep.mubr.bf16.mxu0 0
        %7391 = vmatmul.mubr.bf16.gmra.mrb[0].mxu0 %v7206
        %v7392 = vpop.f32.mrb[0].mxu0
        %v7393 = vadd.f32 0.0, %v7392
        %v7394 = vpop.f32.mrb[0].mxu0
        %v7395 = vpop.f32.mrb[0].mxu0
        %v7396 = vadd.f32 0.0, %v7395
        %v7397 = vpop.f32.mrb[0].mxu0
        %7398 = vmatprep.mubr.bf16.mxu0 0
        %7399 = vmatmul.mubr.bf16.gmra.mrb[0].mxu0 %v7209
        %v7400 = vpop.f32.mrb[0].mxu0
        %v7401 = vadd.f32 0.0, %v7400
        %v7402 = vpop.f32.mrb[0].mxu0
        %v7403 = vpop.f32.mrb[0].mxu0
        %v7404 = vadd.f32 0.0, %v7403
        %v7405 = vpop.f32.mrb[0].mxu0
        %7406 = vmatprep.mubr.bf16.mxu0 0
        %7407 = vmatmul.mubr.bf16.gmra.mrb[0].mxu0 %v7212
        %v7408 = vpop.f32.mrb[0].mxu0
        %v7409 = vadd.f32 0.0, %v7408
        %v7410 = vpop.f32.mrb[0].mxu0
        %v7411 = vpop.f32.mrb[0].mxu0
        %v7412 = vadd.f32 0.0, %v7411
        %v7413 = vpop.f32.mrb[0].mxu0
        %7414 = vmatprep.mubr.bf16.mxu0 0
        %7415 = vmatmul.mubr.bf16.gmra.mrb[0].mxu0 %v7215
        %v7416 = vpop.f32.mrb[0].mxu0
        %v7417 = vadd.f32 0.0, %v7416
        %v7418 = vpop.f32.mrb[0].mxu0
        %v7419 = vpop.f32.mrb[0].mxu0
        %v7420 = vadd.f32 0.0, %v7419
        %v7421 = vpop.f32.mrb[0].mxu0
        %7422 = vmatprep.mubr.bf16.mxu0 0
        %7423 = vmatmul.mubr.bf16.gmra.mrb[0].mxu0 %v7218
        %v7424 = vpop.f32.mrb[0].mxu0
        %v7425 = vadd.f32 0.0, %v7424
        %v7426 = vpop.f32.mrb[0].mxu0
        %v7427 = vpop.f32.mrb[0].mxu0
        %v7428 = vadd.f32 0.0, %v7427
        %v7429 = vpop.f32.mrb[0].mxu0
        %7430 = vmatprep.mubr.bf16.mxu0 0
        %7431 = vmatmul.mubr.bf16.gmra.mrb[0].mxu0 %v7221
        %v7432 = vpop.f32.mrb[0].mxu0
        %v7433 = vadd.f32 0.0, %v7432
        %v7434 = vpop.f32.mrb[0].mxu0
        %v7435 = vpop.f32.mrb[0].mxu0
        %v7436 = vadd.f32 0.0, %v7435
        %v7437 = vpop.f32.mrb[0].mxu0
        %7438 = vmatprep.mubr.bf16.mxu0 0
        %7439 = vmatmul.mubr.bf16.gmra.mrb[0].mxu0 %v7224
        %v7440 = vpop.f32.mrb[0].mxu0
        %v7441 = vadd.f32 0.0, %v7440
        %v7442 = vpop.f32.mrb[0].mxu0
        %v7443 = vpop.f32.mrb[0].mxu0
        %v7444 = vadd.f32 0.0, %v7443
        %v7445 = vpop.f32.mrb[0].mxu0
        %7446 = vmatprep.mubr.bf16.mxu0 0
        %7447 = vmatmul.mubr.bf16.gmra.mrb[0].mxu0 %v7227
        %v7448 = vpop.f32.mrb[0].mxu0
        %v7449 = vadd.f32 0.0, %v7448
        %v7450 = vpop.f32.mrb[0].mxu0
        %v7451 = vpop.f32.mrb[0].mxu0
        %v7452 = vadd.f32 0.0, %v7451
        %v7453 = vpop.f32.mrb[0].mxu0
        %7454 = vmatprep.mubr.bf16.mxu0 0
        %7455 = vmatmul.mubr.bf16.gmra.mrb[0].mxu0 %v7230
        %v7456 = vpop.f32.mrb[0].mxu0
        %v7457 = vadd.f32 0.0, %v7456
        %v7458 = vpop.f32.mrb[0].mxu0
        %v7459 = vpop.f32.mrb[0].mxu0
        %v7460 = vadd.f32 0.0, %v7459
        %v7461 = vpop.f32.mrb[0].mxu0
        %7462 = vmatprep.mubr.bf16.mxu0 0
        %7463 = vmatmul.mubr.bf16.gmra.mrb[0].mxu0 %v7233
        %v7464 = vpop.f32.mrb[0].mxu0
        %v7465 = vadd.f32 0.0, %v7464
        %v7466 = vpop.f32.mrb[0].mxu0
        %v7467 = vpop.f32.mrb[0].mxu0
        %v7468 = vadd.f32 0.0, %v7467
        %v7469 = vpop.f32.mrb[0].mxu0
        %7470 = vmatprep.mubr.bf16.mxu0 0
        %7471 = vmatmul.mubr.bf16.gmra.mrb[0].mxu0 %v7236
        %v7472 = vpop.f32.mrb[0].mxu0
        %v7473 = vadd.f32 0.0, %v7472
        %v7474 = vpop.f32.mrb[0].mxu0
        %v7475 = vpop.f32.mrb[0].mxu0
        %v7476 = vadd.f32 0.0, %v7475
        %v7477 = vpop.f32.mrb[0].mxu0
        %7478 = vdwg.mxu0
        %v7479 = vadd.f32 %v7109, %v7353
        %v7480 = vadd.f32 %v7110, %v7356
        %v7481 = vadd.f32 %v7111, %v7361
        %v7482 = vadd.f32 %v7112, %v7364
        %v7483 = vadd.f32 %v7113, %v7369
        %v7484 = vadd.f32 %v7114, %v7372
        %v7485 = vadd.f32 %v7115, %v7377
        %v7486 = vadd.f32 %v7116, %v7380
        %v7487 = vadd.f32 %v7117, %v7385
        %v7488 = vadd.f32 %v7118, %v7388
        %v7489 = vadd.f32 %v7119, %v7393
        %v7490 = vadd.f32 %v7120, %v7396
        %v7491 = vadd.f32 %v7121, %v7401
        %v7492 = vadd.f32 %v7122, %v7404
        %v7493 = vadd.f32 %v7123, %v7409
        %v7494 = vadd.f32 %v7124, %v7412
        %v7495 = vadd.f32 %v7125, %v7417
        %v7496 = vadd.f32 %v7126, %v7420
        %v7497 = vadd.f32 %v7127, %v7425
        %v7498 = vadd.f32 %v7128, %v7428
        %v7499 = vadd.f32 %v7129, %v7433
        %v7500 = vadd.f32 %v7130, %v7436
        %v7501 = vadd.f32 %v7131, %v7441
        %v7502 = vadd.f32 %v7132, %v7444
        %v7503 = vadd.f32 %v7133, %v7449
        %v7504 = vadd.f32 %v7134, %v7452
        %v7505 = vadd.f32 %v7135, %v7457
        %v7506 = vadd.f32 %v7136, %v7460
        %v7507 = vadd.f32 %v7137, %v7465
        %v7508 = vadd.f32 %v7138, %v7468
        %v7509 = vadd.f32 %v7139, %v7473
        %v7510 = vadd.f32 %v7140, %v7476
        %v7511 = vld [vmem:[%s284 + $0x8] sm:$0x1f]
        %v7512 = vld [vmem:[%s284 + $0x18] sm:$0x1f]
        %v7513 = vld [vmem:[%s284 + $0x28] sm:$0x1f]
        %v7514 = vld [vmem:[%s284 + $0x38] sm:$0x1f]
        %v7515 = vld [vmem:[%s284 + $0x48] sm:$0x1f]
        %v7516 = vld [vmem:[%s284 + $0x58] sm:$0x1f]
        %v7517 = vld [vmem:[%s284 + $0x68] sm:$0x1f]
        %v7518 = vld [vmem:[%s284 + $0x78] sm:$0x1f]
        %v7519 = vld [vmem:[%s284 + $0x88] sm:$0x1f]
        %v7520 = vld [vmem:[%s284 + $0x98] sm:$0x1f]
        %v7521 = vld [vmem:[%s284 + $0xa8] sm:$0x1f]
        %v7522 = vld [vmem:[%s284 + $0xb8] sm:$0x1f]
        %v7523 = vld [vmem:[%s284 + $0xc8] sm:$0x1f]
        %v7524 = vld [vmem:[%s284 + $0xd8] sm:$0x1f]
        %v7525 = vld [vmem:[%s284 + $0xe8] sm:$0x1f]
        %v7526 = vld [vmem:[%s284 + $0xf8] sm:$0x1f]
        %v7528 = vshrl.u32 %v7141, 16
        %v7530 = vrot.slane %v7528, 4
        %v7531 = vshll.u32 %v7141, 16
        %v7533 = vrot.slane %v7531, 5
        %v7534 = vor.u32 %v7530, %v7533
        %v7536 = vshrl.u32 %v7511, 16
        %v7538 = vrot.slane %v7536, 4
        %v7539 = vshll.u32 %v7511, 16
        %v7541 = vrot.slane %v7539, 5
        %v7542 = vor.u32 %v7538, %v7541
        %v7543 = vsel %vm1383, %v7534, %v7542
        %v7545 = vshrl.u32 %v7142, 16
        %v7547 = vrot.slane %v7545, 4
        %v7548 = vshll.u32 %v7142, 16
        %v7550 = vrot.slane %v7548, 5
        %v7551 = vor.u32 %v7547, %v7550
        %v7553 = vshrl.u32 %v7512, 16
        %v7555 = vrot.slane %v7553, 4
        %v7556 = vshll.u32 %v7512, 16
        %v7558 = vrot.slane %v7556, 5
        %v7559 = vor.u32 %v7555, %v7558
        %v7560 = vsel %vm1383, %v7551, %v7559
        %v7562 = vshrl.u32 %v7143, 16
        %v7564 = vrot.slane %v7562, 4
        %v7565 = vshll.u32 %v7143, 16
        %v7567 = vrot.slane %v7565, 5
        %v7568 = vor.u32 %v7564, %v7567
        %v7570 = vshrl.u32 %v7513, 16
        %v7572 = vrot.slane %v7570, 4
        %v7573 = vshll.u32 %v7513, 16
        %v7575 = vrot.slane %v7573, 5
        %v7576 = vor.u32 %v7572, %v7575
        %v7577 = vsel %vm1383, %v7568, %v7576
        %v7579 = vshrl.u32 %v7144, 16
        %v7581 = vrot.slane %v7579, 4
        %v7582 = vshll.u32 %v7144, 16
        %v7584 = vrot.slane %v7582, 5
        %v7585 = vor.u32 %v7581, %v7584
        %v7587 = vshrl.u32 %v7514, 16
        %v7589 = vrot.slane %v7587, 4
        %v7590 = vshll.u32 %v7514, 16
        %v7592 = vrot.slane %v7590, 5
        %v7593 = vor.u32 %v7589, %v7592
        %v7594 = vsel %vm1383, %v7585, %v7593
        %v7596 = vshrl.u32 %v7145, 16
        %v7598 = vrot.slane %v7596, 4
        %v7599 = vshll.u32 %v7145, 16
        %v7601 = vrot.slane %v7599, 5
        %v7602 = vor.u32 %v7598, %v7601
        %v7604 = vshrl.u32 %v7515, 16
        %v7606 = vrot.slane %v7604, 4
        %v7607 = vshll.u32 %v7515, 16
        %v7609 = vrot.slane %v7607, 5
        %v7610 = vor.u32 %v7606, %v7609
        %v7611 = vsel %vm1383, %v7602, %v7610
        %v7613 = vshrl.u32 %v7146, 16
        %v7615 = vrot.slane %v7613, 4
        %v7616 = vshll.u32 %v7146, 16
        %v7618 = vrot.slane %v7616, 5
        %v7619 = vor.u32 %v7615, %v7618
        %v7621 = vshrl.u32 %v7516, 16
        %v7623 = vrot.slane %v7621, 4
        %v7624 = vshll.u32 %v7516, 16
        %v7626 = vrot.slane %v7624, 5
        %v7627 = vor.u32 %v7623, %v7626
        %v7628 = vsel %vm1383, %v7619, %v7627
        %v7630 = vshrl.u32 %v7147, 16
        %v7632 = vrot.slane %v7630, 4
        %v7633 = vshll.u32 %v7147, 16
        %v7635 = vrot.slane %v7633, 5
        %v7636 = vor.u32 %v7632, %v7635
        %v7638 = vshrl.u32 %v7517, 16
        %v7640 = vrot.slane %v7638, 4
        %v7641 = vshll.u32 %v7517, 16
        %v7643 = vrot.slane %v7641, 5
        %v7644 = vor.u32 %v7640, %v7643
        %v7645 = vsel %vm1383, %v7636, %v7644
        %v7647 = vshrl.u32 %v7148, 16
        %v7649 = vrot.slane %v7647, 4
        %v7650 = vshll.u32 %v7148, 16
        %v7652 = vrot.slane %v7650, 5
        %v7653 = vor.u32 %v7649, %v7652
        %v7655 = vshrl.u32 %v7518, 16
        %v7657 = vrot.slane %v7655, 4
        %v7658 = vshll.u32 %v7518, 16
        %v7660 = vrot.slane %v7658, 5
        %v7661 = vor.u32 %v7657, %v7660
        %v7662 = vsel %vm1383, %v7653, %v7661
        %v7664 = vshrl.u32 %v7149, 16
        %v7666 = vrot.slane %v7664, 4
        %v7667 = vshll.u32 %v7149, 16
        %v7669 = vrot.slane %v7667, 5
        %v7670 = vor.u32 %v7666, %v7669
        %v7672 = vshrl.u32 %v7519, 16
        %v7674 = vrot.slane %v7672, 4
        %v7675 = vshll.u32 %v7519, 16
        %v7677 = vrot.slane %v7675, 5
        %v7678 = vor.u32 %v7674, %v7677
        %v7679 = vsel %vm1383, %v7670, %v7678
        %v7681 = vshrl.u32 %v7150, 16
        %v7683 = vrot.slane %v7681, 4
        %v7684 = vshll.u32 %v7150, 16
        %v7686 = vrot.slane %v7684, 5
        %v7687 = vor.u32 %v7683, %v7686
        %v7689 = vshrl.u32 %v7520, 16
        %v7691 = vrot.slane %v7689, 4
        %v7692 = vshll.u32 %v7520, 16
        %v7694 = vrot.slane %v7692, 5
        %v7695 = vor.u32 %v7691, %v7694
        %v7696 = vsel %vm1383, %v7687, %v7695
        %v7698 = vshrl.u32 %v7151, 16
        %v7700 = vrot.slane %v7698, 4
        %v7701 = vshll.u32 %v7151, 16
        %v7703 = vrot.slane %v7701, 5
        %v7704 = vor.u32 %v7700, %v7703
        %v7706 = vshrl.u32 %v7521, 16
        %v7708 = vrot.slane %v7706, 4
        %v7709 = vshll.u32 %v7521, 16
        %v7711 = vrot.slane %v7709, 5
        %v7712 = vor.u32 %v7708, %v7711
        %v7713 = vsel %vm1383, %v7704, %v7712
        %v7715 = vshrl.u32 %v7152, 16
        %v7717 = vrot.slane %v7715, 4
        %v7718 = vshll.u32 %v7152, 16
        %v7720 = vrot.slane %v7718, 5
        %v7721 = vor.u32 %v7717, %v7720
        %v7723 = vshrl.u32 %v7522, 16
        %v7725 = vrot.slane %v7723, 4
        %v7726 = vshll.u32 %v7522, 16
        %v7728 = vrot.slane %v7726, 5
        %v7729 = vor.u32 %v7725, %v7728
        %v7730 = vsel %vm1383, %v7721, %v7729
        %v7732 = vshrl.u32 %v7153, 16
        %v7734 = vrot.slane %v7732, 4
        %v7735 = vshll.u32 %v7153, 16
        %v7737 = vrot.slane %v7735, 5
        %v7738 = vor.u32 %v7734, %v7737
        %v7740 = vshrl.u32 %v7523, 16
        %v7742 = vrot.slane %v7740, 4
        %v7743 = vshll.u32 %v7523, 16
        %v7745 = vrot.slane %v7743, 5
        %v7746 = vor.u32 %v7742, %v7745
        %v7747 = vsel %vm1383, %v7738, %v7746
        %v7749 = vshrl.u32 %v7154, 16
        %v7751 = vrot.slane %v7749, 4
        %v7752 = vshll.u32 %v7154, 16
        %v7754 = vrot.slane %v7752, 5
        %v7755 = vor.u32 %v7751, %v7754
        %v7757 = vshrl.u32 %v7524, 16
        %v7759 = vrot.slane %v7757, 4
        %v7760 = vshll.u32 %v7524, 16
        %v7762 = vrot.slane %v7760, 5
        %v7763 = vor.u32 %v7759, %v7762
        %v7764 = vsel %vm1383, %v7755, %v7763
        %v7766 = vshrl.u32 %v7155, 16
        %v7768 = vrot.slane %v7766, 4
        %v7769 = vshll.u32 %v7155, 16
        %v7771 = vrot.slane %v7769, 5
        %v7772 = vor.u32 %v7768, %v7771
        %v7774 = vshrl.u32 %v7525, 16
        %v7776 = vrot.slane %v7774, 4
        %v7777 = vshll.u32 %v7525, 16
        %v7779 = vrot.slane %v7777, 5
        %v7780 = vor.u32 %v7776, %v7779
        %v7781 = vsel %vm1383, %v7772, %v7780
        %v7783 = vshrl.u32 %v7156, 16
        %v7785 = vrot.slane %v7783, 4
        %v7786 = vshll.u32 %v7156, 16
        %v7788 = vrot.slane %v7786, 5
        %v7789 = vor.u32 %v7785, %v7788
        %v7791 = vshrl.u32 %v7526, 16
        %v7793 = vrot.slane %v7791, 4
        %v7794 = vshll.u32 %v7526, 16
        %v7796 = vrot.slane %v7794, 5
        %v7797 = vor.u32 %v7793, %v7796
        %v7798 = vsel %vm1383, %v7789, %v7797
        %s7815 = scalar_lea.vmem %s3, 320
        %v7816 = vld [vmem:[%s7815] sm:$0xf]
        %v7817 = vld [vmem:[%s7815 + $0x4] sm:$0xf]
        %v7818 = vld [vmem:[%s7815 + $0x8] sm:$0xf]
        %v7819 = vld [vmem:[%s7815 + $0xc] sm:$0xf]
        %v7820 = vld [vmem:[%s7815 + $0x10] sm:$0xf]
        %v7821 = vld [vmem:[%s7815 + $0x14] sm:$0xf]
        %v7822 = vld [vmem:[%s7815 + $0x18] sm:$0xf]
        %v7823 = vld [vmem:[%s7815 + $0x1c] sm:$0xf]
        %v7824 = vld [vmem:[%s7815 + $0x20] sm:$0xf]
        %v7825 = vld [vmem:[%s7815 + $0x24] sm:$0xf]
        %v7826 = vld [vmem:[%s7815 + $0x28] sm:$0xf]
        %v7827 = vld [vmem:[%s7815 + $0x2c] sm:$0xf]
        %v7828 = vld [vmem:[%s7815 + $0x30] sm:$0xf]
        %v7829 = vld [vmem:[%s7815 + $0x34] sm:$0xf]
        %v7830 = vld [vmem:[%s7815 + $0x38] sm:$0xf]
        %v7831 = vld [vmem:[%s7815 + $0x3c] sm:$0xf]
        %v7848 = vunpack.c.l.b16 %v7816
        %v7849 = vunpack.c.l.b16 %v7817
        %v7850 = vunpack.c.l.b16 %v7818
        %v7851 = vunpack.c.l.b16 %v7819
        %v7852 = vunpack.c.l.b16 %v7820
        %v7853 = vunpack.c.l.b16 %v7821
        %v7854 = vunpack.c.l.b16 %v7822
        %v7855 = vunpack.c.l.b16 %v7823
        %v7856 = vunpack.c.l.b16 %v7824
        %v7857 = vunpack.c.l.b16 %v7825
        %v7858 = vunpack.c.l.b16 %v7826
        %v7859 = vunpack.c.l.b16 %v7827
        %v7860 = vunpack.c.l.b16 %v7828
        %v7861 = vunpack.c.l.b16 %v7829
        %v7862 = vunpack.c.l.b16 %v7830
        %v7863 = vunpack.c.l.b16 %v7831
        %v7864 = vpack.c.b16 %v7849, %v7848
        %v7865 = vpack.c.b16 %v7851, %v7850
        %v7866 = vpack.c.b16 %v7853, %v7852
        %v7867 = vpack.c.b16 %v7855, %v7854
        %v7868 = vpack.c.b16 %v7857, %v7856
        %v7869 = vpack.c.b16 %v7859, %v7858
        %v7870 = vpack.c.b16 %v7861, %v7860
        %v7871 = vpack.c.b16 %v7863, %v7862
        %7880 = vmatprep.subr.bf16.mxu0 0
        %7881 = vmatpush1.bf16.msra.mxu0 %v7864
        %7882 = vmatprep.subr.bf16.mxu0 0
        %7883 = vmatpush1.bf16.msra.mxu0 %v7865
        %7884 = vmatprep.subr.bf16.mxu0 0
        %7885 = vmatpush1.bf16.msra.mxu0 %v7866
        %7886 = vmatprep.subr.bf16.mxu0 0
        %7887 = vmatpush1.bf16.msra.mxu0 %v7867
        %7888 = vmatprep.subr.bf16.mxu0 0
        %7889 = vmatpush1.bf16.msra.mxu0 %v7868
        %7890 = vmatprep.subr.bf16.mxu0 0
        %7891 = vmatpush1.bf16.msra.mxu0 %v7869
        %7892 = vmatprep.subr.bf16.mxu0 0
        %7893 = vmatpush1.bf16.msra.mxu0 %v7870
        %7894 = vmatprep.subr.bf16.mxu0 0
        %7895 = vmatpush1.bf16.msra.mxu0 %v7871
        %7896 = vmatprep.subr.bf16.mxu0 0
        %7897 = vmatpush1.bf16.msra.mxu0 0
        %7898 = vmatprep.subr.bf16.mxu0 0
        %7899 = vmatpush1.bf16.msra.mxu0 0
        %7900 = vmatprep.subr.bf16.mxu0 0
        %7901 = vmatpush1.bf16.msra.mxu0 0
        %7902 = vmatprep.subr.bf16.mxu0 0
        %7903 = vmatpush1.bf16.msra.mxu0 0
        %7904 = vmatprep.subr.bf16.mxu0 0
        %7905 = vmatpush1.bf16.msra.mxu0 0
        %7906 = vmatprep.subr.bf16.mxu0 0
        %7907 = vmatpush1.bf16.msra.mxu0 0
        %7908 = vmatprep.subr.bf16.mxu0 0
        %7909 = vmatpush1.bf16.msra.mxu0 0
        %7910 = vmatprep.subr.bf16.mxu0 0
        %7911 = vmatpush1.bf16.msra.mxu0 0
        %7912 = vmatprep.mubr.bf16.mxu0 0
        %7913 = vmatmul.mubr.bf16.gmra.mrb[0].mxu0 %v7543
        %v7914 = vpop.f32.mrb[0].mxu0
        %v7915 = vadd.f32 0.0, %v7914
        %v7916 = vpop.f32.mrb[0].mxu0
        %v7917 = vpop.f32.mrb[0].mxu0
        %v7918 = vadd.f32 0.0, %v7917
        %v7919 = vpop.f32.mrb[0].mxu0
        %7920 = vmatprep.mubr.bf16.mxu0 0
        %7921 = vmatmul.mubr.bf16.gmra.mrb[0].mxu0 %v7560
        %v7922 = vpop.f32.mrb[0].mxu0
        %v7923 = vadd.f32 0.0, %v7922
        %v7924 = vpop.f32.mrb[0].mxu0
        %v7925 = vpop.f32.mrb[0].mxu0
        %v7926 = vadd.f32 0.0, %v7925
        %v7927 = vpop.f32.mrb[0].mxu0
        %7928 = vmatprep.mubr.bf16.mxu0 0
        %7929 = vmatmul.mubr.bf16.gmra.mrb[0].mxu0 %v7577
        %v7930 = vpop.f32.mrb[0].mxu0
        %v7931 = vadd.f32 0.0, %v7930
        %v7932 = vpop.f32.mrb[0].mxu0
        %v7933 = vpop.f32.mrb[0].mxu0
        %v7934 = vadd.f32 0.0, %v7933
        %v7935 = vpop.f32.mrb[0].mxu0
        %7936 = vmatprep.mubr.bf16.mxu0 0
        %7937 = vmatmul.mubr.bf16.gmra.mrb[0].mxu0 %v7594
        %v7938 = vpop.f32.mrb[0].mxu0
        %v7939 = vadd.f32 0.0, %v7938
        %v7940 = vpop.f32.mrb[0].mxu0
        %v7941 = vpop.f32.mrb[0].mxu0
        %v7942 = vadd.f32 0.0, %v7941
        %v7943 = vpop.f32.mrb[0].mxu0
        %7944 = vmatprep.mubr.bf16.mxu0 0
        %7945 = vmatmul.mubr.bf16.gmra.mrb[0].mxu0 %v7611
        %v7946 = vpop.f32.mrb[0].mxu0
        %v7947 = vadd.f32 0.0, %v7946
        %v7948 = vpop.f32.mrb[0].mxu0
        %v7949 = vpop.f32.mrb[0].mxu0
        %v7950 = vadd.f32 0.0, %v7949
        %v7951 = vpop.f32.mrb[0].mxu0
        %7952 = vmatprep.mubr.bf16.mxu0 0
        %7953 = vmatmul.mubr.bf16.gmra.mrb[0].mxu0 %v7628
        %v7954 = vpop.f32.mrb[0].mxu0
        %v7955 = vadd.f32 0.0, %v7954
        %v7956 = vpop.f32.mrb[0].mxu0
        %v7957 = vpop.f32.mrb[0].mxu0
        %v7958 = vadd.f32 0.0, %v7957
        %v7959 = vpop.f32.mrb[0].mxu0
        %7960 = vmatprep.mubr.bf16.mxu0 0
        %7961 = vmatmul.mubr.bf16.gmra.mrb[0].mxu0 %v7645
        %v7962 = vpop.f32.mrb[0].mxu0
        %v7963 = vadd.f32 0.0, %v7962
        %v7964 = vpop.f32.mrb[0].mxu0
        %v7965 = vpop.f32.mrb[0].mxu0
        %v7966 = vadd.f32 0.0, %v7965
        %v7967 = vpop.f32.mrb[0].mxu0
        %7968 = vmatprep.mubr.bf16.mxu0 0
        %7969 = vmatmul.mubr.bf16.gmra.mrb[0].mxu0 %v7662
        %v7970 = vpop.f32.mrb[0].mxu0
        %v7971 = vadd.f32 0.0, %v7970
        %v7972 = vpop.f32.mrb[0].mxu0
        %v7973 = vpop.f32.mrb[0].mxu0
        %v7974 = vadd.f32 0.0, %v7973
        %v7975 = vpop.f32.mrb[0].mxu0
        %7976 = vmatprep.mubr.bf16.mxu0 0
        %7977 = vmatmul.mubr.bf16.gmra.mrb[0].mxu0 %v7679
        %v7978 = vpop.f32.mrb[0].mxu0
        %v7979 = vadd.f32 0.0, %v7978
        %v7980 = vpop.f32.mrb[0].mxu0
        %v7981 = vpop.f32.mrb[0].mxu0
        %v7982 = vadd.f32 0.0, %v7981
        %v7983 = vpop.f32.mrb[0].mxu0
        %7984 = vmatprep.mubr.bf16.mxu0 0
        %7985 = vmatmul.mubr.bf16.gmra.mrb[0].mxu0 %v7696
        %v7986 = vpop.f32.mrb[0].mxu0
        %v7987 = vadd.f32 0.0, %v7986
        %v7988 = vpop.f32.mrb[0].mxu0
        %v7989 = vpop.f32.mrb[0].mxu0
        %v7990 = vadd.f32 0.0, %v7989
        %v7991 = vpop.f32.mrb[0].mxu0
        %7992 = vmatprep.mubr.bf16.mxu0 0
        %7993 = vmatmul.mubr.bf16.gmra.mrb[0].mxu0 %v7713
        %v7994 = vpop.f32.mrb[0].mxu0
        %v7995 = vadd.f32 0.0, %v7994
        %v7996 = vpop.f32.mrb[0].mxu0
        %v7997 = vpop.f32.mrb[0].mxu0
        %v7998 = vadd.f32 0.0, %v7997
        %v7999 = vpop.f32.mrb[0].mxu0
        %8000 = vmatprep.mubr.bf16.mxu0 0
        %8001 = vmatmul.mubr.bf16.gmra.mrb[0].mxu0 %v7730
        %v8002 = vpop.f32.mrb[0].mxu0
        %v8003 = vadd.f32 0.0, %v8002
        %v8004 = vpop.f32.mrb[0].mxu0
        %v8005 = vpop.f32.mrb[0].mxu0
        %v8006 = vadd.f32 0.0, %v8005
        %v8007 = vpop.f32.mrb[0].mxu0
        %8008 = vmatprep.mubr.bf16.mxu0 0
        %8009 = vmatmul.mubr.bf16.gmra.mrb[0].mxu0 %v7747
        %v8010 = vpop.f32.mrb[0].mxu0
        %v8011 = vadd.f32 0.0, %v8010
        %v8012 = vpop.f32.mrb[0].mxu0
        %v8013 = vpop.f32.mrb[0].mxu0
        %v8014 = vadd.f32 0.0, %v8013
        %v8015 = vpop.f32.mrb[0].mxu0
        %8016 = vmatprep.mubr.bf16.mxu0 0
        %8017 = vmatmul.mubr.bf16.gmra.mrb[0].mxu0 %v7764
        %v8018 = vpop.f32.mrb[0].mxu0
        %v8019 = vadd.f32 0.0, %v8018
        %v8020 = vpop.f32.mrb[0].mxu0
        %v8021 = vpop.f32.mrb[0].mxu0
        %v8022 = vadd.f32 0.0, %v8021
        %v8023 = vpop.f32.mrb[0].mxu0
        %8024 = vmatprep.mubr.bf16.mxu0 0
        %8025 = vmatmul.mubr.bf16.gmra.mrb[0].mxu0 %v7781
        %v8026 = vpop.f32.mrb[0].mxu0
        %v8027 = vadd.f32 0.0, %v8026
        %v8028 = vpop.f32.mrb[0].mxu0
        %v8029 = vpop.f32.mrb[0].mxu0
        %v8030 = vadd.f32 0.0, %v8029
        %v8031 = vpop.f32.mrb[0].mxu0
        %8032 = vmatprep.mubr.bf16.mxu0 0
        %8033 = vmatmul.mubr.bf16.gmra.mrb[0].mxu0 %v7798
        %v8034 = vpop.f32.mrb[0].mxu0
        %v8035 = vadd.f32 0.0, %v8034
        %v8036 = vpop.f32.mrb[0].mxu0
        %v8037 = vpop.f32.mrb[0].mxu0
        %v8038 = vadd.f32 0.0, %v8037
        %v8039 = vpop.f32.mrb[0].mxu0
        %8040 = vdwg.mxu0
        %v8041 = vadd.f32 %v7479, %v7915
        %v8042 = vadd.f32 %v7480, %v7918
        %v8043 = vadd.f32 %v7481, %v7923
        %v8044 = vadd.f32 %v7482, %v7926
        %v8045 = vadd.f32 %v7483, %v7931
        %v8046 = vadd.f32 %v7484, %v7934
        %v8047 = vadd.f32 %v7485, %v7939
        %v8048 = vadd.f32 %v7486, %v7942
        %v8049 = vadd.f32 %v7487, %v7947
        %v8050 = vadd.f32 %v7488, %v7950
        %v8051 = vadd.f32 %v7489, %v7955
        %v8052 = vadd.f32 %v7490, %v7958
        %v8053 = vadd.f32 %v7491, %v7963
        %v8054 = vadd.f32 %v7492, %v7966
        %v8055 = vadd.f32 %v7493, %v7971
        %v8056 = vadd.f32 %v7494, %v7974
        %v8057 = vadd.f32 %v7495, %v7979
        %v8058 = vadd.f32 %v7496, %v7982
        %v8059 = vadd.f32 %v7497, %v7987
        %v8060 = vadd.f32 %v7498, %v7990
        %v8061 = vadd.f32 %v7499, %v7995
        %v8062 = vadd.f32 %v7500, %v7998
        %v8063 = vadd.f32 %v7501, %v8003
        %v8064 = vadd.f32 %v7502, %v8006
        %v8065 = vadd.f32 %v7503, %v8011
        %v8066 = vadd.f32 %v7504, %v8014
        %v8067 = vadd.f32 %v7505, %v8019
        %v8068 = vadd.f32 %v7506, %v8022
        %v8069 = vadd.f32 %v7507, %v8027
        %v8070 = vadd.f32 %v7508, %v8030
        %v8071 = vadd.f32 %v7509, %v8035
        %v8072 = vadd.f32 %v7510, %v8038
        %s8073 = scalar_lea.vmem [#allocation3], 32
        %v8074 = vld [vmem:[%s8073] sm:$0xf8]
        %v8075 = vld [vmem:[%s8073 + $0x8] sm:$0xf]
        %v8076 = vld [vmem:[%s8073 + $0x10] sm:$0xf8]
        %v8077 = vld [vmem:[%s8073 + $0x18] sm:$0xf]
        %v8078 = vld [vmem:[%s8073 + $0x20] sm:$0xf8]
        %v8079 = vld [vmem:[%s8073 + $0x28] sm:$0xf]
        %v8080 = vld [vmem:[%s8073 + $0x30] sm:$0xf8]
        %v8081 = vld [vmem:[%s8073 + $0x38] sm:$0xf]
        %v8082 = vld [vmem:[%s8073 + $0x40] sm:$0xf8]
        %v8083 = vld [vmem:[%s8073 + $0x48] sm:$0xf]
        %v8084 = vld [vmem:[%s8073 + $0x50] sm:$0xf8]
        %v8085 = vld [vmem:[%s8073 + $0x58] sm:$0xf]
        %v8086 = vld [vmem:[%s8073 + $0x60] sm:$0xf8]
        %v8087 = vld [vmem:[%s8073 + $0x68] sm:$0xf]
        %v8088 = vld [vmem:[%s8073 + $0x70] sm:$0xf8]
        %v8089 = vld [vmem:[%s8073 + $0x78] sm:$0xf]
        %v8090 = vld [vmem:[%s8073 + $0x80] sm:$0xf8]
        %v8091 = vld [vmem:[%s8073 + $0x88] sm:$0xf]
        %v8092 = vld [vmem:[%s8073 + $0x90] sm:$0xf8]
        %v8093 = vld [vmem:[%s8073 + $0x98] sm:$0xf]
        %v8094 = vld [vmem:[%s8073 + $0xa0] sm:$0xf8]
        %v8095 = vld [vmem:[%s8073 + $0xa8] sm:$0xf]
        %v8096 = vld [vmem:[%s8073 + $0xb0] sm:$0xf8]
        %v8097 = vld [vmem:[%s8073 + $0xb8] sm:$0xf]
        %v8098 = vld [vmem:[%s8073 + $0xc0] sm:$0xf8]
        %v8099 = vld [vmem:[%s8073 + $0xc8] sm:$0xf]
        %v8100 = vld [vmem:[%s8073 + $0xd0] sm:$0xf8]
        %v8101 = vld [vmem:[%s8073 + $0xd8] sm:$0xf]
        %v8102 = vld [vmem:[%s8073 + $0xe0] sm:$0xf8]
        %v8103 = vld [vmem:[%s8073 + $0xe8] sm:$0xf]
        %v8104 = vld [vmem:[%s8073 + $0xf0] sm:$0xf8]
        %v8105 = vld [vmem:[%s8073 + $0xf8] sm:$0xf]
        %v8107 = vshrl.u32 %v8074, 16
        %v8109 = vrot.slane %v8107, 3
        %v8110 = vshll.u32 %v8074, 16
        %v8112 = vrot.slane %v8110, 4
        %v8113 = vor.u32 %v8109, %v8112
        %v8115 = vshrl.u32 %v8075, 16
        %v8117 = vrot.slane %v8115, 3
        %v8118 = vshll.u32 %v8075, 16
        %v8120 = vrot.slane %v8118, 4
        %v8121 = vor.u32 %v8117, %v8120
        %v8122 = vsel %vm514, %v8113, %v8121
        %v8124 = vshrl.u32 %v8076, 16
        %v8126 = vrot.slane %v8124, 3
        %v8127 = vshll.u32 %v8076, 16
        %v8129 = vrot.slane %v8127, 4
        %v8130 = vor.u32 %v8126, %v8129
        %v8132 = vshrl.u32 %v8077, 16
        %v8134 = vrot.slane %v8132, 3
        %v8135 = vshll.u32 %v8077, 16
        %v8137 = vrot.slane %v8135, 4
        %v8138 = vor.u32 %v8134, %v8137
        %v8139 = vsel %vm514, %v8130, %v8138
        %v8141 = vshrl.u32 %v8078, 16
        %v8143 = vrot.slane %v8141, 3
        %v8144 = vshll.u32 %v8078, 16
        %v8146 = vrot.slane %v8144, 4
        %v8147 = vor.u32 %v8143, %v8146
        %v8149 = vshrl.u32 %v8079, 16
        %v8151 = vrot.slane %v8149, 3
        %v8152 = vshll.u32 %v8079, 16
        %v8154 = vrot.slane %v8152, 4
        %v8155 = vor.u32 %v8151, %v8154
        %v8156 = vsel %vm514, %v8147, %v8155
        %v8158 = vshrl.u32 %v8080, 16
        %v8160 = vrot.slane %v8158, 3
        %v8161 = vshll.u32 %v8080, 16
        %v8163 = vrot.slane %v8161, 4
        %v8164 = vor.u32 %v8160, %v8163
        %v8166 = vshrl.u32 %v8081, 16
        %v8168 = vrot.slane %v8166, 3
        %v8169 = vshll.u32 %v8081, 16
        %v8171 = vrot.slane %v8169, 4
        %v8172 = vor.u32 %v8168, %v8171
        %v8173 = vsel %vm514, %v8164, %v8172
        %v8175 = vshrl.u32 %v8082, 16
        %v8177 = vrot.slane %v8175, 3
        %v8178 = vshll.u32 %v8082, 16
        %v8180 = vrot.slane %v8178, 4
        %v8181 = vor.u32 %v8177, %v8180
        %v8183 = vshrl.u32 %v8083, 16
        %v8185 = vrot.slane %v8183, 3
        %v8186 = vshll.u32 %v8083, 16
        %v8188 = vrot.slane %v8186, 4
        %v8189 = vor.u32 %v8185, %v8188
        %v8190 = vsel %vm514, %v8181, %v8189
        %v8192 = vshrl.u32 %v8084, 16
        %v8194 = vrot.slane %v8192, 3
        %v8195 = vshll.u32 %v8084, 16
        %v8197 = vrot.slane %v8195, 4
        %v8198 = vor.u32 %v8194, %v8197
        %v8200 = vshrl.u32 %v8085, 16
        %v8202 = vrot.slane %v8200, 3
        %v8203 = vshll.u32 %v8085, 16
        %v8205 = vrot.slane %v8203, 4
        %v8206 = vor.u32 %v8202, %v8205
        %v8207 = vsel %vm514, %v8198, %v8206
        %v8209 = vshrl.u32 %v8086, 16
        %v8211 = vrot.slane %v8209, 3
        %v8212 = vshll.u32 %v8086, 16
        %v8214 = vrot.slane %v8212, 4
        %v8215 = vor.u32 %v8211, %v8214
        %v8217 = vshrl.u32 %v8087, 16
        %v8219 = vrot.slane %v8217, 3
        %v8220 = vshll.u32 %v8087, 16
        %v8222 = vrot.slane %v8220, 4
        %v8223 = vor.u32 %v8219, %v8222
        %v8224 = vsel %vm514, %v8215, %v8223
        %v8226 = vshrl.u32 %v8088, 16
        %v8228 = vrot.slane %v8226, 3
        %v8229 = vshll.u32 %v8088, 16
        %v8231 = vrot.slane %v8229, 4
        %v8232 = vor.u32 %v8228, %v8231
        %v8234 = vshrl.u32 %v8089, 16
        %v8236 = vrot.slane %v8234, 3
        %v8237 = vshll.u32 %v8089, 16
        %v8239 = vrot.slane %v8237, 4
        %v8240 = vor.u32 %v8236, %v8239
        %v8241 = vsel %vm514, %v8232, %v8240
        %v8243 = vshrl.u32 %v8090, 16
        %v8245 = vrot.slane %v8243, 3
        %v8246 = vshll.u32 %v8090, 16
        %v8248 = vrot.slane %v8246, 4
        %v8249 = vor.u32 %v8245, %v8248
        %v8251 = vshrl.u32 %v8091, 16
        %v8253 = vrot.slane %v8251, 3
        %v8254 = vshll.u32 %v8091, 16
        %v8256 = vrot.slane %v8254, 4
        %v8257 = vor.u32 %v8253, %v8256
        %v8258 = vsel %vm514, %v8249, %v8257
        %v8260 = vshrl.u32 %v8092, 16
        %v8262 = vrot.slane %v8260, 3
        %v8263 = vshll.u32 %v8092, 16
        %v8265 = vrot.slane %v8263, 4
        %v8266 = vor.u32 %v8262, %v8265
        %v8268 = vshrl.u32 %v8093, 16
        %v8270 = vrot.slane %v8268, 3
        %v8271 = vshll.u32 %v8093, 16
        %v8273 = vrot.slane %v8271, 4
        %v8274 = vor.u32 %v8270, %v8273
        %v8275 = vsel %vm514, %v8266, %v8274
        %v8277 = vshrl.u32 %v8094, 16
        %v8279 = vrot.slane %v8277, 3
        %v8280 = vshll.u32 %v8094, 16
        %v8282 = vrot.slane %v8280, 4
        %v8283 = vor.u32 %v8279, %v8282
        %v8285 = vshrl.u32 %v8095, 16
        %v8287 = vrot.slane %v8285, 3
        %v8288 = vshll.u32 %v8095, 16
        %v8290 = vrot.slane %v8288, 4
        %v8291 = vor.u32 %v8287, %v8290
        %v8292 = vsel %vm514, %v8283, %v8291
        %v8294 = vshrl.u32 %v8096, 16
        %v8296 = vrot.slane %v8294, 3
        %v8297 = vshll.u32 %v8096, 16
        %v8299 = vrot.slane %v8297, 4
        %v8300 = vor.u32 %v8296, %v8299
        %v8302 = vshrl.u32 %v8097, 16
        %v8304 = vrot.slane %v8302, 3
        %v8305 = vshll.u32 %v8097, 16
        %v8307 = vrot.slane %v8305, 4
        %v8308 = vor.u32 %v8304, %v8307
        %v8309 = vsel %vm514, %v8300, %v8308
        %v8311 = vshrl.u32 %v8098, 16
        %v8313 = vrot.slane %v8311, 3
        %v8314 = vshll.u32 %v8098, 16
        %v8316 = vrot.slane %v8314, 4
        %v8317 = vor.u32 %v8313, %v8316
        %v8319 = vshrl.u32 %v8099, 16
        %v8321 = vrot.slane %v8319, 3
        %v8322 = vshll.u32 %v8099, 16
        %v8324 = vrot.slane %v8322, 4
        %v8325 = vor.u32 %v8321, %v8324
        %v8326 = vsel %vm514, %v8317, %v8325
        %v8328 = vshrl.u32 %v8100, 16
        %v8330 = vrot.slane %v8328, 3
        %v8331 = vshll.u32 %v8100, 16
        %v8333 = vrot.slane %v8331, 4
        %v8334 = vor.u32 %v8330, %v8333
        %v8336 = vshrl.u32 %v8101, 16
        %v8338 = vrot.slane %v8336, 3
        %v8339 = vshll.u32 %v8101, 16
        %v8341 = vrot.slane %v8339, 4
        %v8342 = vor.u32 %v8338, %v8341
        %v8343 = vsel %vm514, %v8334, %v8342
        %v8345 = vshrl.u32 %v8102, 16
        %v8347 = vrot.slane %v8345, 3
        %v8348 = vshll.u32 %v8102, 16
        %v8350 = vrot.slane %v8348, 4
        %v8351 = vor.u32 %v8347, %v8350
        %v8353 = vshrl.u32 %v8103, 16
        %v8355 = vrot.slane %v8353, 3
        %v8356 = vshll.u32 %v8103, 16
        %v8358 = vrot.slane %v8356, 4
        %v8359 = vor.u32 %v8355, %v8358
        %v8360 = vsel %vm514, %v8351, %v8359
        %v8362 = vshrl.u32 %v8104, 16
        %v8364 = vrot.slane %v8362, 3
        %v8365 = vshll.u32 %v8104, 16
        %v8367 = vrot.slane %v8365, 4
        %v8368 = vor.u32 %v8364, %v8367
        %v8370 = vshrl.u32 %v8105, 16
        %v8372 = vrot.slane %v8370, 3
        %v8373 = vshll.u32 %v8105, 16
        %v8375 = vrot.slane %v8373, 4
        %v8376 = vor.u32 %v8372, %v8375
        %v8377 = vsel %vm514, %v8368, %v8376
        %s8394 = scalar_lea.vmem %s3, 384
        %v8395 = vld [vmem:[%s8394] sm:$0xf]
        %v8396 = vld [vmem:[%s8394 + $0x4] sm:$0xf]
        %v8397 = vld [vmem:[%s8394 + $0x8] sm:$0xf]
        %v8398 = vld [vmem:[%s8394 + $0xc] sm:$0xf]
        %v8399 = vld [vmem:[%s8394 + $0x10] sm:$0xf]
        %v8400 = vld [vmem:[%s8394 + $0x14] sm:$0xf]
        %v8401 = vld [vmem:[%s8394 + $0x18] sm:$0xf]
        %v8402 = vld [vmem:[%s8394 + $0x1c] sm:$0xf]
        %v8403 = vld [vmem:[%s8394 + $0x20] sm:$0xf]
        %v8404 = vld [vmem:[%s8394 + $0x24] sm:$0xf]
        %v8405 = vld [vmem:[%s8394 + $0x28] sm:$0xf]
        %v8406 = vld [vmem:[%s8394 + $0x2c] sm:$0xf]
        %v8407 = vld [vmem:[%s8394 + $0x30] sm:$0xf]
        %v8408 = vld [vmem:[%s8394 + $0x34] sm:$0xf]
        %v8409 = vld [vmem:[%s8394 + $0x38] sm:$0xf]
        %v8410 = vld [vmem:[%s8394 + $0x3c] sm:$0xf]
        %v8427 = vunpack.c.l.b16 %v8395
        %v8428 = vunpack.c.l.b16 %v8396
        %v8429 = vunpack.c.l.b16 %v8397
        %v8430 = vunpack.c.l.b16 %v8398
        %v8431 = vunpack.c.l.b16 %v8399
        %v8432 = vunpack.c.l.b16 %v8400
        %v8433 = vunpack.c.l.b16 %v8401
        %v8434 = vunpack.c.l.b16 %v8402
        %v8435 = vunpack.c.l.b16 %v8403
        %v8436 = vunpack.c.l.b16 %v8404
        %v8437 = vunpack.c.l.b16 %v8405
        %v8438 = vunpack.c.l.b16 %v8406
        %v8439 = vunpack.c.l.b16 %v8407
        %v8440 = vunpack.c.l.b16 %v8408
        %v8441 = vunpack.c.l.b16 %v8409
        %v8442 = vunpack.c.l.b16 %v8410
        %v8443 = vpack.c.b16 %v8428, %v8427
        %v8444 = vpack.c.b16 %v8430, %v8429
        %v8445 = vpack.c.b16 %v8432, %v8431
        %v8446 = vpack.c.b16 %v8434, %v8433
        %v8447 = vpack.c.b16 %v8436, %v8435
        %v8448 = vpack.c.b16 %v8438, %v8437
        %v8449 = vpack.c.b16 %v8440, %v8439
        %v8450 = vpack.c.b16 %v8442, %v8441
        %8459 = vmatprep.subr.bf16.mxu0 0
        %8460 = vmatpush1.bf16.msra.mxu0 %v8443
        %8461 = vmatprep.subr.bf16.mxu0 0
        %8462 = vmatpush1.bf16.msra.mxu0 %v8444
        %8463 = vmatprep.subr.bf16.mxu0 0
        %8464 = vmatpush1.bf16.msra.mxu0 %v8445
        %8465 = vmatprep.subr.bf16.mxu0 0
        %8466 = vmatpush1.bf16.msra.mxu0 %v8446
        %8467 = vmatprep.subr.bf16.mxu0 0
        %8468 = vmatpush1.bf16.msra.mxu0 %v8447
        %8469 = vmatprep.subr.bf16.mxu0 0
        %8470 = vmatpush1.bf16.msra.mxu0 %v8448
        %8471 = vmatprep.subr.bf16.mxu0 0
        %8472 = vmatpush1.bf16.msra.mxu0 %v8449
        %8473 = vmatprep.subr.bf16.mxu0 0
        %8474 = vmatpush1.bf16.msra.mxu0 %v8450
        %8475 = vmatprep.subr.bf16.mxu0 0
        %8476 = vmatpush1.bf16.msra.mxu0 0
        %8477 = vmatprep.subr.bf16.mxu0 0
        %8478 = vmatpush1.bf16.msra.mxu0 0
        %8479 = vmatprep.subr.bf16.mxu0 0
        %8480 = vmatpush1.bf16.msra.mxu0 0
        %8481 = vmatprep.subr.bf16.mxu0 0
        %8482 = vmatpush1.bf16.msra.mxu0 0
        %8483 = vmatprep.subr.bf16.mxu0 0
        %8484 = vmatpush1.bf16.msra.mxu0 0
        %8485 = vmatprep.subr.bf16.mxu0 0
        %8486 = vmatpush1.bf16.msra.mxu0 0
        %8487 = vmatprep.subr.bf16.mxu0 0
        %8488 = vmatpush1.bf16.msra.mxu0 0
        %8489 = vmatprep.subr.bf16.mxu0 0
        %8490 = vmatpush1.bf16.msra.mxu0 0
        %8491 = vmatprep.mubr.bf16.mxu0 0
        %8492 = vmatmul.mubr.bf16.gmra.mrb[0].mxu0 %v8122
        %v8493 = vpop.f32.mrb[0].mxu0
        %v8494 = vadd.f32 0.0, %v8493
        %v8495 = vpop.f32.mrb[0].mxu0
        %v8496 = vpop.f32.mrb[0].mxu0
        %v8497 = vadd.f32 0.0, %v8496
        %v8498 = vpop.f32.mrb[0].mxu0
        %8499 = vmatprep.mubr.bf16.mxu0 0
        %8500 = vmatmul.mubr.bf16.gmra.mrb[0].mxu0 %v8139
        %v8501 = vpop.f32.mrb[0].mxu0
        %v8502 = vadd.f32 0.0, %v8501
        %v8503 = vpop.f32.mrb[0].mxu0
        %v8504 = vpop.f32.mrb[0].mxu0
        %v8505 = vadd.f32 0.0, %v8504
        %v8506 = vpop.f32.mrb[0].mxu0
        %8507 = vmatprep.mubr.bf16.mxu0 0
        %8508 = vmatmul.mubr.bf16.gmra.mrb[0].mxu0 %v8156
        %v8509 = vpop.f32.mrb[0].mxu0
        %v8510 = vadd.f32 0.0, %v8509
        %v8511 = vpop.f32.mrb[0].mxu0
        %v8512 = vpop.f32.mrb[0].mxu0
        %v8513 = vadd.f32 0.0, %v8512
        %v8514 = vpop.f32.mrb[0].mxu0
        %8515 = vmatprep.mubr.bf16.mxu0 0
        %8516 = vmatmul.mubr.bf16.gmra.mrb[0].mxu0 %v8173
        %v8517 = vpop.f32.mrb[0].mxu0
        %v8518 = vadd.f32 0.0, %v8517
        %v8519 = vpop.f32.mrb[0].mxu0
        %v8520 = vpop.f32.mrb[0].mxu0
        %v8521 = vadd.f32 0.0, %v8520
        %v8522 = vpop.f32.mrb[0].mxu0
        %8523 = vmatprep.mubr.bf16.mxu0 0
        %8524 = vmatmul.mubr.bf16.gmra.mrb[0].mxu0 %v8190
        %v8525 = vpop.f32.mrb[0].mxu0
        %v8526 = vadd.f32 0.0, %v8525
        %v8527 = vpop.f32.mrb[0].mxu0
        %v8528 = vpop.f32.mrb[0].mxu0
        %v8529 = vadd.f32 0.0, %v8528
        %v8530 = vpop.f32.mrb[0].mxu0
        %8531 = vmatprep.mubr.bf16.mxu0 0
        %8532 = vmatmul.mubr.bf16.gmra.mrb[0].mxu0 %v8207
        %v8533 = vpop.f32.mrb[0].mxu0
        %v8534 = vadd.f32 0.0, %v8533
        %v8535 = vpop.f32.mrb[0].mxu0
        %v8536 = vpop.f32.mrb[0].mxu0
        %v8537 = vadd.f32 0.0, %v8536
        %v8538 = vpop.f32.mrb[0].mxu0
        %8539 = vmatprep.mubr.bf16.mxu0 0
        %8540 = vmatmul.mubr.bf16.gmra.mrb[0].mxu0 %v8224
        %v8541 = vpop.f32.mrb[0].mxu0
        %v8542 = vadd.f32 0.0, %v8541
        %v8543 = vpop.f32.mrb[0].mxu0
        %v8544 = vpop.f32.mrb[0].mxu0
        %v8545 = vadd.f32 0.0, %v8544
        %v8546 = vpop.f32.mrb[0].mxu0
        %8547 = vmatprep.mubr.bf16.mxu0 0
        %8548 = vmatmul.mubr.bf16.gmra.mrb[0].mxu0 %v8241
        %v8549 = vpop.f32.mrb[0].mxu0
        %v8550 = vadd.f32 0.0, %v8549
        %v8551 = vpop.f32.mrb[0].mxu0
        %v8552 = vpop.f32.mrb[0].mxu0
        %v8553 = vadd.f32 0.0, %v8552
        %v8554 = vpop.f32.mrb[0].mxu0
        %8555 = vmatprep.mubr.bf16.mxu0 0
        %8556 = vmatmul.mubr.bf16.gmra.mrb[0].mxu0 %v8258
        %v8557 = vpop.f32.mrb[0].mxu0
        %v8558 = vadd.f32 0.0, %v8557
        %v8559 = vpop.f32.mrb[0].mxu0
        %v8560 = vpop.f32.mrb[0].mxu0
        %v8561 = vadd.f32 0.0, %v8560
        %v8562 = vpop.f32.mrb[0].mxu0
        %8563 = vmatprep.mubr.bf16.mxu0 0
        %8564 = vmatmul.mubr.bf16.gmra.mrb[0].mxu0 %v8275
        %v8565 = vpop.f32.mrb[0].mxu0
        %v8566 = vadd.f32 0.0, %v8565
        %v8567 = vpop.f32.mrb[0].mxu0
        %v8568 = vpop.f32.mrb[0].mxu0
        %v8569 = vadd.f32 0.0, %v8568
        %v8570 = vpop.f32.mrb[0].mxu0
        %8571 = vmatprep.mubr.bf16.mxu0 0
        %8572 = vmatmul.mubr.bf16.gmra.mrb[0].mxu0 %v8292
        %v8573 = vpop.f32.mrb[0].mxu0
        %v8574 = vadd.f32 0.0, %v8573
        %v8575 = vpop.f32.mrb[0].mxu0
        %v8576 = vpop.f32.mrb[0].mxu0
        %v8577 = vadd.f32 0.0, %v8576
        %v8578 = vpop.f32.mrb[0].mxu0
        %8579 = vmatprep.mubr.bf16.mxu0 0
        %8580 = vmatmul.mubr.bf16.gmra.mrb[0].mxu0 %v8309
        %v8581 = vpop.f32.mrb[0].mxu0
        %v8582 = vadd.f32 0.0, %v8581
        %v8583 = vpop.f32.mrb[0].mxu0
        %v8584 = vpop.f32.mrb[0].mxu0
        %v8585 = vadd.f32 0.0, %v8584
        %v8586 = vpop.f32.mrb[0].mxu0
        %8587 = vmatprep.mubr.bf16.mxu0 0
        %8588 = vmatmul.mubr.bf16.gmra.mrb[0].mxu0 %v8326
        %v8589 = vpop.f32.mrb[0].mxu0
        %v8590 = vadd.f32 0.0, %v8589
        %v8591 = vpop.f32.mrb[0].mxu0
        %v8592 = vpop.f32.mrb[0].mxu0
        %v8593 = vadd.f32 0.0, %v8592
        %v8594 = vpop.f32.mrb[0].mxu0
        %8595 = vmatprep.mubr.bf16.mxu0 0
        %8596 = vmatmul.mubr.bf16.gmra.mrb[0].mxu0 %v8343
        %v8597 = vpop.f32.mrb[0].mxu0
        %v8598 = vadd.f32 0.0, %v8597
        %v8599 = vpop.f32.mrb[0].mxu0
        %v8600 = vpop.f32.mrb[0].mxu0
        %v8601 = vadd.f32 0.0, %v8600
        %v8602 = vpop.f32.mrb[0].mxu0
        %8603 = vmatprep.mubr.bf16.mxu0 0
        %8604 = vmatmul.mubr.bf16.gmra.mrb[0].mxu0 %v8360
        %v8605 = vpop.f32.mrb[0].mxu0
        %v8606 = vadd.f32 0.0, %v8605
        %v8607 = vpop.f32.mrb[0].mxu0
        %v8608 = vpop.f32.mrb[0].mxu0
        %v8609 = vadd.f32 0.0, %v8608
        %v8610 = vpop.f32.mrb[0].mxu0
        %8611 = vmatprep.mubr.bf16.mxu0 0
        %8612 = vmatmul.mubr.bf16.gmra.mrb[0].mxu0 %v8377
        %v8613 = vpop.f32.mrb[0].mxu0
        %v8614 = vadd.f32 0.0, %v8613
        %v8615 = vpop.f32.mrb[0].mxu0
        %v8616 = vpop.f32.mrb[0].mxu0
        %v8617 = vadd.f32 0.0, %v8616
        %v8618 = vpop.f32.mrb[0].mxu0
        %8619 = vdwg.mxu0
        %v8620 = vadd.f32 %v8041, %v8494
        %v8621 = vadd.f32 %v8042, %v8497
        %v8622 = vadd.f32 %v8043, %v8502
        %v8623 = vadd.f32 %v8044, %v8505
        %v8624 = vadd.f32 %v8045, %v8510
        %v8625 = vadd.f32 %v8046, %v8513
        %v8626 = vadd.f32 %v8047, %v8518
        %v8627 = vadd.f32 %v8048, %v8521
        %v8628 = vadd.f32 %v8049, %v8526
        %v8629 = vadd.f32 %v8050, %v8529
        %v8630 = vadd.f32 %v8051, %v8534
        %v8631 = vadd.f32 %v8052, %v8537
        %v8632 = vadd.f32 %v8053, %v8542
        %v8633 = vadd.f32 %v8054, %v8545
        %v8634 = vadd.f32 %v8055, %v8550
        %v8635 = vadd.f32 %v8056, %v8553
        %v8636 = vadd.f32 %v8057, %v8558
        %v8637 = vadd.f32 %v8058, %v8561
        %v8638 = vadd.f32 %v8059, %v8566
        %v8639 = vadd.f32 %v8060, %v8569
        %v8640 = vadd.f32 %v8061, %v8574
        %v8641 = vadd.f32 %v8062, %v8577
        %v8642 = vadd.f32 %v8063, %v8582
        %v8643 = vadd.f32 %v8064, %v8585
        %v8644 = vadd.f32 %v8065, %v8590
        %v8645 = vadd.f32 %v8066, %v8593
        %v8646 = vadd.f32 %v8067, %v8598
        %v8647 = vadd.f32 %v8068, %v8601
        %v8648 = vadd.f32 %v8069, %v8606
        %v8649 = vadd.f32 %v8070, %v8609
        %v8650 = vadd.f32 %v8071, %v8614
        %v8651 = vadd.f32 %v8072, %v8617
        %v8652 = vld [vmem:[%s8073] sm:$0xf0]
        %v8653 = vld [vmem:[%s8073 + $0x10] sm:$0xf0]
        %v8654 = vld [vmem:[%s8073 + $0x20] sm:$0xf0]
        %v8655 = vld [vmem:[%s8073 + $0x30] sm:$0xf0]
        %v8656 = vld [vmem:[%s8073 + $0x40] sm:$0xf0]
        %v8657 = vld [vmem:[%s8073 + $0x50] sm:$0xf0]
        %v8658 = vld [vmem:[%s8073 + $0x60] sm:$0xf0]
        %v8659 = vld [vmem:[%s8073 + $0x70] sm:$0xf0]
        %v8660 = vld [vmem:[%s8073 + $0x80] sm:$0xf0]
        %v8661 = vld [vmem:[%s8073 + $0x90] sm:$0xf0]
        %v8662 = vld [vmem:[%s8073 + $0xa0] sm:$0xf0]
        %v8663 = vld [vmem:[%s8073 + $0xb0] sm:$0xf0]
        %v8664 = vld [vmem:[%s8073 + $0xc0] sm:$0xf0]
        %v8665 = vld [vmem:[%s8073 + $0xd0] sm:$0xf0]
        %v8666 = vld [vmem:[%s8073 + $0xe0] sm:$0xf0]
        %v8667 = vld [vmem:[%s8073 + $0xf0] sm:$0xf0]
        %v8700 = vrot.slane %v8652, 4
        %v8701 = vrot.slane %v8075, 4
        %v8702 = vsel %vm867, %v8700, %v8701
        %v8703 = vrot.slane %v8653, 4
        %v8704 = vrot.slane %v8077, 4
        %v8705 = vsel %vm867, %v8703, %v8704
        %v8706 = vrot.slane %v8654, 4
        %v8707 = vrot.slane %v8079, 4
        %v8708 = vsel %vm867, %v8706, %v8707
        %v8709 = vrot.slane %v8655, 4
        %v8710 = vrot.slane %v8081, 4
        %v8711 = vsel %vm867, %v8709, %v8710
        %v8712 = vrot.slane %v8656, 4
        %v8713 = vrot.slane %v8083, 4
        %v8714 = vsel %vm867, %v8712, %v8713
        %v8715 = vrot.slane %v8657, 4
        %v8716 = vrot.slane %v8085, 4
        %v8717 = vsel %vm867, %v8715, %v8716
        %v8718 = vrot.slane %v8658, 4
        %v8719 = vrot.slane %v8087, 4
        %v8720 = vsel %vm867, %v8718, %v8719
        %v8721 = vrot.slane %v8659, 4
        %v8722 = vrot.slane %v8089, 4
        %v8723 = vsel %vm867, %v8721, %v8722
        %v8724 = vrot.slane %v8660, 4
        %v8725 = vrot.slane %v8091, 4
        %v8726 = vsel %vm867, %v8724, %v8725
        %v8727 = vrot.slane %v8661, 4
        %v8728 = vrot.slane %v8093, 4
        %v8729 = vsel %vm867, %v8727, %v8728
        %v8730 = vrot.slane %v8662, 4
        %v8731 = vrot.slane %v8095, 4
        %v8732 = vsel %vm867, %v8730, %v8731
        %v8733 = vrot.slane %v8663, 4
        %v8734 = vrot.slane %v8097, 4
        %v8735 = vsel %vm867, %v8733, %v8734
        %v8736 = vrot.slane %v8664, 4
        %v8737 = vrot.slane %v8099, 4
        %v8738 = vsel %vm867, %v8736, %v8737
        %v8739 = vrot.slane %v8665, 4
        %v8740 = vrot.slane %v8101, 4
        %v8741 = vsel %vm867, %v8739, %v8740
        %v8742 = vrot.slane %v8666, 4
        %v8743 = vrot.slane %v8103, 4
        %v8744 = vsel %vm867, %v8742, %v8743
        %v8745 = vrot.slane %v8667, 4
        %v8746 = vrot.slane %v8105, 4
        %v8747 = vsel %vm867, %v8745, %v8746
        %s8764 = scalar_lea.vmem %s3, 448
        %v8765 = vld [vmem:[%s8764] sm:$0xf]
        %v8766 = vld [vmem:[%s8764 + $0x4] sm:$0xf]
        %v8767 = vld [vmem:[%s8764 + $0x8] sm:$0xf]
        %v8768 = vld [vmem:[%s8764 + $0xc] sm:$0xf]
        %v8769 = vld [vmem:[%s8764 + $0x10] sm:$0xf]
        %v8770 = vld [vmem:[%s8764 + $0x14] sm:$0xf]
        %v8771 = vld [vmem:[%s8764 + $0x18] sm:$0xf]
        %v8772 = vld [vmem:[%s8764 + $0x1c] sm:$0xf]
        %v8773 = vld [vmem:[%s8764 + $0x20] sm:$0xf]
        %v8774 = vld [vmem:[%s8764 + $0x24] sm:$0xf]
        %v8775 = vld [vmem:[%s8764 + $0x28] sm:$0xf]
        %v8776 = vld [vmem:[%s8764 + $0x2c] sm:$0xf]
        %v8777 = vld [vmem:[%s8764 + $0x30] sm:$0xf]
        %v8778 = vld [vmem:[%s8764 + $0x34] sm:$0xf]
        %v8779 = vld [vmem:[%s8764 + $0x38] sm:$0xf]
        %v8780 = vld [vmem:[%s8764 + $0x3c] sm:$0xf]
        %v8797 = vunpack.c.l.b16 %v8765
        %v8798 = vunpack.c.l.b16 %v8766
        %v8799 = vunpack.c.l.b16 %v8767
        %v8800 = vunpack.c.l.b16 %v8768
        %v8801 = vunpack.c.l.b16 %v8769
        %v8802 = vunpack.c.l.b16 %v8770
        %v8803 = vunpack.c.l.b16 %v8771
        %v8804 = vunpack.c.l.b16 %v8772
        %v8805 = vunpack.c.l.b16 %v8773
        %v8806 = vunpack.c.l.b16 %v8774
        %v8807 = vunpack.c.l.b16 %v8775
        %v8808 = vunpack.c.l.b16 %v8776
        %v8809 = vunpack.c.l.b16 %v8777
        %v8810 = vunpack.c.l.b16 %v8778
        %v8811 = vunpack.c.l.b16 %v8779
        %v8812 = vunpack.c.l.b16 %v8780
        %v8813 = vpack.c.b16 %v8798, %v8797
        %v8814 = vpack.c.b16 %v8800, %v8799
        %v8815 = vpack.c.b16 %v8802, %v8801
        %v8816 = vpack.c.b16 %v8804, %v8803
        %v8817 = vpack.c.b16 %v8806, %v8805
        %v8818 = vpack.c.b16 %v8808, %v8807
        %v8819 = vpack.c.b16 %v8810, %v8809
        %v8820 = vpack.c.b16 %v8812, %v8811
        %8829 = vmatprep.subr.bf16.mxu0 0
        %8830 = vmatpush1.bf16.msra.mxu0 %v8813
        %8831 = vmatprep.subr.bf16.mxu0 0
        %8832 = vmatpush1.bf16.msra.mxu0 %v8814
        %8833 = vmatprep.subr.bf16.mxu0 0
        %8834 = vmatpush1.bf16.msra.mxu0 %v8815
        %8835 = vmatprep.subr.bf16.mxu0 0
        %8836 = vmatpush1.bf16.msra.mxu0 %v8816
        %8837 = vmatprep.subr.bf16.mxu0 0
        %8838 = vmatpush1.bf16.msra.mxu0 %v8817
        %8839 = vmatprep.subr.bf16.mxu0 0
        %8840 = vmatpush1.bf16.msra.mxu0 %v8818
        %8841 = vmatprep.subr.bf16.mxu0 0
        %8842 = vmatpush1.bf16.msra.mxu0 %v8819
        %8843 = vmatprep.subr.bf16.mxu0 0
        %8844 = vmatpush1.bf16.msra.mxu0 %v8820
        %8845 = vmatprep.subr.bf16.mxu0 0
        %8846 = vmatpush1.bf16.msra.mxu0 0
        %8847 = vmatprep.subr.bf16.mxu0 0
        %8848 = vmatpush1.bf16.msra.mxu0 0
        %8849 = vmatprep.subr.bf16.mxu0 0
        %8850 = vmatpush1.bf16.msra.mxu0 0
        %8851 = vmatprep.subr.bf16.mxu0 0
        %8852 = vmatpush1.bf16.msra.mxu0 0
        %8853 = vmatprep.subr.bf16.mxu0 0
        %8854 = vmatpush1.bf16.msra.mxu0 0
        %8855 = vmatprep.subr.bf16.mxu0 0
        %8856 = vmatpush1.bf16.msra.mxu0 0
        %8857 = vmatprep.subr.bf16.mxu0 0
        %8858 = vmatpush1.bf16.msra.mxu0 0
        %8859 = vmatprep.subr.bf16.mxu0 0
        %8860 = vmatpush1.bf16.msra.mxu0 0
        %8861 = vmatprep.mubr.bf16.mxu0 0
        %8862 = vmatmul.mubr.bf16.gmra.mrb[0].mxu0 %v8702
        %v8863 = vpop.f32.mrb[0].mxu0
        %v8864 = vadd.f32 0.0, %v8863
        %v8865 = vpop.f32.mrb[0].mxu0
        %v8866 = vpop.f32.mrb[0].mxu0
        %v8867 = vadd.f32 0.0, %v8866
        %v8868 = vpop.f32.mrb[0].mxu0
        %8869 = vmatprep.mubr.bf16.mxu0 0
        %8870 = vmatmul.mubr.bf16.gmra.mrb[0].mxu0 %v8705
        %v8871 = vpop.f32.mrb[0].mxu0
        %v8872 = vadd.f32 0.0, %v8871
        %v8873 = vpop.f32.mrb[0].mxu0
        %v8874 = vpop.f32.mrb[0].mxu0
        %v8875 = vadd.f32 0.0, %v8874
        %v8876 = vpop.f32.mrb[0].mxu0
        %8877 = vmatprep.mubr.bf16.mxu0 0
        %8878 = vmatmul.mubr.bf16.gmra.mrb[0].mxu0 %v8708
        %v8879 = vpop.f32.mrb[0].mxu0
        %v8880 = vadd.f32 0.0, %v8879
        %v8881 = vpop.f32.mrb[0].mxu0
        %v8882 = vpop.f32.mrb[0].mxu0
        %v8883 = vadd.f32 0.0, %v8882
        %v8884 = vpop.f32.mrb[0].mxu0
        %8885 = vmatprep.mubr.bf16.mxu0 0
        %8886 = vmatmul.mubr.bf16.gmra.mrb[0].mxu0 %v8711
        %v8887 = vpop.f32.mrb[0].mxu0
        %v8888 = vadd.f32 0.0, %v8887
        %v8889 = vpop.f32.mrb[0].mxu0
        %v8890 = vpop.f32.mrb[0].mxu0
        %v8891 = vadd.f32 0.0, %v8890
        %v8892 = vpop.f32.mrb[0].mxu0
        %8893 = vmatprep.mubr.bf16.mxu0 0
        %8894 = vmatmul.mubr.bf16.gmra.mrb[0].mxu0 %v8714
        %v8895 = vpop.f32.mrb[0].mxu0
        %v8896 = vadd.f32 0.0, %v8895
        %v8897 = vpop.f32.mrb[0].mxu0
        %v8898 = vpop.f32.mrb[0].mxu0
        %v8899 = vadd.f32 0.0, %v8898
        %v8900 = vpop.f32.mrb[0].mxu0
        %8901 = vmatprep.mubr.bf16.mxu0 0
        %8902 = vmatmul.mubr.bf16.gmra.mrb[0].mxu0 %v8717
        %v8903 = vpop.f32.mrb[0].mxu0
        %v8904 = vadd.f32 0.0, %v8903
        %v8905 = vpop.f32.mrb[0].mxu0
        %v8906 = vpop.f32.mrb[0].mxu0
        %v8907 = vadd.f32 0.0, %v8906
        %v8908 = vpop.f32.mrb[0].mxu0
        %8909 = vmatprep.mubr.bf16.mxu0 0
        %8910 = vmatmul.mubr.bf16.gmra.mrb[0].mxu0 %v8720
        %v8911 = vpop.f32.mrb[0].mxu0
        %v8912 = vadd.f32 0.0, %v8911
        %v8913 = vpop.f32.mrb[0].mxu0
        %v8914 = vpop.f32.mrb[0].mxu0
        %v8915 = vadd.f32 0.0, %v8914
        %v8916 = vpop.f32.mrb[0].mxu0
        %8917 = vmatprep.mubr.bf16.mxu0 0
        %8918 = vmatmul.mubr.bf16.gmra.mrb[0].mxu0 %v8723
        %v8919 = vpop.f32.mrb[0].mxu0
        %v8920 = vadd.f32 0.0, %v8919
        %v8921 = vpop.f32.mrb[0].mxu0
        %v8922 = vpop.f32.mrb[0].mxu0
        %v8923 = vadd.f32 0.0, %v8922
        %v8924 = vpop.f32.mrb[0].mxu0
        %8925 = vmatprep.mubr.bf16.mxu0 0
        %8926 = vmatmul.mubr.bf16.gmra.mrb[0].mxu0 %v8726
        %v8927 = vpop.f32.mrb[0].mxu0
        %v8928 = vadd.f32 0.0, %v8927
        %v8929 = vpop.f32.mrb[0].mxu0
        %v8930 = vpop.f32.mrb[0].mxu0
        %v8931 = vadd.f32 0.0, %v8930
        %v8932 = vpop.f32.mrb[0].mxu0
        %8933 = vmatprep.mubr.bf16.mxu0 0
        %8934 = vmatmul.mubr.bf16.gmra.mrb[0].mxu0 %v8729
        %v8935 = vpop.f32.mrb[0].mxu0
        %v8936 = vadd.f32 0.0, %v8935
        %v8937 = vpop.f32.mrb[0].mxu0
        %v8938 = vpop.f32.mrb[0].mxu0
        %v8939 = vadd.f32 0.0, %v8938
        %v8940 = vpop.f32.mrb[0].mxu0
        %8941 = vmatprep.mubr.bf16.mxu0 0
        %8942 = vmatmul.mubr.bf16.gmra.mrb[0].mxu0 %v8732
        %v8943 = vpop.f32.mrb[0].mxu0
        %v8944 = vadd.f32 0.0, %v8943
        %v8945 = vpop.f32.mrb[0].mxu0
        %v8946 = vpop.f32.mrb[0].mxu0
        %v8947 = vadd.f32 0.0, %v8946
        %v8948 = vpop.f32.mrb[0].mxu0
        %8949 = vmatprep.mubr.bf16.mxu0 0
        %8950 = vmatmul.mubr.bf16.gmra.mrb[0].mxu0 %v8735
        %v8951 = vpop.f32.mrb[0].mxu0
        %v8952 = vadd.f32 0.0, %v8951
        %v8953 = vpop.f32.mrb[0].mxu0
        %v8954 = vpop.f32.mrb[0].mxu0
        %v8955 = vadd.f32 0.0, %v8954
        %v8956 = vpop.f32.mrb[0].mxu0
        %8957 = vmatprep.mubr.bf16.mxu0 0
        %8958 = vmatmul.mubr.bf16.gmra.mrb[0].mxu0 %v8738
        %v8959 = vpop.f32.mrb[0].mxu0
        %v8960 = vadd.f32 0.0, %v8959
        %v8961 = vpop.f32.mrb[0].mxu0
        %v8962 = vpop.f32.mrb[0].mxu0
        %v8963 = vadd.f32 0.0, %v8962
        %v8964 = vpop.f32.mrb[0].mxu0
        %8965 = vmatprep.mubr.bf16.mxu0 0
        %8966 = vmatmul.mubr.bf16.gmra.mrb[0].mxu0 %v8741
        %v8967 = vpop.f32.mrb[0].mxu0
        %v8968 = vadd.f32 0.0, %v8967
        %v8969 = vpop.f32.mrb[0].mxu0
        %v8970 = vpop.f32.mrb[0].mxu0
        %v8971 = vadd.f32 0.0, %v8970
        %v8972 = vpop.f32.mrb[0].mxu0
        %8973 = vmatprep.mubr.bf16.mxu0 0
        %8974 = vmatmul.mubr.bf16.gmra.mrb[0].mxu0 %v8744
        %v8975 = vpop.f32.mrb[0].mxu0
        %v8976 = vadd.f32 0.0, %v8975
        %v8977 = vpop.f32.mrb[0].mxu0
        %v8978 = vpop.f32.mrb[0].mxu0
        %v8979 = vadd.f32 0.0, %v8978
        %v8980 = vpop.f32.mrb[0].mxu0
        %8981 = vmatprep.mubr.bf16.mxu0 0
        %8982 = vmatmul.mubr.bf16.gmra.mrb[0].mxu0 %v8747
        %v8983 = vpop.f32.mrb[0].mxu0
        %v8984 = vadd.f32 0.0, %v8983
        %v8985 = vpop.f32.mrb[0].mxu0
        %v8986 = vpop.f32.mrb[0].mxu0
        %v8987 = vadd.f32 0.0, %v8986
        %v8988 = vpop.f32.mrb[0].mxu0
        %8989 = vdwg.mxu0
        %v8990 = vadd.f32 %v8620, %v8864
        %v8991 = vadd.f32 %v8621, %v8867
        %v8992 = vadd.f32 %v8622, %v8872
        %v8993 = vadd.f32 %v8623, %v8875
        %v8994 = vadd.f32 %v8624, %v8880
        %v8995 = vadd.f32 %v8625, %v8883
        %v8996 = vadd.f32 %v8626, %v8888
        %v8997 = vadd.f32 %v8627, %v8891
        %v8998 = vadd.f32 %v8628, %v8896
        %v8999 = vadd.f32 %v8629, %v8899
        %v9000 = vadd.f32 %v8630, %v8904
        %v9001 = vadd.f32 %v8631, %v8907
        %v9002 = vadd.f32 %v8632, %v8912
        %v9003 = vadd.f32 %v8633, %v8915
        %v9004 = vadd.f32 %v8634, %v8920
        %v9005 = vadd.f32 %v8635, %v8923
        %v9006 = vadd.f32 %v8636, %v8928
        %v9007 = vadd.f32 %v8637, %v8931
        %v9008 = vadd.f32 %v8638, %v8936
        %v9009 = vadd.f32 %v8639, %v8939
        %v9010 = vadd.f32 %v8640, %v8944
        %v9011 = vadd.f32 %v8641, %v8947
        %v9012 = vadd.f32 %v8642, %v8952
        %v9013 = vadd.f32 %v8643, %v8955
        %v9014 = vadd.f32 %v8644, %v8960
        %v9015 = vadd.f32 %v8645, %v8963
        %v9016 = vadd.f32 %v8646, %v8968
        %v9017 = vadd.f32 %v8647, %v8971
        %v9018 = vadd.f32 %v8648, %v8976
        %v9019 = vadd.f32 %v8649, %v8979
        %v9020 = vadd.f32 %v8650, %v8984
        %v9021 = vadd.f32 %v8651, %v8987
        %v9022 = vld [vmem:[%s8073 + $0x8] sm:$0x1f]
        %v9023 = vld [vmem:[%s8073 + $0x18] sm:$0x1f]
        %v9024 = vld [vmem:[%s8073 + $0x28] sm:$0x1f]
        %v9025 = vld [vmem:[%s8073 + $0x38] sm:$0x1f]
        %v9026 = vld [vmem:[%s8073 + $0x48] sm:$0x1f]
        %v9027 = vld [vmem:[%s8073 + $0x58] sm:$0x1f]
        %v9028 = vld [vmem:[%s8073 + $0x68] sm:$0x1f]
        %v9029 = vld [vmem:[%s8073 + $0x78] sm:$0x1f]
        %v9030 = vld [vmem:[%s8073 + $0x88] sm:$0x1f]
        %v9031 = vld [vmem:[%s8073 + $0x98] sm:$0x1f]
        %v9032 = vld [vmem:[%s8073 + $0xa8] sm:$0x1f]
        %v9033 = vld [vmem:[%s8073 + $0xb8] sm:$0x1f]
        %v9034 = vld [vmem:[%s8073 + $0xc8] sm:$0x1f]
        %v9035 = vld [vmem:[%s8073 + $0xd8] sm:$0x1f]
        %v9036 = vld [vmem:[%s8073 + $0xe8] sm:$0x1f]
        %v9037 = vld [vmem:[%s8073 + $0xf8] sm:$0x1f]
        %v9039 = vshrl.u32 %v8652, 16
        %v9041 = vrot.slane %v9039, 4
        %v9042 = vshll.u32 %v8652, 16
        %v9044 = vrot.slane %v9042, 5
        %v9045 = vor.u32 %v9041, %v9044
        %v9047 = vshrl.u32 %v9022, 16
        %v9049 = vrot.slane %v9047, 4
        %v9050 = vshll.u32 %v9022, 16
        %v9052 = vrot.slane %v9050, 5
        %v9053 = vor.u32 %v9049, %v9052
        %v9054 = vsel %vm1383, %v9045, %v9053
        %v9056 = vshrl.u32 %v8653, 16
        %v9058 = vrot.slane %v9056, 4
        %v9059 = vshll.u32 %v8653, 16
        %v9061 = vrot.slane %v9059, 5
        %v9062 = vor.u32 %v9058, %v9061
        %v9064 = vshrl.u32 %v9023, 16
        %v9066 = vrot.slane %v9064, 4
        %v9067 = vshll.u32 %v9023, 16
        %v9069 = vrot.slane %v9067, 5
        %v9070 = vor.u32 %v9066, %v9069
        %v9071 = vsel %vm1383, %v9062, %v9070
        %v9073 = vshrl.u32 %v8654, 16
        %v9075 = vrot.slane %v9073, 4
        %v9076 = vshll.u32 %v8654, 16
        %v9078 = vrot.slane %v9076, 5
        %v9079 = vor.u32 %v9075, %v9078
        %v9081 = vshrl.u32 %v9024, 16
        %v9083 = vrot.slane %v9081, 4
        %v9084 = vshll.u32 %v9024, 16
        %v9086 = vrot.slane %v9084, 5
        %v9087 = vor.u32 %v9083, %v9086
        %v9088 = vsel %vm1383, %v9079, %v9087
        %v9090 = vshrl.u32 %v8655, 16
        %v9092 = vrot.slane %v9090, 4
        %v9093 = vshll.u32 %v8655, 16
        %v9095 = vrot.slane %v9093, 5
        %v9096 = vor.u32 %v9092, %v9095
        %v9098 = vshrl.u32 %v9025, 16
        %v9100 = vrot.slane %v9098, 4
        %v9101 = vshll.u32 %v9025, 16
        %v9103 = vrot.slane %v9101, 5
        %v9104 = vor.u32 %v9100, %v9103
        %v9105 = vsel %vm1383, %v9096, %v9104
        %v9107 = vshrl.u32 %v8656, 16
        %v9109 = vrot.slane %v9107, 4
        %v9110 = vshll.u32 %v8656, 16
        %v9112 = vrot.slane %v9110, 5
        %v9113 = vor.u32 %v9109, %v9112
        %v9115 = vshrl.u32 %v9026, 16
        %v9117 = vrot.slane %v9115, 4
        %v9118 = vshll.u32 %v9026, 16
        %v9120 = vrot.slane %v9118, 5
        %v9121 = vor.u32 %v9117, %v9120
        %v9122 = vsel %vm1383, %v9113, %v9121
        %v9124 = vshrl.u32 %v8657, 16
        %v9126 = vrot.slane %v9124, 4
        %v9127 = vshll.u32 %v8657, 16
        %v9129 = vrot.slane %v9127, 5
        %v9130 = vor.u32 %v9126, %v9129
        %v9132 = vshrl.u32 %v9027, 16
        %v9134 = vrot.slane %v9132, 4
        %v9135 = vshll.u32 %v9027, 16
        %v9137 = vrot.slane %v9135, 5
        %v9138 = vor.u32 %v9134, %v9137
        %v9139 = vsel %vm1383, %v9130, %v9138
        %v9141 = vshrl.u32 %v8658, 16
        %v9143 = vrot.slane %v9141, 4
        %v9144 = vshll.u32 %v8658, 16
        %v9146 = vrot.slane %v9144, 5
        %v9147 = vor.u32 %v9143, %v9146
        %v9149 = vshrl.u32 %v9028, 16
        %v9151 = vrot.slane %v9149, 4
        %v9152 = vshll.u32 %v9028, 16
        %v9154 = vrot.slane %v9152, 5
        %v9155 = vor.u32 %v9151, %v9154
        %v9156 = vsel %vm1383, %v9147, %v9155
        %v9158 = vshrl.u32 %v8659, 16
        %v9160 = vrot.slane %v9158, 4
        %v9161 = vshll.u32 %v8659, 16
        %v9163 = vrot.slane %v9161, 5
        %v9164 = vor.u32 %v9160, %v9163
        %v9166 = vshrl.u32 %v9029, 16
        %v9168 = vrot.slane %v9166, 4
        %v9169 = vshll.u32 %v9029, 16
        %v9171 = vrot.slane %v9169, 5
        %v9172 = vor.u32 %v9168, %v9171
        %v9173 = vsel %vm1383, %v9164, %v9172
        %v9175 = vshrl.u32 %v8660, 16
        %v9177 = vrot.slane %v9175, 4
        %v9178 = vshll.u32 %v8660, 16
        %v9180 = vrot.slane %v9178, 5
        %v9181 = vor.u32 %v9177, %v9180
        %v9183 = vshrl.u32 %v9030, 16
        %v9185 = vrot.slane %v9183, 4
        %v9186 = vshll.u32 %v9030, 16
        %v9188 = vrot.slane %v9186, 5
        %v9189 = vor.u32 %v9185, %v9188
        %v9190 = vsel %vm1383, %v9181, %v9189
        %v9192 = vshrl.u32 %v8661, 16
        %v9194 = vrot.slane %v9192, 4
        %v9195 = vshll.u32 %v8661, 16
        %v9197 = vrot.slane %v9195, 5
        %v9198 = vor.u32 %v9194, %v9197
        %v9200 = vshrl.u32 %v9031, 16
        %v9202 = vrot.slane %v9200, 4
        %v9203 = vshll.u32 %v9031, 16
        %v9205 = vrot.slane %v9203, 5
        %v9206 = vor.u32 %v9202, %v9205
        %v9207 = vsel %vm1383, %v9198, %v9206
        %v9209 = vshrl.u32 %v8662, 16
        %v9211 = vrot.slane %v9209, 4
        %v9212 = vshll.u32 %v8662, 16
        %v9214 = vrot.slane %v9212, 5
        %v9215 = vor.u32 %v9211, %v9214
        %v9217 = vshrl.u32 %v9032, 16
        %v9219 = vrot.slane %v9217, 4
        %v9220 = vshll.u32 %v9032, 16
        %v9222 = vrot.slane %v9220, 5
        %v9223 = vor.u32 %v9219, %v9222
        %v9224 = vsel %vm1383, %v9215, %v9223
        %v9226 = vshrl.u32 %v8663, 16
        %v9228 = vrot.slane %v9226, 4
        %v9229 = vshll.u32 %v8663, 16
        %v9231 = vrot.slane %v9229, 5
        %v9232 = vor.u32 %v9228, %v9231
        %v9234 = vshrl.u32 %v9033, 16
        %v9236 = vrot.slane %v9234, 4
        %v9237 = vshll.u32 %v9033, 16
        %v9239 = vrot.slane %v9237, 5
        %v9240 = vor.u32 %v9236, %v9239
        %v9241 = vsel %vm1383, %v9232, %v9240
        %v9243 = vshrl.u32 %v8664, 16
        %v9245 = vrot.slane %v9243, 4
        %v9246 = vshll.u32 %v8664, 16
        %v9248 = vrot.slane %v9246, 5
        %v9249 = vor.u32 %v9245, %v9248
        %v9251 = vshrl.u32 %v9034, 16
        %v9253 = vrot.slane %v9251, 4
        %v9254 = vshll.u32 %v9034, 16
        %v9256 = vrot.slane %v9254, 5
        %v9257 = vor.u32 %v9253, %v9256
        %v9258 = vsel %vm1383, %v9249, %v9257
        %v9260 = vshrl.u32 %v8665, 16
        %v9262 = vrot.slane %v9260, 4
        %v9263 = vshll.u32 %v8665, 16
        %v9265 = vrot.slane %v9263, 5
        %v9266 = vor.u32 %v9262, %v9265
        %v9268 = vshrl.u32 %v9035, 16
        %v9270 = vrot.slane %v9268, 4
        %v9271 = vshll.u32 %v9035, 16
        %v9273 = vrot.slane %v9271, 5
        %v9274 = vor.u32 %v9270, %v9273
        %v9275 = vsel %vm1383, %v9266, %v9274
        %v9277 = vshrl.u32 %v8666, 16
        %v9279 = vrot.slane %v9277, 4
        %v9280 = vshll.u32 %v8666, 16
        %v9282 = vrot.slane %v9280, 5
        %v9283 = vor.u32 %v9279, %v9282
        %v9285 = vshrl.u32 %v9036, 16
        %v9287 = vrot.slane %v9285, 4
        %v9288 = vshll.u32 %v9036, 16
        %v9290 = vrot.slane %v9288, 5
        %v9291 = vor.u32 %v9287, %v9290
        %v9292 = vsel %vm1383, %v9283, %v9291
        %v9294 = vshrl.u32 %v8667, 16
        %v9296 = vrot.slane %v9294, 4
        %v9297 = vshll.u32 %v8667, 16
        %v9299 = vrot.slane %v9297, 5
        %v9300 = vor.u32 %v9296, %v9299
        %v9302 = vshrl.u32 %v9037, 16
        %v9304 = vrot.slane %v9302, 4
        %v9305 = vshll.u32 %v9037, 16
        %v9307 = vrot.slane %v9305, 5
        %v9308 = vor.u32 %v9304, %v9307
        %v9309 = vsel %vm1383, %v9300, %v9308
        %s9326 = scalar_lea.vmem %s3, 512
        %v9327 = vld [vmem:[%s9326] sm:$0xf]
        %v9328 = vld [vmem:[%s9326 + $0x4] sm:$0xf]
        %v9329 = vld [vmem:[%s9326 + $0x8] sm:$0xf]
        %v9330 = vld [vmem:[%s9326 + $0xc] sm:$0xf]
        %v9331 = vld [vmem:[%s9326 + $0x10] sm:$0xf]
        %v9332 = vld [vmem:[%s9326 + $0x14] sm:$0xf]
        %v9333 = vld [vmem:[%s9326 + $0x18] sm:$0xf]
        %v9334 = vld [vmem:[%s9326 + $0x1c] sm:$0xf]
        %v9335 = vld [vmem:[%s9326 + $0x20] sm:$0xf]
        %v9336 = vld [vmem:[%s9326 + $0x24] sm:$0xf]
        %v9337 = vld [vmem:[%s9326 + $0x28] sm:$0xf]
        %v9338 = vld [vmem:[%s9326 + $0x2c] sm:$0xf]
        %v9339 = vld [vmem:[%s9326 + $0x30] sm:$0xf]
        %v9340 = vld [vmem:[%s9326 + $0x34] sm:$0xf]
        %v9341 = vld [vmem:[%s9326 + $0x38] sm:$0xf]
        %v9342 = vld [vmem:[%s9326 + $0x3c] sm:$0xf]
        %v9359 = vunpack.c.l.b16 %v9327
        %v9360 = vunpack.c.l.b16 %v9328
        %v9361 = vunpack.c.l.b16 %v9329
        %v9362 = vunpack.c.l.b16 %v9330
        %v9363 = vunpack.c.l.b16 %v9331
        %v9364 = vunpack.c.l.b16 %v9332
        %v9365 = vunpack.c.l.b16 %v9333
        %v9366 = vunpack.c.l.b16 %v9334
        %v9367 = vunpack.c.l.b16 %v9335
        %v9368 = vunpack.c.l.b16 %v9336
        %v9369 = vunpack.c.l.b16 %v9337
        %v9370 = vunpack.c.l.b16 %v9338
        %v9371 = vunpack.c.l.b16 %v9339
        %v9372 = vunpack.c.l.b16 %v9340
        %v9373 = vunpack.c.l.b16 %v9341
        %v9374 = vunpack.c.l.b16 %v9342
        %v9375 = vpack.c.b16 %v9360, %v9359
        %v9376 = vpack.c.b16 %v9362, %v9361
        %v9377 = vpack.c.b16 %v9364, %v9363
        %v9378 = vpack.c.b16 %v9366, %v9365
        %v9379 = vpack.c.b16 %v9368, %v9367
        %v9380 = vpack.c.b16 %v9370, %v9369
        %v9381 = vpack.c.b16 %v9372, %v9371
        %v9382 = vpack.c.b16 %v9374, %v9373
        %9391 = vmatprep.subr.bf16.mxu0 0
        %9392 = vmatpush1.bf16.msra.mxu0 %v9375
        %9393 = vmatprep.subr.bf16.mxu0 0
        %9394 = vmatpush1.bf16.msra.mxu0 %v9376
        %9395 = vmatprep.subr.bf16.mxu0 0
        %9396 = vmatpush1.bf16.msra.mxu0 %v9377
        %9397 = vmatprep.subr.bf16.mxu0 0
        %9398 = vmatpush1.bf16.msra.mxu0 %v9378
        %9399 = vmatprep.subr.bf16.mxu0 0
        %9400 = vmatpush1.bf16.msra.mxu0 %v9379
        %9401 = vmatprep.subr.bf16.mxu0 0
        %9402 = vmatpush1.bf16.msra.mxu0 %v9380
        %9403 = vmatprep.subr.bf16.mxu0 0
        %9404 = vmatpush1.bf16.msra.mxu0 %v9381
        %9405 = vmatprep.subr.bf16.mxu0 0
        %9406 = vmatpush1.bf16.msra.mxu0 %v9382
        %9407 = vmatprep.subr.bf16.mxu0 0
        %9408 = vmatpush1.bf16.msra.mxu0 0
        %9409 = vmatprep.subr.bf16.mxu0 0
        %9410 = vmatpush1.bf16.msra.mxu0 0
        %9411 = vmatprep.subr.bf16.mxu0 0
        %9412 = vmatpush1.bf16.msra.mxu0 0
        %9413 = vmatprep.subr.bf16.mxu0 0
        %9414 = vmatpush1.bf16.msra.mxu0 0
        %9415 = vmatprep.subr.bf16.mxu0 0
        %9416 = vmatpush1.bf16.msra.mxu0 0
        %9417 = vmatprep.subr.bf16.mxu0 0
        %9418 = vmatpush1.bf16.msra.mxu0 0
        %9419 = vmatprep.subr.bf16.mxu0 0
        %9420 = vmatpush1.bf16.msra.mxu0 0
        %9421 = vmatprep.subr.bf16.mxu0 0
        %9422 = vmatpush1.bf16.msra.mxu0 0
        %9423 = vmatprep.mubr.bf16.mxu0 0
        %9424 = vmatmul.mubr.bf16.gmra.mrb[0].mxu0 %v9054
        %v9425 = vpop.f32.mrb[0].mxu0
        %v9426 = vadd.f32 0.0, %v9425
        %v9427 = vpop.f32.mrb[0].mxu0
        %v9428 = vpop.f32.mrb[0].mxu0
        %v9429 = vadd.f32 0.0, %v9428
        %v9430 = vpop.f32.mrb[0].mxu0
        %9431 = vmatprep.mubr.bf16.mxu0 0
        %9432 = vmatmul.mubr.bf16.gmra.mrb[0].mxu0 %v9071
        %v9433 = vpop.f32.mrb[0].mxu0
        %v9434 = vadd.f32 0.0, %v9433
        %v9435 = vpop.f32.mrb[0].mxu0
        %v9436 = vpop.f32.mrb[0].mxu0
        %v9437 = vadd.f32 0.0, %v9436
        %v9438 = vpop.f32.mrb[0].mxu0
        %9439 = vmatprep.mubr.bf16.mxu0 0
        %9440 = vmatmul.mubr.bf16.gmra.mrb[0].mxu0 %v9088
        %v9441 = vpop.f32.mrb[0].mxu0
        %v9442 = vadd.f32 0.0, %v9441
        %v9443 = vpop.f32.mrb[0].mxu0
        %v9444 = vpop.f32.mrb[0].mxu0
        %v9445 = vadd.f32 0.0, %v9444
        %v9446 = vpop.f32.mrb[0].mxu0
        %9447 = vmatprep.mubr.bf16.mxu0 0
        %9448 = vmatmul.mubr.bf16.gmra.mrb[0].mxu0 %v9105
        %v9449 = vpop.f32.mrb[0].mxu0
        %v9450 = vadd.f32 0.0, %v9449
        %v9451 = vpop.f32.mrb[0].mxu0
        %v9452 = vpop.f32.mrb[0].mxu0
        %v9453 = vadd.f32 0.0, %v9452
        %v9454 = vpop.f32.mrb[0].mxu0
        %9455 = vmatprep.mubr.bf16.mxu0 0
        %9456 = vmatmul.mubr.bf16.gmra.mrb[0].mxu0 %v9122
        %v9457 = vpop.f32.mrb[0].mxu0
        %v9458 = vadd.f32 0.0, %v9457
        %v9459 = vpop.f32.mrb[0].mxu0
        %v9460 = vpop.f32.mrb[0].mxu0
        %v9461 = vadd.f32 0.0, %v9460
        %v9462 = vpop.f32.mrb[0].mxu0
        %9463 = vmatprep.mubr.bf16.mxu0 0
        %9464 = vmatmul.mubr.bf16.gmra.mrb[0].mxu0 %v9139
        %v9465 = vpop.f32.mrb[0].mxu0
        %v9466 = vadd.f32 0.0, %v9465
        %v9467 = vpop.f32.mrb[0].mxu0
        %v9468 = vpop.f32.mrb[0].mxu0
        %v9469 = vadd.f32 0.0, %v9468
        %v9470 = vpop.f32.mrb[0].mxu0
        %9471 = vmatprep.mubr.bf16.mxu0 0
        %9472 = vmatmul.mubr.bf16.gmra.mrb[0].mxu0 %v9156
        %v9473 = vpop.f32.mrb[0].mxu0
        %v9474 = vadd.f32 0.0, %v9473
        %v9475 = vpop.f32.mrb[0].mxu0
        %v9476 = vpop.f32.mrb[0].mxu0
        %v9477 = vadd.f32 0.0, %v9476
        %v9478 = vpop.f32.mrb[0].mxu0
        %9479 = vmatprep.mubr.bf16.mxu0 0
        %9480 = vmatmul.mubr.bf16.gmra.mrb[0].mxu0 %v9173
        %v9481 = vpop.f32.mrb[0].mxu0
        %v9482 = vadd.f32 0.0, %v9481
        %v9483 = vpop.f32.mrb[0].mxu0
        %v9484 = vpop.f32.mrb[0].mxu0
        %v9485 = vadd.f32 0.0, %v9484
        %v9486 = vpop.f32.mrb[0].mxu0
        %9487 = vmatprep.mubr.bf16.mxu0 0
        %9488 = vmatmul.mubr.bf16.gmra.mrb[0].mxu0 %v9190
        %v9489 = vpop.f32.mrb[0].mxu0
        %v9490 = vadd.f32 0.0, %v9489
        %v9491 = vpop.f32.mrb[0].mxu0
        %v9492 = vpop.f32.mrb[0].mxu0
        %v9493 = vadd.f32 0.0, %v9492
        %v9494 = vpop.f32.mrb[0].mxu0
        %9495 = vmatprep.mubr.bf16.mxu0 0
        %9496 = vmatmul.mubr.bf16.gmra.mrb[0].mxu0 %v9207
        %v9497 = vpop.f32.mrb[0].mxu0
        %v9498 = vadd.f32 0.0, %v9497
        %v9499 = vpop.f32.mrb[0].mxu0
        %v9500 = vpop.f32.mrb[0].mxu0
        %v9501 = vadd.f32 0.0, %v9500
        %v9502 = vpop.f32.mrb[0].mxu0
        %9503 = vmatprep.mubr.bf16.mxu0 0
        %9504 = vmatmul.mubr.bf16.gmra.mrb[0].mxu0 %v9224
        %v9505 = vpop.f32.mrb[0].mxu0
        %v9506 = vadd.f32 0.0, %v9505
        %v9507 = vpop.f32.mrb[0].mxu0
        %v9508 = vpop.f32.mrb[0].mxu0
        %v9509 = vadd.f32 0.0, %v9508
        %v9510 = vpop.f32.mrb[0].mxu0
        %9511 = vmatprep.mubr.bf16.mxu0 0
        %9512 = vmatmul.mubr.bf16.gmra.mrb[0].mxu0 %v9241
        %v9513 = vpop.f32.mrb[0].mxu0
        %v9514 = vadd.f32 0.0, %v9513
        %v9515 = vpop.f32.mrb[0].mxu0
        %v9516 = vpop.f32.mrb[0].mxu0
        %v9517 = vadd.f32 0.0, %v9516
        %v9518 = vpop.f32.mrb[0].mxu0
        %9519 = vmatprep.mubr.bf16.mxu0 0
        %9520 = vmatmul.mubr.bf16.gmra.mrb[0].mxu0 %v9258
        %v9521 = vpop.f32.mrb[0].mxu0
        %v9522 = vadd.f32 0.0, %v9521
        %v9523 = vpop.f32.mrb[0].mxu0
        %v9524 = vpop.f32.mrb[0].mxu0
        %v9525 = vadd.f32 0.0, %v9524
        %v9526 = vpop.f32.mrb[0].mxu0
        %9527 = vmatprep.mubr.bf16.mxu0 0
        %9528 = vmatmul.mubr.bf16.gmra.mrb[0].mxu0 %v9275
        %v9529 = vpop.f32.mrb[0].mxu0
        %v9530 = vadd.f32 0.0, %v9529
        %v9531 = vpop.f32.mrb[0].mxu0
        %v9532 = vpop.f32.mrb[0].mxu0
        %v9533 = vadd.f32 0.0, %v9532
        %v9534 = vpop.f32.mrb[0].mxu0
        %9535 = vmatprep.mubr.bf16.mxu0 0
        %9536 = vmatmul.mubr.bf16.gmra.mrb[0].mxu0 %v9292
        %v9537 = vpop.f32.mrb[0].mxu0
        %v9538 = vadd.f32 0.0, %v9537
        %v9539 = vpop.f32.mrb[0].mxu0
        %v9540 = vpop.f32.mrb[0].mxu0
        %v9541 = vadd.f32 0.0, %v9540
        %v9542 = vpop.f32.mrb[0].mxu0
        %9543 = vmatprep.mubr.bf16.mxu0 0
        %9544 = vmatmul.mubr.bf16.gmra.mrb[0].mxu0 %v9309
        %v9545 = vpop.f32.mrb[0].mxu0
        %v9546 = vadd.f32 0.0, %v9545
        %v9547 = vpop.f32.mrb[0].mxu0
        %v9548 = vpop.f32.mrb[0].mxu0
        %v9549 = vadd.f32 0.0, %v9548
        %v9550 = vpop.f32.mrb[0].mxu0
        %9551 = vdwg.mxu0
        %v9552 = vadd.f32 %v8990, %v9426
        %v9553 = vadd.f32 %v8991, %v9429
        %v9554 = vadd.f32 %v8992, %v9434
        %v9555 = vadd.f32 %v8993, %v9437
        %v9556 = vadd.f32 %v8994, %v9442
        %v9557 = vadd.f32 %v8995, %v9445
        %v9558 = vadd.f32 %v8996, %v9450
        %v9559 = vadd.f32 %v8997, %v9453
        %v9560 = vadd.f32 %v8998, %v9458
        %v9561 = vadd.f32 %v8999, %v9461
        %v9562 = vadd.f32 %v9000, %v9466
        %v9563 = vadd.f32 %v9001, %v9469
        %v9564 = vadd.f32 %v9002, %v9474
        %v9565 = vadd.f32 %v9003, %v9477
        %v9566 = vadd.f32 %v9004, %v9482
        %v9567 = vadd.f32 %v9005, %v9485
        %v9568 = vadd.f32 %v9006, %v9490
        %v9569 = vadd.f32 %v9007, %v9493
        %v9570 = vadd.f32 %v9008, %v9498
        %v9571 = vadd.f32 %v9009, %v9501
        %v9572 = vadd.f32 %v9010, %v9506
        %v9573 = vadd.f32 %v9011, %v9509
        %v9574 = vadd.f32 %v9012, %v9514
        %v9575 = vadd.f32 %v9013, %v9517
        %v9576 = vadd.f32 %v9014, %v9522
        %v9577 = vadd.f32 %v9015, %v9525
        %v9578 = vadd.f32 %v9016, %v9530
        %v9579 = vadd.f32 %v9017, %v9533
        %v9580 = vadd.f32 %v9018, %v9538
        %v9581 = vadd.f32 %v9019, %v9541
        %v9582 = vadd.f32 %v9020, %v9546
        %v9583 = vadd.f32 %v9021, %v9549
        %v9585 = vlaneseq
        %v9586 = vshrl.u32 %v9585, 7
        %v9587 = vsub.s32 0, %v9586
        %v9588 = vrot.slane %v5117, %v9587
        %v9590 = vadd.f32 %v9552, %v9588
        %v9591 = vadd.f32 %v9553, %v9588
        %v9592 = vadd.f32 %v9554, %v9588
        %v9593 = vadd.f32 %v9555, %v9588
        %v9594 = vadd.f32 %v9556, %v9588
        %v9595 = vadd.f32 %v9557, %v9588
        %v9596 = vadd.f32 %v9558, %v9588
        %v9597 = vadd.f32 %v9559, %v9588
        %v9598 = vadd.f32 %v9560, %v9588
        %v9599 = vadd.f32 %v9561, %v9588
        %v9600 = vadd.f32 %v9562, %v9588
        %v9601 = vadd.f32 %v9563, %v9588
        %v9602 = vadd.f32 %v9564, %v9588
        %v9603 = vadd.f32 %v9565, %v9588
        %v9604 = vadd.f32 %v9566, %v9588
        %v9605 = vadd.f32 %v9567, %v9588
        %v9606 = vadd.f32 %v9568, %v9588
        %v9607 = vadd.f32 %v9569, %v9588
        %v9608 = vadd.f32 %v9570, %v9588
        %v9609 = vadd.f32 %v9571, %v9588
        %v9610 = vadd.f32 %v9572, %v9588
        %v9611 = vadd.f32 %v9573, %v9588
        %v9612 = vadd.f32 %v9574, %v9588
        %v9613 = vadd.f32 %v9575, %v9588
        %v9614 = vadd.f32 %v9576, %v9588
        %v9615 = vadd.f32 %v9577, %v9588
        %v9616 = vadd.f32 %v9578, %v9588
        %v9617 = vadd.f32 %v9579, %v9588
        %v9618 = vadd.f32 %v9580, %v9588
        %v9619 = vadd.f32 %v9581, %v9588
        %v9620 = vadd.f32 %v9582, %v9588
        %v9621 = vadd.f32 %v9583, %v9588
        %v9622 = vmax.f32 %v9590, 0.0
        %v9623 = vmax.f32 %v9591, 0.0
        %v9624 = vmax.f32 %v9592, 0.0
        %v9625 = vmax.f32 %v9593, 0.0
        %v9626 = vmax.f32 %v9594, 0.0
        %v9627 = vmax.f32 %v9595, 0.0
        %v9628 = vmax.f32 %v9596, 0.0
        %v9629 = vmax.f32 %v9597, 0.0
        %v9630 = vmax.f32 %v9598, 0.0
        %v9631 = vmax.f32 %v9599, 0.0
        %v9632 = vmax.f32 %v9600, 0.0
        %v9633 = vmax.f32 %v9601, 0.0
        %v9634 = vmax.f32 %v9602, 0.0
        %v9635 = vmax.f32 %v9603, 0.0
        %v9636 = vmax.f32 %v9604, 0.0
        %v9637 = vmax.f32 %v9605, 0.0
        %v9638 = vmax.f32 %v9606, 0.0
        %v9639 = vmax.f32 %v9607, 0.0
        %v9640 = vmax.f32 %v9608, 0.0
        %v9641 = vmax.f32 %v9609, 0.0
        %v9642 = vmax.f32 %v9610, 0.0
        %v9643 = vmax.f32 %v9611, 0.0
        %v9644 = vmax.f32 %v9612, 0.0
        %v9645 = vmax.f32 %v9613, 0.0
        %v9646 = vmax.f32 %v9614, 0.0
        %v9647 = vmax.f32 %v9615, 0.0
        %v9648 = vmax.f32 %v9616, 0.0
        %v9649 = vmax.f32 %v9617, 0.0
        %v9650 = vmax.f32 %v9618, 0.0
        %v9651 = vmax.f32 %v9619, 0.0
        %v9652 = vmax.f32 %v9620, 0.0
        %v9653 = vmax.f32 %v9621, 0.0
        %v9654 = vadd.f32 %v9622, %v9624
        %v9655 = vadd.f32 %v9623, %v9625
        %v9656 = vadd.f32 %v9626, %v9628
        %v9657 = vadd.f32 %v9627, %v9629
        %v9658 = vadd.f32 %v9630, %v9632
        %v9659 = vadd.f32 %v9631, %v9633
        %v9660 = vadd.f32 %v9634, %v9636
        %v9661 = vadd.f32 %v9635, %v9637
        %v9662 = vadd.f32 %v9638, %v9640
        %v9663 = vadd.f32 %v9639, %v9641
        %v9664 = vadd.f32 %v9642, %v9644
        %v9665 = vadd.f32 %v9643, %v9645
        %v9666 = vadd.f32 %v9646, %v9648
        %v9667 = vadd.f32 %v9647, %v9649
        %v9668 = vadd.f32 %v9650, %v9652
        %v9669 = vadd.f32 %v9651, %v9653
        %v9686 = vcombine.high %v9654, %v9654
        %v9688 = vunpack.c.l.s4 1983009808
        %v9689 = vunpack.c.0.s8 %v9688
        %v9690 = vlaneseq
        %v9691 = vshrl.u32 %v9690, 7
        %v9692 = vsub.s32 %v9689, %v9691
        %v9693 = vrot.slane %v9654, %v9692
        %v9695 = vunpack.c.l.s4 1983009808
        %v9696 = vunpack.c.0.s8 %v9695
        %v9697 = vlaneseq
        %v9698 = vshrl.u32 %v9697, 7
        %v9699 = vsub.s32 %v9696, %v9698
        %v9700 = vrot.slane %v9686, %v9699
        %v9701 = vcombine.high %v9693, %v9693
        %v9702 = vcombine.high %v9700, %v9700
        %v9703 = vcombine.high %v9655, %v9655
        %v9705 = vunpack.c.l.s4 1983009808
        %v9706 = vunpack.c.0.s8 %v9705
        %v9707 = vlaneseq
        %v9708 = vshrl.u32 %v9707, 7
        %v9709 = vsub.s32 %v9706, %v9708
        %v9710 = vrot.slane %v9655, %v9709
        %v9712 = vunpack.c.l.s4 1983009808
        %v9713 = vunpack.c.0.s8 %v9712
        %v9714 = vlaneseq
        %v9715 = vshrl.u32 %v9714, 7
        %v9716 = vsub.s32 %v9713, %v9715
        %v9717 = vrot.slane %v9703, %v9716
        %v9718 = vcombine.high %v9710, %v9710
        %v9719 = vcombine.high %v9717, %v9717
        %v9720 = vcombine.high %v9656, %v9656
        %v9722 = vunpack.c.l.s4 1983009808
        %v9723 = vunpack.c.0.s8 %v9722
        %v9724 = vlaneseq
        %v9725 = vshrl.u32 %v9724, 7
        %v9726 = vsub.s32 %v9723, %v9725
        %v9727 = vrot.slane %v9656, %v9726
        %v9729 = vunpack.c.l.s4 1983009808
        %v9730 = vunpack.c.0.s8 %v9729
        %v9731 = vlaneseq
        %v9732 = vshrl.u32 %v9731, 7
        %v9733 = vsub.s32 %v9730, %v9732
        %v9734 = vrot.slane %v9720, %v9733
        %v9735 = vcombine.high %v9727, %v9727
        %v9736 = vcombine.high %v9734, %v9734
        %v9737 = vcombine.high %v9657, %v9657
        %v9739 = vunpack.c.l.s4 1983009808
        %v9740 = vunpack.c.0.s8 %v9739
        %v9741 = vlaneseq
        %v9742 = vshrl.u32 %v9741, 7
        %v9743 = vsub.s32 %v9740, %v9742
        %v9744 = vrot.slane %v9657, %v9743
        %v9746 = vunpack.c.l.s4 1983009808
        %v9747 = vunpack.c.0.s8 %v9746
        %v9748 = vlaneseq
        %v9749 = vshrl.u32 %v9748, 7
        %v9750 = vsub.s32 %v9747, %v9749
        %v9751 = vrot.slane %v9737, %v9750
        %v9752 = vcombine.high %v9744, %v9744
        %v9753 = vcombine.high %v9751, %v9751
        %v9754 = vcombine.high %v9658, %v9658
        %v9756 = vunpack.c.l.s4 1983009808
        %v9757 = vunpack.c.0.s8 %v9756
        %v9758 = vlaneseq
        %v9759 = vshrl.u32 %v9758, 7
        %v9760 = vsub.s32 %v9757, %v9759
        %v9761 = vrot.slane %v9658, %v9760
        %v9763 = vunpack.c.l.s4 1983009808
        %v9764 = vunpack.c.0.s8 %v9763
        %v9765 = vlaneseq
        %v9766 = vshrl.u32 %v9765, 7
        %v9767 = vsub.s32 %v9764, %v9766
        %v9768 = vrot.slane %v9754, %v9767
        %v9769 = vcombine.high %v9761, %v9761
        %v9770 = vcombine.high %v9768, %v9768
        %v9771 = vcombine.high %v9659, %v9659
        %v9773 = vunpack.c.l.s4 1983009808
        %v9774 = vunpack.c.0.s8 %v9773
        %v9775 = vlaneseq
        %v9776 = vshrl.u32 %v9775, 7
        %v9777 = vsub.s32 %v9774, %v9776
        %v9778 = vrot.slane %v9659, %v9777
        %v9780 = vunpack.c.l.s4 1983009808
        %v9781 = vunpack.c.0.s8 %v9780
        %v9782 = vlaneseq
        %v9783 = vshrl.u32 %v9782, 7
        %v9784 = vsub.s32 %v9781, %v9783
        %v9785 = vrot.slane %v9771, %v9784
        %v9786 = vcombine.high %v9778, %v9778
        %v9787 = vcombine.high %v9785, %v9785
        %v9788 = vcombine.high %v9660, %v9660
        %v9790 = vunpack.c.l.s4 1983009808
        %v9791 = vunpack.c.0.s8 %v9790
        %v9792 = vlaneseq
        %v9793 = vshrl.u32 %v9792, 7
        %v9794 = vsub.s32 %v9791, %v9793
        %v9795 = vrot.slane %v9660, %v9794
        %v9797 = vunpack.c.l.s4 1983009808
        %v9798 = vunpack.c.0.s8 %v9797
        %v9799 = vlaneseq
        %v9800 = vshrl.u32 %v9799, 7
        %v9801 = vsub.s32 %v9798, %v9800
        %v9802 = vrot.slane %v9788, %v9801
        %v9803 = vcombine.high %v9795, %v9795
        %v9804 = vcombine.high %v9802, %v9802
        %v9805 = vcombine.high %v9661, %v9661
        %v9807 = vunpack.c.l.s4 1983009808
        %v9808 = vunpack.c.0.s8 %v9807
        %v9809 = vlaneseq
        %v9810 = vshrl.u32 %v9809, 7
        %v9811 = vsub.s32 %v9808, %v9810
        %v9812 = vrot.slane %v9661, %v9811
        %v9814 = vunpack.c.l.s4 1983009808
        %v9815 = vunpack.c.0.s8 %v9814
        %v9816 = vlaneseq
        %v9817 = vshrl.u32 %v9816, 7
        %v9818 = vsub.s32 %v9815, %v9817
        %v9819 = vrot.slane %v9805, %v9818
        %v9820 = vcombine.high %v9812, %v9812
        %v9821 = vcombine.high %v9819, %v9819
        %v9822 = vcombine.high %v9662, %v9662
        %v9824 = vunpack.c.l.s4 1983009808
        %v9825 = vunpack.c.0.s8 %v9824
        %v9826 = vlaneseq
        %v9827 = vshrl.u32 %v9826, 7
        %v9828 = vsub.s32 %v9825, %v9827
        %v9829 = vrot.slane %v9662, %v9828
        %v9831 = vunpack.c.l.s4 1983009808
        %v9832 = vunpack.c.0.s8 %v9831
        %v9833 = vlaneseq
        %v9834 = vshrl.u32 %v9833, 7
        %v9835 = vsub.s32 %v9832, %v9834
        %v9836 = vrot.slane %v9822, %v9835
        %v9837 = vcombine.high %v9829, %v9829
        %v9838 = vcombine.high %v9836, %v9836
        %v9839 = vcombine.high %v9663, %v9663
        %v9841 = vunpack.c.l.s4 1983009808
        %v9842 = vunpack.c.0.s8 %v9841
        %v9843 = vlaneseq
        %v9844 = vshrl.u32 %v9843, 7
        %v9845 = vsub.s32 %v9842, %v9844
        %v9846 = vrot.slane %v9663, %v9845
        %v9848 = vunpack.c.l.s4 1983009808
        %v9849 = vunpack.c.0.s8 %v9848
        %v9850 = vlaneseq
        %v9851 = vshrl.u32 %v9850, 7
        %v9852 = vsub.s32 %v9849, %v9851
        %v9853 = vrot.slane %v9839, %v9852
        %v9854 = vcombine.high %v9846, %v9846
        %v9855 = vcombine.high %v9853, %v9853
        %v9856 = vcombine.high %v9664, %v9664
        %v9858 = vunpack.c.l.s4 1983009808
        %v9859 = vunpack.c.0.s8 %v9858
        %v9860 = vlaneseq
        %v9861 = vshrl.u32 %v9860, 7
        %v9862 = vsub.s32 %v9859, %v9861
        %v9863 = vrot.slane %v9664, %v9862
        %v9865 = vunpack.c.l.s4 1983009808
        %v9866 = vunpack.c.0.s8 %v9865
        %v9867 = vlaneseq
        %v9868 = vshrl.u32 %v9867, 7
        %v9869 = vsub.s32 %v9866, %v9868
        %v9870 = vrot.slane %v9856, %v9869
        %v9871 = vcombine.high %v9863, %v9863
        %v9872 = vcombine.high %v9870, %v9870
        %v9873 = vcombine.high %v9665, %v9665
        %v9875 = vunpack.c.l.s4 1983009808
        %v9876 = vunpack.c.0.s8 %v9875
        %v9877 = vlaneseq
        %v9878 = vshrl.u32 %v9877, 7
        %v9879 = vsub.s32 %v9876, %v9878
        %v9880 = vrot.slane %v9665, %v9879
        %v9882 = vunpack.c.l.s4 1983009808
        %v9883 = vunpack.c.0.s8 %v9882
        %v9884 = vlaneseq
        %v9885 = vshrl.u32 %v9884, 7
        %v9886 = vsub.s32 %v9883, %v9885
        %v9887 = vrot.slane %v9873, %v9886
        %v9888 = vcombine.high %v9880, %v9880
        %v9889 = vcombine.high %v9887, %v9887
        %v9890 = vcombine.high %v9666, %v9666
        %v9892 = vunpack.c.l.s4 1983009808
        %v9893 = vunpack.c.0.s8 %v9892
        %v9894 = vlaneseq
        %v9895 = vshrl.u32 %v9894, 7
        %v9896 = vsub.s32 %v9893, %v9895
        %v9897 = vrot.slane %v9666, %v9896
        %v9899 = vunpack.c.l.s4 1983009808
        %v9900 = vunpack.c.0.s8 %v9899
        %v9901 = vlaneseq
        %v9902 = vshrl.u32 %v9901, 7
        %v9903 = vsub.s32 %v9900, %v9902
        %v9904 = vrot.slane %v9890, %v9903
        %v9905 = vcombine.high %v9897, %v9897
        %v9906 = vcombine.high %v9904, %v9904
        %v9907 = vcombine.high %v9667, %v9667
        %v9909 = vunpack.c.l.s4 1983009808
        %v9910 = vunpack.c.0.s8 %v9909
        %v9911 = vlaneseq
        %v9912 = vshrl.u32 %v9911, 7
        %v9913 = vsub.s32 %v9910, %v9912
        %v9914 = vrot.slane %v9667, %v9913
        %v9916 = vunpack.c.l.s4 1983009808
        %v9917 = vunpack.c.0.s8 %v9916
        %v9918 = vlaneseq
        %v9919 = vshrl.u32 %v9918, 7
        %v9920 = vsub.s32 %v9917, %v9919
        %v9921 = vrot.slane %v9907, %v9920
        %v9922 = vcombine.high %v9914, %v9914
        %v9923 = vcombine.high %v9921, %v9921
        %v9924 = vcombine.high %v9668, %v9668
        %v9926 = vunpack.c.l.s4 1983009808
        %v9927 = vunpack.c.0.s8 %v9926
        %v9928 = vlaneseq
        %v9929 = vshrl.u32 %v9928, 7
        %v9930 = vsub.s32 %v9927, %v9929
        %v9931 = vrot.slane %v9668, %v9930
        %v9933 = vunpack.c.l.s4 1983009808
        %v9934 = vunpack.c.0.s8 %v9933
        %v9935 = vlaneseq
        %v9936 = vshrl.u32 %v9935, 7
        %v9937 = vsub.s32 %v9934, %v9936
        %v9938 = vrot.slane %v9924, %v9937
        %v9939 = vcombine.high %v9931, %v9931
        %v9940 = vcombine.high %v9938, %v9938
        %v9941 = vcombine.high %v9669, %v9669
        %v9943 = vunpack.c.l.s4 1983009808
        %v9944 = vunpack.c.0.s8 %v9943
        %v9945 = vlaneseq
        %v9946 = vshrl.u32 %v9945, 7
        %v9947 = vsub.s32 %v9944, %v9946
        %v9948 = vrot.slane %v9669, %v9947
        %v9950 = vunpack.c.l.s4 1983009808
        %v9951 = vunpack.c.0.s8 %v9950
        %v9952 = vlaneseq
        %v9953 = vshrl.u32 %v9952, 7
        %v9954 = vsub.s32 %v9951, %v9953
        %v9955 = vrot.slane %v9941, %v9954
        %v9956 = vcombine.high %v9948, %v9948
        %v9957 = vcombine.high %v9955, %v9955
        %vm10022 = vcmask 1041408
        %v10023 = vsel %vm10022, %v9693, 0.0
        %v10024 = vrot.slane %v10023, 4
        %v10025 = vadd.f32 %v10023, %v10024
        %v10026 = vrot.slane %v10025, 2
        %v10027 = vadd.f32 %v10025, %v10026
        %v10028 = vrot.slane %v10027, 1
        %v10029 = vadd.f32 %v10027, %v10028
        %v10030 = vsel %vm10022, %v9701, 0.0
        %v10031 = vrot.slane %v10030, 4
        %v10032 = vadd.f32 %v10030, %v10031
        %v10033 = vrot.slane %v10032, 2
        %v10034 = vadd.f32 %v10032, %v10033
        %v10035 = vrot.slane %v10034, 1
        %v10036 = vadd.f32 %v10034, %v10035
        %v10037 = vsel %vm10022, %v9700, 0.0
        %v10038 = vrot.slane %v10037, 4
        %v10039 = vadd.f32 %v10037, %v10038
        %v10040 = vrot.slane %v10039, 2
        %v10041 = vadd.f32 %v10039, %v10040
        %v10042 = vrot.slane %v10041, 1
        %v10043 = vadd.f32 %v10041, %v10042
        %v10044 = vsel %vm10022, %v9702, 0.0
        %v10045 = vrot.slane %v10044, 4
        %v10046 = vadd.f32 %v10044, %v10045
        %v10047 = vrot.slane %v10046, 2
        %v10048 = vadd.f32 %v10046, %v10047
        %v10049 = vrot.slane %v10048, 1
        %v10050 = vadd.f32 %v10048, %v10049
        %v10051 = vsel %vm10022, %v9710, 0.0
        %v10052 = vrot.slane %v10051, 4
        %v10053 = vadd.f32 %v10051, %v10052
        %v10054 = vrot.slane %v10053, 2
        %v10055 = vadd.f32 %v10053, %v10054
        %v10056 = vrot.slane %v10055, 1
        %v10057 = vadd.f32 %v10055, %v10056
        %v10058 = vsel %vm10022, %v9718, 0.0
        %v10059 = vrot.slane %v10058, 4
        %v10060 = vadd.f32 %v10058, %v10059
        %v10061 = vrot.slane %v10060, 2
        %v10062 = vadd.f32 %v10060, %v10061
        %v10063 = vrot.slane %v10062, 1
        %v10064 = vadd.f32 %v10062, %v10063
        %v10065 = vsel %vm10022, %v9717, 0.0
        %v10066 = vrot.slane %v10065, 4
        %v10067 = vadd.f32 %v10065, %v10066
        %v10068 = vrot.slane %v10067, 2
        %v10069 = vadd.f32 %v10067, %v10068
        %v10070 = vrot.slane %v10069, 1
        %v10071 = vadd.f32 %v10069, %v10070
        %v10072 = vsel %vm10022, %v9719, 0.0
        %v10073 = vrot.slane %v10072, 4
        %v10074 = vadd.f32 %v10072, %v10073
        %v10075 = vrot.slane %v10074, 2
        %v10076 = vadd.f32 %v10074, %v10075
        %v10077 = vrot.slane %v10076, 1
        %v10078 = vadd.f32 %v10076, %v10077
        %v10079 = vsel %vm10022, %v9727, 0.0
        %v10080 = vrot.slane %v10079, 4
        %v10081 = vadd.f32 %v10079, %v10080
        %v10082 = vrot.slane %v10081, 2
        %v10083 = vadd.f32 %v10081, %v10082
        %v10084 = vrot.slane %v10083, 1
        %v10085 = vadd.f32 %v10083, %v10084
        %v10086 = vsel %vm10022, %v9735, 0.0
        %v10087 = vrot.slane %v10086, 4
        %v10088 = vadd.f32 %v10086, %v10087
        %v10089 = vrot.slane %v10088, 2
        %v10090 = vadd.f32 %v10088, %v10089
        %v10091 = vrot.slane %v10090, 1
        %v10092 = vadd.f32 %v10090, %v10091
        %v10093 = vsel %vm10022, %v9734, 0.0
        %v10094 = vrot.slane %v10093, 4
        %v10095 = vadd.f32 %v10093, %v10094
        %v10096 = vrot.slane %v10095, 2
        %v10097 = vadd.f32 %v10095, %v10096
        %v10098 = vrot.slane %v10097, 1
        %v10099 = vadd.f32 %v10097, %v10098
        %v10100 = vsel %vm10022, %v9736, 0.0
        %v10101 = vrot.slane %v10100, 4
        %v10102 = vadd.f32 %v10100, %v10101
        %v10103 = vrot.slane %v10102, 2
        %v10104 = vadd.f32 %v10102, %v10103
        %v10105 = vrot.slane %v10104, 1
        %v10106 = vadd.f32 %v10104, %v10105
        %v10107 = vsel %vm10022, %v9744, 0.0
        %v10108 = vrot.slane %v10107, 4
        %v10109 = vadd.f32 %v10107, %v10108
        %v10110 = vrot.slane %v10109, 2
        %v10111 = vadd.f32 %v10109, %v10110
        %v10112 = vrot.slane %v10111, 1
        %v10113 = vadd.f32 %v10111, %v10112
        %v10114 = vsel %vm10022, %v9752, 0.0
        %v10115 = vrot.slane %v10114, 4
        %v10116 = vadd.f32 %v10114, %v10115
        %v10117 = vrot.slane %v10116, 2
        %v10118 = vadd.f32 %v10116, %v10117
        %v10119 = vrot.slane %v10118, 1
        %v10120 = vadd.f32 %v10118, %v10119
        %v10121 = vsel %vm10022, %v9751, 0.0
        %v10122 = vrot.slane %v10121, 4
        %v10123 = vadd.f32 %v10121, %v10122
        %v10124 = vrot.slane %v10123, 2
        %v10125 = vadd.f32 %v10123, %v10124
        %v10126 = vrot.slane %v10125, 1
        %v10127 = vadd.f32 %v10125, %v10126
        %v10128 = vsel %vm10022, %v9753, 0.0
        %v10129 = vrot.slane %v10128, 4
        %v10130 = vadd.f32 %v10128, %v10129
        %v10131 = vrot.slane %v10130, 2
        %v10132 = vadd.f32 %v10130, %v10131
        %v10133 = vrot.slane %v10132, 1
        %v10134 = vadd.f32 %v10132, %v10133
        %v10135 = vsel %vm10022, %v9761, 0.0
        %v10136 = vrot.slane %v10135, 4
        %v10137 = vadd.f32 %v10135, %v10136
        %v10138 = vrot.slane %v10137, 2
        %v10139 = vadd.f32 %v10137, %v10138
        %v10140 = vrot.slane %v10139, 1
        %v10141 = vadd.f32 %v10139, %v10140
        %v10142 = vsel %vm10022, %v9769, 0.0
        %v10143 = vrot.slane %v10142, 4
        %v10144 = vadd.f32 %v10142, %v10143
        %v10145 = vrot.slane %v10144, 2
        %v10146 = vadd.f32 %v10144, %v10145
        %v10147 = vrot.slane %v10146, 1
        %v10148 = vadd.f32 %v10146, %v10147
        %v10149 = vsel %vm10022, %v9768, 0.0
        %v10150 = vrot.slane %v10149, 4
        %v10151 = vadd.f32 %v10149, %v10150
        %v10152 = vrot.slane %v10151, 2
        %v10153 = vadd.f32 %v10151, %v10152
        %v10154 = vrot.slane %v10153, 1
        %v10155 = vadd.f32 %v10153, %v10154
        %v10156 = vsel %vm10022, %v9770, 0.0
        %v10157 = vrot.slane %v10156, 4
        %v10158 = vadd.f32 %v10156, %v10157
        %v10159 = vrot.slane %v10158, 2
        %v10160 = vadd.f32 %v10158, %v10159
        %v10161 = vrot.slane %v10160, 1
        %v10162 = vadd.f32 %v10160, %v10161
        %v10163 = vsel %vm10022, %v9778, 0.0
        %v10164 = vrot.slane %v10163, 4
        %v10165 = vadd.f32 %v10163, %v10164
        %v10166 = vrot.slane %v10165, 2
        %v10167 = vadd.f32 %v10165, %v10166
        %v10168 = vrot.slane %v10167, 1
        %v10169 = vadd.f32 %v10167, %v10168
        %v10170 = vsel %vm10022, %v9786, 0.0
        %v10171 = vrot.slane %v10170, 4
        %v10172 = vadd.f32 %v10170, %v10171
        %v10173 = vrot.slane %v10172, 2
        %v10174 = vadd.f32 %v10172, %v10173
        %v10175 = vrot.slane %v10174, 1
        %v10176 = vadd.f32 %v10174, %v10175
        %v10177 = vsel %vm10022, %v9785, 0.0
        %v10178 = vrot.slane %v10177, 4
        %v10179 = vadd.f32 %v10177, %v10178
        %v10180 = vrot.slane %v10179, 2
        %v10181 = vadd.f32 %v10179, %v10180
        %v10182 = vrot.slane %v10181, 1
        %v10183 = vadd.f32 %v10181, %v10182
        %v10184 = vsel %vm10022, %v9787, 0.0
        %v10185 = vrot.slane %v10184, 4
        %v10186 = vadd.f32 %v10184, %v10185
        %v10187 = vrot.slane %v10186, 2
        %v10188 = vadd.f32 %v10186, %v10187
        %v10189 = vrot.slane %v10188, 1
        %v10190 = vadd.f32 %v10188, %v10189
        %v10191 = vsel %vm10022, %v9795, 0.0
        %v10192 = vrot.slane %v10191, 4
        %v10193 = vadd.f32 %v10191, %v10192
        %v10194 = vrot.slane %v10193, 2
        %v10195 = vadd.f32 %v10193, %v10194
        %v10196 = vrot.slane %v10195, 1
        %v10197 = vadd.f32 %v10195, %v10196
        %v10198 = vsel %vm10022, %v9803, 0.0
        %v10199 = vrot.slane %v10198, 4
        %v10200 = vadd.f32 %v10198, %v10199
        %v10201 = vrot.slane %v10200, 2
        %v10202 = vadd.f32 %v10200, %v10201
        %v10203 = vrot.slane %v10202, 1
        %v10204 = vadd.f32 %v10202, %v10203
        %v10205 = vsel %vm10022, %v9802, 0.0
        %v10206 = vrot.slane %v10205, 4
        %v10207 = vadd.f32 %v10205, %v10206
        %v10208 = vrot.slane %v10207, 2
        %v10209 = vadd.f32 %v10207, %v10208
        %v10210 = vrot.slane %v10209, 1
        %v10211 = vadd.f32 %v10209, %v10210
        %v10212 = vsel %vm10022, %v9804, 0.0
        %v10213 = vrot.slane %v10212, 4
        %v10214 = vadd.f32 %v10212, %v10213
        %v10215 = vrot.slane %v10214, 2
        %v10216 = vadd.f32 %v10214, %v10215
        %v10217 = vrot.slane %v10216, 1
        %v10218 = vadd.f32 %v10216, %v10217
        %v10219 = vsel %vm10022, %v9812, 0.0
        %v10220 = vrot.slane %v10219, 4
        %v10221 = vadd.f32 %v10219, %v10220
        %v10222 = vrot.slane %v10221, 2
        %v10223 = vadd.f32 %v10221, %v10222
        %v10224 = vrot.slane %v10223, 1
        %v10225 = vadd.f32 %v10223, %v10224
        %v10226 = vsel %vm10022, %v9820, 0.0
        %v10227 = vrot.slane %v10226, 4
        %v10228 = vadd.f32 %v10226, %v10227
        %v10229 = vrot.slane %v10228, 2
        %v10230 = vadd.f32 %v10228, %v10229
        %v10231 = vrot.slane %v10230, 1
        %v10232 = vadd.f32 %v10230, %v10231
        %v10233 = vsel %vm10022, %v9819, 0.0
        %v10234 = vrot.slane %v10233, 4
        %v10235 = vadd.f32 %v10233, %v10234
        %v10236 = vrot.slane %v10235, 2
        %v10237 = vadd.f32 %v10235, %v10236
        %v10238 = vrot.slane %v10237, 1
        %v10239 = vadd.f32 %v10237, %v10238
        %v10240 = vsel %vm10022, %v9821, 0.0
        %v10241 = vrot.slane %v10240, 4
        %v10242 = vadd.f32 %v10240, %v10241
        %v10243 = vrot.slane %v10242, 2
        %v10244 = vadd.f32 %v10242, %v10243
        %v10245 = vrot.slane %v10244, 1
        %v10246 = vadd.f32 %v10244, %v10245
        %v10247 = vsel %vm10022, %v9829, 0.0
        %v10248 = vrot.slane %v10247, 4
        %v10249 = vadd.f32 %v10247, %v10248
        %v10250 = vrot.slane %v10249, 2
        %v10251 = vadd.f32 %v10249, %v10250
        %v10252 = vrot.slane %v10251, 1
        %v10253 = vadd.f32 %v10251, %v10252
        %v10254 = vsel %vm10022, %v9837, 0.0
        %v10255 = vrot.slane %v10254, 4
        %v10256 = vadd.f32 %v10254, %v10255
        %v10257 = vrot.slane %v10256, 2
        %v10258 = vadd.f32 %v10256, %v10257
        %v10259 = vrot.slane %v10258, 1
        %v10260 = vadd.f32 %v10258, %v10259
        %v10261 = vsel %vm10022, %v9836, 0.0
        %v10262 = vrot.slane %v10261, 4
        %v10263 = vadd.f32 %v10261, %v10262
        %v10264 = vrot.slane %v10263, 2
        %v10265 = vadd.f32 %v10263, %v10264
        %v10266 = vrot.slane %v10265, 1
        %v10267 = vadd.f32 %v10265, %v10266
        %v10268 = vsel %vm10022, %v9838, 0.0
        %v10269 = vrot.slane %v10268, 4
        %v10270 = vadd.f32 %v10268, %v10269
        %v10271 = vrot.slane %v10270, 2
        %v10272 = vadd.f32 %v10270, %v10271
        %v10273 = vrot.slane %v10272, 1
        %v10274 = vadd.f32 %v10272, %v10273
        %v10275 = vsel %vm10022, %v9846, 0.0
        %v10276 = vrot.slane %v10275, 4
        %v10277 = vadd.f32 %v10275, %v10276
        %v10278 = vrot.slane %v10277, 2
        %v10279 = vadd.f32 %v10277, %v10278
        %v10280 = vrot.slane %v10279, 1
        %v10281 = vadd.f32 %v10279, %v10280
        %v10282 = vsel %vm10022, %v9854, 0.0
        %v10283 = vrot.slane %v10282, 4
        %v10284 = vadd.f32 %v10282, %v10283
        %v10285 = vrot.slane %v10284, 2
        %v10286 = vadd.f32 %v10284, %v10285
        %v10287 = vrot.slane %v10286, 1
        %v10288 = vadd.f32 %v10286, %v10287
        %v10289 = vsel %vm10022, %v9853, 0.0
        %v10290 = vrot.slane %v10289, 4
        %v10291 = vadd.f32 %v10289, %v10290
        %v10292 = vrot.slane %v10291, 2
        %v10293 = vadd.f32 %v10291, %v10292
        %v10294 = vrot.slane %v10293, 1
        %v10295 = vadd.f32 %v10293, %v10294
        %v10296 = vsel %vm10022, %v9855, 0.0
        %v10297 = vrot.slane %v10296, 4
        %v10298 = vadd.f32 %v10296, %v10297
        %v10299 = vrot.slane %v10298, 2
        %v10300 = vadd.f32 %v10298, %v10299
        %v10301 = vrot.slane %v10300, 1
        %v10302 = vadd.f32 %v10300, %v10301
        %v10303 = vsel %vm10022, %v9863, 0.0
        %v10304 = vrot.slane %v10303, 4
        %v10305 = vadd.f32 %v10303, %v10304
        %v10306 = vrot.slane %v10305, 2
        %v10307 = vadd.f32 %v10305, %v10306
        %v10308 = vrot.slane %v10307, 1
        %v10309 = vadd.f32 %v10307, %v10308
        %v10310 = vsel %vm10022, %v9871, 0.0
        %v10311 = vrot.slane %v10310, 4
        %v10312 = vadd.f32 %v10310, %v10311
        %v10313 = vrot.slane %v10312, 2
        %v10314 = vadd.f32 %v10312, %v10313
        %v10315 = vrot.slane %v10314, 1
        %v10316 = vadd.f32 %v10314, %v10315
        %v10317 = vsel %vm10022, %v9870, 0.0
        %v10318 = vrot.slane %v10317, 4
        %v10319 = vadd.f32 %v10317, %v10318
        %v10320 = vrot.slane %v10319, 2
        %v10321 = vadd.f32 %v10319, %v10320
        %v10322 = vrot.slane %v10321, 1
        %v10323 = vadd.f32 %v10321, %v10322
        %v10324 = vsel %vm10022, %v9872, 0.0
        %v10325 = vrot.slane %v10324, 4
        %v10326 = vadd.f32 %v10324, %v10325
        %v10327 = vrot.slane %v10326, 2
        %v10328 = vadd.f32 %v10326, %v10327
        %v10329 = vrot.slane %v10328, 1
        %v10330 = vadd.f32 %v10328, %v10329
        %v10331 = vsel %vm10022, %v9880, 0.0
        %v10332 = vrot.slane %v10331, 4
        %v10333 = vadd.f32 %v10331, %v10332
        %v10334 = vrot.slane %v10333, 2
        %v10335 = vadd.f32 %v10333, %v10334
        %v10336 = vrot.slane %v10335, 1
        %v10337 = vadd.f32 %v10335, %v10336
        %v10338 = vsel %vm10022, %v9888, 0.0
        %v10339 = vrot.slane %v10338, 4
        %v10340 = vadd.f32 %v10338, %v10339
        %v10341 = vrot.slane %v10340, 2
        %v10342 = vadd.f32 %v10340, %v10341
        %v10343 = vrot.slane %v10342, 1
        %v10344 = vadd.f32 %v10342, %v10343
        %v10345 = vsel %vm10022, %v9887, 0.0
        %v10346 = vrot.slane %v10345, 4
        %v10347 = vadd.f32 %v10345, %v10346
        %v10348 = vrot.slane %v10347, 2
        %v10349 = vadd.f32 %v10347, %v10348
        %v10350 = vrot.slane %v10349, 1
        %v10351 = vadd.f32 %v10349, %v10350
        %v10352 = vsel %vm10022, %v9889, 0.0
        %v10353 = vrot.slane %v10352, 4
        %v10354 = vadd.f32 %v10352, %v10353
        %v10355 = vrot.slane %v10354, 2
        %v10356 = vadd.f32 %v10354, %v10355
        %v10357 = vrot.slane %v10356, 1
        %v10358 = vadd.f32 %v10356, %v10357
        %v10359 = vsel %vm10022, %v9897, 0.0
        %v10360 = vrot.slane %v10359, 4
        %v10361 = vadd.f32 %v10359, %v10360
        %v10362 = vrot.slane %v10361, 2
        %v10363 = vadd.f32 %v10361, %v10362
        %v10364 = vrot.slane %v10363, 1
        %v10365 = vadd.f32 %v10363, %v10364
        %v10366 = vsel %vm10022, %v9905, 0.0
        %v10367 = vrot.slane %v10366, 4
        %v10368 = vadd.f32 %v10366, %v10367
        %v10369 = vrot.slane %v10368, 2
        %v10370 = vadd.f32 %v10368, %v10369
        %v10371 = vrot.slane %v10370, 1
        %v10372 = vadd.f32 %v10370, %v10371
        %v10373 = vsel %vm10022, %v9904, 0.0
        %v10374 = vrot.slane %v10373, 4
        %v10375 = vadd.f32 %v10373, %v10374
        %v10376 = vrot.slane %v10375, 2
        %v10377 = vadd.f32 %v10375, %v10376
        %v10378 = vrot.slane %v10377, 1
        %v10379 = vadd.f32 %v10377, %v10378
        %v10380 = vsel %vm10022, %v9906, 0.0
        %v10381 = vrot.slane %v10380, 4
        %v10382 = vadd.f32 %v10380, %v10381
        %v10383 = vrot.slane %v10382, 2
        %v10384 = vadd.f32 %v10382, %v10383
        %v10385 = vrot.slane %v10384, 1
        %v10386 = vadd.f32 %v10384, %v10385
        %v10387 = vsel %vm10022, %v9914, 0.0
        %v10388 = vrot.slane %v10387, 4
        %v10389 = vadd.f32 %v10387, %v10388
        %v10390 = vrot.slane %v10389, 2
        %v10391 = vadd.f32 %v10389, %v10390
        %v10392 = vrot.slane %v10391, 1
        %v10393 = vadd.f32 %v10391, %v10392
        %v10394 = vsel %vm10022, %v9922, 0.0
        %v10395 = vrot.slane %v10394, 4
        %v10396 = vadd.f32 %v10394, %v10395
        %v10397 = vrot.slane %v10396, 2
        %v10398 = vadd.f32 %v10396, %v10397
        %v10399 = vrot.slane %v10398, 1
        %v10400 = vadd.f32 %v10398, %v10399
        %v10401 = vsel %vm10022, %v9921, 0.0
        %v10402 = vrot.slane %v10401, 4
        %v10403 = vadd.f32 %v10401, %v10402
        %v10404 = vrot.slane %v10403, 2
        %v10405 = vadd.f32 %v10403, %v10404
        %v10406 = vrot.slane %v10405, 1
        %v10407 = vadd.f32 %v10405, %v10406
        %v10408 = vsel %vm10022, %v9923, 0.0
        %v10409 = vrot.slane %v10408, 4
        %v10410 = vadd.f32 %v10408, %v10409
        %v10411 = vrot.slane %v10410, 2
        %v10412 = vadd.f32 %v10410, %v10411
        %v10413 = vrot.slane %v10412, 1
        %v10414 = vadd.f32 %v10412, %v10413
        %v10415 = vsel %vm10022, %v9931, 0.0
        %v10416 = vrot.slane %v10415, 4
        %v10417 = vadd.f32 %v10415, %v10416
        %v10418 = vrot.slane %v10417, 2
        %v10419 = vadd.f32 %v10417, %v10418
        %v10420 = vrot.slane %v10419, 1
        %v10421 = vadd.f32 %v10419, %v10420
        %v10422 = vsel %vm10022, %v9939, 0.0
        %v10423 = vrot.slane %v10422, 4
        %v10424 = vadd.f32 %v10422, %v10423
        %v10425 = vrot.slane %v10424, 2
        %v10426 = vadd.f32 %v10424, %v10425
        %v10427 = vrot.slane %v10426, 1
        %v10428 = vadd.f32 %v10426, %v10427
        %v10429 = vsel %vm10022, %v9938, 0.0
        %v10430 = vrot.slane %v10429, 4
        %v10431 = vadd.f32 %v10429, %v10430
        %v10432 = vrot.slane %v10431, 2
        %v10433 = vadd.f32 %v10431, %v10432
        %v10434 = vrot.slane %v10433, 1
        %v10435 = vadd.f32 %v10433, %v10434
        %v10436 = vsel %vm10022, %v9940, 0.0
        %v10437 = vrot.slane %v10436, 4
        %v10438 = vadd.f32 %v10436, %v10437
        %v10439 = vrot.slane %v10438, 2
        %v10440 = vadd.f32 %v10438, %v10439
        %v10441 = vrot.slane %v10440, 1
        %v10442 = vadd.f32 %v10440, %v10441
        %v10443 = vsel %vm10022, %v9948, 0.0
        %v10444 = vrot.slane %v10443, 4
        %v10445 = vadd.f32 %v10443, %v10444
        %v10446 = vrot.slane %v10445, 2
        %v10447 = vadd.f32 %v10445, %v10446
        %v10448 = vrot.slane %v10447, 1
        %v10449 = vadd.f32 %v10447, %v10448
        %v10450 = vsel %vm10022, %v9956, 0.0
        %v10451 = vrot.slane %v10450, 4
        %v10452 = vadd.f32 %v10450, %v10451
        %v10453 = vrot.slane %v10452, 2
        %v10454 = vadd.f32 %v10452, %v10453
        %v10455 = vrot.slane %v10454, 1
        %v10456 = vadd.f32 %v10454, %v10455
        %v10457 = vsel %vm10022, %v9955, 0.0
        %v10458 = vrot.slane %v10457, 4
        %v10459 = vadd.f32 %v10457, %v10458
        %v10460 = vrot.slane %v10459, 2
        %v10461 = vadd.f32 %v10459, %v10460
        %v10462 = vrot.slane %v10461, 1
        %v10463 = vadd.f32 %v10461, %v10462
        %v10464 = vsel %vm10022, %v9957, 0.0
        %v10465 = vrot.slane %v10464, 4
        %v10466 = vadd.f32 %v10464, %v10465
        %v10467 = vrot.slane %v10466, 2
        %v10468 = vadd.f32 %v10466, %v10467
        %v10469 = vrot.slane %v10468, 1
        %v10470 = vadd.f32 %v10468, %v10469
        %v10471 = vmul.f32 %v10029, 0.25
        %v10472 = vmul.f32 %v10036, 0.25
        %v10473 = vmul.f32 %v10043, 0.25
        %v10474 = vmul.f32 %v10050, 0.25
        %v10475 = vmul.f32 %v10057, 0.25
        %v10476 = vmul.f32 %v10064, 0.25
        %v10477 = vmul.f32 %v10071, 0.25
        %v10478 = vmul.f32 %v10078, 0.25
        %v10479 = vmul.f32 %v10085, 0.25
        %v10480 = vmul.f32 %v10092, 0.25
        %v10481 = vmul.f32 %v10099, 0.25
        %v10482 = vmul.f32 %v10106, 0.25
        %v10483 = vmul.f32 %v10113, 0.25
        %v10484 = vmul.f32 %v10120, 0.25
        %v10485 = vmul.f32 %v10127, 0.25
        %v10486 = vmul.f32 %v10134, 0.25
        %v10487 = vmul.f32 %v10141, 0.25
        %v10488 = vmul.f32 %v10148, 0.25
        %v10489 = vmul.f32 %v10155, 0.25
        %v10490 = vmul.f32 %v10162, 0.25
        %v10491 = vmul.f32 %v10169, 0.25
        %v10492 = vmul.f32 %v10176, 0.25
        %v10493 = vmul.f32 %v10183, 0.25
        %v10494 = vmul.f32 %v10190, 0.25
        %v10495 = vmul.f32 %v10197, 0.25
        %v10496 = vmul.f32 %v10204, 0.25
        %v10497 = vmul.f32 %v10211, 0.25
        %v10498 = vmul.f32 %v10218, 0.25
        %v10499 = vmul.f32 %v10225, 0.25
        %v10500 = vmul.f32 %v10232, 0.25
        %v10501 = vmul.f32 %v10239, 0.25
        %v10502 = vmul.f32 %v10246, 0.25
        %v10503 = vmul.f32 %v10253, 0.25
        %v10504 = vmul.f32 %v10260, 0.25
        %v10505 = vmul.f32 %v10267, 0.25
        %v10506 = vmul.f32 %v10274, 0.25
        %v10507 = vmul.f32 %v10281, 0.25
        %v10508 = vmul.f32 %v10288, 0.25
        %v10509 = vmul.f32 %v10295, 0.25
        %v10510 = vmul.f32 %v10302, 0.25
        %v10511 = vmul.f32 %v10309, 0.25
        %v10512 = vmul.f32 %v10316, 0.25
        %v10513 = vmul.f32 %v10323, 0.25
        %v10514 = vmul.f32 %v10330, 0.25
        %v10515 = vmul.f32 %v10337, 0.25
        %v10516 = vmul.f32 %v10344, 0.25
        %v10517 = vmul.f32 %v10351, 0.25
        %v10518 = vmul.f32 %v10358, 0.25
        %v10519 = vmul.f32 %v10365, 0.25
        %v10520 = vmul.f32 %v10372, 0.25
        %v10521 = vmul.f32 %v10379, 0.25
        %v10522 = vmul.f32 %v10386, 0.25
        %v10523 = vmul.f32 %v10393, 0.25
        %v10524 = vmul.f32 %v10400, 0.25
        %v10525 = vmul.f32 %v10407, 0.25
        %v10526 = vmul.f32 %v10414, 0.25
        %v10527 = vmul.f32 %v10421, 0.25
        %v10528 = vmul.f32 %v10428, 0.25
        %v10529 = vmul.f32 %v10435, 0.25
        %v10530 = vmul.f32 %v10442, 0.25
        %v10531 = vmul.f32 %v10449, 0.25
        %v10532 = vmul.f32 %v10456, 0.25
        %v10533 = vmul.f32 %v10463, 0.25
        %v10534 = vmul.f32 %v10470, 0.25
        %vm10599 = vcmask 1041409
        %v10600 = vsel %vm10599, %v10472, %v10471
        %vm10601 = vcmask 1042434
        %v10602 = vsel %vm10601, %v10473, %v10600
        %vm10603 = vcmask 1043459
        %v10604 = vsel %vm10603, %v10474, %v10602
        %vm10605 = vcmask 1044484
        %v10606 = vsel %vm10605, %v10475, %v10604
        %vm10607 = vcmask 1045509
        %v10608 = vsel %vm10607, %v10476, %v10606
        %vm10609 = vcmask 1046534
        %v10610 = vsel %vm10609, %v10477, %v10608
        %vm10611 = vcmask 1047559
        %v10612 = vsel %vm10611, %v10478, %v10610
        %v10613 = vsel %vm10599, %v10480, %v10479
        %v10614 = vsel %vm10601, %v10481, %v10613
        %v10615 = vsel %vm10603, %v10482, %v10614
        %v10616 = vsel %vm10605, %v10483, %v10615
        %v10617 = vsel %vm10607, %v10484, %v10616
        %v10618 = vsel %vm10609, %v10485, %v10617
        %v10619 = vsel %vm10611, %v10486, %v10618
        %v10620 = vsel %vm10599, %v10488, %v10487
        %v10621 = vsel %vm10601, %v10489, %v10620
        %v10622 = vsel %vm10603, %v10490, %v10621
        %v10623 = vsel %vm10605, %v10491, %v10622
        %v10624 = vsel %vm10607, %v10492, %v10623
        %v10625 = vsel %vm10609, %v10493, %v10624
        %v10626 = vsel %vm10611, %v10494, %v10625
        %v10627 = vsel %vm10599, %v10496, %v10495
        %v10628 = vsel %vm10601, %v10497, %v10627
        %v10629 = vsel %vm10603, %v10498, %v10628
        %v10630 = vsel %vm10605, %v10499, %v10629
        %v10631 = vsel %vm10607, %v10500, %v10630
        %v10632 = vsel %vm10609, %v10501, %v10631
        %v10633 = vsel %vm10611, %v10502, %v10632
        %v10634 = vsel %vm10599, %v10504, %v10503
        %v10635 = vsel %vm10601, %v10505, %v10634
        %v10636 = vsel %vm10603, %v10506, %v10635
        %v10637 = vsel %vm10605, %v10507, %v10636
        %v10638 = vsel %vm10607, %v10508, %v10637
        %v10639 = vsel %vm10609, %v10509, %v10638
        %v10640 = vsel %vm10611, %v10510, %v10639
        %v10641 = vsel %vm10599, %v10512, %v10511
        %v10642 = vsel %vm10601, %v10513, %v10641
        %v10643 = vsel %vm10603, %v10514, %v10642
        %v10644 = vsel %vm10605, %v10515, %v10643
        %v10645 = vsel %vm10607, %v10516, %v10644
        %v10646 = vsel %vm10609, %v10517, %v10645
        %v10647 = vsel %vm10611, %v10518, %v10646
        %v10648 = vsel %vm10599, %v10520, %v10519
        %v10649 = vsel %vm10601, %v10521, %v10648
        %v10650 = vsel %vm10603, %v10522, %v10649
        %v10651 = vsel %vm10605, %v10523, %v10650
        %v10652 = vsel %vm10607, %v10524, %v10651
        %v10653 = vsel %vm10609, %v10525, %v10652
        %v10654 = vsel %vm10611, %v10526, %v10653
        %v10655 = vsel %vm10599, %v10528, %v10527
        %v10656 = vsel %vm10601, %v10529, %v10655
        %v10657 = vsel %vm10603, %v10530, %v10656
        %v10658 = vsel %vm10605, %v10531, %v10657
        %v10659 = vsel %vm10607, %v10532, %v10658
        %v10660 = vsel %vm10609, %v10533, %v10659
        %v10661 = vsel %vm10611, %v10534, %v10660
        %10670 = vst [vmem:[%s239] sm:$0xff] %v10612
        %10671 = vst [vmem:[%s239 + $0x8] sm:$0xff] %v10619
        %10672 = vst [vmem:[%s239 + $0x10] sm:$0xff] %v10626
        %10673 = vst [vmem:[%s239 + $0x18] sm:$0xff] %v10633
        %10674 = vst [vmem:[%s239 + $0x20] sm:$0xff] %v10640
        %10675 = vst [vmem:[%s239 + $0x28] sm:$0xff] %v10647
        %10676 = vst [vmem:[%s239 + $0x30] sm:$0xff] %v10654
        %10677 = vst [vmem:[%s239 + $0x38] sm:$0xff] %v10661
        %p10678 = scmp.lt.s32.totalorder %s17, 1
        %s10679 = scalar_select %p10678, %s17, 1
        %s10680 = smul.addr %s10679, 8
        %s10681 = smul.addr %s10680, 8
        %s10682 = scalar_lea.vmem %s5, %s10681
        // Predicated region
        $region45: #{_lambda_.1} parent=39 // pred_check
          %p10683 = pneg %p145
        $region46: #{_lambda_.1} parent=39 // pred_check_branch
          %10685 = sbr.rel (%p10683) target = $region48
        $region47: #{_lambda_.1} parent=39 // pred_region
          _
        $region48: #{_lambda_.1} parent=39 // pred_fallthru
          _
      $region40: #{_lambda_.1} parent=5 // pred_fallthru
        _
      %p10686 = scmp.le.s32.totalorder 2, %s12
      // Predicated region
      $region49: #{_lambda_.1} parent=5 // pred_check
        %p10687 = pneg %p10686
      $region50: #{_lambda_.1} parent=5 // pred_check_branch
        %10689 = sbr.rel (%p10687) target = $region52
      $region51: #{_lambda_.1} parent=5 // pred_region
        %s10690 = ssub.s32 %s12, 2
        // Predicated region
        $region53: #{_lambda_.1} parent=51 // pred_check
          %p10691 = pneg %p151
        $region54: #{_lambda_.1} parent=51 // pred_check_branch
          %10693 = sbr.rel (%p10691) target = $region56
        $region55: #{_lambda_.1} parent=51 // pred_region
          %p10694 = scmp.lt.s32.totalorder %s18, 1
          %s10695 = scalar_select %p10694, %s18, 1
          %s10696 = smul.addr %s10695, 8
          %s10697 = smul.addr %s10696, 8
          %s10698 = scalar_lea.vmem %s5, %s10697
        $region56: #{_lambda_.1} parent=51 // pred_fallthru
          _
      $region52: #{_lambda_.1} parent=5 // pred_fallthru
        _
    $region6: #{_lambda_.1} parent=1 // loop_footer
      %s16 = sadd.s32 1, %s12
    $region7: #{_lambda_.1} parent=1 // loop_footer_branch
      %11 = sbr.rel target = $region3
    $region8: #{_lambda_.1} parent=1 // loop_exit
      _
    %10699 = vsyncpa [#allocation5], 1
    %s10700 = scalar_lea.sflag [#allocation5], 1
    %10701 = vsyncpa %s10700, 1

</llo_original>
